<compile_context>
chip_gen: v7x
topology: tpu7x:2x2x1
jax: 0.10.0
libtpu: 0.0.40
codegen_flags: <defaults>
</compile_context>

<pallas_src>
import jax
import jax.numpy as jnp
from jax import lax
from jax.experimental import pallas as pl
from jax.experimental.pallas import tpu as pltpu

IMG_SCALE = 1.0 / 255.0
IMG_MEAN = (0.485, 0.456, 0.406)
IMG_STD = (0.229, 0.224, 0.225)


def _cparams(dims, vmem_mb):
    return pltpu.CompilerParams(
        dimension_semantics=dims,
        vmem_limit_bytes=vmem_mb * 1024 * 1024)


def _pick_lanes(n, target, align=128):
    """Largest multiple of `align` dividing n and <= target, else the full dim."""
    if n <= target:
        return n
    t = (min(target, n) // align) * align
    while t >= align:
        if n % t == 0:
            return t
        t -= align
    return n


# ------------------------------------------------------------------
# Fused main kernel: preprocess + make_trimap + FBA net stand-in + fba loss.
#   layout: (BT, C, HW) channels-first, HW on the lane axis, grid = (BT, HW//hw_t).
#   The five scalar L1 sums accumulate across the hw ("arbitrary") axis into
#   lane-dense (8,128) output blocks indexed by the parallel bt axis.
# ------------------------------------------------------------------
def _main_kernel(a_ref, fg_ref, bg_ref, tri_ref, mean_ref, istd_ref,
                 w1_ref, b1_ref, w2_ref, b2_ref,
                 simg_ref, sfg_ref, sbg_ref, tvis_ref, al_ref, comp_ref,
                 fpr_ref, bpr_ref,
                 s_a1_ref, s_ac_ref, s_fbc_ref, s_f1_ref, s_b1_ref):
    @pl.when(pl.program_id(1) == 0)
    def _init():
        for r in (s_a1_ref, s_ac_ref, s_fbc_ref, s_f1_ref, s_b1_ref):
            r[...] = jnp.zeros_like(r)

    gt = a_ref[0]                                  # (1, hw)  alpha GT
    fg_rgb = fg_ref[0]                             # (3, hw)  raw 0..255, RGB order
    bg_rgb = bg_ref[0]
    tri = tri_ref[0]                               # (3, hw)  soft trimap

    def _bgr(x):                                   # channel flip (RGB -> BGR) in VMEM
        return jnp.concatenate([x[2:3], x[1:2], x[0:1]], axis=0)

    sfg = _bgr(fg_rgb) * IMG_SCALE
    sbg = _bgr(bg_rgb) * IMG_SCALE
    simg = sfg * gt + sbg * (1.0 - gt)
    img = (simg - mean_ref[0]) * istd_ref[0]       # normalize (multiply by 1/std)

    # ---- make_trimap: argmax (first-wins), binary masks, 8 channels ----
    t0, t1, t2 = tri[0:1], tri[1:2], tri[2:3]
    is0 = jnp.logical_and(t0 >= t1, t0 >= t2)                     # argmax == 0
    is1 = jnp.logical_and(jnp.logical_not(is0), t1 >= t2)         # argmax == 1
    is2 = jnp.logical_not(jnp.logical_or(is0, is1))               # argmax == 2
    tb = is0.astype(jnp.float32)                                  # trimap2b
    tf = is2.astype(jnp.float32)                                  # trimap2f
    tm = is1.astype(jnp.float32)                                  # trimask
    # TODO(synk): trimap_transform (euclidean distance-transform Gaussians) has no clean
    #             Pallas equivalent; stand-in repeats the two binary masks 3x (6 channels).
    x_tri = jnp.concatenate([tb, tb, tb, tf, tf, tf, t0, t2], axis=0)   # (8, hw)

    # ---- FBA network stand-in (pointwise 2-layer MLP on the MXU) ----
    # TODO(synk): the real FBA encoder/decoder is an external module not provided;
    #             replaced by a deterministic 1x1-conv MLP producing alpha(1)/F(3)/B(3).
    x = jnp.concatenate([img, x_tri], axis=0)      # (11, hw)
    h = jnp.maximum(
        jnp.dot(w1_ref[...], x, preferred_element_type=jnp.float32) + b1_ref[...], 0.0)
    y = jax.nn.sigmoid(
        jnp.dot(w2_ref[...], h, preferred_element_type=jnp.float32) + b2_ref[...])
    al = y[0:1]                                    # predicted alpha
    pf = y[1:4]                                    # predicted F
    pb = y[4:7]                                    # predicted B

    # ---- fba_single_image_loss hot path ----
    fmask = jnp.logical_and(tm > 0.0, gt > 0.0)
    cF = jnp.where(fmask, pf, sfg)
    cB = jnp.where(tm > 0.0, pb, sbg)
    comp = cF * al + cB * (1.0 - al)

    simg_ref[0] = simg
    sfg_ref[0] = sfg
    sbg_ref[0] = sbg
    tvis_ref[0] = jnp.where(tm > 0.0, jnp.full_like(gt, 128.0 * IMG_SCALE), gt)
    al_ref[0] = al
    comp_ref[0] = comp
    fpr_ref[0] = cF
    bpr_ref[0] = cB

    ac = cF * gt + cB * (1.0 - gt)
    fbc = sfg * al + sbg * (1.0 - al)
    s_a1_ref[...] += jnp.sum(jnp.abs(al - gt))
    s_ac_ref[...] += jnp.sum(jnp.abs(ac - simg))
    s_fbc_ref[...] += jnp.sum(jnp.abs(fbc - simg))
    s_f1_ref[...] += jnp.sum(jnp.abs(cF - sfg))
    s_b1_ref[...] += jnp.sum(jnp.abs(cB - sbg))


def main_pallas(a_bt, fg_bt, bg_bt, tri_bt, mean, istd, w1, b1, w2, b2, hw_t):
    BT, _, HW = fg_bt.shape
    s1 = pl.BlockSpec((1, 1, hw_t), lambda i, j: (i, 0, j))
    s3 = pl.BlockSpec((1, 3, hw_t), lambda i, j: (i, 0, j))

    def wspec(shape):
        nd = len(shape)
        return pl.BlockSpec(shape, lambda i, j, _nd=nd: (0,) * _nd)   # resident constants

    ssum = pl.BlockSpec((8, 128), lambda i, j: (i, 0))
    o1 = jax.ShapeDtypeStruct((BT, 1, HW), jnp.float32)
    o3 = jax.ShapeDtypeStruct((BT, 3, HW), jnp.float32)
    osum = jax.ShapeDtypeStruct((BT * 8, 128), jnp.float32)
    consts = (mean, istd, w1, b1, w2, b2)
    return pl.pallas_call(
        _main_kernel,
        grid=(BT, HW // hw_t),
        in_specs=[s1, s3, s3, s3] + [wspec(c.shape) for c in consts],
        out_specs=(s3, s3, s3, s1, s1, s3, s3, s3, ssum, ssum, ssum, ssum, ssum),
        out_shape=(o3, o3, o3, o1, o1, o3, o3, o3, osum, osum, osum, osum, osum),
        compiler_params=_cparams(("parallel", "arbitrary"), 32),
    )(a_bt, fg_bt, bg_bt, tri_bt, *consts)


# ------------------------------------------------------------------
# Roll-based pyramid / gradient stats kernels (replace the matmul formulation).
# All arrays stay at full (H, W) resolution as "replicated" pyramids: the level-l
# value is held constant over each 2^l x 2^l block, so pooling / nearest-upsample /
# finite differences are pltpu.roll + VPU selects, and level sums are full-res
# masked sums divided by 4^l.
# ------------------------------------------------------------------
def _block_mean(x, row, col, l, H, W):
    """2x2 mean at pyramid level l (x constant on 2^l blocks) -> constant on 2^(l+1)."""
    s = 1 << l
    t = x + pltpu.roll(x, shift=W - s, axis=1)                     # + partner column block
    t = jnp.where(((col >> l) & 1) == 0, t, pltpu.roll(t, shift=s, axis=1))
    t = t + pltpu.roll(t, shift=H - s, axis=0)                     # + partner row block
    t = jnp.where(((row >> l) & 1) == 0, t, pltpu.roll(t, shift=s, axis=0))
    return 0.25 * t


def make_alpha_stats_kernel(H, W, levels):
    """Stats on d = alpha - gt: [grad_x, grad_y, lap_0 .. lap_{levels-1}]."""
    # TODO(synk): L.L1_grad (Sobel) and L.LapLoss (Gaussian pyramid) are external modules;
    #             forward-difference / 2x2 avg-pool pyramid stand-ins are used.
    def kernel(x_ref, y_ref, *out_refs):
        d = x_ref[0] - y_ref[0]                                    # (H, W)
        col = lax.broadcasted_iota(jnp.int32, (H, W), 1)
        row = lax.broadcasted_iota(jnp.int32, (H, W), 0)
        outs = []
        dx = pltpu.roll(d, shift=W - 1, axis=1) - d                # d[:, j+1] - d[:, j]
        dy = pltpu.roll(d, shift=H - 1, axis=0) - d
        outs.append(jnp.sum(jnp.where(col < W - 1, jnp.abs(dx), 0.0)))
        outs.append(jnp.sum(jnp.where(row < H - 1, jnp.abs(dy), 0.0)))
        cur = d
        for l in range(levels):
            nxt = _block_mean(cur, row, col, l, H, W)
            outs.append(jnp.sum(jnp.abs(cur - nxt)) / float(4 ** l))
            cur = nxt
        for ref, val in zip(out_refs, outs):
            ref[...] = jnp.broadcast_to(val, (8, 128)).astype(jnp.float32)

    return kernel, 2 + levels


def make_fb_stats_kernel(H, W, levels):
    """Fused lap(F,fg) + lap(B,bg) + exclusion(F,B); F/B/fg/bg read once per row.
    Outputs: lapF_l (levels), lapB_l (levels), exX_l (levels), exY_l (levels)."""
    # TODO(synk): L.exclusion_loss is an external module; sum(|dF|*|dB|) stand-in.
    def kernel(f_ref, b_ref, fg_ref, bg_ref, *out_refs):
        f = f_ref[0]
        b = b_ref[0]
        df = f - fg_ref[0]
        db = b - bg_ref[0]
        col = lax.broadcasted_iota(jnp.int32, (H, W), 1)
        row = lax.broadcasted_iota(jnp.int32, (H, W), 0)
        lapf, lapb, exx, exy = [], [], [], []
        for l in range(levels):
            s = 1 << l
            inv = 1.0 / float(4 ** l)
            fx = pltpu.roll(f, shift=W - s, axis=1) - f
            bx = pltpu.roll(b, shift=W - s, axis=1) - b
            fy = pltpu.roll(f, shift=H - s, axis=0) - f
            by = pltpu.roll(b, shift=H - s, axis=0) - b
            exx.append(inv * jnp.sum(
                jnp.where(col < W - s, jnp.abs(fx) * jnp.abs(bx), 0.0)))
            exy.append(inv * jnp.sum(
                jnp.where(row < H - s, jnp.abs(fy) * jnp.abs(by), 0.0)))
            dfn = _block_mean(df, row, col, l, H, W)
            dbn = _block_mean(db, row, col, l, H, W)
            lapf.append(inv * jnp.sum(jnp.abs(df - dfn)))
            lapb.append(inv * jnp.sum(jnp.abs(db - dbn)))
            df, db = dfn, dbn
            if l < levels - 1:
                f = _block_mean(f, row, col, l, H, W)
                b = _block_mean(b, row, col, l, H, W)
        outs = lapf + lapb + exx + exy
        for ref, val in zip(out_refs, outs):
            ref[...] = jnp.broadcast_to(val, (8, 128)).astype(jnp.float32)

    return kernel, 4 * levels


def row_stats_pallas(kernel, n_out, arrays):
    """Run a fused stats kernel over (R, H, W) inputs, 1 row per grid step ('parallel')."""
    R, H, W = arrays[0].shape
    io = pl.BlockSpec((1, H, W), lambda i: (i, 0, 0))
    ssum = pl.BlockSpec((8, 128), lambda i: (i, 0))
    osum = jax.ShapeDtypeStruct((R * 8, 128), jnp.float32)
    outs = pl.pallas_call(
        kernel,
        grid=(R,),
        in_specs=[io] * len(arrays),
        out_specs=tuple([ssum] * n_out),
        out_shape=tuple([osum] * n_out),
        compiler_params=_cparams(("parallel",), 40),
    )(*arrays)
    if not isinstance(outs, (tuple, list)):
        outs = (outs,)
    return [jnp.sum(o[::8, 0]) for o in outs]


# ------------------------------------------------------------------
# Temporal-consistency kernel: frame differencing fused via offset index maps
# (no dp/dg temporaries in XLA); alpha / F / B SSDs emitted from one pass.
# ------------------------------------------------------------------
def _tc_kernel(ac, an, gc, gn, fc, fn, fgc, fgn, bc, bn, bgc, bgn,
               sa_ref, sf_ref, sb_ref):
    @pl.when(pl.program_id(2) == 0)
    def _init():
        for r in (sa_ref, sf_ref, sb_ref):
            r[...] = jnp.zeros_like(r)
    da = (an[...] - ac[...]) - (gn[...] - gc[...])
    df = (fn[...] - fc[...]) - (fgn[...] - fgc[...])
    db = (bn[...] - bc[...]) - (bgn[...] - bgc[...])
    sa_ref[...] += jnp.sum(da * da)
    sf_ref[...] += jnp.sum(df * df)
    sb_ref[...] += jnp.sum(db * db)


def tc_pallas(al5, gt5, f5, fg5, b5, bg5, hw_t):
    Bb, T, _, HW = al5.shape

    def spec(C, dt):
        return pl.BlockSpec((1, 1, C, hw_t),
                            lambda b, t, k, _dt=dt: (b, t + _dt, 0, k))

    ssum = pl.BlockSpec((8, 128), lambda b, t, k: (b * (T - 1) + t, 0))
    osum = jax.ShapeDtypeStruct((Bb * (T - 1) * 8, 128), jnp.float32)
    outs = pl.pallas_call(
        _tc_kernel,
        grid=(Bb, T - 1, HW // hw_t),
        in_specs=[spec(1, 0), spec(1, 1), spec(1, 0), spec(1, 1),
                  spec(3, 0), spec(3, 1), spec(3, 0), spec(3, 1),
                  spec(3, 0), spec(3, 1), spec(3, 0), spec(3, 1)],
        out_specs=(ssum, ssum, ssum),
        out_shape=(osum, osum, osum),
        compiler_params=_cparams(("parallel", "parallel", "arbitrary"), 32),
    )(al5, al5, gt5, gt5, f5, f5, fg5, fg5, b5, b5, bg5, bg5)
    return [jnp.sum(o[::8, 0]) for o in outs]


# ------------------------------------------------------------------
# Full forward (stage=1: refinement=False, self.trimap=None)
# ------------------------------------------------------------------
def full_model_forward(a, fg, bg, tri, params):
    Bb, T, _, H, W = a.shape
    BT, HW = Bb * T, H * W
    f32 = jnp.float32
    a, fg, bg, tri = a.astype(f32), fg.astype(f32), bg.astype(f32), tri.astype(f32)

    # channels-first (BT, C, HW) layout: all reshapes below are transpose-free.
    a_bt = a.reshape(BT, 1, HW)
    fg_bt = fg.reshape(BT, 3, HW)          # raw RGB; BGR flip happens in-kernel
    bg_bt = bg.reshape(BT, 3, HW)
    tri_bt = tri.reshape(BT, 3, HW)

    mean = jnp.array(IMG_MEAN, f32).reshape(1, 3, 1)
    istd = (1.0 / jnp.array(IMG_STD, f32)).reshape(1, 3, 1)
    w1 = jnp.concatenate([params['w1i'], params['w1t']], axis=1)      # (hidden, 11)
    b1 = params['b1']
    w2 = jnp.concatenate([params['w2a'], params['w2f'], params['w2b']], axis=0)   # (7, hidden)
    b2 = jnp.concatenate([params['b2a'], params['b2f'], params['b2b']], axis=0)   # (7, 1)

    hw_t = _pick_lanes(HW, 2048)
    (simg, sfg, sbg, tvis, al_bt, comp_bt, F_bt, Bg_bt,
     s_a1, s_ac, s_fbc, s_f1, s_b1) = main_pallas(
        a_bt, fg_bt, bg_bt, tri_bt, mean, istd, w1, b1, w2, b2, hw_t)

    def tot(s):
        return jnp.sum(s[::8, 0])

    n1 = float(BT * HW)
    n3 = float(BT * 3 * HW)
    L_a1 = tot(s_a1) / n1
    L_ac = tot(s_ac) / n3
    L_FBc = tot(s_fbc) / n3
    L_FB1 = (tot(s_f1) + tot(s_b1)) / n3
    L_alpha_comp = L_a1 + L_ac + 0.25 * (L_FBc + L_FB1)

    # ---- fused roll-based pyramid losses ----
    levels = 3
    while levels > 1 and ((H % (1 << levels)) or (W % (1 << levels))):
        levels -= 1

    alpha_hw = al_bt.reshape(BT, H, W)
    gt_hw = a.reshape(BT, H, W)
    F_hw = F_bt.reshape(BT * 3, H, W)
    B_hw = Bg_bt.reshape(BT * 3, H, W)
    fg_hw = sfg.reshape(BT * 3, H, W)
    bg_hw = sbg.reshape(BT * 3, H, W)

    ker_a, nout_a = make_alpha_stats_kernel(H, W, levels)
    ker_fb, nout_fb = make_fb_stats_kernel(H, W, levels)
    ag = row_stats_pallas(ker_a, nout_a, [alpha_hw, gt_hw])       # [gx, gy, lap_0..]
    fb = row_stats_pallas(ker_fb, nout_fb, [F_hw, B_hw, fg_hw, bg_hw])

    L_ag = ag[0] / float(BT * H * (W - 1)) + ag[1] / float(BT * (H - 1) * W)

    def lap_total(vals, rows):
        t = jnp.float32(0.0)
        for l in range(levels):
            t = t + (2.0 ** l) * vals[l] / float(rows * (H >> l) * (W >> l))
        return t

    L_a_lap = lap_total(ag[2:], BT)
    L_F_lap = lap_total(fb[0:levels], BT * 3)
    L_B_lap = lap_total(fb[levels:2 * levels], BT * 3)
    L_lap = L_a_lap + 0.25 * (L_F_lap + L_B_lap)

    exX = fb[2 * levels:3 * levels]
    exY = fb[3 * levels:4 * levels]
    L_excl = jnp.float32(0.0)
    for l in range(levels):
        Hl, Wl = H >> l, W >> l
        L_excl = (L_excl + exX[l] / float(BT * 3 * Hl * (Wl - 1))
                  + exY[l] / float(BT * 3 * (Hl - 1) * Wl))
    L_grad = L_ag + 0.25 * L_excl

    # temporal consistency (end - start > 1)
    if T > 1:
        al5 = al_bt.reshape(Bb, T, 1, HW)
        gt5 = a.reshape(Bb, T, 1, HW)
        f5 = F_bt.reshape(Bb, T, 3, HW)
        fg5 = sfg.reshape(Bb, T, 3, HW)
        b5 = Bg_bt.reshape(Bb, T, 3, HW)
        bg5 = sbg.reshape(Bb, T, 3, HW)
        sa, sf, sb = tc_pallas(al5, gt5, f5, fg5, b5, bg5, hw_t)
        L_tc = (sa / float(Bb * (T - 1) * 1 * HW)
                + 0.25 * (sf / float(Bb * (T - 1) * 3 * HW)
                          + sb / float(Bb * (T - 1) * 3 * HW)))
        L_grad = L_grad + L_tc

    # ---- outputs (pure reshapes, no transposes) ----
    scaled_imgs = simg.reshape(Bb, T, 3, H, W)
    tris_vis = tvis.reshape(Bb, T, 1, H, W)
    alphas = al_bt.reshape(Bb, T, 1, H, W)
    comps = comp_bt.reshape(Bb, T, 3, H, W)
    Fs = F_bt.reshape(Bb, T, 3, H, W)
    Bs = Bg_bt.reshape(Bb, T, 3, H, W)
    scaled_gts = a
    preds_trimap = tri                         # self.trimap is None branch
    loss_trimap = jnp.zeros((1,), f32)         # self.trimap is None branch

    return [L_alpha_comp, L_lap, L_grad, loss_trimap, scaled_imgs, tris_vis, alphas,
            comps, scaled_gts, Fs, Bs, preds_trimap]


if __name__ == "__main__":
    key = jax.random.PRNGKey(0)
    kA, kFg, kBg, kTri, k1, k2, k3, k4, k5 = jax.random.split(key, 9)
    B, T, H, W = 2, 3, 16, 16
    hidden = 32

    a = jax.random.uniform(kA, (B, T, 1, H, W), jnp.float32)             # alpha GT
    fg = jax.random.uniform(kFg, (B, T, 3, H, W), jnp.float32) * 255.0   # fg image (0..255)
    bg = jax.random.uniform(kBg, (B, T, 3, H, W), jnp.float32) * 255.0   # bg image (0..255)
    tri = jax.nn.softmax(jax.random.uniform(kTri, (B, T, 3, H, W), jnp.float32) * 4.0, axis=2)

    params = {
        'w1i': jax.random.normal(k1, (hidden, 3), jnp.float32) * 0.1,
        'w1t': jax.random.normal(k2, (hidden, 8), jnp.float32) * 0.1,
        'b1': jnp.zeros((hidden, 1), jnp.float32),
        'w2a': jax.random.normal(k3, (1, hidden), jnp.float32) * 0.1,
        'b2a': jnp.zeros((1, 1), jnp.float32),
        'w2f': jax.random.normal(k4, (3, hidden), jnp.float32) * 0.1,
        'b2f': jnp.zeros((3, 1), jnp.float32),
        'w2b': jax.random.normal(k5, (3, hidden), jnp.float32) * 0.1,
        'b2b': jnp.zeros((3, 1), jnp.float32),
    }

    fwd = jax.jit(full_model_forward)
    outs = fwd(a, fg, bg, tri, params)
    for o in outs:
        jax.block_until_ready(o)
    print("KERNEL_OK")
</pallas_src>

<mosaic_0001>
module attributes {stable_mosaic.version = 11 : i64} {
  func.func @kernel(%arg0: i32, %arg1: memref<1x16x16xf32, #tpu.memory_space<vmem>>, %arg2: memref<1x16x16xf32, #tpu.memory_space<vmem>>, %arg3: memref<8x128xf32, #tpu.memory_space<vmem>>, %arg4: memref<8x128xf32, #tpu.memory_space<vmem>>, %arg5: memref<8x128xf32, #tpu.memory_space<vmem>>, %arg6: memref<8x128xf32, #tpu.memory_space<vmem>>, %arg7: memref<8x128xf32, #tpu.memory_space<vmem>>) attributes {dimension_semantics = [#tpu.dimension_semantics<parallel>], iteration_bounds = array<i64: 6>, scalar_prefetch = 0 : i64, scratch_operands = 0 : i64, tpu.core_type = #tpu.core_type<tc>, window_params = [{transform_indices = @transform_0, window_bounds = array<i64: 1, 16, 16>}, {transform_indices = @transform_1, window_bounds = array<i64: 1, 16, 16>}, {transform_indices = @transform_2, window_bounds = array<i64: 8, 128>}, {transform_indices = @transform_3, window_bounds = array<i64: 8, 128>}, {transform_indices = @transform_4, window_bounds = array<i64: 8, 128>}, {transform_indices = @transform_5, window_bounds = array<i64: 8, 128>}, {transform_indices = @transform_6, window_bounds = array<i64: 8, 128>}]} {
    %c0 = arith.constant 0 : index
    %c0_0 = arith.constant 0 : index
    %c0_1 = arith.constant 0 : index
    %0 = vector.load %arg1[%c0, %c0_0, %c0_1] : memref<1x16x16xf32, #tpu.memory_space<vmem>>, vector<1x16x16xf32>
    %1 = vector.shape_cast %0 : vector<1x16x16xf32> to vector<16x16xf32>
    %c0_2 = arith.constant 0 : index
    %c0_3 = arith.constant 0 : index
    %c0_4 = arith.constant 0 : index
    %2 = vector.load %arg2[%c0_2, %c0_3, %c0_4] : memref<1x16x16xf32, #tpu.memory_space<vmem>>, vector<1x16x16xf32>
    %3 = vector.shape_cast %2 : vector<1x16x16xf32> to vector<16x16xf32>
    %4 = arith.subf %1, %3 : vector<16x16xf32>
    %5 = tpu.iota {dimensions = array<i32: 1>} : vector<16x16xi32>
    %6 = tpu.iota {dimensions = array<i32: 0>} : vector<16x16xi32>
    %c15_i32 = arith.constant 15 : i32
    %7 = tpu.dynamic_rotate %4 by %c15_i32 dim 1 : vector<16x16xf32>, i32 -> vector<16x16xf32>
    %8 = arith.subf %7, %4 : vector<16x16xf32>
    %c15_i32_5 = arith.constant 15 : i32
    %9 = tpu.dynamic_rotate %4 by %c15_i32_5 dim 0 : vector<16x16xf32>, i32 -> vector<16x16xf32>
    %10 = arith.subf %9, %4 : vector<16x16xf32>
    %c15_i32_6 = arith.constant 15 : i32
    %11 = vector.broadcast %c15_i32_6 : i32 to vector<16x16xi32>
    %12 = arith.cmpi slt, %5, %11 : vector<16x16xi32>
    %13 = math.absf %8 : vector<16x16xf32>
    %cst = arith.constant 0.000000e+00 : f32
    %14 = vector.broadcast %cst : f32 to vector<16x16xf32>
    %15 = arith.select %12, %13, %14 : vector<16x16xi1>, vector<16x16xf32>
    %16 = vector.shape_cast %15 : vector<16x16xf32> to vector<1x16x16xf32>
    %cst_7 = arith.constant dense<0.000000e+00> : vector<1xf32>
    %17 = vector.multi_reduction <add>, %16, %cst_7 [1, 2] : vector<1x16x16xf32> to vector<1xf32>
    %18 = vector.shape_cast %17 : vector<1xf32> to vector<1x1x1xf32>
    %19 = vector.extract %18[0, 0, 0] : f32 from vector<1x1x1xf32>
    %c15_i32_8 = arith.constant 15 : i32
    %20 = vector.broadcast %c15_i32_8 : i32 to vector<16x16xi32>
    %21 = arith.cmpi slt, %6, %20 : vector<16x16xi32>
    %22 = math.absf %10 : vector<16x16xf32>
    %cst_9 = arith.constant 0.000000e+00 : f32
    %23 = vector.broadcast %cst_9 : f32 to vector<16x16xf32>
    %24 = arith.select %21, %22, %23 : vector<16x16xi1>, vector<16x16xf32>
    %25 = vector.shape_cast %24 : vector<16x16xf32> to vector<1x16x16xf32>
    %cst_10 = arith.constant dense<0.000000e+00> : vector<1xf32>
    %26 = vector.multi_reduction <add>, %25, %cst_10 [1, 2] : vector<1x16x16xf32> to vector<1xf32>
    %27 = vector.shape_cast %26 : vector<1xf32> to vector<1x1x1xf32>
    %28 = vector.extract %27[0, 0, 0] : f32 from vector<1x1x1xf32>
    %c15_i32_11 = arith.constant 15 : i32
    %29 = tpu.dynamic_rotate %4 by %c15_i32_11 dim 1 : vector<16x16xf32>, i32 -> vector<16x16xf32>
    %30 = arith.addf %4, %29 : vector<16x16xf32>
    %c0_i32 = arith.constant 0 : i32
    %31 = vector.broadcast %c0_i32 : i32 to vector<16x16xi32>
    %32 = arith.shrsi %5, %31 : vector<16x16xi32>
    %c1_i32 = arith.constant 1 : i32
    %33 = vector.broadcast %c1_i32 : i32 to vector<16x16xi32>
    %34 = arith.andi %32, %33 : vector<16x16xi32>
    %c0_i32_12 = arith.constant 0 : i32
    %35 = vector.broadcast %c0_i32_12 : i32 to vector<16x16xi32>
    %36 = arith.cmpi eq, %34, %35 : vector<16x16xi32>
    %c1_i32_13 = arith.constant 1 : i32
    %37 = tpu.dynamic_rotate %30 by %c1_i32_13 dim 1 : vector<16x16xf32>, i32 -> vector<16x16xf32>
    %38 = arith.select %36, %30, %37 : vector<16x16xi1>, vector<16x16xf32>
    %c15_i32_14 = arith.constant 15 : i32
    %39 = tpu.dynamic_rotate %38 by %c15_i32_14 dim 0 : vector<16x16xf32>, i32 -> vector<16x16xf32>
    %40 = arith.addf %38, %39 : vector<16x16xf32>
    %c0_i32_15 = arith.constant 0 : i32
    %41 = vector.broadcast %c0_i32_15 : i32 to vector<16x16xi32>
    %42 = arith.shrsi %6, %41 : vector<16x16xi32>
    %c1_i32_16 = arith.constant 1 : i32
    %43 = vector.broadcast %c1_i32_16 : i32 to vector<16x16xi32>
    %44 = arith.andi %42, %43 : vector<16x16xi32>
    %c0_i32_17 = arith.constant 0 : i32
    %45 = vector.broadcast %c0_i32_17 : i32 to vector<16x16xi32>
    %46 = arith.cmpi eq, %44, %45 : vector<16x16xi32>
    %c1_i32_18 = arith.constant 1 : i32
    %47 = tpu.dynamic_rotate %40 by %c1_i32_18 dim 0 : vector<16x16xf32>, i32 -> vector<16x16xf32>
    %48 = arith.select %46, %40, %47 : vector<16x16xi1>, vector<16x16xf32>
    %cst_19 = arith.constant 2.500000e-01 : f32
    %49 = vector.broadcast %cst_19 : f32 to vector<16x16xf32>
    %50 = arith.mulf %49, %48 : vector<16x16xf32>
    %51 = arith.subf %4, %50 : vector<16x16xf32>
    %52 = math.absf %51 : vector<16x16xf32>
    %53 = vector.shape_cast %52 : vector<16x16xf32> to vector<1x16x16xf32>
    %cst_20 = arith.constant dense<0.000000e+00> : vector<1xf32>
    %54 = vector.multi_reduction <add>, %53, %cst_20 [1, 2] : vector<1x16x16xf32> to vector<1xf32>
    %55 = vector.shape_cast %54 : vector<1xf32> to vector<1x1x1xf32>
    %56 = vector.extract %55[0, 0, 0] : f32 from vector<1x1x1xf32>
    %cst_21 = arith.constant 1.000000e+00 : f32
    %57 = arith.divf %56, %cst_21 : f32
    %c14_i32 = arith.constant 14 : i32
    %58 = tpu.dynamic_rotate %50 by %c14_i32 dim 1 : vector<16x16xf32>, i32 -> vector<16x16xf32>
    %59 = arith.addf %50, %58 : vector<16x16xf32>
    %c1_i32_22 = arith.constant 1 : i32
    %60 = vector.broadcast %c1_i32_22 : i32 to vector<16x16xi32>
    %61 = arith.shrsi %5, %60 : vector<16x16xi32>
    %c1_i32_23 = arith.constant 1 : i32
    %62 = vector.broadcast %c1_i32_23 : i32 to vector<16x16xi32>
    %63 = arith.andi %61, %62 : vector<16x16xi32>
    %c0_i32_24 = arith.constant 0 : i32
    %64 = vector.broadcast %c0_i32_24 : i32 to vector<16x16xi32>
    %65 = arith.cmpi eq, %63, %64 : vector<16x16xi32>
    %c2_i32 = arith.constant 2 : i32
    %66 = tpu.dynamic_rotate %59 by %c2_i32 dim 1 : vector<16x16xf32>, i32 -> vector<16x16xf32>
    %67 = arith.select %65, %59, %66 : vector<16x16xi1>, vector<16x16xf32>
    %c14_i32_25 = arith.constant 14 : i32
    %68 = tpu.dynamic_rotate %67 by %c14_i32_25 dim 0 : vector<16x16xf32>, i32 -> vector<16x16xf32>
    %69 = arith.addf %67, %68 : vector<16x16xf32>
    %c1_i32_26 = arith.constant 1 : i32
    %70 = vector.broadcast %c1_i32_26 : i32 to vector<16x16xi32>
    %71 = arith.shrsi %6, %70 : vector<16x16xi32>
    %c1_i32_27 = arith.constant 1 : i32
    %72 = vector.broadcast %c1_i32_27 : i32 to vector<16x16xi32>
    %73 = arith.andi %71, %72 : vector<16x16xi32>
    %c0_i32_28 = arith.constant 0 : i32
    %74 = vector.broadcast %c0_i32_28 : i32 to vector<16x16xi32>
    %75 = arith.cmpi eq, %73, %74 : vector<16x16xi32>
    %c2_i32_29 = arith.constant 2 : i32
    %76 = tpu.dynamic_rotate %69 by %c2_i32_29 dim 0 : vector<16x16xf32>, i32 -> vector<16x16xf32>
    %77 = arith.select %75, %69, %76 : vector<16x16xi1>, vector<16x16xf32>
    %cst_30 = arith.constant 2.500000e-01 : f32
    %78 = vector.broadcast %cst_30 : f32 to vector<16x16xf32>
    %79 = arith.mulf %78, %77 : vector<16x16xf32>
    %80 = arith.subf %50, %79 : vector<16x16xf32>
    %81 = math.absf %80 : vector<16x16xf32>
    %82 = vector.shape_cast %81 : vector<16x16xf32> to vector<1x16x16xf32>
    %cst_31 = arith.constant dense<0.000000e+00> : vector<1xf32>
    %83 = vector.multi_reduction <add>, %82, %cst_31 [1, 2] : vector<1x16x16xf32> to vector<1xf32>
    %84 = vector.shape_cast %83 : vector<1xf32> to vector<1x1x1xf32>
    %85 = vector.extract %84[0, 0, 0] : f32 from vector<1x1x1xf32>
    %cst_32 = arith.constant 4.000000e+00 : f32
    %86 = arith.divf %85, %cst_32 : f32
    %c12_i32 = arith.constant 12 : i32
    %87 = tpu.dynamic_rotate %79 by %c12_i32 dim 1 : vector<16x16xf32>, i32 -> vector<16x16xf32>
    %88 = arith.addf %79, %87 : vector<16x16xf32>
    %c2_i32_33 = arith.constant 2 : i32
    %89 = vector.broadcast %c2_i32_33 : i32 to vector<16x16xi32>
    %90 = arith.shrsi %5, %89 : vector<16x16xi32>
    %c1_i32_34 = arith.constant 1 : i32
    %91 = vector.broadcast %c1_i32_34 : i32 to vector<16x16xi32>
    %92 = arith.andi %90, %91 : vector<16x16xi32>
    %c0_i32_35 = arith.constant 0 : i32
    %93 = vector.broadcast %c0_i32_35 : i32 to vector<16x16xi32>
    %94 = arith.cmpi eq, %92, %93 : vector<16x16xi32>
    %c4_i32 = arith.constant 4 : i32
    %95 = tpu.dynamic_rotate %88 by %c4_i32 dim 1 : vector<16x16xf32>, i32 -> vector<16x16xf32>
    %96 = arith.select %94, %88, %95 : vector<16x16xi1>, vector<16x16xf32>
    %c12_i32_36 = arith.constant 12 : i32
    %97 = tpu.dynamic_rotate %96 by %c12_i32_36 dim 0 : vector<16x16xf32>, i32 -> vector<16x16xf32>
    %98 = arith.addf %96, %97 : vector<16x16xf32>
    %c2_i32_37 = arith.constant 2 : i32
    %99 = vector.broadcast %c2_i32_37 : i32 to vector<16x16xi32>
    %100 = arith.shrsi %6, %99 : vector<16x16xi32>
    %c1_i32_38 = arith.constant 1 : i32
    %101 = vector.broadcast %c1_i32_38 : i32 to vector<16x16xi32>
    %102 = arith.andi %100, %101 : vector<16x16xi32>
    %c0_i32_39 = arith.constant 0 : i32
    %103 = vector.broadcast %c0_i32_39 : i32 to vector<16x16xi32>
    %104 = arith.cmpi eq, %102, %103 : vector<16x16xi32>
    %c4_i32_40 = arith.constant 4 : i32
    %105 = tpu.dynamic_rotate %98 by %c4_i32_40 dim 0 : vector<16x16xf32>, i32 -> vector<16x16xf32>
    %106 = arith.select %104, %98, %105 : vector<16x16xi1>, vector<16x16xf32>
    %cst_41 = arith.constant 2.500000e-01 : f32
    %107 = vector.broadcast %cst_41 : f32 to vector<16x16xf32>
    %108 = arith.mulf %107, %106 : vector<16x16xf32>
    %109 = arith.subf %79, %108 : vector<16x16xf32>
    %110 = math.absf %109 : vector<16x16xf32>
    %111 = vector.shape_cast %110 : vector<16x16xf32> to vector<1x16x16xf32>
    %cst_42 = arith.constant dense<0.000000e+00> : vector<1xf32>
    %112 = vector.multi_reduction <add>, %111, %cst_42 [1, 2] : vector<1x16x16xf32> to vector<1xf32>
    %113 = vector.shape_cast %112 : vector<1xf32> to vector<1x1x1xf32>
    %114 = vector.extract %113[0, 0, 0] : f32 from vector<1x1x1xf32>
    %cst_43 = arith.constant 1.600000e+01 : f32
    %115 = arith.divf %114, %cst_43 : f32
    %116 = vector.broadcast %19 : f32 to vector<8x128xf32>
    %c0_44 = arith.constant 0 : index
    %c0_45 = arith.constant 0 : index
    %117 = vector.load %arg3[%c0_44, %c0_45] : memref<8x128xf32, #tpu.memory_space<vmem>>, vector<8x128xf32>
    tpu.vector_store %arg3[%c0_44, %c0_45], %116 {strides = array<i32>} : memref<8x128xf32, #tpu.memory_space<vmem>>, vector<8x128xf32>,
    %118 = vector.broadcast %28 : f32 to vector<8x128xf32>
    %c0_46 = arith.constant 0 : index
    %c0_47 = arith.constant 0 : index
    %119 = vector.load %arg4[%c0_46, %c0_47] : memref<8x128xf32, #tpu.memory_space<vmem>>, vector<8x128xf32>
    tpu.vector_store %arg4[%c0_46, %c0_47], %118 {strides = array<i32>} : memref<8x128xf32, #tpu.memory_space<vmem>>, vector<8x128xf32>,
    %120 = vector.broadcast %57 : f32 to vector<8x128xf32>
    %c0_48 = arith.constant 0 : index
    %c0_49 = arith.constant 0 : index
    %121 = vector.load %arg5[%c0_48, %c0_49] : memref<8x128xf32, #tpu.memory_space<vmem>>, vector<8x128xf32>
    tpu.vector_store %arg5[%c0_48, %c0_49], %120 {strides = array<i32>} : memref<8x128xf32, #tpu.memory_space<vmem>>, vector<8x128xf32>,
    %122 = vector.broadcast %86 : f32 to vector<8x128xf32>
    %c0_50 = arith.constant 0 : index
    %c0_51 = arith.constant 0 : index
    %123 = vector.load %arg6[%c0_50, %c0_51] : memref<8x128xf32, #tpu.memory_space<vmem>>, vector<8x128xf32>
    tpu.vector_store %arg6[%c0_50, %c0_51], %122 {strides = array<i32>} : memref<8x128xf32, #tpu.memory_space<vmem>>, vector<8x128xf32>,
    %124 = vector.broadcast %115 : f32 to vector<8x128xf32>
    %c0_52 = arith.constant 0 : index
    %c0_53 = arith.constant 0 : index
    %125 = vector.load %arg7[%c0_52, %c0_53] : memref<8x128xf32, #tpu.memory_space<vmem>>, vector<8x128xf32>
    tpu.vector_store %arg7[%c0_52, %c0_53], %124 {strides = array<i32>} : memref<8x128xf32, #tpu.memory_space<vmem>>, vector<8x128xf32>,
    return
  }
  func.func @transform_0(%arg0: i32) -> (i32, i32, i32) {
    %c0_i32 = arith.constant 0 : i32
    %c0_i32_0 = arith.constant 0 : i32
    %c0_i32_1 = arith.constant 0 : i32
    return %arg0, %c0_i32, %c0_i32_0 : i32, i32, i32
  }
  func.func @transform_1(%arg0: i32) -> (i32, i32, i32) {
    %c0_i32 = arith.constant 0 : i32
    %c0_i32_0 = arith.constant 0 : i32
    %c0_i32_1 = arith.constant 0 : i32
    return %arg0, %c0_i32, %c0_i32_0 : i32, i32, i32
  }
  func.func @transform_2(%arg0: i32) -> (i32, i32) {
    %c0_i32 = arith.constant 0 : i32
    %c0_i32_0 = arith.constant 0 : i32
    return %arg0, %c0_i32 : i32, i32
  }
  func.func @transform_3(%arg0: i32) -> (i32, i32) {
    %c0_i32 = arith.constant 0 : i32
    %c0_i32_0 = arith.constant 0 : i32
    return %arg0, %c0_i32 : i32, i32
  }
  func.func @transform_4(%arg0: i32) -> (i32, i32) {
    %c0_i32 = arith.constant 0 : i32
    %c0_i32_0 = arith.constant 0 : i32
    return %arg0, %c0_i32 : i32, i32
  }
  func.func @transform_5(%arg0: i32) -> (i32, i32) {
    %c0_i32 = arith.constant 0 : i32
    %c0_i32_0 = arith.constant 0 : i32
    return %arg0, %c0_i32 : i32, i32
  }
  func.func @transform_6(%arg0: i32) -> (i32, i32) {
    %c0_i32 = arith.constant 0 : i32
    %c0_i32_0 = arith.constant 0 : i32
    return %arg0, %c0_i32 : i32, i32
  }
}

module attributes {stable_mosaic.version = 11 : i64} {
  func.func @_main_kernel(%arg0: i32, %arg1: i32, %arg2: memref<1x1x256xf32, #tpu.memory_space<vmem>>, %arg3: memref<1x3x256xf32, #tpu.memory_space<vmem>>, %arg4: memref<1x3x256xf32, #tpu.memory_space<vmem>>, %arg5: memref<1x3x256xf32, #tpu.memory_space<vmem>>, %arg6: memref<1x3x1xf32, #tpu.memory_space<vmem>>, %arg7: memref<1x3x1xf32, #tpu.memory_space<vmem>>, %arg8: memref<32x11xf32, #tpu.memory_space<vmem>>, %arg9: memref<32x1xf32, #tpu.memory_space<vmem>>, %arg10: memref<7x32xf32, #tpu.memory_space<vmem>>, %arg11: memref<7x1xf32, #tpu.memory_space<vmem>>, %arg12: memref<1x3x256xf32, #tpu.memory_space<vmem>>, %arg13: memref<1x3x256xf32, #tpu.memory_space<vmem>>, %arg14: memref<1x3x256xf32, #tpu.memory_space<vmem>>, %arg15: memref<1x1x256xf32, #tpu.memory_space<vmem>>, %arg16: memref<1x1x256xf32, #tpu.memory_space<vmem>>, %arg17: memref<1x3x256xf32, #tpu.memory_space<vmem>>, %arg18: memref<1x3x256xf32, #tpu.memory_space<vmem>>, %arg19: memref<1x3x256xf32, #tpu.memory_space<vmem>>, %arg20: memref<8x128xf32, #tpu.memory_space<vmem>>, %arg21: memref<8x128xf32, #tpu.memory_space<vmem>>, %arg22: memref<8x128xf32, #tpu.memory_space<vmem>>, %arg23: memref<8x128xf32, #tpu.memory_space<vmem>>, %arg24: memref<8x128xf32, #tpu.memory_space<vmem>>) attributes {dimension_semantics = [#tpu.dimension_semantics<parallel>, #tpu.dimension_semantics<arbitrary>], iteration_bounds = array<i64: 6, 1>, scalar_prefetch = 0 : i64, scratch_operands = 0 : i64, tpu.core_type = #tpu.core_type<tc>, window_params = [{transform_indices = @transform_0, window_bounds = array<i64: 1, 1, 256>}, {transform_indices = @transform_1, window_bounds = array<i64: 1, 3, 256>}, {transform_indices = @transform_2, window_bounds = array<i64: 1, 3, 256>}, {transform_indices = @transform_3, window_bounds = array<i64: 1, 3, 256>}, {pipeline_mode = #tpu.pipeline_mode<synchronous>, transform_indices = @transform_4, window_bounds = array<i64: 1, 3, 1>}, {pipeline_mode = #tpu.pipeline_mode<synchronous>, transform_indices = @transform_5, window_bounds = array<i64: 1, 3, 1>}, {pipeline_mode = #tpu.pipeline_mode<synchronous>, transform_indices = @transform_6, window_bounds = array<i64: 32, 11>}, {pipeline_mode = #tpu.pipeline_mode<synchronous>, transform_indices = @transform_7, window_bounds = array<i64: 32, 1>}, {pipeline_mode = #tpu.pipeline_mode<synchronous>, transform_indices = @transform_8, window_bounds = array<i64: 7, 32>}, {pipeline_mode = #tpu.pipeline_mode<synchronous>, transform_indices = @transform_9, window_bounds = array<i64: 7, 1>}, {transform_indices = @transform_10, window_bounds = array<i64: 1, 3, 256>}, {transform_indices = @transform_11, window_bounds = array<i64: 1, 3, 256>}, {transform_indices = @transform_12, window_bounds = array<i64: 1, 3, 256>}, {transform_indices = @transform_13, window_bounds = array<i64: 1, 1, 256>}, {transform_indices = @transform_14, window_bounds = array<i64: 1, 1, 256>}, {transform_indices = @transform_15, window_bounds = array<i64: 1, 3, 256>}, {transform_indices = @transform_16, window_bounds = array<i64: 1, 3, 256>}, {transform_indices = @transform_17, window_bounds = array<i64: 1, 3, 256>}, {transform_indices = @transform_18, window_bounds = array<i64: 8, 128>}, {transform_indices = @transform_19, window_bounds = array<i64: 8, 128>}, {transform_indices = @transform_20, window_bounds = array<i64: 8, 128>}, {transform_indices = @transform_21, window_bounds = array<i64: 8, 128>}, {transform_indices = @transform_22, window_bounds = array<i64: 8, 128>}]} {
    %c0_i32 = arith.constant 0 : i32
    %0 = arith.cmpi eq, %arg1, %c0_i32 : i32
    %1 = arith.extui %0 : i1 to i32
    %c0_i32_0 = arith.constant 0 : i32
    %2 = arith.cmpi ne, %1, %c0_i32_0 : i32
    scf.if %2 {
      %cst_91 = arith.constant 0.000000e+00 : f32
      %189 = vector.broadcast %cst_91 : f32 to vector<8x128xf32>
      %c0_92 = arith.constant 0 : index
      %c0_93 = arith.constant 0 : index
      %190 = vector.load %arg20[%c0_92, %c0_93] : memref<8x128xf32, #tpu.memory_space<vmem>>, vector<8x128xf32>
      tpu.vector_store %arg20[%c0_92, %c0_93], %189 {strides = array<i32>} : memref<8x128xf32, #tpu.memory_space<vmem>>, vector<8x128xf32>,
      %cst_94 = arith.constant 0.000000e+00 : f32
      %191 = vector.broadcast %cst_94 : f32 to vector<8x128xf32>
      %c0_95 = arith.constant 0 : index
      %c0_96 = arith.constant 0 : index
      %192 = vector.load %arg21[%c0_95, %c0_96] : memref<8x128xf32, #tpu.memory_space<vmem>>, vector<8x128xf32>
      tpu.vector_store %arg21[%c0_95, %c0_96], %191 {strides = array<i32>} : memref<8x128xf32, #tpu.memory_space<vmem>>, vector<8x128xf32>,
      %cst_97 = arith.constant 0.000000e+00 : f32
      %193 = vector.broadcast %cst_97 : f32 to vector<8x128xf32>
      %c0_98 = arith.constant 0 : index
      %c0_99 = arith.constant 0 : index
      %194 = vector.load %arg22[%c0_98, %c0_99] : memref<8x128xf32, #tpu.memory_space<vmem>>, vector<8x128xf32>
      tpu.vector_store %arg22[%c0_98, %c0_99], %193 {strides = array<i32>} : memref<8x128xf32, #tpu.memory_space<vmem>>, vector<8x128xf32>,
      %cst_100 = arith.constant 0.000000e+00 : f32
      %195 = vector.broadcast %cst_100 : f32 to vector<8x128xf32>
      %c0_101 = arith.constant 0 : index
      %c0_102 = arith.constant 0 : index
      %196 = vector.load %arg23[%c0_101, %c0_102] : memref<8x128xf32, #tpu.memory_space<vmem>>, vector<8x128xf32>
      tpu.vector_store %arg23[%c0_101, %c0_102], %195 {strides = array<i32>} : memref<8x128xf32, #tpu.memory_space<vmem>>, vector<8x128xf32>,
      %cst_103 = arith.constant 0.000000e+00 : f32
      %197 = vector.broadcast %cst_103 : f32 to vector<8x128xf32>
      %c0_104 = arith.constant 0 : index
      %c0_105 = arith.constant 0 : index
      %198 = vector.load %arg24[%c0_104, %c0_105] : memref<8x128xf32, #tpu.memory_space<vmem>>, vector<8x128xf32>
      tpu.vector_store %arg24[%c0_104, %c0_105], %197 {strides = array<i32>} : memref<8x128xf32, #tpu.memory_space<vmem>>, vector<8x128xf32>,
    } else {
    }
    %c0 = arith.constant 0 : index
    %c0_1 = arith.constant 0 : index
    %c0_2 = arith.constant 0 : index
    %3 = vector.load %arg2[%c0, %c0_1, %c0_2] : memref<1x1x256xf32, #tpu.memory_space<vmem>>, vector<1x1x256xf32>
    %4 = vector.shape_cast %3 : vector<1x1x256xf32> to vector<1x256xf32>
    %c0_3 = arith.constant 0 : index
    %c0_4 = arith.constant 0 : index
    %c0_5 = arith.constant 0 : index
    %5 = vector.load %arg3[%c0_3, %c0_4, %c0_5] : memref<1x3x256xf32, #tpu.memory_space<vmem>>, vector<1x3x256xf32>
    %6 = vector.shape_cast %5 : vector<1x3x256xf32> to vector<3x256xf32>
    %c0_6 = arith.constant 0 : index
    %c0_7 = arith.constant 0 : index
    %c0_8 = arith.constant 0 : index
    %7 = vector.load %arg4[%c0_6, %c0_7, %c0_8] : memref<1x3x256xf32, #tpu.memory_space<vmem>>, vector<1x3x256xf32>
    %8 = vector.shape_cast %7 : vector<1x3x256xf32> to vector<3x256xf32>
    %c0_9 = arith.constant 0 : index
    %c0_10 = arith.constant 0 : index
    %c0_11 = arith.constant 0 : index
    %9 = vector.load %arg5[%c0_9, %c0_10, %c0_11] : memref<1x3x256xf32, #tpu.memory_space<vmem>>, vector<1x3x256xf32>
    %10 = vector.shape_cast %9 : vector<1x3x256xf32> to vector<3x256xf32>
    %11 = vector.extract_strided_slice %6 {offsets = [2, 0], sizes = [1, 256], strides = [1, 1]} : vector<3x256xf32> to vector<1x256xf32>
    %12 = vector.extract_strided_slice %6 {offsets = [1, 0], sizes = [1, 256], strides = [1, 1]} : vector<3x256xf32> to vector<1x256xf32>
    %13 = vector.extract_strided_slice %6 {offsets = [0, 0], sizes = [1, 256], strides = [1, 1]} : vector<3x256xf32> to vector<1x256xf32>
    %14 = tpu.concatenate %11, %12, %13 in 0 : vector<1x256xf32>, vector<1x256xf32>, vector<1x256xf32> -> vector<3x256xf32>
    %cst = arith.constant 0.00392156886 : f32
    %15 = vector.broadcast %cst : f32 to vector<3x256xf32>
    %16 = arith.mulf %14, %15 : vector<3x256xf32>
    %17 = vector.extract_strided_slice %8 {offsets = [2, 0], sizes = [1, 256], strides = [1, 1]} : vector<3x256xf32> to vector<1x256xf32>
    %18 = vector.extract_strided_slice %8 {offsets = [1, 0], sizes = [1, 256], strides = [1, 1]} : vector<3x256xf32> to vector<1x256xf32>
    %19 = vector.extract_strided_slice %8 {offsets = [0, 0], sizes = [1, 256], strides = [1, 1]} : vector<3x256xf32> to vector<1x256xf32>
    %20 = tpu.concatenate %17, %18, %19 in 0 : vector<1x256xf32>, vector<1x256xf32>, vector<1x256xf32> -> vector<3x256xf32>
    %cst_12 = arith.constant 0.00392156886 : f32
    %21 = vector.broadcast %cst_12 : f32 to vector<3x256xf32>
    %22 = arith.mulf %20, %21 : vector<3x256xf32>
    %23 = vector.broadcast %4 : vector<1x256xf32> to vector<3x256xf32>
    %24 = arith.mulf %16, %23 : vector<3x256xf32>
    %cst_13 = arith.constant 1.000000e+00 : f32
    %25 = vector.broadcast %cst_13 : f32 to vector<1x256xf32>
    %26 = arith.subf %25, %4 : vector<1x256xf32>
    %27 = vector.broadcast %26 : vector<1x256xf32> to vector<3x256xf32>
    %28 = arith.mulf %22, %27 : vector<3x256xf32>
    %29 = arith.addf %24, %28 : vector<3x256xf32>
    %c0_14 = arith.constant 0 : index
    %c0_15 = arith.constant 0 : index
    %c0_16 = arith.constant 0 : index
    %30 = vector.load %arg6[%c0_14, %c0_15, %c0_16] : memref<1x3x1xf32, #tpu.memory_space<vmem>>, vector<1x3x1xf32>
    %31 = vector.shape_cast %30 : vector<1x3x1xf32> to vector<3x1xf32>
    %32 = vector.broadcast %31 : vector<3x1xf32> to vector<3x256xf32>
    %33 = arith.subf %29, %32 : vector<3x256xf32>
    %c0_17 = arith.constant 0 : index
    %c0_18 = arith.constant 0 : index
    %c0_19 = arith.constant 0 : index
    %34 = vector.load %arg7[%c0_17, %c0_18, %c0_19] : memref<1x3x1xf32, #tpu.memory_space<vmem>>, vector<1x3x1xf32>
    %35 = vector.shape_cast %34 : vector<1x3x1xf32> to vector<3x1xf32>
    %36 = vector.broadcast %35 : vector<3x1xf32> to vector<3x256xf32>
    %37 = arith.mulf %33, %36 : vector<3x256xf32>
    %38 = vector.extract_strided_slice %10 {offsets = [0, 0], sizes = [1, 256], strides = [1, 1]} : vector<3x256xf32> to vector<1x256xf32>
    %39 = vector.extract_strided_slice %10 {offsets = [1, 0], sizes = [1, 256], strides = [1, 1]} : vector<3x256xf32> to vector<1x256xf32>
    %40 = vector.extract_strided_slice %10 {offsets = [2, 0], sizes = [1, 256], strides = [1, 1]} : vector<3x256xf32> to vector<1x256xf32>
    %41 = arith.cmpf oge, %38, %39 : vector<1x256xf32>
    %42 = arith.cmpf oge, %38, %40 : vector<1x256xf32>
    %43 = arith.andi %41, %42 : vector<1x256xi1>
    %cst_20 = arith.constant dense<true> : vector<1x256xi1>
    %44 = arith.xori %43, %cst_20 : vector<1x256xi1>
    %45 = arith.cmpf oge, %39, %40 : vector<1x256xf32>
    %46 = arith.andi %44, %45 : vector<1x256xi1>
    %47 = arith.ori %43, %46 : vector<1x256xi1>
    %cst_21 = arith.constant dense<true> : vector<1x256xi1>
    %48 = arith.xori %47, %cst_21 : vector<1x256xi1>
    %49 = arith.extui %43 : vector<1x256xi1> to vector<1x256xi32>
    %50 = arith.sitofp %49 : vector<1x256xi32> to vector<1x256xf32>
    %51 = arith.extui %48 : vector<1x256xi1> to vector<1x256xi32>
    %52 = arith.sitofp %51 : vector<1x256xi32> to vector<1x256xf32>
    %53 = arith.extui %46 : vector<1x256xi1> to vector<1x256xi32>
    %54 = arith.sitofp %53 : vector<1x256xi32> to vector<1x256xf32>
    %55 = tpu.concatenate %50, %50, %50, %52, %52, %52, %38, %40 in 0 : vector<1x256xf32>, vector<1x256xf32>, vector<1x256xf32>, vector<1x256xf32>, vector<1x256xf32>, vector<1x256xf32>, vector<1x256xf32>, vector<1x256xf32> -> vector<8x256xf32>
    %56 = tpu.concatenate %37, %55 in 0 : vector<3x256xf32>, vector<8x256xf32> -> vector<11x256xf32>
    %c0_22 = arith.constant 0 : index
    %c0_23 = arith.constant 0 : index
    %57 = vector.load %arg8[%c0_22, %c0_23] : memref<32x11xf32, #tpu.memory_space<vmem>>, vector<32x11xf32>
    %cst_24 = arith.constant dense<0.000000e+00> : vector<32x256xf32>
    %58 = tpu.matmul %57, %56, %cst_24 {dimension_numbers = #tpu.dot_dimension_numbers<[1], [0], [0], [1], [0, 0, 1, 1], [], []>} : vector<32x11xf32>, vector<11x256xf32>, vector<32x256xf32> -> vector<32x256xf32>
    %c0_25 = arith.constant 0 : index
    %c0_26 = arith.constant 0 : index
    %59 = vector.load %arg9[%c0_25, %c0_26] : memref<32x1xf32, #tpu.memory_space<vmem>>, vector<32x1xf32>
    %60 = vector.broadcast %59 : vector<32x1xf32> to vector<32x256xf32>
    %61 = arith.addf %58, %60 : vector<32x256xf32>
    %cst_27 = arith.constant 0.000000e+00 : f32
    %62 = vector.broadcast %cst_27 : f32 to vector<32x256xf32>
    %63 = arith.maximumf %61, %62 : vector<32x256xf32>
    %c0_28 = arith.constant 0 : index
    %c0_29 = arith.constant 0 : index
    %64 = vector.load %arg10[%c0_28, %c0_29] : memref<7x32xf32, #tpu.memory_space<vmem>>, vector<7x32xf32>
    %cst_30 = arith.constant dense<0.000000e+00> : vector<7x256xf32>
    %65 = tpu.matmul %64, %63, %cst_30 {dimension_numbers = #tpu.dot_dimension_numbers<[1], [0], [0], [1], [0, 0, 1, 1], [], []>} : vector<7x32xf32>, vector<32x256xf32>, vector<7x256xf32> -> vector<7x256xf32>
    %c0_31 = arith.constant 0 : index
    %c0_32 = arith.constant 0 : index
    %66 = vector.load %arg11[%c0_31, %c0_32] : memref<7x1xf32, #tpu.memory_space<vmem>>, vector<7x1xf32>
    %67 = vector.broadcast %66 : vector<7x1xf32> to vector<7x256xf32>
    %68 = arith.addf %65, %67 : vector<7x256xf32>
    %69 = arith.negf %68 : vector<7x256xf32>
    %70 = math.exp %69 : vector<7x256xf32>
    %cst_33 = arith.constant 1.000000e+00 : f32
    %71 = vector.broadcast %cst_33 : f32 to vector<7x256xf32>
    %72 = arith.addf %71, %70 : vector<7x256xf32>
    %73 = arith.divf %71, %72 : vector<7x256xf32>
    %74 = vector.extract_strided_slice %73 {offsets = [0, 0], sizes = [1, 256], strides = [1, 1]} : vector<7x256xf32> to vector<1x256xf32>
    %75 = vector.extract_strided_slice %73 {offsets = [1, 0], sizes = [3, 256], strides = [1, 1]} : vector<7x256xf32> to vector<3x256xf32>
    %76 = vector.extract_strided_slice %73 {offsets = [4, 0], sizes = [3, 256], strides = [1, 1]} : vector<7x256xf32> to vector<3x256xf32>
    %cst_34 = arith.constant 0.000000e+00 : f32
    %77 = vector.broadcast %cst_34 : f32 to vector<1x256xf32>
    %78 = arith.cmpf ogt, %54, %77 : vector<1x256xf32>
    %cst_35 = arith.constant 0.000000e+00 : f32
    %79 = vector.broadcast %cst_35 : f32 to vector<1x256xf32>
    %80 = arith.cmpf ogt, %4, %79 : vector<1x256xf32>
    %81 = arith.andi %78, %80 : vector<1x256xi1>
    %82 = vector.shape_cast %81 : vector<1x256xi1> to vector<1x256xi1>
    %83 = vector.broadcast %82 : vector<1x256xi1> to vector<3x256xi1>
    %84 = arith.select %83, %75, %16 : vector<3x256xi1>, vector<3x256xf32>
    %cst_36 = arith.constant 0.000000e+00 : f32
    %85 = vector.broadcast %cst_36 : f32 to vector<1x256xf32>
    %86 = arith.cmpf ogt, %54, %85 : vector<1x256xf32>
    %87 = vector.shape_cast %86 : vector<1x256xi1> to vector<1x256xi1>
    %88 = vector.broadcast %87 : vector<1x256xi1> to vector<3x256xi1>
    %89 = arith.select %88, %76, %22 : vector<3x256xi1>, vector<3x256xf32>
    %90 = vector.broadcast %74 : vector<1x256xf32> to vector<3x256xf32>
    %91 = arith.mulf %84, %90 : vector<3x256xf32>
    %cst_37 = arith.constant 1.000000e+00 : f32
    %92 = vector.broadcast %cst_37 : f32 to vector<1x256xf32>
    %93 = arith.subf %92, %74 : vector<1x256xf32>
    %94 = vector.broadcast %93 : vector<1x256xf32> to vector<3x256xf32>
    %95 = arith.mulf %89, %94 : vector<3x256xf32>
    %96 = arith.addf %91, %95 : vector<3x256xf32>
    %c0_38 = arith.constant 0 : index
    %c0_39 = arith.constant 0 : index
    %c0_40 = arith.constant 0 : index
    %97 = vector.load %arg12[%c0_38, %c0_39, %c0_40] : memref<1x3x256xf32, #tpu.memory_space<vmem>>, vector<1x3x256xf32>
    %98 = vector.shape_cast %97 : vector<1x3x256xf32> to vector<3x256xf32>
    %99 = vector.shape_cast %29 : vector<3x256xf32> to vector<1x3x256xf32>
    tpu.vector_store %arg12[%c0_38, %c0_39, %c0_40], %99 {strides = array<i32>} : memref<1x3x256xf32, #tpu.memory_space<vmem>>, vector<1x3x256xf32>,
    %c0_41 = arith.constant 0 : index
    %c0_42 = arith.constant 0 : index
    %c0_43 = arith.constant 0 : index
    %100 = vector.load %arg13[%c0_41, %c0_42, %c0_43] : memref<1x3x256xf32, #tpu.memory_space<vmem>>, vector<1x3x256xf32>
    %101 = vector.shape_cast %100 : vector<1x3x256xf32> to vector<3x256xf32>
    %102 = vector.shape_cast %16 : vector<3x256xf32> to vector<1x3x256xf32>
    tpu.vector_store %arg13[%c0_41, %c0_42, %c0_43], %102 {strides = array<i32>} : memref<1x3x256xf32, #tpu.memory_space<vmem>>, vector<1x3x256xf32>,
    %c0_44 = arith.constant 0 : index
    %c0_45 = arith.constant 0 : index
    %c0_46 = arith.constant 0 : index
    %103 = vector.load %arg14[%c0_44, %c0_45, %c0_46] : memref<1x3x256xf32, #tpu.memory_space<vmem>>, vector<1x3x256xf32>
    %104 = vector.shape_cast %103 : vector<1x3x256xf32> to vector<3x256xf32>
    %105 = vector.shape_cast %22 : vector<3x256xf32> to vector<1x3x256xf32>
    tpu.vector_store %arg14[%c0_44, %c0_45, %c0_46], %105 {strides = array<i32>} : memref<1x3x256xf32, #tpu.memory_space<vmem>>, vector<1x3x256xf32>,
    %cst_47 = arith.constant 0.000000e+00 : f32
    %106 = vector.broadcast %cst_47 : f32 to vector<1x256xf32>
    %107 = arith.cmpf ogt, %54, %106 : vector<1x256xf32>
    %cst_48 = arith.constant 0.501960814 : f32
    %108 = vector.broadcast %cst_48 : f32 to vector<1x256xf32>
    %109 = arith.select %107, %108, %4 : vector<1x256xi1>, vector<1x256xf32>
    %c0_49 = arith.constant 0 : index
    %c0_50 = arith.constant 0 : index
    %c0_51 = arith.constant 0 : index
    %110 = vector.load %arg15[%c0_49, %c0_50, %c0_51] : memref<1x1x256xf32, #tpu.memory_space<vmem>>, vector<1x1x256xf32>
    %111 = vector.shape_cast %110 : vector<1x1x256xf32> to vector<1x256xf32>
    %112 = vector.shape_cast %109 : vector<1x256xf32> to vector<1x1x256xf32>
    tpu.vector_store %arg15[%c0_49, %c0_50, %c0_51], %112 {strides = array<i32>} : memref<1x1x256xf32, #tpu.memory_space<vmem>>, vector<1x1x256xf32>,
    %c0_52 = arith.constant 0 : index
    %c0_53 = arith.constant 0 : index
    %c0_54 = arith.constant 0 : index
    %113 = vector.load %arg16[%c0_52, %c0_53, %c0_54] : memref<1x1x256xf32, #tpu.memory_space<vmem>>, vector<1x1x256xf32>
    %114 = vector.shape_cast %113 : vector<1x1x256xf32> to vector<1x256xf32>
    %115 = vector.shape_cast %74 : vector<1x256xf32> to vector<1x1x256xf32>
    tpu.vector_store %arg16[%c0_52, %c0_53, %c0_54], %115 {strides = array<i32>} : memref<1x1x256xf32, #tpu.memory_space<vmem>>, vector<1x1x256xf32>,
    %c0_55 = arith.constant 0 : index
    %c0_56 = arith.constant 0 : index
    %c0_57 = arith.constant 0 : index
    %116 = vector.load %arg17[%c0_55, %c0_56, %c0_57] : memref<1x3x256xf32, #tpu.memory_space<vmem>>, vector<1x3x256xf32>
    %117 = vector.shape_cast %116 : vector<1x3x256xf32> to vector<3x256xf32>
    %118 = vector.shape_cast %96 : vector<3x256xf32> to vector<1x3x256xf32>
    tpu.vector_store %arg17[%c0_55, %c0_56, %c0_57], %118 {strides = array<i32>} : memref<1x3x256xf32, #tpu.memory_space<vmem>>, vector<1x3x256xf32>,
    %c0_58 = arith.constant 0 : index
    %c0_59 = arith.constant 0 : index
    %c0_60 = arith.constant 0 : index
    %119 = vector.load %arg18[%c0_58, %c0_59, %c0_60] : memref<1x3x256xf32, #tpu.memory_space<vmem>>, vector<1x3x256xf32>
    %120 = vector.shape_cast %119 : vector<1x3x256xf32> to vector<3x256xf32>
    %121 = vector.shape_cast %84 : vector<3x256xf32> to vector<1x3x256xf32>
    tpu.vector_store %arg18[%c0_58, %c0_59, %c0_60], %121 {strides = array<i32>} : memref<1x3x256xf32, #tpu.memory_space<vmem>>, vector<1x3x256xf32>,
    %c0_61 = arith.constant 0 : index
    %c0_62 = arith.constant 0 : index
    %c0_63 = arith.constant 0 : index
    %122 = vector.load %arg19[%c0_61, %c0_62, %c0_63] : memref<1x3x256xf32, #tpu.memory_space<vmem>>, vector<1x3x256xf32>
    %123 = vector.shape_cast %122 : vector<1x3x256xf32> to vector<3x256xf32>
    %124 = vector.shape_cast %89 : vector<3x256xf32> to vector<1x3x256xf32>
    tpu.vector_store %arg19[%c0_61, %c0_62, %c0_63], %124 {strides = array<i32>} : memref<1x3x256xf32, #tpu.memory_space<vmem>>, vector<1x3x256xf32>,
    %125 = vector.broadcast %4 : vector<1x256xf32> to vector<3x256xf32>
    %126 = arith.mulf %84, %125 : vector<3x256xf32>
    %cst_64 = arith.constant 1.000000e+00 : f32
    %127 = vector.broadcast %cst_64 : f32 to vector<1x256xf32>
    %128 = arith.subf %127, %4 : vector<1x256xf32>
    %129 = vector.broadcast %128 : vector<1x256xf32> to vector<3x256xf32>
    %130 = arith.mulf %89, %129 : vector<3x256xf32>
    %131 = arith.addf %126, %130 : vector<3x256xf32>
    %132 = vector.broadcast %74 : vector<1x256xf32> to vector<3x256xf32>
    %133 = arith.mulf %16, %132 : vector<3x256xf32>
    %cst_65 = arith.constant 1.000000e+00 : f32
    %134 = vector.broadcast %cst_65 : f32 to vector<1x256xf32>
    %135 = arith.subf %134, %74 : vector<1x256xf32>
    %136 = vector.broadcast %135 : vector<1x256xf32> to vector<3x256xf32>
    %137 = arith.mulf %22, %136 : vector<3x256xf32>
    %138 = arith.addf %133, %137 : vector<3x256xf32>
    %c0_66 = arith.constant 0 : index
    %c0_67 = arith.constant 0 : index
    %139 = vector.load %arg20[%c0_66, %c0_67] : memref<8x128xf32, #tpu.memory_space<vmem>>, vector<8x128xf32>
    %140 = arith.subf %74, %4 : vector<1x256xf32>
    %141 = math.absf %140 : vector<1x256xf32>
    %142 = vector.shape_cast %141 : vector<1x256xf32> to vector<1x1x256xf32>
    %cst_68 = arith.constant dense<0.000000e+00> : vector<1xf32>
    %143 = vector.multi_reduction <add>, %142, %cst_68 [1, 2] : vector<1x1x256xf32> to vector<1xf32>
    %144 = vector.shape_cast %143 : vector<1xf32> to vector<1x1x1xf32>
    %145 = vector.extract %144[0, 0, 0] : f32 from vector<1x1x1xf32>
    %146 = vector.broadcast %145 : f32 to vector<8x128xf32>
    %147 = arith.addf %139, %146 : vector<8x128xf32>
    %c0_69 = arith.constant 0 : index
    %c0_70 = arith.constant 0 : index
    %148 = vector.load %arg20[%c0_69, %c0_70] : memref<8x128xf32, #tpu.memory_space<vmem>>, vector<8x128xf32>
    tpu.vector_store %arg20[%c0_69, %c0_70], %147 {strides = array<i32>} : memref<8x128xf32, #tpu.memory_space<vmem>>, vector<8x128xf32>,
    %c0_71 = arith.constant 0 : index
    %c0_72 = arith.constant 0 : index
    %149 = vector.load %arg21[%c0_71, %c0_72] : memref<8x128xf32, #tpu.memory_space<vmem>>, vector<8x128xf32>
    %150 = arith.subf %131, %29 : vector<3x256xf32>
    %151 = math.absf %150 : vector<3x256xf32>
    %152 = vector.shape_cast %151 : vector<3x256xf32> to vector<1x3x256xf32>
    %cst_73 = arith.constant dense<0.000000e+00> : vector<1xf32>
    %153 = vector.multi_reduction <add>, %152, %cst_73 [1, 2] : vector<1x3x256xf32> to vector<1xf32>
    %154 = vector.shape_cast %153 : vector<1xf32> to vector<1x1x1xf32>
    %155 = vector.extract %154[0, 0, 0] : f32 from vector<1x1x1xf32>
    %156 = vector.broadcast %155 : f32 to vector<8x128xf32>
    %157 = arith.addf %149, %156 : vector<8x128xf32>
    %c0_74 = arith.constant 0 : index
    %c0_75 = arith.constant 0 : index
    %158 = vector.load %arg21[%c0_74, %c0_75] : memref<8x128xf32, #tpu.memory_space<vmem>>, vector<8x128xf32>
    tpu.vector_store %arg21[%c0_74, %c0_75], %157 {strides = array<i32>} : memref<8x128xf32, #tpu.memory_space<vmem>>, vector<8x128xf32>,
    %c0_76 = arith.constant 0 : index
    %c0_77 = arith.constant 0 : index
    %159 = vector.load %arg22[%c0_76, %c0_77] : memref<8x128xf32, #tpu.memory_space<vmem>>, vector<8x128xf32>
    %160 = arith.subf %138, %29 : vector<3x256xf32>
    %161 = math.absf %160 : vector<3x256xf32>
    %162 = vector.shape_cast %161 : vector<3x256xf32> to vector<1x3x256xf32>
    %cst_78 = arith.constant dense<0.000000e+00> : vector<1xf32>
    %163 = vector.multi_reduction <add>, %162, %cst_78 [1, 2] : vector<1x3x256xf32> to vector<1xf32>
    %164 = vector.shape_cast %163 : vector<1xf32> to vector<1x1x1xf32>
    %165 = vector.extract %164[0, 0, 0] : f32 from vector<1x1x1xf32>
    %166 = vector.broadcast %165 : f32 to vector<8x128xf32>
    %167 = arith.addf %159, %166 : vector<8x128xf32>
    %c0_79 = arith.constant 0 : index
    %c0_80 = arith.constant 0 : index
    %168 = vector.load %arg22[%c0_79, %c0_80] : memref<8x128xf32, #tpu.memory_space<vmem>>, vector<8x128xf32>
    tpu.vector_store %arg22[%c0_79, %c0_80], %167 {strides = array<i32>} : memref<8x128xf32, #tpu.memory_space<vmem>>, vector<8x128xf32>,
    %c0_81 = arith.constant 0 : index
    %c0_82 = arith.constant 0 : index
    %169 = vector.load %arg23[%c0_81, %c0_82] : memref<8x128xf32, #tpu.memory_space<vmem>>, vector<8x128xf32>
    %170 = arith.subf %84, %16 : vector<3x256xf32>
    %171 = math.absf %170 : vector<3x256xf32>
    %172 = vector.shape_cast %171 : vector<3x256xf32> to vector<1x3x256xf32>
    %cst_83 = arith.constant dense<0.000000e+00> : vector<1xf32>
    %173 = vector.multi_reduction <add>, %172, %cst_83 [1, 2] : vector<1x3x256xf32> to vector<1xf32>
    %174 = vector.shape_cast %173 : vector<1xf32> to vector<1x1x1xf32>
    %175 = vector.extract %174[0, 0, 0] : f32 from vector<1x1x1xf32>
    %176 = vector.broadcast %175 : f32 to vector<8x128xf32>
    %177 = arith.addf %169, %176 : vector<8x128xf32>
    %c0_84 = arith.constant 0 : index
    %c0_85 = arith.constant 0 : index
    %178 = vector.load %arg23[%c0_84, %c0_85] : memref<8x128xf32, #tpu.memory_space<vmem>>, vector<8x128xf32>
    tpu.vector_store %arg23[%c0_84, %c0_85], %177 {strides = array<i32>} : memref<8x128xf32, #tpu.memory_space<vmem>>, vector<8x128xf32>,
    %c0_86 = arith.constant 0 : index
    %c0_87 = arith.constant 0 : index
    %179 = vector.load %arg24[%c0_86, %c0_87] : memref<8x128xf32, #tpu.memory_space<vmem>>, vector<8x128xf32>
    %180 = arith.subf %89, %22 : vector<3x256xf32>
    %181 = math.absf %180 : vector<3x256xf32>
    %182 = vector.shape_cast %181 : vector<3x256xf32> to vector<1x3x256xf32>
    %cst_88 = arith.constant dense<0.000000e+00> : vector<1xf32>
    %183 = vector.multi_reduction <add>, %182, %cst_88 [1, 2] : vector<1x3x256xf32> to vector<1xf32>
    %184 = vector.shape_cast %183 : vector<1xf32> to vector<1x1x1xf32>
    %185 = vector.extract %184[0, 0, 0] : f32 from vector<1x1x1xf32>
    %186 = vector.broadcast %185 : f32 to vector<8x128xf32>
    %187 = arith.addf %179, %186 : vector<8x128xf32>
    %c0_89 = arith.constant 0 : index
    %c0_90 = arith.constant 0 : index
    %188 = vector.load %arg24[%c0_89, %c0_90] : memref<8x128xf32, #tpu.memory_space<vmem>>, vector<8x128xf32>
    tpu.vector_store %arg24[%c0_89, %c0_90], %187 {strides = array<i32>} : memref<8x128xf32, #tpu.memory_space<vmem>>, vector<8x128xf32>,
    return
  }
  func.func @transform_0(%arg0: i32, %arg1: i32) -> (i32, i32, i32) {
    %c0_i32 = arith.constant 0 : i32
    %c0_i32_0 = arith.constant 0 : i32
    return %arg0, %c0_i32, %arg1 : i32, i32, i32
  }
  func.func @transform_1(%arg0: i32, %arg1: i32) -> (i32, i32, i32) {
    %c0_i32 = arith.constant 0 : i32
    %c0_i32_0 = arith.constant 0 : i32
    return %arg0, %c0_i32, %arg1 : i32, i32, i32
  }
  func.func @transform_2(%arg0: i32, %arg1: i32) -> (i32, i32, i32) {
    %c0_i32 = arith.constant 0 : i32
    %c0_i32_0 = arith.constant 0 : i32
    return %arg0, %c0_i32, %arg1 : i32, i32, i32
  }
  func.func @transform_3(%arg0: i32, %arg1: i32) -> (i32, i32, i32) {
    %c0_i32 = arith.constant 0 : i32
    %c0_i32_0 = arith.constant 0 : i32
    return %arg0, %c0_i32, %arg1 : i32, i32, i32
  }
  func.func @transform_4(%arg0: i32, %arg1: i32) -> (i32, i32, i32) {
    %c0_i32 = arith.constant 0 : i32
    %c0_i32_0 = arith.constant 0 : i32
    %c0_i32_1 = arith.constant 0 : i32
    %c0_i32_2 = arith.constant 0 : i32
    return %c0_i32, %c0_i32_0, %c0_i32_1 : i32, i32, i32
  }
  func.func @transform_5(%arg0: i32, %arg1: i32) -> (i32, i32, i32) {
    %c0_i32 = arith.constant 0 : i32
    %c0_i32_0 = arith.constant 0 : i32
    %c0_i32_1 = arith.constant 0 : i32
    %c0_i32_2 = arith.constant 0 : i32
    return %c0_i32, %c0_i32_0, %c0_i32_1 : i32, i32, i32
  }
  func.func @transform_6(%arg0: i32, %arg1: i32) -> (i32, i32) {
    %c0_i32 = arith.constant 0 : i32
    %c0_i32_0 = arith.constant 0 : i32
    %c0_i32_1 = arith.constant 0 : i32
    return %c0_i32, %c0_i32_0 : i32, i32
  }
  func.func @transform_7(%arg0: i32, %arg1: i32) -> (i32, i32) {
    %c0_i32 = arith.constant 0 : i32
    %c0_i32_0 = arith.constant 0 : i32
    %c0_i32_1 = arith.constant 0 : i32
    return %c0_i32, %c0_i32_0 : i32, i32
  }
  func.func @transform_8(%arg0: i32, %arg1: i32) -> (i32, i32) {
    %c0_i32 = arith.constant 0 : i32
    %c0_i32_0 = arith.constant 0 : i32
    %c0_i32_1 = arith.constant 0 : i32
    return %c0_i32, %c0_i32_0 : i32, i32
  }
  func.func @transform_9(%arg0: i32, %arg1: i32) -> (i32, i32) {
    %c0_i32 = arith.constant 0 : i32
    %c0_i32_0 = arith.constant 0 : i32
    %c0_i32_1 = arith.constant 0 : i32
    return %c0_i32, %c0_i32_0 : i32, i32
  }
  func.func @transform_10(%arg0: i32, %arg1: i32) -> (i32, i32, i32) {
    %c0_i32 = arith.constant 0 : i32
    %c0_i32_0 = arith.constant 0 : i32
    return %arg0, %c0_i32, %arg1 : i32, i32, i32
  }
  func.func @transform_11(%arg0: i32, %arg1: i32) -> (i32, i32, i32) {
    %c0_i32 = arith.constant 0 : i32
    %c0_i32_0 = arith.constant 0 : i32
    return %arg0, %c0_i32, %arg1 : i32, i32, i32
  }
  func.func @transform_12(%arg0: i32, %arg1: i32) -> (i32, i32, i32) {
    %c0_i32 = arith.constant 0 : i32
    %c0_i32_0 = arith.constant 0 : i32
    return %arg0, %c0_i32, %arg1 : i32, i32, i32
  }
  func.func @transform_13(%arg0: i32, %arg1: i32) -> (i32, i32, i32) {
    %c0_i32 = arith.constant 0 : i32
    %c0_i32_0 = arith.constant 0 : i32
    return %arg0, %c0_i32, %arg1 : i32, i32, i32
  }
  func.func @transform_14(%arg0: i32, %arg1: i32) -> (i32, i32, i32) {
    %c0_i32 = arith.constant 0 : i32
    %c0_i32_0 = arith.constant 0 : i32
    return %arg0, %c0_i32, %arg1 : i32, i32, i32
  }
  func.func @transform_15(%arg0: i32, %arg1: i32) -> (i32, i32, i32) {
    %c0_i32 = arith.constant 0 : i32
    %c0_i32_0 = arith.constant 0 : i32
    return %arg0, %c0_i32, %arg1 : i32, i32, i32
  }
  func.func @transform_16(%arg0: i32, %arg1: i32) -> (i32, i32, i32) {
    %c0_i32 = arith.constant 0 : i32
    %c0_i32_0 = arith.constant 0 : i32
    return %arg0, %c0_i32, %arg1 : i32, i32, i32
  }
  func.func @transform_17(%arg0: i32, %arg1: i32) -> (i32, i32, i32) {
    %c0_i32 = arith.constant 0 : i32
    %c0_i32_0 = arith.constant 0 : i32
    return %arg0, %c0_i32, %arg1 : i32, i32, i32
  }
  func.func @transform_18(%arg0: i32, %arg1: i32) -> (i32, i32) {
    %c0_i32 = arith.constant 0 : i32
    %c0_i32_0 = arith.constant 0 : i32
    return %arg0, %c0_i32 : i32, i32
  }
  func.func @transform_19(%arg0: i32, %arg1: i32) -> (i32, i32) {
    %c0_i32 = arith.constant 0 : i32
    %c0_i32_0 = arith.constant 0 : i32
    return %arg0, %c0_i32 : i32, i32
  }
  func.func @transform_20(%arg0: i32, %arg1: i32) -> (i32, i32) {
    %c0_i32 = arith.constant 0 : i32
    %c0_i32_0 = arith.constant 0 : i32
    return %arg0, %c0_i32 : i32, i32
  }
  func.func @transform_21(%arg0: i32, %arg1: i32) -> (i32, i32) {
    %c0_i32 = arith.constant 0 : i32
    %c0_i32_0 = arith.constant 0 : i32
    return %arg0, %c0_i32 : i32, i32
  }
  func.func @transform_22(%arg0: i32, %arg1: i32) -> (i32, i32) {
    %c0_i32 = arith.constant 0 : i32
    %c0_i32_0 = arith.constant 0 : i32
    return %arg0, %c0_i32 : i32, i32
  }
}

module attributes {stable_mosaic.version = 11 : i64} {
  func.func @kernel(%arg0: i32, %arg1: memref<1x16x16xf32, #tpu.memory_space<vmem>>, %arg2: memref<1x16x16xf32, #tpu.memory_space<vmem>>, %arg3: memref<1x16x16xf32, #tpu.memory_space<vmem>>, %arg4: memref<1x16x16xf32, #tpu.memory_space<vmem>>, %arg5: memref<8x128xf32, #tpu.memory_space<vmem>>, %arg6: memref<8x128xf32, #tpu.memory_space<vmem>>, %arg7: memref<8x128xf32, #tpu.memory_space<vmem>>, %arg8: memref<8x128xf32, #tpu.memory_space<vmem>>, %arg9: memref<8x128xf32, #tpu.memory_space<vmem>>, %arg10: memref<8x128xf32, #tpu.memory_space<vmem>>, %arg11: memref<8x128xf32, #tpu.memory_space<vmem>>, %arg12: memref<8x128xf32, #tpu.memory_space<vmem>>, %arg13: memref<8x128xf32, #tpu.memory_space<vmem>>, %arg14: memref<8x128xf32, #tpu.memory_space<vmem>>, %arg15: memref<8x128xf32, #tpu.memory_space<vmem>>, %arg16: memref<8x128xf32, #tpu.memory_space<vmem>>) attributes {dimension_semantics = [#tpu.dimension_semantics<parallel>], iteration_bounds = array<i64: 18>, scalar_prefetch = 0 : i64, scratch_operands = 0 : i64, tpu.core_type = #tpu.core_type<tc>, window_params = [{transform_indices = @transform_0, window_bounds = array<i64: 1, 16, 16>}, {transform_indices = @transform_1, window_bounds = array<i64: 1, 16, 16>}, {transform_indices = @transform_2, window_bounds = array<i64: 1, 16, 16>}, {transform_indices = @transform_3, window_bounds = array<i64: 1, 16, 16>}, {transform_indices = @transform_4, window_bounds = array<i64: 8, 128>}, {transform_indices = @transform_5, window_bounds = array<i64: 8, 128>}, {transform_indices = @transform_6, window_bounds = array<i64: 8, 128>}, {transform_indices = @transform_7, window_bounds = array<i64: 8, 128>}, {transform_indices = @transform_8, window_bounds = array<i64: 8, 128>}, {transform_indices = @transform_9, window_bounds = array<i64: 8, 128>}, {transform_indices = @transform_10, window_bounds = array<i64: 8, 128>}, {transform_indices = @transform_11, window_bounds = array<i64: 8, 128>}, {transform_indices = @transform_12, window_bounds = array<i64: 8, 128>}, {transform_indices = @transform_13, window_bounds = array<i64: 8, 128>}, {transform_indices = @transform_14, window_bounds = array<i64: 8, 128>}, {transform_indices = @transform_15, window_bounds = array<i64: 8, 128>}]} {
    %c0 = arith.constant 0 : index
    %c0_0 = arith.constant 0 : index
    %c0_1 = arith.constant 0 : index
    %0 = vector.load %arg1[%c0, %c0_0, %c0_1] : memref<1x16x16xf32, #tpu.memory_space<vmem>>, vector<1x16x16xf32>
    %1 = vector.shape_cast %0 : vector<1x16x16xf32> to vector<16x16xf32>
    %c0_2 = arith.constant 0 : index
    %c0_3 = arith.constant 0 : index
    %c0_4 = arith.constant 0 : index
    %2 = vector.load %arg2[%c0_2, %c0_3, %c0_4] : memref<1x16x16xf32, #tpu.memory_space<vmem>>, vector<1x16x16xf32>
    %3 = vector.shape_cast %2 : vector<1x16x16xf32> to vector<16x16xf32>
    %c0_5 = arith.constant 0 : index
    %c0_6 = arith.constant 0 : index
    %c0_7 = arith.constant 0 : index
    %4 = vector.load %arg3[%c0_5, %c0_6, %c0_7] : memref<1x16x16xf32, #tpu.memory_space<vmem>>, vector<1x16x16xf32>
    %5 = vector.shape_cast %4 : vector<1x16x16xf32> to vector<16x16xf32>
    %6 = arith.subf %1, %5 : vector<16x16xf32>
    %c0_8 = arith.constant 0 : index
    %c0_9 = arith.constant 0 : index
    %c0_10 = arith.constant 0 : index
    %7 = vector.load %arg4[%c0_8, %c0_9, %c0_10] : memref<1x16x16xf32, #tpu.memory_space<vmem>>, vector<1x16x16xf32>
    %8 = vector.shape_cast %7 : vector<1x16x16xf32> to vector<16x16xf32>
    %9 = arith.subf %3, %8 : vector<16x16xf32>
    %10 = tpu.iota {dimensions = array<i32: 1>} : vector<16x16xi32>
    %11 = tpu.iota {dimensions = array<i32: 0>} : vector<16x16xi32>
    %c15_i32 = arith.constant 15 : i32
    %12 = tpu.dynamic_rotate %1 by %c15_i32 dim 1 : vector<16x16xf32>, i32 -> vector<16x16xf32>
    %13 = arith.subf %12, %1 : vector<16x16xf32>
    %c15_i32_11 = arith.constant 15 : i32
    %14 = tpu.dynamic_rotate %3 by %c15_i32_11 dim 1 : vector<16x16xf32>, i32 -> vector<16x16xf32>
    %15 = arith.subf %14, %3 : vector<16x16xf32>
    %c15_i32_12 = arith.constant 15 : i32
    %16 = tpu.dynamic_rotate %1 by %c15_i32_12 dim 0 : vector<16x16xf32>, i32 -> vector<16x16xf32>
    %17 = arith.subf %16, %1 : vector<16x16xf32>
    %c15_i32_13 = arith.constant 15 : i32
    %18 = tpu.dynamic_rotate %3 by %c15_i32_13 dim 0 : vector<16x16xf32>, i32 -> vector<16x16xf32>
    %19 = arith.subf %18, %3 : vector<16x16xf32>
    %c15_i32_14 = arith.constant 15 : i32
    %20 = vector.broadcast %c15_i32_14 : i32 to vector<16x16xi32>
    %21 = arith.cmpi slt, %10, %20 : vector<16x16xi32>
    %22 = math.absf %13 : vector<16x16xf32>
    %23 = math.absf %15 : vector<16x16xf32>
    %24 = arith.mulf %22, %23 : vector<16x16xf32>
    %cst = arith.constant 0.000000e+00 : f32
    %25 = vector.broadcast %cst : f32 to vector<16x16xf32>
    %26 = arith.select %21, %24, %25 : vector<16x16xi1>, vector<16x16xf32>
    %27 = vector.shape_cast %26 : vector<16x16xf32> to vector<1x16x16xf32>
    %cst_15 = arith.constant dense<0.000000e+00> : vector<1xf32>
    %28 = vector.multi_reduction <add>, %27, %cst_15 [1, 2] : vector<1x16x16xf32> to vector<1xf32>
    %29 = vector.shape_cast %28 : vector<1xf32> to vector<1x1x1xf32>
    %30 = vector.extract %29[0, 0, 0] : f32 from vector<1x1x1xf32>
    %cst_16 = arith.constant 1.000000e+00 : f32
    %31 = arith.mulf %cst_16, %30 : f32
    %c15_i32_17 = arith.constant 15 : i32
    %32 = vector.broadcast %c15_i32_17 : i32 to vector<16x16xi32>
    %33 = arith.cmpi slt, %11, %32 : vector<16x16xi32>
    %34 = math.absf %17 : vector<16x16xf32>
    %35 = math.absf %19 : vector<16x16xf32>
    %36 = arith.mulf %34, %35 : vector<16x16xf32>
    %cst_18 = arith.constant 0.000000e+00 : f32
    %37 = vector.broadcast %cst_18 : f32 to vector<16x16xf32>
    %38 = arith.select %33, %36, %37 : vector<16x16xi1>, vector<16x16xf32>
    %39 = vector.shape_cast %38 : vector<16x16xf32> to vector<1x16x16xf32>
    %cst_19 = arith.constant dense<0.000000e+00> : vector<1xf32>
    %40 = vector.multi_reduction <add>, %39, %cst_19 [1, 2] : vector<1x16x16xf32> to vector<1xf32>
    %41 = vector.shape_cast %40 : vector<1xf32> to vector<1x1x1xf32>
    %42 = vector.extract %41[0, 0, 0] : f32 from vector<1x1x1xf32>
    %cst_20 = arith.constant 1.000000e+00 : f32
    %43 = arith.mulf %cst_20, %42 : f32
    %c15_i32_21 = arith.constant 15 : i32
    %44 = tpu.dynamic_rotate %6 by %c15_i32_21 dim 1 : vector<16x16xf32>, i32 -> vector<16x16xf32>
    %45 = arith.addf %6, %44 : vector<16x16xf32>
    %c0_i32 = arith.constant 0 : i32
    %46 = vector.broadcast %c0_i32 : i32 to vector<16x16xi32>
    %47 = arith.shrsi %10, %46 : vector<16x16xi32>
    %c1_i32 = arith.constant 1 : i32
    %48 = vector.broadcast %c1_i32 : i32 to vector<16x16xi32>
    %49 = arith.andi %47, %48 : vector<16x16xi32>
    %c0_i32_22 = arith.constant 0 : i32
    %50 = vector.broadcast %c0_i32_22 : i32 to vector<16x16xi32>
    %51 = arith.cmpi eq, %49, %50 : vector<16x16xi32>
    %c1_i32_23 = arith.constant 1 : i32
    %52 = tpu.dynamic_rotate %45 by %c1_i32_23 dim 1 : vector<16x16xf32>, i32 -> vector<16x16xf32>
    %53 = arith.select %51, %45, %52 : vector<16x16xi1>, vector<16x16xf32>
    %c15_i32_24 = arith.constant 15 : i32
    %54 = tpu.dynamic_rotate %53 by %c15_i32_24 dim 0 : vector<16x16xf32>, i32 -> vector<16x16xf32>
    %55 = arith.addf %53, %54 : vector<16x16xf32>
    %c0_i32_25 = arith.constant 0 : i32
    %56 = vector.broadcast %c0_i32_25 : i32 to vector<16x16xi32>
    %57 = arith.shrsi %11, %56 : vector<16x16xi32>
    %c1_i32_26 = arith.constant 1 : i32
    %58 = vector.broadcast %c1_i32_26 : i32 to vector<16x16xi32>
    %59 = arith.andi %57, %58 : vector<16x16xi32>
    %c0_i32_27 = arith.constant 0 : i32
    %60 = vector.broadcast %c0_i32_27 : i32 to vector<16x16xi32>
    %61 = arith.cmpi eq, %59, %60 : vector<16x16xi32>
    %c1_i32_28 = arith.constant 1 : i32
    %62 = tpu.dynamic_rotate %55 by %c1_i32_28 dim 0 : vector<16x16xf32>, i32 -> vector<16x16xf32>
    %63 = arith.select %61, %55, %62 : vector<16x16xi1>, vector<16x16xf32>
    %cst_29 = arith.constant 2.500000e-01 : f32
    %64 = vector.broadcast %cst_29 : f32 to vector<16x16xf32>
    %65 = arith.mulf %64, %63 : vector<16x16xf32>
    %c15_i32_30 = arith.constant 15 : i32
    %66 = tpu.dynamic_rotate %9 by %c15_i32_30 dim 1 : vector<16x16xf32>, i32 -> vector<16x16xf32>
    %67 = arith.addf %9, %66 : vector<16x16xf32>
    %c0_i32_31 = arith.constant 0 : i32
    %68 = vector.broadcast %c0_i32_31 : i32 to vector<16x16xi32>
    %69 = arith.shrsi %10, %68 : vector<16x16xi32>
    %c1_i32_32 = arith.constant 1 : i32
    %70 = vector.broadcast %c1_i32_32 : i32 to vector<16x16xi32>
    %71 = arith.andi %69, %70 : vector<16x16xi32>
    %c0_i32_33 = arith.constant 0 : i32
    %72 = vector.broadcast %c0_i32_33 : i32 to vector<16x16xi32>
    %73 = arith.cmpi eq, %71, %72 : vector<16x16xi32>
    %c1_i32_34 = arith.constant 1 : i32
    %74 = tpu.dynamic_rotate %67 by %c1_i32_34 dim 1 : vector<16x16xf32>, i32 -> vector<16x16xf32>
    %75 = arith.select %73, %67, %74 : vector<16x16xi1>, vector<16x16xf32>
    %c15_i32_35 = arith.constant 15 : i32
    %76 = tpu.dynamic_rotate %75 by %c15_i32_35 dim 0 : vector<16x16xf32>, i32 -> vector<16x16xf32>
    %77 = arith.addf %75, %76 : vector<16x16xf32>
    %c0_i32_36 = arith.constant 0 : i32
    %78 = vector.broadcast %c0_i32_36 : i32 to vector<16x16xi32>
    %79 = arith.shrsi %11, %78 : vector<16x16xi32>
    %c1_i32_37 = arith.constant 1 : i32
    %80 = vector.broadcast %c1_i32_37 : i32 to vector<16x16xi32>
    %81 = arith.andi %79, %80 : vector<16x16xi32>
    %c0_i32_38 = arith.constant 0 : i32
    %82 = vector.broadcast %c0_i32_38 : i32 to vector<16x16xi32>
    %83 = arith.cmpi eq, %81, %82 : vector<16x16xi32>
    %c1_i32_39 = arith.constant 1 : i32
    %84 = tpu.dynamic_rotate %77 by %c1_i32_39 dim 0 : vector<16x16xf32>, i32 -> vector<16x16xf32>
    %85 = arith.select %83, %77, %84 : vector<16x16xi1>, vector<16x16xf32>
    %cst_40 = arith.constant 2.500000e-01 : f32
    %86 = vector.broadcast %cst_40 : f32 to vector<16x16xf32>
    %87 = arith.mulf %86, %85 : vector<16x16xf32>
    %88 = arith.subf %6, %65 : vector<16x16xf32>
    %89 = math.absf %88 : vector<16x16xf32>
    %90 = vector.shape_cast %89 : vector<16x16xf32> to vector<1x16x16xf32>
    %cst_41 = arith.constant dense<0.000000e+00> : vector<1xf32>
    %91 = vector.multi_reduction <add>, %90, %cst_41 [1, 2] : vector<1x16x16xf32> to vector<1xf32>
    %92 = vector.shape_cast %91 : vector<1xf32> to vector<1x1x1xf32>
    %93 = vector.extract %92[0, 0, 0] : f32 from vector<1x1x1xf32>
    %cst_42 = arith.constant 1.000000e+00 : f32
    %94 = arith.mulf %cst_42, %93 : f32
    %95 = arith.subf %9, %87 : vector<16x16xf32>
    %96 = math.absf %95 : vector<16x16xf32>
    %97 = vector.shape_cast %96 : vector<16x16xf32> to vector<1x16x16xf32>
    %cst_43 = arith.constant dense<0.000000e+00> : vector<1xf32>
    %98 = vector.multi_reduction <add>, %97, %cst_43 [1, 2] : vector<1x16x16xf32> to vector<1xf32>
    %99 = vector.shape_cast %98 : vector<1xf32> to vector<1x1x1xf32>
    %100 = vector.extract %99[0, 0, 0] : f32 from vector<1x1x1xf32>
    %cst_44 = arith.constant 1.000000e+00 : f32
    %101 = arith.mulf %cst_44, %100 : f32
    %c15_i32_45 = arith.constant 15 : i32
    %102 = tpu.dynamic_rotate %1 by %c15_i32_45 dim 1 : vector<16x16xf32>, i32 -> vector<16x16xf32>
    %103 = arith.addf %1, %102 : vector<16x16xf32>
    %c0_i32_46 = arith.constant 0 : i32
    %104 = vector.broadcast %c0_i32_46 : i32 to vector<16x16xi32>
    %105 = arith.shrsi %10, %104 : vector<16x16xi32>
    %c1_i32_47 = arith.constant 1 : i32
    %106 = vector.broadcast %c1_i32_47 : i32 to vector<16x16xi32>
    %107 = arith.andi %105, %106 : vector<16x16xi32>
    %c0_i32_48 = arith.constant 0 : i32
    %108 = vector.broadcast %c0_i32_48 : i32 to vector<16x16xi32>
    %109 = arith.cmpi eq, %107, %108 : vector<16x16xi32>
    %c1_i32_49 = arith.constant 1 : i32
    %110 = tpu.dynamic_rotate %103 by %c1_i32_49 dim 1 : vector<16x16xf32>, i32 -> vector<16x16xf32>
    %111 = arith.select %109, %103, %110 : vector<16x16xi1>, vector<16x16xf32>
    %c15_i32_50 = arith.constant 15 : i32
    %112 = tpu.dynamic_rotate %111 by %c15_i32_50 dim 0 : vector<16x16xf32>, i32 -> vector<16x16xf32>
    %113 = arith.addf %111, %112 : vector<16x16xf32>
    %c0_i32_51 = arith.constant 0 : i32
    %114 = vector.broadcast %c0_i32_51 : i32 to vector<16x16xi32>
    %115 = arith.shrsi %11, %114 : vector<16x16xi32>
    %c1_i32_52 = arith.constant 1 : i32
    %116 = vector.broadcast %c1_i32_52 : i32 to vector<16x16xi32>
    %117 = arith.andi %115, %116 : vector<16x16xi32>
    %c0_i32_53 = arith.constant 0 : i32
    %118 = vector.broadcast %c0_i32_53 : i32 to vector<16x16xi32>
    %119 = arith.cmpi eq, %117, %118 : vector<16x16xi32>
    %c1_i32_54 = arith.constant 1 : i32
    %120 = tpu.dynamic_rotate %113 by %c1_i32_54 dim 0 : vector<16x16xf32>, i32 -> vector<16x16xf32>
    %121 = arith.select %119, %113, %120 : vector<16x16xi1>, vector<16x16xf32>
    %cst_55 = arith.constant 2.500000e-01 : f32
    %122 = vector.broadcast %cst_55 : f32 to vector<16x16xf32>
    %123 = arith.mulf %122, %121 : vector<16x16xf32>
    %c15_i32_56 = arith.constant 15 : i32
    %124 = tpu.dynamic_rotate %3 by %c15_i32_56 dim 1 : vector<16x16xf32>, i32 -> vector<16x16xf32>
    %125 = arith.addf %3, %124 : vector<16x16xf32>
    %c0_i32_57 = arith.constant 0 : i32
    %126 = vector.broadcast %c0_i32_57 : i32 to vector<16x16xi32>
    %127 = arith.shrsi %10, %126 : vector<16x16xi32>
    %c1_i32_58 = arith.constant 1 : i32
    %128 = vector.broadcast %c1_i32_58 : i32 to vector<16x16xi32>
    %129 = arith.andi %127, %128 : vector<16x16xi32>
    %c0_i32_59 = arith.constant 0 : i32
    %130 = vector.broadcast %c0_i32_59 : i32 to vector<16x16xi32>
    %131 = arith.cmpi eq, %129, %130 : vector<16x16xi32>
    %c1_i32_60 = arith.constant 1 : i32
    %132 = tpu.dynamic_rotate %125 by %c1_i32_60 dim 1 : vector<16x16xf32>, i32 -> vector<16x16xf32>
    %133 = arith.select %131, %125, %132 : vector<16x16xi1>, vector<16x16xf32>
    %c15_i32_61 = arith.constant 15 : i32
    %134 = tpu.dynamic_rotate %133 by %c15_i32_61 dim 0 : vector<16x16xf32>, i32 -> vector<16x16xf32>
    %135 = arith.addf %133, %134 : vector<16x16xf32>
    %c0_i32_62 = arith.constant 0 : i32
    %136 = vector.broadcast %c0_i32_62 : i32 to vector<16x16xi32>
    %137 = arith.shrsi %11, %136 : vector<16x16xi32>
    %c1_i32_63 = arith.constant 1 : i32
    %138 = vector.broadcast %c1_i32_63 : i32 to vector<16x16xi32>
    %139 = arith.andi %137, %138 : vector<16x16xi32>
    %c0_i32_64 = arith.constant 0 : i32
    %140 = vector.broadcast %c0_i32_64 : i32 to vector<16x16xi32>
    %141 = arith.cmpi eq, %139, %140 : vector<16x16xi32>
    %c1_i32_65 = arith.constant 1 : i32
    %142 = tpu.dynamic_rotate %135 by %c1_i32_65 dim 0 : vector<16x16xf32>, i32 -> vector<16x16xf32>
    %143 = arith.select %141, %135, %142 : vector<16x16xi1>, vector<16x16xf32>
    %cst_66 = arith.constant 2.500000e-01 : f32
    %144 = vector.broadcast %cst_66 : f32 to vector<16x16xf32>
    %145 = arith.mulf %144, %143 : vector<16x16xf32>
    %c14_i32 = arith.constant 14 : i32
    %146 = tpu.dynamic_rotate %123 by %c14_i32 dim 1 : vector<16x16xf32>, i32 -> vector<16x16xf32>
    %147 = arith.subf %146, %123 : vector<16x16xf32>
    %c14_i32_67 = arith.constant 14 : i32
    %148 = tpu.dynamic_rotate %145 by %c14_i32_67 dim 1 : vector<16x16xf32>, i32 -> vector<16x16xf32>
    %149 = arith.subf %148, %145 : vector<16x16xf32>
    %c14_i32_68 = arith.constant 14 : i32
    %150 = tpu.dynamic_rotate %123 by %c14_i32_68 dim 0 : vector<16x16xf32>, i32 -> vector<16x16xf32>
    %151 = arith.subf %150, %123 : vector<16x16xf32>
    %c14_i32_69 = arith.constant 14 : i32
    %152 = tpu.dynamic_rotate %145 by %c14_i32_69 dim 0 : vector<16x16xf32>, i32 -> vector<16x16xf32>
    %153 = arith.subf %152, %145 : vector<16x16xf32>
    %c14_i32_70 = arith.constant 14 : i32
    %154 = vector.broadcast %c14_i32_70 : i32 to vector<16x16xi32>
    %155 = arith.cmpi slt, %10, %154 : vector<16x16xi32>
    %156 = math.absf %147 : vector<16x16xf32>
    %157 = math.absf %149 : vector<16x16xf32>
    %158 = arith.mulf %156, %157 : vector<16x16xf32>
    %cst_71 = arith.constant 0.000000e+00 : f32
    %159 = vector.broadcast %cst_71 : f32 to vector<16x16xf32>
    %160 = arith.select %155, %158, %159 : vector<16x16xi1>, vector<16x16xf32>
    %161 = vector.shape_cast %160 : vector<16x16xf32> to vector<1x16x16xf32>
    %cst_72 = arith.constant dense<0.000000e+00> : vector<1xf32>
    %162 = vector.multi_reduction <add>, %161, %cst_72 [1, 2] : vector<1x16x16xf32> to vector<1xf32>
    %163 = vector.shape_cast %162 : vector<1xf32> to vector<1x1x1xf32>
    %164 = vector.extract %163[0, 0, 0] : f32 from vector<1x1x1xf32>
    %cst_73 = arith.constant 2.500000e-01 : f32
    %165 = arith.mulf %cst_73, %164 : f32
    %c14_i32_74 = arith.constant 14 : i32
    %166 = vector.broadcast %c14_i32_74 : i32 to vector<16x16xi32>
    %167 = arith.cmpi slt, %11, %166 : vector<16x16xi32>
    %168 = math.absf %151 : vector<16x16xf32>
    %169 = math.absf %153 : vector<16x16xf32>
    %170 = arith.mulf %168, %169 : vector<16x16xf32>
    %cst_75 = arith.constant 0.000000e+00 : f32
    %171 = vector.broadcast %cst_75 : f32 to vector<16x16xf32>
    %172 = arith.select %167, %170, %171 : vector<16x16xi1>, vector<16x16xf32>
    %173 = vector.shape_cast %172 : vector<16x16xf32> to vector<1x16x16xf32>
    %cst_76 = arith.constant dense<0.000000e+00> : vector<1xf32>
    %174 = vector.multi_reduction <add>, %173, %cst_76 [1, 2] : vector<1x16x16xf32> to vector<1xf32>
    %175 = vector.shape_cast %174 : vector<1xf32> to vector<1x1x1xf32>
    %176 = vector.extract %175[0, 0, 0] : f32 from vector<1x1x1xf32>
    %cst_77 = arith.constant 2.500000e-01 : f32
    %177 = arith.mulf %cst_77, %176 : f32
    %c14_i32_78 = arith.constant 14 : i32
    %178 = tpu.dynamic_rotate %65 by %c14_i32_78 dim 1 : vector<16x16xf32>, i32 -> vector<16x16xf32>
    %179 = arith.addf %65, %178 : vector<16x16xf32>
    %c1_i32_79 = arith.constant 1 : i32
    %180 = vector.broadcast %c1_i32_79 : i32 to vector<16x16xi32>
    %181 = arith.shrsi %10, %180 : vector<16x16xi32>
    %c1_i32_80 = arith.constant 1 : i32
    %182 = vector.broadcast %c1_i32_80 : i32 to vector<16x16xi32>
    %183 = arith.andi %181, %182 : vector<16x16xi32>
    %c0_i32_81 = arith.constant 0 : i32
    %184 = vector.broadcast %c0_i32_81 : i32 to vector<16x16xi32>
    %185 = arith.cmpi eq, %183, %184 : vector<16x16xi32>
    %c2_i32 = arith.constant 2 : i32
    %186 = tpu.dynamic_rotate %179 by %c2_i32 dim 1 : vector<16x16xf32>, i32 -> vector<16x16xf32>
    %187 = arith.select %185, %179, %186 : vector<16x16xi1>, vector<16x16xf32>
    %c14_i32_82 = arith.constant 14 : i32
    %188 = tpu.dynamic_rotate %187 by %c14_i32_82 dim 0 : vector<16x16xf32>, i32 -> vector<16x16xf32>
    %189 = arith.addf %187, %188 : vector<16x16xf32>
    %c1_i32_83 = arith.constant 1 : i32
    %190 = vector.broadcast %c1_i32_83 : i32 to vector<16x16xi32>
    %191 = arith.shrsi %11, %190 : vector<16x16xi32>
    %c1_i32_84 = arith.constant 1 : i32
    %192 = vector.broadcast %c1_i32_84 : i32 to vector<16x16xi32>
    %193 = arith.andi %191, %192 : vector<16x16xi32>
    %c0_i32_85 = arith.constant 0 : i32
    %194 = vector.broadcast %c0_i32_85 : i32 to vector<16x16xi32>
    %195 = arith.cmpi eq, %193, %194 : vector<16x16xi32>
    %c2_i32_86 = arith.constant 2 : i32
    %196 = tpu.dynamic_rotate %189 by %c2_i32_86 dim 0 : vector<16x16xf32>, i32 -> vector<16x16xf32>
    %197 = arith.select %195, %189, %196 : vector<16x16xi1>, vector<16x16xf32>
    %cst_87 = arith.constant 2.500000e-01 : f32
    %198 = vector.broadcast %cst_87 : f32 to vector<16x16xf32>
    %199 = arith.mulf %198, %197 : vector<16x16xf32>
    %c14_i32_88 = arith.constant 14 : i32
    %200 = tpu.dynamic_rotate %87 by %c14_i32_88 dim 1 : vector<16x16xf32>, i32 -> vector<16x16xf32>
    %201 = arith.addf %87, %200 : vector<16x16xf32>
    %c1_i32_89 = arith.constant 1 : i32
    %202 = vector.broadcast %c1_i32_89 : i32 to vector<16x16xi32>
    %203 = arith.shrsi %10, %202 : vector<16x16xi32>
    %c1_i32_90 = arith.constant 1 : i32
    %204 = vector.broadcast %c1_i32_90 : i32 to vector<16x16xi32>
    %205 = arith.andi %203, %204 : vector<16x16xi32>
    %c0_i32_91 = arith.constant 0 : i32
    %206 = vector.broadcast %c0_i32_91 : i32 to vector<16x16xi32>
    %207 = arith.cmpi eq, %205, %206 : vector<16x16xi32>
    %c2_i32_92 = arith.constant 2 : i32
    %208 = tpu.dynamic_rotate %201 by %c2_i32_92 dim 1 : vector<16x16xf32>, i32 -> vector<16x16xf32>
    %209 = arith.select %207, %201, %208 : vector<16x16xi1>, vector<16x16xf32>
    %c14_i32_93 = arith.constant 14 : i32
    %210 = tpu.dynamic_rotate %209 by %c14_i32_93 dim 0 : vector<16x16xf32>, i32 -> vector<16x16xf32>
    %211 = arith.addf %209, %210 : vector<16x16xf32>
    %c1_i32_94 = arith.constant 1 : i32
    %212 = vector.broadcast %c1_i32_94 : i32 to vector<16x16xi32>
    %213 = arith.shrsi %11, %212 : vector<16x16xi32>
    %c1_i32_95 = arith.constant 1 : i32
    %214 = vector.broadcast %c1_i32_95 : i32 to vector<16x16xi32>
    %215 = arith.andi %213, %214 : vector<16x16xi32>
    %c0_i32_96 = arith.constant 0 : i32
    %216 = vector.broadcast %c0_i32_96 : i32 to vector<16x16xi32>
    %217 = arith.cmpi eq, %215, %216 : vector<16x16xi32>
    %c2_i32_97 = arith.constant 2 : i32
    %218 = tpu.dynamic_rotate %211 by %c2_i32_97 dim 0 : vector<16x16xf32>, i32 -> vector<16x16xf32>
    %219 = arith.select %217, %211, %218 : vector<16x16xi1>, vector<16x16xf32>
    %cst_98 = arith.constant 2.500000e-01 : f32
    %220 = vector.broadcast %cst_98 : f32 to vector<16x16xf32>
    %221 = arith.mulf %220, %219 : vector<16x16xf32>
    %222 = arith.subf %65, %199 : vector<16x16xf32>
    %223 = math.absf %222 : vector<16x16xf32>
    %224 = vector.shape_cast %223 : vector<16x16xf32> to vector<1x16x16xf32>
    %cst_99 = arith.constant dense<0.000000e+00> : vector<1xf32>
    %225 = vector.multi_reduction <add>, %224, %cst_99 [1, 2] : vector<1x16x16xf32> to vector<1xf32>
    %226 = vector.shape_cast %225 : vector<1xf32> to vector<1x1x1xf32>
    %227 = vector.extract %226[0, 0, 0] : f32 from vector<1x1x1xf32>
    %cst_100 = arith.constant 2.500000e-01 : f32
    %228 = arith.mulf %cst_100, %227 : f32
    %229 = arith.subf %87, %221 : vector<16x16xf32>
    %230 = math.absf %229 : vector<16x16xf32>
    %231 = vector.shape_cast %230 : vector<16x16xf32> to vector<1x16x16xf32>
    %cst_101 = arith.constant dense<0.000000e+00> : vector<1xf32>
    %232 = vector.multi_reduction <add>, %231, %cst_101 [1, 2] : vector<1x16x16xf32> to vector<1xf32>
    %233 = vector.shape_cast %232 : vector<1xf32> to vector<1x1x1xf32>
    %234 = vector.extract %233[0, 0, 0] : f32 from vector<1x1x1xf32>
    %cst_102 = arith.constant 2.500000e-01 : f32
    %235 = arith.mulf %cst_102, %234 : f32
    %c14_i32_103 = arith.constant 14 : i32
    %236 = tpu.dynamic_rotate %123 by %c14_i32_103 dim 1 : vector<16x16xf32>, i32 -> vector<16x16xf32>
    %237 = arith.addf %123, %236 : vector<16x16xf32>
    %c1_i32_104 = arith.constant 1 : i32
    %238 = vector.broadcast %c1_i32_104 : i32 to vector<16x16xi32>
    %239 = arith.shrsi %10, %238 : vector<16x16xi32>
    %c1_i32_105 = arith.constant 1 : i32
    %240 = vector.broadcast %c1_i32_105 : i32 to vector<16x16xi32>
    %241 = arith.andi %239, %240 : vector<16x16xi32>
    %c0_i32_106 = arith.constant 0 : i32
    %242 = vector.broadcast %c0_i32_106 : i32 to vector<16x16xi32>
    %243 = arith.cmpi eq, %241, %242 : vector<16x16xi32>
    %c2_i32_107 = arith.constant 2 : i32
    %244 = tpu.dynamic_rotate %237 by %c2_i32_107 dim 1 : vector<16x16xf32>, i32 -> vector<16x16xf32>
    %245 = arith.select %243, %237, %244 : vector<16x16xi1>, vector<16x16xf32>
    %c14_i32_108 = arith.constant 14 : i32
    %246 = tpu.dynamic_rotate %245 by %c14_i32_108 dim 0 : vector<16x16xf32>, i32 -> vector<16x16xf32>
    %247 = arith.addf %245, %246 : vector<16x16xf32>
    %c1_i32_109 = arith.constant 1 : i32
    %248 = vector.broadcast %c1_i32_109 : i32 to vector<16x16xi32>
    %249 = arith.shrsi %11, %248 : vector<16x16xi32>
    %c1_i32_110 = arith.constant 1 : i32
    %250 = vector.broadcast %c1_i32_110 : i32 to vector<16x16xi32>
    %251 = arith.andi %249, %250 : vector<16x16xi32>
    %c0_i32_111 = arith.constant 0 : i32
    %252 = vector.broadcast %c0_i32_111 : i32 to vector<16x16xi32>
    %253 = arith.cmpi eq, %251, %252 : vector<16x16xi32>
    %c2_i32_112 = arith.constant 2 : i32
    %254 = tpu.dynamic_rotate %247 by %c2_i32_112 dim 0 : vector<16x16xf32>, i32 -> vector<16x16xf32>
    %255 = arith.select %253, %247, %254 : vector<16x16xi1>, vector<16x16xf32>
    %cst_113 = arith.constant 2.500000e-01 : f32
    %256 = vector.broadcast %cst_113 : f32 to vector<16x16xf32>
    %257 = arith.mulf %256, %255 : vector<16x16xf32>
    %c14_i32_114 = arith.constant 14 : i32
    %258 = tpu.dynamic_rotate %145 by %c14_i32_114 dim 1 : vector<16x16xf32>, i32 -> vector<16x16xf32>
    %259 = arith.addf %145, %258 : vector<16x16xf32>
    %c1_i32_115 = arith.constant 1 : i32
    %260 = vector.broadcast %c1_i32_115 : i32 to vector<16x16xi32>
    %261 = arith.shrsi %10, %260 : vector<16x16xi32>
    %c1_i32_116 = arith.constant 1 : i32
    %262 = vector.broadcast %c1_i32_116 : i32 to vector<16x16xi32>
    %263 = arith.andi %261, %262 : vector<16x16xi32>
    %c0_i32_117 = arith.constant 0 : i32
    %264 = vector.broadcast %c0_i32_117 : i32 to vector<16x16xi32>
    %265 = arith.cmpi eq, %263, %264 : vector<16x16xi32>
    %c2_i32_118 = arith.constant 2 : i32
    %266 = tpu.dynamic_rotate %259 by %c2_i32_118 dim 1 : vector<16x16xf32>, i32 -> vector<16x16xf32>
    %267 = arith.select %265, %259, %266 : vector<16x16xi1>, vector<16x16xf32>
    %c14_i32_119 = arith.constant 14 : i32
    %268 = tpu.dynamic_rotate %267 by %c14_i32_119 dim 0 : vector<16x16xf32>, i32 -> vector<16x16xf32>
    %269 = arith.addf %267, %268 : vector<16x16xf32>
    %c1_i32_120 = arith.constant 1 : i32
    %270 = vector.broadcast %c1_i32_120 : i32 to vector<16x16xi32>
    %271 = arith.shrsi %11, %270 : vector<16x16xi32>
    %c1_i32_121 = arith.constant 1 : i32
    %272 = vector.broadcast %c1_i32_121 : i32 to vector<16x16xi32>
    %273 = arith.andi %271, %272 : vector<16x16xi32>
    %c0_i32_122 = arith.constant 0 : i32
    %274 = vector.broadcast %c0_i32_122 : i32 to vector<16x16xi32>
    %275 = arith.cmpi eq, %273, %274 : vector<16x16xi32>
    %c2_i32_123 = arith.constant 2 : i32
    %276 = tpu.dynamic_rotate %269 by %c2_i32_123 dim 0 : vector<16x16xf32>, i32 -> vector<16x16xf32>
    %277 = arith.select %275, %269, %276 : vector<16x16xi1>, vector<16x16xf32>
    %cst_124 = arith.constant 2.500000e-01 : f32
    %278 = vector.broadcast %cst_124 : f32 to vector<16x16xf32>
    %279 = arith.mulf %278, %277 : vector<16x16xf32>
    %c12_i32 = arith.constant 12 : i32
    %280 = tpu.dynamic_rotate %257 by %c12_i32 dim 1 : vector<16x16xf32>, i32 -> vector<16x16xf32>
    %281 = arith.subf %280, %257 : vector<16x16xf32>
    %c12_i32_125 = arith.constant 12 : i32
    %282 = tpu.dynamic_rotate %279 by %c12_i32_125 dim 1 : vector<16x16xf32>, i32 -> vector<16x16xf32>
    %283 = arith.subf %282, %279 : vector<16x16xf32>
    %c12_i32_126 = arith.constant 12 : i32
    %284 = tpu.dynamic_rotate %257 by %c12_i32_126 dim 0 : vector<16x16xf32>, i32 -> vector<16x16xf32>
    %285 = arith.subf %284, %257 : vector<16x16xf32>
    %c12_i32_127 = arith.constant 12 : i32
    %286 = tpu.dynamic_rotate %279 by %c12_i32_127 dim 0 : vector<16x16xf32>, i32 -> vector<16x16xf32>
    %287 = arith.subf %286, %279 : vector<16x16xf32>
    %c12_i32_128 = arith.constant 12 : i32
    %288 = vector.broadcast %c12_i32_128 : i32 to vector<16x16xi32>
    %289 = arith.cmpi slt, %10, %288 : vector<16x16xi32>
    %290 = math.absf %281 : vector<16x16xf32>
    %291 = math.absf %283 : vector<16x16xf32>
    %292 = arith.mulf %290, %291 : vector<16x16xf32>
    %cst_129 = arith.constant 0.000000e+00 : f32
    %293 = vector.broadcast %cst_129 : f32 to vector<16x16xf32>
    %294 = arith.select %289, %292, %293 : vector<16x16xi1>, vector<16x16xf32>
    %295 = vector.shape_cast %294 : vector<16x16xf32> to vector<1x16x16xf32>
    %cst_130 = arith.constant dense<0.000000e+00> : vector<1xf32>
    %296 = vector.multi_reduction <add>, %295, %cst_130 [1, 2] : vector<1x16x16xf32> to vector<1xf32>
    %297 = vector.shape_cast %296 : vector<1xf32> to vector<1x1x1xf32>
    %298 = vector.extract %297[0, 0, 0] : f32 from vector<1x1x1xf32>
    %cst_131 = arith.constant 6.250000e-02 : f32
    %299 = arith.mulf %cst_131, %298 : f32
    %c12_i32_132 = arith.constant 12 : i32
    %300 = vector.broadcast %c12_i32_132 : i32 to vector<16x16xi32>
    %301 = arith.cmpi slt, %11, %300 : vector<16x16xi32>
    %302 = math.absf %285 : vector<16x16xf32>
    %303 = math.absf %287 : vector<16x16xf32>
    %304 = arith.mulf %302, %303 : vector<16x16xf32>
    %cst_133 = arith.constant 0.000000e+00 : f32
    %305 = vector.broadcast %cst_133 : f32 to vector<16x16xf32>
    %306 = arith.select %301, %304, %305 : vector<16x16xi1>, vector<16x16xf32>
    %307 = vector.shape_cast %306 : vector<16x16xf32> to vector<1x16x16xf32>
    %cst_134 = arith.constant dense<0.000000e+00> : vector<1xf32>
    %308 = vector.multi_reduction <add>, %307, %cst_134 [1, 2] : vector<1x16x16xf32> to vector<1xf32>
    %309 = vector.shape_cast %308 : vector<1xf32> to vector<1x1x1xf32>
    %310 = vector.extract %309[0, 0, 0] : f32 from vector<1x1x1xf32>
    %cst_135 = arith.constant 6.250000e-02 : f32
    %311 = arith.mulf %cst_135, %310 : f32
    %c12_i32_136 = arith.constant 12 : i32
    %312 = tpu.dynamic_rotate %199 by %c12_i32_136 dim 1 : vector<16x16xf32>, i32 -> vector<16x16xf32>
    %313 = arith.addf %199, %312 : vector<16x16xf32>
    %c2_i32_137 = arith.constant 2 : i32
    %314 = vector.broadcast %c2_i32_137 : i32 to vector<16x16xi32>
    %315 = arith.shrsi %10, %314 : vector<16x16xi32>
    %c1_i32_138 = arith.constant 1 : i32
    %316 = vector.broadcast %c1_i32_138 : i32 to vector<16x16xi32>
    %317 = arith.andi %315, %316 : vector<16x16xi32>
    %c0_i32_139 = arith.constant 0 : i32
    %318 = vector.broadcast %c0_i32_139 : i32 to vector<16x16xi32>
    %319 = arith.cmpi eq, %317, %318 : vector<16x16xi32>
    %c4_i32 = arith.constant 4 : i32
    %320 = tpu.dynamic_rotate %313 by %c4_i32 dim 1 : vector<16x16xf32>, i32 -> vector<16x16xf32>
    %321 = arith.select %319, %313, %320 : vector<16x16xi1>, vector<16x16xf32>
    %c12_i32_140 = arith.constant 12 : i32
    %322 = tpu.dynamic_rotate %321 by %c12_i32_140 dim 0 : vector<16x16xf32>, i32 -> vector<16x16xf32>
    %323 = arith.addf %321, %322 : vector<16x16xf32>
    %c2_i32_141 = arith.constant 2 : i32
    %324 = vector.broadcast %c2_i32_141 : i32 to vector<16x16xi32>
    %325 = arith.shrsi %11, %324 : vector<16x16xi32>
    %c1_i32_142 = arith.constant 1 : i32
    %326 = vector.broadcast %c1_i32_142 : i32 to vector<16x16xi32>
    %327 = arith.andi %325, %326 : vector<16x16xi32>
    %c0_i32_143 = arith.constant 0 : i32
    %328 = vector.broadcast %c0_i32_143 : i32 to vector<16x16xi32>
    %329 = arith.cmpi eq, %327, %328 : vector<16x16xi32>
    %c4_i32_144 = arith.constant 4 : i32
    %330 = tpu.dynamic_rotate %323 by %c4_i32_144 dim 0 : vector<16x16xf32>, i32 -> vector<16x16xf32>
    %331 = arith.select %329, %323, %330 : vector<16x16xi1>, vector<16x16xf32>
    %cst_145 = arith.constant 2.500000e-01 : f32
    %332 = vector.broadcast %cst_145 : f32 to vector<16x16xf32>
    %333 = arith.mulf %332, %331 : vector<16x16xf32>
    %c12_i32_146 = arith.constant 12 : i32
    %334 = tpu.dynamic_rotate %221 by %c12_i32_146 dim 1 : vector<16x16xf32>, i32 -> vector<16x16xf32>
    %335 = arith.addf %221, %334 : vector<16x16xf32>
    %c2_i32_147 = arith.constant 2 : i32
    %336 = vector.broadcast %c2_i32_147 : i32 to vector<16x16xi32>
    %337 = arith.shrsi %10, %336 : vector<16x16xi32>
    %c1_i32_148 = arith.constant 1 : i32
    %338 = vector.broadcast %c1_i32_148 : i32 to vector<16x16xi32>
    %339 = arith.andi %337, %338 : vector<16x16xi32>
    %c0_i32_149 = arith.constant 0 : i32
    %340 = vector.broadcast %c0_i32_149 : i32 to vector<16x16xi32>
    %341 = arith.cmpi eq, %339, %340 : vector<16x16xi32>
    %c4_i32_150 = arith.constant 4 : i32
    %342 = tpu.dynamic_rotate %335 by %c4_i32_150 dim 1 : vector<16x16xf32>, i32 -> vector<16x16xf32>
    %343 = arith.select %341, %335, %342 : vector<16x16xi1>, vector<16x16xf32>
    %c12_i32_151 = arith.constant 12 : i32
    %344 = tpu.dynamic_rotate %343 by %c12_i32_151 dim 0 : vector<16x16xf32>, i32 -> vector<16x16xf32>
    %345 = arith.addf %343, %344 : vector<16x16xf32>
    %c2_i32_152 = arith.constant 2 : i32
    %346 = vector.broadcast %c2_i32_152 : i32 to vector<16x16xi32>
    %347 = arith.shrsi %11, %346 : vector<16x16xi32>
    %c1_i32_153 = arith.constant 1 : i32
    %348 = vector.broadcast %c1_i32_153 : i32 to vector<16x16xi32>
    %349 = arith.andi %347, %348 : vector<16x16xi32>
    %c0_i32_154 = arith.constant 0 : i32
    %350 = vector.broadcast %c0_i32_154 : i32 to vector<16x16xi32>
    %351 = arith.cmpi eq, %349, %350 : vector<16x16xi32>
    %c4_i32_155 = arith.constant 4 : i32
    %352 = tpu.dynamic_rotate %345 by %c4_i32_155 dim 0 : vector<16x16xf32>, i32 -> vector<16x16xf32>
    %353 = arith.select %351, %345, %352 : vector<16x16xi1>, vector<16x16xf32>
    %cst_156 = arith.constant 2.500000e-01 : f32
    %354 = vector.broadcast %cst_156 : f32 to vector<16x16xf32>
    %355 = arith.mulf %354, %353 : vector<16x16xf32>
    %356 = arith.subf %199, %333 : vector<16x16xf32>
    %357 = math.absf %356 : vector<16x16xf32>
    %358 = vector.shape_cast %357 : vector<16x16xf32> to vector<1x16x16xf32>
    %cst_157 = arith.constant dense<0.000000e+00> : vector<1xf32>
    %359 = vector.multi_reduction <add>, %358, %cst_157 [1, 2] : vector<1x16x16xf32> to vector<1xf32>
    %360 = vector.shape_cast %359 : vector<1xf32> to vector<1x1x1xf32>
    %361 = vector.extract %360[0, 0, 0] : f32 from vector<1x1x1xf32>
    %cst_158 = arith.constant 6.250000e-02 : f32
    %362 = arith.mulf %cst_158, %361 : f32
    %363 = arith.subf %221, %355 : vector<16x16xf32>
    %364 = math.absf %363 : vector<16x16xf32>
    %365 = vector.shape_cast %364 : vector<16x16xf32> to vector<1x16x16xf32>
    %cst_159 = arith.constant dense<0.000000e+00> : vector<1xf32>
    %366 = vector.multi_reduction <add>, %365, %cst_159 [1, 2] : vector<1x16x16xf32> to vector<1xf32>
    %367 = vector.shape_cast %366 : vector<1xf32> to vector<1x1x1xf32>
    %368 = vector.extract %367[0, 0, 0] : f32 from vector<1x1x1xf32>
    %cst_160 = arith.constant 6.250000e-02 : f32
    %369 = arith.mulf %cst_160, %368 : f32
    %370 = vector.broadcast %94 : f32 to vector<8x128xf32>
    %c0_161 = arith.constant 0 : index
    %c0_162 = arith.constant 0 : index
    %371 = vector.load %arg5[%c0_161, %c0_162] : memref<8x128xf32, #tpu.memory_space<vmem>>, vector<8x128xf32>
    tpu.vector_store %arg5[%c0_161, %c0_162], %370 {strides = array<i32>} : memref<8x128xf32, #tpu.memory_space<vmem>>, vector<8x128xf32>,
    %372 = vector.broadcast %228 : f32 to vector<8x128xf32>
    %c0_163 = arith.constant 0 : index
    %c0_164 = arith.constant 0 : index
    %373 = vector.load %arg6[%c0_163, %c0_164] : memref<8x128xf32, #tpu.memory_space<vmem>>, vector<8x128xf32>
    tpu.vector_store %arg6[%c0_163, %c0_164], %372 {strides = array<i32>} : memref<8x128xf32, #tpu.memory_space<vmem>>, vector<8x128xf32>,
    %374 = vector.broadcast %362 : f32 to vector<8x128xf32>
    %c0_165 = arith.constant 0 : index
    %c0_166 = arith.constant 0 : index
    %375 = vector.load %arg7[%c0_165, %c0_166] : memref<8x128xf32, #tpu.memory_space<vmem>>, vector<8x128xf32>
    tpu.vector_store %arg7[%c0_165, %c0_166], %374 {strides = array<i32>} : memref<8x128xf32, #tpu.memory_space<vmem>>, vector<8x128xf32>,
    %376 = vector.broadcast %101 : f32 to vector<8x128xf32>
    %c0_167 = arith.constant 0 : index
    %c0_168 = arith.constant 0 : index
    %377 = vector.load %arg8[%c0_167, %c0_168] : memref<8x128xf32, #tpu.memory_space<vmem>>, vector<8x128xf32>
    tpu.vector_store %arg8[%c0_167, %c0_168], %376 {strides = array<i32>} : memref<8x128xf32, #tpu.memory_space<vmem>>, vector<8x128xf32>,
    %378 = vector.broadcast %235 : f32 to vector<8x128xf32>
    %c0_169 = arith.constant 0 : index
    %c0_170 = arith.constant 0 : index
    %379 = vector.load %arg9[%c0_169, %c0_170] : memref<8x128xf32, #tpu.memory_space<vmem>>, vector<8x128xf32>
    tpu.vector_store %arg9[%c0_169, %c0_170], %378 {strides = array<i32>} : memref<8x128xf32, #tpu.memory_space<vmem>>, vector<8x128xf32>,
    %380 = vector.broadcast %369 : f32 to vector<8x128xf32>
    %c0_171 = arith.constant 0 : index
    %c0_172 = arith.constant 0 : index
    %381 = vector.load %arg10[%c0_171, %c0_172] : memref<8x128xf32, #tpu.memory_space<vmem>>, vector<8x128xf32>
    tpu.vector_store %arg10[%c0_171, %c0_172], %380 {strides = array<i32>} : memref<8x128xf32, #tpu.memory_space<vmem>>, vector<8x128xf32>,
    %382 = vector.broadcast %31 : f32 to vector<8x128xf32>
    %c0_173 = arith.constant 0 : index
    %c0_174 = arith.constant 0 : index
    %383 = vector.load %arg11[%c0_173, %c0_174] : memref<8x128xf32, #tpu.memory_space<vmem>>, vector<8x128xf32>
    tpu.vector_store %arg11[%c0_173, %c0_174], %382 {strides = array<i32>} : memref<8x128xf32, #tpu.memory_space<vmem>>, vector<8x128xf32>,
    %384 = vector.broadcast %165 : f32 to vector<8x128xf32>
    %c0_175 = arith.constant 0 : index
    %c0_176 = arith.constant 0 : index
    %385 = vector.load %arg12[%c0_175, %c0_176] : memref<8x128xf32, #tpu.memory_space<vmem>>, vector<8x128xf32>
    tpu.vector_store %arg12[%c0_175, %c0_176], %384 {strides = array<i32>} : memref<8x128xf32, #tpu.memory_space<vmem>>, vector<8x128xf32>,
    %386 = vector.broadcast %299 : f32 to vector<8x128xf32>
    %c0_177 = arith.constant 0 : index
    %c0_178 = arith.constant 0 : index
    %387 = vector.load %arg13[%c0_177, %c0_178] : memref<8x128xf32, #tpu.memory_space<vmem>>, vector<8x128xf32>
    tpu.vector_store %arg13[%c0_177, %c0_178], %386 {strides = array<i32>} : memref<8x128xf32, #tpu.memory_space<vmem>>, vector<8x128xf32>,
    %388 = vector.broadcast %43 : f32 to vector<8x128xf32>
    %c0_179 = arith.constant 0 : index
    %c0_180 = arith.constant 0 : index
    %389 = vector.load %arg14[%c0_179, %c0_180] : memref<8x128xf32, #tpu.memory_space<vmem>>, vector<8x128xf32>
    tpu.vector_store %arg14[%c0_179, %c0_180], %388 {strides = array<i32>} : memref<8x128xf32, #tpu.memory_space<vmem>>, vector<8x128xf32>,
    %390 = vector.broadcast %177 : f32 to vector<8x128xf32>
    %c0_181 = arith.constant 0 : index
    %c0_182 = arith.constant 0 : index
    %391 = vector.load %arg15[%c0_181, %c0_182] : memref<8x128xf32, #tpu.memory_space<vmem>>, vector<8x128xf32>
    tpu.vector_store %arg15[%c0_181, %c0_182], %390 {strides = array<i32>} : memref<8x128xf32, #tpu.memory_space<vmem>>, vector<8x128xf32>,
    %392 = vector.broadcast %311 : f32 to vector<8x128xf32>
    %c0_183 = arith.constant 0 : index
    %c0_184 = arith.constant 0 : index
    %393 = vector.load %arg16[%c0_183, %c0_184] : memref<8x128xf32, #tpu.memory_space<vmem>>, vector<8x128xf32>
    tpu.vector_store %arg16[%c0_183, %c0_184], %392 {strides = array<i32>} : memref<8x128xf32, #tpu.memory_space<vmem>>, vector<8x128xf32>,
    return
  }
  func.func @transform_0(%arg0: i32) -> (i32, i32, i32) {
    %c0_i32 = arith.constant 0 : i32
    %c0_i32_0 = arith.constant 0 : i32
    %c0_i32_1 = arith.constant 0 : i32
    return %arg0, %c0_i32, %c0_i32_0 : i32, i32, i32
  }
  func.func @transform_1(%arg0: i32) -> (i32, i32, i32) {
    %c0_i32 = arith.constant 0 : i32
    %c0_i32_0 = arith.constant 0 : i32
    %c0_i32_1 = arith.constant 0 : i32
    return %arg0, %c0_i32, %c0_i32_0 : i32, i32, i32
  }
  func.func @transform_2(%arg0: i32) -> (i32, i32, i32) {
    %c0_i32 = arith.constant 0 : i32
    %c0_i32_0 = arith.constant 0 : i32
    %c0_i32_1 = arith.constant 0 : i32
    return %arg0, %c0_i32, %c0_i32_0 : i32, i32, i32
  }
  func.func @transform_3(%arg0: i32) -> (i32, i32, i32) {
    %c0_i32 = arith.constant 0 : i32
    %c0_i32_0 = arith.constant 0 : i32
    %c0_i32_1 = arith.constant 0 : i32
    return %arg0, %c0_i32, %c0_i32_0 : i32, i32, i32
  }
  func.func @transform_4(%arg0: i32) -> (i32, i32) {
    %c0_i32 = arith.constant 0 : i32
    %c0_i32_0 = arith.constant 0 : i32
    return %arg0, %c0_i32 : i32, i32
  }
  func.func @transform_5(%arg0: i32) -> (i32, i32) {
    %c0_i32 = arith.constant 0 : i32
    %c0_i32_0 = arith.constant 0 : i32
    return %arg0, %c0_i32 : i32, i32
  }
  func.func @transform_6(%arg0: i32) -> (i32, i32) {
    %c0_i32 = arith.constant 0 : i32
    %c0_i32_0 = arith.constant 0 : i32
    return %arg0, %c0_i32 : i32, i32
  }
  func.func @transform_7(%arg0: i32) -> (i32, i32) {
    %c0_i32 = arith.constant 0 : i32
    %c0_i32_0 = arith.constant 0 : i32
    return %arg0, %c0_i32 : i32, i32
  }
  func.func @transform_8(%arg0: i32) -> (i32, i32) {
    %c0_i32 = arith.constant 0 : i32
    %c0_i32_0 = arith.constant 0 : i32
    return %arg0, %c0_i32 : i32, i32
  }
  func.func @transform_9(%arg0: i32) -> (i32, i32) {
    %c0_i32 = arith.constant 0 : i32
    %c0_i32_0 = arith.constant 0 : i32
    return %arg0, %c0_i32 : i32, i32
  }
  func.func @transform_10(%arg0: i32) -> (i32, i32) {
    %c0_i32 = arith.constant 0 : i32
    %c0_i32_0 = arith.constant 0 : i32
    return %arg0, %c0_i32 : i32, i32
  }
  func.func @transform_11(%arg0: i32) -> (i32, i32) {
    %c0_i32 = arith.constant 0 : i32
    %c0_i32_0 = arith.constant 0 : i32
    return %arg0, %c0_i32 : i32, i32
  }
  func.func @transform_12(%arg0: i32) -> (i32, i32) {
    %c0_i32 = arith.constant 0 : i32
    %c0_i32_0 = arith.constant 0 : i32
    return %arg0, %c0_i32 : i32, i32
  }
  func.func @transform_13(%arg0: i32) -> (i32, i32) {
    %c0_i32 = arith.constant 0 : i32
    %c0_i32_0 = arith.constant 0 : i32
    return %arg0, %c0_i32 : i32, i32
  }
  func.func @transform_14(%arg0: i32) -> (i32, i32) {
    %c0_i32 = arith.constant 0 : i32
    %c0_i32_0 = arith.constant 0 : i32
    return %arg0, %c0_i32 : i32, i32
  }
  func.func @transform_15(%arg0: i32) -> (i32, i32) {
    %c0_i32 = arith.constant 0 : i32
    %c0_i32_0 = arith.constant 0 : i32
    return %arg0, %c0_i32 : i32, i32
  }
}

module attributes {stable_mosaic.version = 11 : i64} {
  func.func @_tc_kernel(%arg0: i32, %arg1: i32, %arg2: i32, %arg3: memref<1x1x1x256xf32, #tpu.memory_space<vmem>>, %arg4: memref<1x1x1x256xf32, #tpu.memory_space<vmem>>, %arg5: memref<1x1x1x256xf32, #tpu.memory_space<vmem>>, %arg6: memref<1x1x1x256xf32, #tpu.memory_space<vmem>>, %arg7: memref<1x1x3x256xf32, #tpu.memory_space<vmem>>, %arg8: memref<1x1x3x256xf32, #tpu.memory_space<vmem>>, %arg9: memref<1x1x3x256xf32, #tpu.memory_space<vmem>>, %arg10: memref<1x1x3x256xf32, #tpu.memory_space<vmem>>, %arg11: memref<1x1x3x256xf32, #tpu.memory_space<vmem>>, %arg12: memref<1x1x3x256xf32, #tpu.memory_space<vmem>>, %arg13: memref<1x1x3x256xf32, #tpu.memory_space<vmem>>, %arg14: memref<1x1x3x256xf32, #tpu.memory_space<vmem>>, %arg15: memref<8x128xf32, #tpu.memory_space<vmem>>, %arg16: memref<8x128xf32, #tpu.memory_space<vmem>>, %arg17: memref<8x128xf32, #tpu.memory_space<vmem>>) attributes {dimension_semantics = [#tpu.dimension_semantics<parallel>, #tpu.dimension_semantics<parallel>, #tpu.dimension_semantics<arbitrary>], iteration_bounds = array<i64: 2, 2, 1>, scalar_prefetch = 0 : i64, scratch_operands = 0 : i64, tpu.core_type = #tpu.core_type<tc>, window_params = [{transform_indices = @transform_0, window_bounds = array<i64: 1, 1, 1, 256>}, {transform_indices = @transform_1, window_bounds = array<i64: 1, 1, 1, 256>}, {transform_indices = @transform_2, window_bounds = array<i64: 1, 1, 1, 256>}, {transform_indices = @transform_3, window_bounds = array<i64: 1, 1, 1, 256>}, {transform_indices = @transform_4, window_bounds = array<i64: 1, 1, 3, 256>}, {transform_indices = @transform_5, window_bounds = array<i64: 1, 1, 3, 256>}, {transform_indices = @transform_6, window_bounds = array<i64: 1, 1, 3, 256>}, {transform_indices = @transform_7, window_bounds = array<i64: 1, 1, 3, 256>}, {transform_indices = @transform_8, window_bounds = array<i64: 1, 1, 3, 256>}, {transform_indices = @transform_9, window_bounds = array<i64: 1, 1, 3, 256>}, {transform_indices = @transform_10, window_bounds = array<i64: 1, 1, 3, 256>}, {transform_indices = @transform_11, window_bounds = array<i64: 1, 1, 3, 256>}, {transform_indices = @transform_12, window_bounds = array<i64: 8, 128>}, {transform_indices = @transform_13, window_bounds = array<i64: 8, 128>}, {transform_indices = @transform_14, window_bounds = array<i64: 8, 128>}]} {
    %c0_i32 = arith.constant 0 : i32
    %0 = arith.cmpi eq, %arg2, %c0_i32 : i32
    %1 = arith.extui %0 : i1 to i32
    %c0_i32_0 = arith.constant 0 : i32
    %2 = arith.cmpi ne, %1, %c0_i32_0 : i32
    scf.if %2 {
      %cst_62 = arith.constant 0.000000e+00 : f32
      %51 = vector.broadcast %cst_62 : f32 to vector<8x128xf32>
      %c0_63 = arith.constant 0 : index
      %c0_64 = arith.constant 0 : index
      %52 = vector.load %arg15[%c0_63, %c0_64] : memref<8x128xf32, #tpu.memory_space<vmem>>, vector<8x128xf32>
      tpu.vector_store %arg15[%c0_63, %c0_64], %51 {strides = array<i32>} : memref<8x128xf32, #tpu.memory_space<vmem>>, vector<8x128xf32>,
      %cst_65 = arith.constant 0.000000e+00 : f32
      %53 = vector.broadcast %cst_65 : f32 to vector<8x128xf32>
      %c0_66 = arith.constant 0 : index
      %c0_67 = arith.constant 0 : index
      %54 = vector.load %arg16[%c0_66, %c0_67] : memref<8x128xf32, #tpu.memory_space<vmem>>, vector<8x128xf32>
      tpu.vector_store %arg16[%c0_66, %c0_67], %53 {strides = array<i32>} : memref<8x128xf32, #tpu.memory_space<vmem>>, vector<8x128xf32>,
      %cst_68 = arith.constant 0.000000e+00 : f32
      %55 = vector.broadcast %cst_68 : f32 to vector<8x128xf32>
      %c0_69 = arith.constant 0 : index
      %c0_70 = arith.constant 0 : index
      %56 = vector.load %arg17[%c0_69, %c0_70] : memref<8x128xf32, #tpu.memory_space<vmem>>, vector<8x128xf32>
      tpu.vector_store %arg17[%c0_69, %c0_70], %55 {strides = array<i32>} : memref<8x128xf32, #tpu.memory_space<vmem>>, vector<8x128xf32>,
    } else {
    }
    %c0 = arith.constant 0 : index
    %c0_1 = arith.constant 0 : index
    %c0_2 = arith.constant 0 : index
    %c0_3 = arith.constant 0 : index
    %3 = vector.load %arg4[%c0, %c0_1, %c0_2, %c0_3] : memref<1x1x1x256xf32, #tpu.memory_space<vmem>>, vector<1x1x1x256xf32>
    %c0_4 = arith.constant 0 : index
    %c0_5 = arith.constant 0 : index
    %c0_6 = arith.constant 0 : index
    %c0_7 = arith.constant 0 : index
    %4 = vector.load %arg3[%c0_4, %c0_5, %c0_6, %c0_7] : memref<1x1x1x256xf32, #tpu.memory_space<vmem>>, vector<1x1x1x256xf32>
    %5 = arith.subf %3, %4 : vector<1x1x1x256xf32>
    %c0_8 = arith.constant 0 : index
    %c0_9 = arith.constant 0 : index
    %c0_10 = arith.constant 0 : index
    %c0_11 = arith.constant 0 : index
    %6 = vector.load %arg6[%c0_8, %c0_9, %c0_10, %c0_11] : memref<1x1x1x256xf32, #tpu.memory_space<vmem>>, vector<1x1x1x256xf32>
    %c0_12 = arith.constant 0 : index
    %c0_13 = arith.constant 0 : index
    %c0_14 = arith.constant 0 : index
    %c0_15 = arith.constant 0 : index
    %7 = vector.load %arg5[%c0_12, %c0_13, %c0_14, %c0_15] : memref<1x1x1x256xf32, #tpu.memory_space<vmem>>, vector<1x1x1x256xf32>
    %8 = arith.subf %6, %7 : vector<1x1x1x256xf32>
    %9 = arith.subf %5, %8 : vector<1x1x1x256xf32>
    %c0_16 = arith.constant 0 : index
    %c0_17 = arith.constant 0 : index
    %c0_18 = arith.constant 0 : index
    %c0_19 = arith.constant 0 : index
    %10 = vector.load %arg8[%c0_16, %c0_17, %c0_18, %c0_19] : memref<1x1x3x256xf32, #tpu.memory_space<vmem>>, vector<1x1x3x256xf32>
    %c0_20 = arith.constant 0 : index
    %c0_21 = arith.constant 0 : index
    %c0_22 = arith.constant 0 : index
    %c0_23 = arith.constant 0 : index
    %11 = vector.load %arg7[%c0_20, %c0_21, %c0_22, %c0_23] : memref<1x1x3x256xf32, #tpu.memory_space<vmem>>, vector<1x1x3x256xf32>
    %12 = arith.subf %10, %11 : vector<1x1x3x256xf32>
    %c0_24 = arith.constant 0 : index
    %c0_25 = arith.constant 0 : index
    %c0_26 = arith.constant 0 : index
    %c0_27 = arith.constant 0 : index
    %13 = vector.load %arg10[%c0_24, %c0_25, %c0_26, %c0_27] : memref<1x1x3x256xf32, #tpu.memory_space<vmem>>, vector<1x1x3x256xf32>
    %c0_28 = arith.constant 0 : index
    %c0_29 = arith.constant 0 : index
    %c0_30 = arith.constant 0 : index
    %c0_31 = arith.constant 0 : index
    %14 = vector.load %arg9[%c0_28, %c0_29, %c0_30, %c0_31] : memref<1x1x3x256xf32, #tpu.memory_space<vmem>>, vector<1x1x3x256xf32>
    %15 = arith.subf %13, %14 : vector<1x1x3x256xf32>
    %16 = arith.subf %12, %15 : vector<1x1x3x256xf32>
    %c0_32 = arith.constant 0 : index
    %c0_33 = arith.constant 0 : index
    %c0_34 = arith.constant 0 : index
    %c0_35 = arith.constant 0 : index
    %17 = vector.load %arg12[%c0_32, %c0_33, %c0_34, %c0_35] : memref<1x1x3x256xf32, #tpu.memory_space<vmem>>, vector<1x1x3x256xf32>
    %c0_36 = arith.constant 0 : index
    %c0_37 = arith.constant 0 : index
    %c0_38 = arith.constant 0 : index
    %c0_39 = arith.constant 0 : index
    %18 = vector.load %arg11[%c0_36, %c0_37, %c0_38, %c0_39] : memref<1x1x3x256xf32, #tpu.memory_space<vmem>>, vector<1x1x3x256xf32>
    %19 = arith.subf %17, %18 : vector<1x1x3x256xf32>
    %c0_40 = arith.constant 0 : index
    %c0_41 = arith.constant 0 : index
    %c0_42 = arith.constant 0 : index
    %c0_43 = arith.constant 0 : index
    %20 = vector.load %arg14[%c0_40, %c0_41, %c0_42, %c0_43] : memref<1x1x3x256xf32, #tpu.memory_space<vmem>>, vector<1x1x3x256xf32>
    %c0_44 = arith.constant 0 : index
    %c0_45 = arith.constant 0 : index
    %c0_46 = arith.constant 0 : index
    %c0_47 = arith.constant 0 : index
    %21 = vector.load %arg13[%c0_44, %c0_45, %c0_46, %c0_47] : memref<1x1x3x256xf32, #tpu.memory_space<vmem>>, vector<1x1x3x256xf32>
    %22 = arith.subf %20, %21 : vector<1x1x3x256xf32>
    %23 = arith.subf %19, %22 : vector<1x1x3x256xf32>
    %c0_48 = arith.constant 0 : index
    %c0_49 = arith.constant 0 : index
    %24 = vector.load %arg15[%c0_48, %c0_49] : memref<8x128xf32, #tpu.memory_space<vmem>>, vector<8x128xf32>
    %25 = arith.mulf %9, %9 : vector<1x1x1x256xf32>
    %26 = vector.shape_cast %25 : vector<1x1x1x256xf32> to vector<1x1x1x1x256xf32>
    %cst = arith.constant dense<0.000000e+00> : vector<1xf32>
    %27 = vector.multi_reduction <add>, %26, %cst [1, 2, 3, 4] : vector<1x1x1x1x256xf32> to vector<1xf32>
    %28 = vector.shape_cast %27 : vector<1xf32> to vector<1x1x1x1x1xf32>
    %29 = vector.extract %28[0, 0, 0, 0, 0] : f32 from vector<1x1x1x1x1xf32>
    %30 = vector.broadcast %29 : f32 to vector<8x128xf32>
    %31 = arith.addf %24, %30 : vector<8x128xf32>
    %c0_50 = arith.constant 0 : index
    %c0_51 = arith.constant 0 : index
    %32 = vector.load %arg15[%c0_50, %c0_51] : memref<8x128xf32, #tpu.memory_space<vmem>>, vector<8x128xf32>
    tpu.vector_store %arg15[%c0_50, %c0_51], %31 {strides = array<i32>} : memref<8x128xf32, #tpu.memory_space<vmem>>, vector<8x128xf32>,
    %c0_52 = arith.constant 0 : index
    %c0_53 = arith.constant 0 : index
    %33 = vector.load %arg16[%c0_52, %c0_53] : memref<8x128xf32, #tpu.memory_space<vmem>>, vector<8x128xf32>
    %34 = arith.mulf %16, %16 : vector<1x1x3x256xf32>
    %35 = vector.shape_cast %34 : vector<1x1x3x256xf32> to vector<1x1x1x3x256xf32>
    %cst_54 = arith.constant dense<0.000000e+00> : vector<1xf32>
    %36 = vector.multi_reduction <add>, %35, %cst_54 [1, 2, 3, 4] : vector<1x1x1x3x256xf32> to vector<1xf32>
    %37 = vector.shape_cast %36 : vector<1xf32> to vector<1x1x1x1x1xf32>
    %38 = vector.extract %37[0, 0, 0, 0, 0] : f32 from vector<1x1x1x1x1xf32>
    %39 = vector.broadcast %38 : f32 to vector<8x128xf32>
    %40 = arith.addf %33, %39 : vector<8x128xf32>
    %c0_55 = arith.constant 0 : index
    %c0_56 = arith.constant 0 : index
    %41 = vector.load %arg16[%c0_55, %c0_56] : memref<8x128xf32, #tpu.memory_space<vmem>>, vector<8x128xf32>
    tpu.vector_store %arg16[%c0_55, %c0_56], %40 {strides = array<i32>} : memref<8x128xf32, #tpu.memory_space<vmem>>, vector<8x128xf32>,
    %c0_57 = arith.constant 0 : index
    %c0_58 = arith.constant 0 : index
    %42 = vector.load %arg17[%c0_57, %c0_58] : memref<8x128xf32, #tpu.memory_space<vmem>>, vector<8x128xf32>
    %43 = arith.mulf %23, %23 : vector<1x1x3x256xf32>
    %44 = vector.shape_cast %43 : vector<1x1x3x256xf32> to vector<1x1x1x3x256xf32>
    %cst_59 = arith.constant dense<0.000000e+00> : vector<1xf32>
    %45 = vector.multi_reduction <add>, %44, %cst_59 [1, 2, 3, 4] : vector<1x1x1x3x256xf32> to vector<1xf32>
    %46 = vector.shape_cast %45 : vector<1xf32> to vector<1x1x1x1x1xf32>
    %47 = vector.extract %46[0, 0, 0, 0, 0] : f32 from vector<1x1x1x1x1xf32>
    %48 = vector.broadcast %47 : f32 to vector<8x128xf32>
    %49 = arith.addf %42, %48 : vector<8x128xf32>
    %c0_60 = arith.constant 0 : index
    %c0_61 = arith.constant 0 : index
    %50 = vector.load %arg17[%c0_60, %c0_61] : memref<8x128xf32, #tpu.memory_space<vmem>>, vector<8x128xf32>
    tpu.vector_store %arg17[%c0_60, %c0_61], %49 {strides = array<i32>} : memref<8x128xf32, #tpu.memory_space<vmem>>, vector<8x128xf32>,
    return
  }
  func.func @transform_0(%arg0: i32, %arg1: i32, %arg2: i32) -> (i32, i32, i32, i32) {
    %c0_i32 = arith.constant 0 : i32
    %0 = arith.addi %arg1, %c0_i32 : i32
    %c0_i32_0 = arith.constant 0 : i32
    %c0_i32_1 = arith.constant 0 : i32
    return %arg0, %0, %c0_i32_0, %arg2 : i32, i32, i32, i32
  }
  func.func @transform_1(%arg0: i32, %arg1: i32, %arg2: i32) -> (i32, i32, i32, i32) {
    %c1_i32 = arith.constant 1 : i32
    %0 = arith.addi %arg1, %c1_i32 : i32
    %c0_i32 = arith.constant 0 : i32
    %c0_i32_0 = arith.constant 0 : i32
    return %arg0, %0, %c0_i32, %arg2 : i32, i32, i32, i32
  }
  func.func @transform_2(%arg0: i32, %arg1: i32, %arg2: i32) -> (i32, i32, i32, i32) {
    %c0_i32 = arith.constant 0 : i32
    %0 = arith.addi %arg1, %c0_i32 : i32
    %c0_i32_0 = arith.constant 0 : i32
    %c0_i32_1 = arith.constant 0 : i32
    return %arg0, %0, %c0_i32_0, %arg2 : i32, i32, i32, i32
  }
  func.func @transform_3(%arg0: i32, %arg1: i32, %arg2: i32) -> (i32, i32, i32, i32) {
    %c1_i32 = arith.constant 1 : i32
    %0 = arith.addi %arg1, %c1_i32 : i32
    %c0_i32 = arith.constant 0 : i32
    %c0_i32_0 = arith.constant 0 : i32
    return %arg0, %0, %c0_i32, %arg2 : i32, i32, i32, i32
  }
  func.func @transform_4(%arg0: i32, %arg1: i32, %arg2: i32) -> (i32, i32, i32, i32) {
    %c0_i32 = arith.constant 0 : i32
    %0 = arith.addi %arg1, %c0_i32 : i32
    %c0_i32_0 = arith.constant 0 : i32
    %c0_i32_1 = arith.constant 0 : i32
    return %arg0, %0, %c0_i32_0, %arg2 : i32, i32, i32, i32
  }
  func.func @transform_5(%arg0: i32, %arg1: i32, %arg2: i32) -> (i32, i32, i32, i32) {
    %c1_i32 = arith.constant 1 : i32
    %0 = arith.addi %arg1, %c1_i32 : i32
    %c0_i32 = arith.constant 0 : i32
    %c0_i32_0 = arith.constant 0 : i32
    return %arg0, %0, %c0_i32, %arg2 : i32, i32, i32, i32
  }
  func.func @transform_6(%arg0: i32, %arg1: i32, %arg2: i32) -> (i32, i32, i32, i32) {
    %c0_i32 = arith.constant 0 : i32
    %0 = arith.addi %arg1, %c0_i32 : i32
    %c0_i32_0 = arith.constant 0 : i32
    %c0_i32_1 = arith.constant 0 : i32
    return %arg0, %0, %c0_i32_0, %arg2 : i32, i32, i32, i32
  }
  func.func @transform_7(%arg0: i32, %arg1: i32, %arg2: i32) -> (i32, i32, i32, i32) {
    %c1_i32 = arith.constant 1 : i32
    %0 = arith.addi %arg1, %c1_i32 : i32
    %c0_i32 = arith.constant 0 : i32
    %c0_i32_0 = arith.constant 0 : i32
    return %arg0, %0, %c0_i32, %arg2 : i32, i32, i32, i32
  }
  func.func @transform_8(%arg0: i32, %arg1: i32, %arg2: i32) -> (i32, i32, i32, i32) {
    %c0_i32 = arith.constant 0 : i32
    %0 = arith.addi %arg1, %c0_i32 : i32
    %c0_i32_0 = arith.constant 0 : i32
    %c0_i32_1 = arith.constant 0 : i32
    return %arg0, %0, %c0_i32_0, %arg2 : i32, i32, i32, i32
  }
  func.func @transform_9(%arg0: i32, %arg1: i32, %arg2: i32) -> (i32, i32, i32, i32) {
    %c1_i32 = arith.constant 1 : i32
    %0 = arith.addi %arg1, %c1_i32 : i32
    %c0_i32 = arith.constant 0 : i32
    %c0_i32_0 = arith.constant 0 : i32
    return %arg0, %0, %c0_i32, %arg2 : i32, i32, i32, i32
  }
  func.func @transform_10(%arg0: i32, %arg1: i32, %arg2: i32) -> (i32, i32, i32, i32) {
    %c0_i32 = arith.constant 0 : i32
    %0 = arith.addi %arg1, %c0_i32 : i32
    %c0_i32_0 = arith.constant 0 : i32
    %c0_i32_1 = arith.constant 0 : i32
    return %arg0, %0, %c0_i32_0, %arg2 : i32, i32, i32, i32
  }
  func.func @transform_11(%arg0: i32, %arg1: i32, %arg2: i32) -> (i32, i32, i32, i32) {
    %c1_i32 = arith.constant 1 : i32
    %0 = arith.addi %arg1, %c1_i32 : i32
    %c0_i32 = arith.constant 0 : i32
    %c0_i32_0 = arith.constant 0 : i32
    return %arg0, %0, %c0_i32, %arg2 : i32, i32, i32, i32
  }
  func.func @transform_12(%arg0: i32, %arg1: i32, %arg2: i32) -> (i32, i32) {
    %c2_i32 = arith.constant 2 : i32
    %0 = arith.muli %arg0, %c2_i32 : i32
    %1 = arith.addi %0, %arg1 : i32
    %c0_i32 = arith.constant 0 : i32
    %c0_i32_0 = arith.constant 0 : i32
    return %1, %c0_i32 : i32, i32
  }
  func.func @transform_13(%arg0: i32, %arg1: i32, %arg2: i32) -> (i32, i32) {
    %c2_i32 = arith.constant 2 : i32
    %0 = arith.muli %arg0, %c2_i32 : i32
    %1 = arith.addi %0, %arg1 : i32
    %c0_i32 = arith.constant 0 : i32
    %c0_i32_0 = arith.constant 0 : i32
    return %1, %c0_i32 : i32, i32
  }
  func.func @transform_14(%arg0: i32, %arg1: i32, %arg2: i32) -> (i32, i32) {
    %c2_i32 = arith.constant 2 : i32
    %0 = arith.muli %arg0, %c2_i32 : i32
    %1 = arith.addi %0, %arg1 : i32
    %c0_i32 = arith.constant 0 : i32
    %c0_i32_0 = arith.constant 0 : i32
    return %1, %c0_i32 : i32, i32
  }
}

</mosaic_0001>

<llo_original>
// kernel: full_model_forward.5
$region0: #{full_model_forward.5}
  #allocation0 [shape = 'u32[]', space=smem, size = 0x4, offset = 0x4, fixed_abs, tag = 'smem constant byte address 0x4 - core index']
  #allocation1 [shape = 'u32[144,128]{1,0:T(1,128)}', space=vmem, size = 0x12000, scoped, tag = 'internal scratch']
  %s0 = inlined_call_operand.vmem [shape: f32[6,16,16], index: 0, kind: input, shape index: {}]
  %s1 = inlined_call_operand.vmem [shape: f32[6,16,16], index: 1, kind: input, shape index: {}]
  %s2 = inlined_call_operand.vmem [shape: f32[48,128], index: 2, kind: output, shape index: {0}]
  %s3 = inlined_call_operand.vmem [shape: f32[48,128], index: 3, kind: output, shape index: {1}]
  %s4 = inlined_call_operand.vmem [shape: f32[48,128], index: 4, kind: output, shape index: {2}]
  %s5 = inlined_call_operand.vmem [shape: f32[48,128], index: 5, kind: output, shape index: {3}]
  %s6 = inlined_call_operand.vmem [shape: f32[48,128], index: 6, kind: output, shape index: {4}]
  %7 = xla_tuple %s2, %s3, %s4, %s5, %s6
  %s8 = sld [smem:[#allocation0]]
  $region73: #{full_model_forward.5} parent=0
    _
  %s10 = ssub.s32 1, %s8
  %s11 = scalar_select 0, %s10, %s8
  loop: start=0, step=1, limit=8
  $region2: #{full_model_forward.5} parent=0 // loop_pre_header
    _
  $region3: #{full_model_forward.5} parent=0 // loop_header
    %s13 = sphi 0, %s17
    %p14 = scmp.ge.s32.totalorder %s13, 8
    %s23 = sphi 0, %s25
    %s26 = sphi 0, %s23
    %s27 = sphi 0, %s26
    %s43 = sphi 0, %s27
    %s49 = sphi 0, %s51
    %s52 = sphi 0, %s49
    %s53 = sphi 0, %s52
    %s69 = sphi 0, %s53
    %s75 = sphi 0, %s77
    %s78 = sphi 0, %s75
    %s79 = sphi 0, %s78
    %s95 = sphi 0, %s79
    %s101 = sphi 0, %s103
    %s104 = sphi 0, %s101
    %s105 = sphi 0, %s104
    %s121 = sphi 0, %s105
    %s127 = sphi 0, %s129
    %s130 = sphi 0, %s127
    %s131 = sphi 0, %s130
    %s147 = sphi 0, %s131
    %s153 = sphi 0, %s155
    %s156 = sphi 0, %s153
    %s157 = sphi 0, %s156
    %s173 = sphi 0, %s157
    %s179 = sphi 0, %s181
    %s182 = sphi 0, %s179
    %s183 = sphi 0, %s182
    %s199 = sphi 0, %s183
  $region4: #{full_model_forward.5} parent=0 // loop_header_branch
    %16 = sbr.rel (%p14) target = $region8
  $region5: #{full_model_forward.5} parent=0 // loop_body
    %s18 = ssub.s32 %s13, 1
    %s19 = ssub.s32 %s13, 2
    %s20 = sadd.s32 %s13, 1
    %s21 = ssub.s32 %s13, %s20
    %p22 = scmp.eq.s32.totalorder %s21, 0
    %s24 = sadd.s32 %s23, 1
    %s25 = scalar_select %p22, %s23, %s24
    %p28 = pneg %p22
    %p29 = scmp.eq.s32.totalorder %s13, 5
    %p30 = por %p28, %p29
    %p31 = scmp.ne.s32.totalorder %s23, %s26
    %p32 = scmp.eq.s32.totalorder %s13, 0
    %p33 = por %p31, %p32
    %p34 = scmp.ne.s32.totalorder %s23, %s26
    %p35 = scmp.eq.s32.totalorder %s18, 5
    %p36 = por %p34, %p35
    %p37 = scmp.ne.s32.totalorder %s26, %s27
    %p38 = scmp.eq.s32.totalorder %s18, 0
    %p39 = por %p37, %p38
    %p40 = scmp.ne.s32.totalorder %s26, %s27
    %p41 = scmp.eq.s32.totalorder %s19, 5
    %p42 = por %p40, %p41
    %p44 = scmp.ne.s32.totalorder %s27, %s43
    %p45 = scmp.eq.s32.totalorder %s19, 0
    %p46 = por %p44, %p45
    %s47 = ssub.s32 %s13, %s20
    %p48 = scmp.eq.s32.totalorder %s47, 0
    %s50 = sadd.s32 %s49, 1
    %s51 = scalar_select %p48, %s49, %s50
    %p54 = pneg %p48
    %p55 = scmp.eq.s32.totalorder %s13, 5
    %p56 = por %p54, %p55
    %p57 = scmp.ne.s32.totalorder %s49, %s52
    %p58 = scmp.eq.s32.totalorder %s13, 0
    %p59 = por %p57, %p58
    %p60 = scmp.ne.s32.totalorder %s49, %s52
    %p61 = scmp.eq.s32.totalorder %s18, 5
    %p62 = por %p60, %p61
    %p63 = scmp.ne.s32.totalorder %s52, %s53
    %p64 = scmp.eq.s32.totalorder %s18, 0
    %p65 = por %p63, %p64
    %p66 = scmp.ne.s32.totalorder %s52, %s53
    %p67 = scmp.eq.s32.totalorder %s19, 5
    %p68 = por %p66, %p67
    %p70 = scmp.ne.s32.totalorder %s53, %s69
    %p71 = scmp.eq.s32.totalorder %s19, 0
    %p72 = por %p70, %p71
    %s73 = ssub.s32 %s13, %s20
    %p74 = scmp.eq.s32.totalorder %s73, 0
    %s76 = sadd.s32 %s75, 1
    %s77 = scalar_select %p74, %s75, %s76
    %p80 = pneg %p74
    %p81 = scmp.eq.s32.totalorder %s13, 5
    %p82 = por %p80, %p81
    %p83 = scmp.ne.s32.totalorder %s75, %s78
    %p84 = scmp.eq.s32.totalorder %s13, 0
    %p85 = por %p83, %p84
    %p86 = scmp.ne.s32.totalorder %s75, %s78
    %p87 = scmp.eq.s32.totalorder %s18, 5
    %p88 = por %p86, %p87
    %p89 = scmp.ne.s32.totalorder %s78, %s79
    %p90 = scmp.eq.s32.totalorder %s18, 0
    %p91 = por %p89, %p90
    %p92 = scmp.ne.s32.totalorder %s78, %s79
    %p93 = scmp.eq.s32.totalorder %s19, 5
    %p94 = por %p92, %p93
    %p96 = scmp.ne.s32.totalorder %s79, %s95
    %p97 = scmp.eq.s32.totalorder %s19, 0
    %p98 = por %p96, %p97
    %s99 = ssub.s32 %s13, %s20
    %p100 = scmp.eq.s32.totalorder %s99, 0
    %s102 = sadd.s32 %s101, 1
    %s103 = scalar_select %p100, %s101, %s102
    %p106 = pneg %p100
    %p107 = scmp.eq.s32.totalorder %s13, 5
    %p108 = por %p106, %p107
    %p109 = scmp.ne.s32.totalorder %s101, %s104
    %p110 = scmp.eq.s32.totalorder %s13, 0
    %p111 = por %p109, %p110
    %p112 = scmp.ne.s32.totalorder %s101, %s104
    %p113 = scmp.eq.s32.totalorder %s18, 5
    %p114 = por %p112, %p113
    %p115 = scmp.ne.s32.totalorder %s104, %s105
    %p116 = scmp.eq.s32.totalorder %s18, 0
    %p117 = por %p115, %p116
    %p118 = scmp.ne.s32.totalorder %s104, %s105
    %p119 = scmp.eq.s32.totalorder %s19, 5
    %p120 = por %p118, %p119
    %p122 = scmp.ne.s32.totalorder %s105, %s121
    %p123 = scmp.eq.s32.totalorder %s19, 0
    %p124 = por %p122, %p123
    %s125 = ssub.s32 %s13, %s20
    %p126 = scmp.eq.s32.totalorder %s125, 0
    %s128 = sadd.s32 %s127, 1
    %s129 = scalar_select %p126, %s127, %s128
    %p132 = pneg %p126
    %p133 = scmp.eq.s32.totalorder %s13, 5
    %p134 = por %p132, %p133
    %p135 = scmp.ne.s32.totalorder %s127, %s130
    %p136 = scmp.eq.s32.totalorder %s13, 0
    %p137 = por %p135, %p136
    %p138 = scmp.ne.s32.totalorder %s127, %s130
    %p139 = scmp.eq.s32.totalorder %s18, 5
    %p140 = por %p138, %p139
    %p141 = scmp.ne.s32.totalorder %s130, %s131
    %p142 = scmp.eq.s32.totalorder %s18, 0
    %p143 = por %p141, %p142
    %p144 = scmp.ne.s32.totalorder %s130, %s131
    %p145 = scmp.eq.s32.totalorder %s19, 5
    %p146 = por %p144, %p145
    %p148 = scmp.ne.s32.totalorder %s131, %s147
    %p149 = scmp.eq.s32.totalorder %s19, 0
    %p150 = por %p148, %p149
    %s151 = ssub.s32 %s13, %s20
    %p152 = scmp.eq.s32.totalorder %s151, 0
    %s154 = sadd.s32 %s153, 1
    %s155 = scalar_select %p152, %s153, %s154
    %p158 = pneg %p152
    %p159 = scmp.eq.s32.totalorder %s13, 5
    %p160 = por %p158, %p159
    %p161 = scmp.ne.s32.totalorder %s153, %s156
    %p162 = scmp.eq.s32.totalorder %s13, 0
    %p163 = por %p161, %p162
    %p164 = scmp.ne.s32.totalorder %s153, %s156
    %p165 = scmp.eq.s32.totalorder %s18, 5
    %p166 = por %p164, %p165
    %p167 = scmp.ne.s32.totalorder %s156, %s157
    %p168 = scmp.eq.s32.totalorder %s18, 0
    %p169 = por %p167, %p168
    %p170 = scmp.ne.s32.totalorder %s156, %s157
    %p171 = scmp.eq.s32.totalorder %s19, 5
    %p172 = por %p170, %p171
    %p174 = scmp.ne.s32.totalorder %s157, %s173
    %p175 = scmp.eq.s32.totalorder %s19, 0
    %p176 = por %p174, %p175
    %s177 = ssub.s32 %s13, %s20
    %p178 = scmp.eq.s32.totalorder %s177, 0
    %s180 = sadd.s32 %s179, 1
    %s181 = scalar_select %p178, %s179, %s180
    %p184 = pneg %p178
    %p185 = scmp.eq.s32.totalorder %s13, 5
    %p186 = por %p184, %p185
    %p187 = scmp.ne.s32.totalorder %s179, %s182
    %p188 = scmp.eq.s32.totalorder %s13, 0
    %p189 = por %p187, %p188
    %p190 = scmp.ne.s32.totalorder %s179, %s182
    %p191 = scmp.eq.s32.totalorder %s18, 5
    %p192 = por %p190, %p191
    %p193 = scmp.ne.s32.totalorder %s182, %s183
    %p194 = scmp.eq.s32.totalorder %s18, 0
    %p195 = por %p193, %p194
    %p196 = scmp.ne.s32.totalorder %s182, %s183
    %p197 = scmp.eq.s32.totalorder %s19, 5
    %p198 = por %p196, %p197
    %p200 = scmp.ne.s32.totalorder %s183, %s199
    %p201 = scmp.eq.s32.totalorder %s19, 0
    %p202 = por %p200, %p201
    %p203 = scmp.le.s32.totalorder 1, %s13
    %p204 = scmp.lt.s32.totalorder %s13, 7
    %p205 = pnand %p203, %p204
    %p206 = pneg %p205
    // Predicated region
    $region9: #{full_model_forward.5} parent=5 // pred_check
      _
    $region10: #{full_model_forward.5} parent=5 // pred_check_branch
      %208 = sbr.rel (%p205) target = $region12
    $region11: #{full_model_forward.5} parent=5 // pred_region
      %s209 = ssub.s32 %s13, 1
    $region12: #{full_model_forward.5} parent=5 // pred_fallthru
      _
    %p210 = scmp.lt.s32.totalorder %s13, 6
    // Predicated region
    $region13: #{full_model_forward.5} parent=5 // pred_check
      %p211 = pneg %p210
    $region14: #{full_model_forward.5} parent=5 // pred_check_branch
      %213 = sbr.rel (%p211) target = $region16
    $region15: #{full_model_forward.5} parent=5 // pred_region
      // Predicated region
      $region17: #{full_model_forward.5} parent=15 // pred_check
        %p214 = pneg %p33
      $region18: #{full_model_forward.5} parent=15 // pred_check_branch
        %216 = sbr.rel (%p214) target = $region20
      $region19: #{full_model_forward.5} parent=15 // pred_region
        %p217 = scmp.lt.s32.totalorder %s13, 5
        %s218 = scalar_select %p217, %s13, 5
        %s219 = smul.addr %s218, 2
        %s220 = smul.addr %s219, 8
        %s221 = scalar_lea.vmem %s0, %s220
      $region20: #{full_model_forward.5} parent=15 // pred_fallthru
        _
      // Predicated region
      $region21: #{full_model_forward.5} parent=15 // pred_check
        %p222 = pneg %p59
      $region22: #{full_model_forward.5} parent=15 // pred_check_branch
        %224 = sbr.rel (%p222) target = $region24
      $region23: #{full_model_forward.5} parent=15 // pred_region
        %p225 = scmp.lt.s32.totalorder %s13, 5
        %s226 = scalar_select %p225, %s13, 5
        %s227 = smul.addr %s226, 2
        %s228 = smul.addr %s227, 8
        %s229 = scalar_lea.vmem %s1, %s228
      $region24: #{full_model_forward.5} parent=15 // pred_fallthru
        _
    $region16: #{full_model_forward.5} parent=5 // pred_fallthru
      _
    %p230 = scmp.le.s32.totalorder 1, %s13
    %p231 = scmp.lt.s32.totalorder %s13, 7
    %p232 = pnand %p230, %p231
    %p233 = pneg %p232
    // Predicated region
    $region25: #{full_model_forward.5} parent=5 // pred_check
      _
    $region26: #{full_model_forward.5} parent=5 // pred_check_branch
      %235 = sbr.rel (%p232) target = $region28
    $region27: #{full_model_forward.5} parent=5 // pred_region
      %s236 = ssub.s32 %s13, 1
      %p237 = scmp.lt.s32.totalorder %s18, 5
      %s238 = scalar_select %p237, %s18, 5
      %s239 = smul.addr %s238, 2
      %s240 = smul.addr %s239, 8
      %s241 = scalar_lea.vmem %s0, %s240
      %p242 = pneg %p39
      %p243 = pneg %p36
      %p244 = scmp.lt.s32.totalorder %s18, 5
      %s245 = scalar_select %p244, %s18, 5
      %s246 = smul.addr %s245, 2
      %s247 = smul.addr %s246, 8
      %s248 = scalar_lea.vmem %s1, %s247
      %p249 = pneg %p65
      %p250 = pneg %p62
      %p251 = pneg %p91
      %p252 = pneg %p88
      %p253 = scmp.lt.s32.totalorder %s18, 5
      %s254 = scalar_select %p253, %s18, 5
      %s255 = smul.addr %s254, 8
      %s256 = scalar_lea.vmem %s2, %s255
      %p257 = pneg %p117
      %p258 = pneg %p114
      %p259 = scmp.lt.s32.totalorder %s18, 5
      %s260 = scalar_select %p259, %s18, 5
      %s261 = smul.addr %s260, 8
      %s262 = scalar_lea.vmem %s3, %s261
      %p263 = pneg %p143
      %p264 = pneg %p140
      %p265 = scmp.lt.s32.totalorder %s18, 5
      %s266 = scalar_select %p265, %s18, 5
      %s267 = smul.addr %s266, 8
      %s268 = scalar_lea.vmem %s4, %s267
      %p269 = pneg %p169
      %p270 = pneg %p166
      %p271 = scmp.lt.s32.totalorder %s18, 5
      %s272 = scalar_select %p271, %s18, 5
      %s273 = smul.addr %s272, 8
      %s274 = scalar_lea.vmem %s5, %s273
      %p275 = pneg %p195
      %p276 = pneg %p192
      %p277 = scmp.lt.s32.totalorder %s18, 5
      %s278 = scalar_select %p277, %s18, 5
      %s279 = smul.addr %s278, 8
      %s280 = scalar_lea.vmem %s6, %s279
      %p281 = scmp.lt.s32.totalorder %s18, 5
      %s282 = scalar_select %p281, %s18, 5
      %s283 = smul.addr %s282, 2
      %s284 = smul.addr %s283, 8
      %s285 = scalar_lea.vmem %s0, %s284
      %p286 = scmp.lt.s32.totalorder %s18, 5
      %s287 = scalar_select %p286, %s18, 5
      %s288 = smul.addr %s287, 2
      %s289 = smul.addr %s288, 8
      %s290 = scalar_lea.vmem %s1, %s289
      %p291 = scmp.lt.s32.totalorder %s18, 5
      %s292 = scalar_select %p291, %s18, 5
      %s293 = smul.addr %s292, 8
      %s294 = scalar_lea.vmem %s2, %s293
      %p295 = scmp.lt.s32.totalorder %s18, 5
      %s296 = scalar_select %p295, %s18, 5
      %s297 = smul.addr %s296, 8
      %s298 = scalar_lea.vmem %s3, %s297
      %p299 = scmp.lt.s32.totalorder %s18, 5
      %s300 = scalar_select %p299, %s18, 5
      %s301 = smul.addr %s300, 8
      %s302 = scalar_lea.vmem %s4, %s301
      %p303 = scmp.lt.s32.totalorder %s18, 5
      %s304 = scalar_select %p303, %s18, 5
      %s305 = smul.addr %s304, 8
      %s306 = scalar_lea.vmem %s5, %s305
      %p307 = scmp.lt.s32.totalorder %s18, 5
      %s308 = scalar_select %p307, %s18, 5
      %s309 = smul.addr %s308, 8
      %s310 = scalar_lea.vmem %s6, %s309
      %v311 = vld [vmem:[%s285] sm:$0xff]
      %v312 = vld [vmem:[%s285 + $0x8] sm:$0xff]
      %v313 = vld [vmem:[%s290] sm:$0xff]
      %v314 = vld [vmem:[%s290 + $0x8] sm:$0xff]
      %v315 = vsub.f32 %v311, %v313
      %v316 = vsub.f32 %v312, %v314
      %v317 = vlaneseq
      %v318 = vand.u32 %v317, 127
      %v319 = vlaneseq
      %v320 = vshrl.u32 %v319, 7
      %v321 = vadd.s32 %v320, 8
      %vm322 = vcmask 1047680
      %323 = vrot.lane.b32.xlu0 %v315, 16
      %v324 = vpop.permute.xlu0 %323
      %v325 = vsel %vm322, %v324, %v315
      %326 = vrot.lane.b32.xlu0 %v316, 16
      %v327 = vpop.permute.xlu0 %326
      %v328 = vsel %vm322, %v327, %v316
      %329 = vrot.lane.b32.xlu0 %v325, 16
      %v330 = vpop.permute.xlu0 %329
      %331 = vrot.lane.b32.xlu0 %v328, 16
      %v332 = vpop.permute.xlu0 %331
      %v333 = vsel %vm322, %v330, %v315
      %v334 = vsel %vm322, %v332, %v316
      %337 = vrot.lane.b32.xlu0 %v315, 1
      %v338 = vpop.permute.xlu0 %337
      %339 = vrot.lane.b32.xlu0 %v316, 1
      %v340 = vpop.permute.xlu0 %339
      %v343 = vsub.f32 %v333, %v338
      %v344 = vsub.f32 %v334, %v340
      %v345 = vrot.slane %v315, 1
      %v346 = vrot.slane %v316, 1
      %vm347 = vcmp.lt.s32.totalorder %v320, 7
      %v348 = vsel %vm347, %v345, %v346
      %v349 = vsel %vm347, %v346, %v345
      %v350 = vsub.f32 %v348, %v315
      %v351 = vsub.f32 %v349, %v316
      %vm352 = vcmp.lt.s32.totalorder %v318, 15
      %v353 = vand.u32 2147483647, %v343
      %v354 = vand.u32 2147483647, %v344
      %357 = vrot.lane.b32.xlu0 %v353, 127
      %v358 = vpop.permute.xlu0 %357
      %359 = vrot.lane.b32.xlu0 %v354, 127
      %v360 = vpop.permute.xlu0 %359
      %v363 = vsel %vm352, %v358, 0.0
      %v364 = vsel %vm352, %v360, 0.0
      %vm365 = vcmask 130048
      %v366 = vsel %vm365, %v363, 0.0
      %v367 = vsel %vm365, %v364, 0.0
      %v368 = vadd.f32 %v366, %v367
      %369 = vadd.xlane.f32.xlu0 %v368
      %v370 = vpop.xlane.xlu0 %369
      %v371 = vrot.slane %v370, 4
      %v372 = vadd.f32 %v370, %v371
      %v373 = vrot.slane %v372, 2
      %v374 = vadd.f32 %v372, %v373
      %v375 = vrot.slane %v374, 1
      %v376 = vadd.f32 %v374, %v375
      %s377 = vtos %v376
      %vm378 = vcmp.lt.s32.totalorder %v320, 15
      %vm379 = vcmp.lt.s32.totalorder %v321, 15
      %v380 = vand.u32 2147483647, %v350
      %v381 = vand.u32 2147483647, %v351
      %v382 = vsel %vm378, %v380, 0.0
      %v383 = vsel %vm379, %v381, 0.0
      %v384 = vsel %vm365, %v382, 0.0
      %v385 = vsel %vm365, %v383, 0.0
      %v386 = vadd.f32 %v384, %v385
      %387 = vadd.xlane.f32.xlu0 %v386
      %v388 = vpop.xlane.xlu0 %387
      %v389 = vrot.slane %v388, 4
      %v390 = vadd.f32 %v388, %v389
      %v391 = vrot.slane %v390, 2
      %v392 = vadd.f32 %v390, %v391
      %v393 = vrot.slane %v392, 1
      %v394 = vadd.f32 %v392, %v393
      %s395 = vtos %v394
      %398 = vrot.lane.b32.xlu0 %v333, 127
      %v399 = vpop.permute.xlu0 %398
      %400 = vrot.lane.b32.xlu0 %v334, 127
      %v401 = vpop.permute.xlu0 %400
      %v404 = vadd.f32 %v315, %v399
      %v405 = vadd.f32 %v316, %v401
      %v406 = vand.u32 %v318, 1
      %vm407 = vcmp.eq.s32.totalorder %v406, 0
      %408 = vrot.lane.b32.xlu0 %v404, 16
      %v409 = vpop.permute.xlu0 %408
      %v410 = vsel %vm322, %v409, %v404
      %411 = vrot.lane.b32.xlu0 %v405, 16
      %v412 = vpop.permute.xlu0 %411
      %v413 = vsel %vm322, %v412, %v405
      %414 = vrot.lane.b32.xlu0 %v410, 16
      %v415 = vpop.permute.xlu0 %414
      %416 = vrot.lane.b32.xlu0 %v413, 16
      %v417 = vpop.permute.xlu0 %416
      %v418 = vsel %vm322, %v415, %v404
      %v419 = vsel %vm322, %v417, %v405
      %422 = vrot.lane.b32.xlu0 %v418, 113
      %v423 = vpop.permute.xlu0 %422
      %424 = vrot.lane.b32.xlu0 %v419, 113
      %v425 = vpop.permute.xlu0 %424
      %v428 = vsel %vm407, %v404, %v423
      %v429 = vsel %vm407, %v405, %v425
      %v430 = vrot.slane %v428, 1
      %v431 = vrot.slane %v429, 1
      %v432 = vsel %vm347, %v430, %v431
      %v433 = vsel %vm347, %v431, %v430
      %v434 = vadd.f32 %v428, %v432
      %v435 = vadd.f32 %v429, %v433
      %v436 = vand.u32 %v320, 1
      %v437 = vand.u32 %v321, 1
      %vm438 = vcmp.eq.s32.totalorder %v436, 0
      %vm439 = vcmp.eq.s32.totalorder %v437, 0
      %v440 = vrot.slane %v434, 7
      %v441 = vrot.slane %v435, 7
      %vm442 = vcmp.lt.s32.totalorder %v320, 1
      %v443 = vsel %vm442, %v440, %v441
      %v444 = vsel %vm442, %v441, %v440
      %v445 = vsel %vm438, %v434, %v444
      %v446 = vsel %vm439, %v435, %v443
      %v447 = vmul.f32 %v445, 0.25
      %v448 = vmul.f32 %v446, 0.25
      %v449 = vsub.f32 %v315, %v447
      %v450 = vsub.f32 %v316, %v448
      %v451 = vand.u32 2147483647, %v449
      %v452 = vand.u32 2147483647, %v450
      %v453 = vsel %vm365, %v451, 0.0
      %v454 = vsel %vm365, %v452, 0.0
      %v455 = vadd.f32 %v453, %v454
      %456 = vadd.xlane.f32.xlu0 %v455
      %v457 = vpop.xlane.xlu0 %456
      %v458 = vrot.slane %v457, 4
      %v459 = vadd.f32 %v457, %v458
      %v460 = vrot.slane %v459, 2
      %v461 = vadd.f32 %v459, %v460
      %v462 = vrot.slane %v461, 1
      %v463 = vadd.f32 %v461, %v462
      %s464 = vtos %v463
      %465 = vrot.lane.b32.xlu0 %v447, 16
      %v466 = vpop.permute.xlu0 %465
      %v467 = vsel %vm322, %v466, %v447
      %468 = vrot.lane.b32.xlu0 %v448, 16
      %v469 = vpop.permute.xlu0 %468
      %v470 = vsel %vm322, %v469, %v448
      %471 = vrot.lane.b32.xlu0 %v467, 16
      %v472 = vpop.permute.xlu0 %471
      %473 = vrot.lane.b32.xlu0 %v470, 16
      %v474 = vpop.permute.xlu0 %473
      %v475 = vsel %vm322, %v472, %v447
      %v476 = vsel %vm322, %v474, %v448
      %479 = vrot.lane.b32.xlu0 %v475, 126
      %v480 = vpop.permute.xlu0 %479
      %481 = vrot.lane.b32.xlu0 %v476, 126
      %v482 = vpop.permute.xlu0 %481
      %v485 = vadd.f32 %v447, %v480
      %v486 = vadd.f32 %v448, %v482
      %v487 = vshra.s32 %v318, 1
      %v488 = vand.u32 %v487, 1
      %vm489 = vcmp.eq.s32.totalorder %v488, 0
      %490 = vrot.lane.b32.xlu0 %v485, 16
      %v491 = vpop.permute.xlu0 %490
      %v492 = vsel %vm322, %v491, %v485
      %493 = vrot.lane.b32.xlu0 %v486, 16
      %v494 = vpop.permute.xlu0 %493
      %v495 = vsel %vm322, %v494, %v486
      %496 = vrot.lane.b32.xlu0 %v492, 16
      %v497 = vpop.permute.xlu0 %496
      %498 = vrot.lane.b32.xlu0 %v495, 16
      %v499 = vpop.permute.xlu0 %498
      %v500 = vsel %vm322, %v497, %v485
      %v501 = vsel %vm322, %v499, %v486
      %504 = vrot.lane.b32.xlu0 %v500, 114
      %v505 = vpop.permute.xlu0 %504
      %506 = vrot.lane.b32.xlu0 %v501, 114
      %v507 = vpop.permute.xlu0 %506
      %v510 = vsel %vm489, %v485, %v505
      %v511 = vsel %vm489, %v486, %v507
      %v512 = vrot.slane %v510, 2
      %v513 = vrot.slane %v511, 2
      %vm514 = vcmp.lt.s32.totalorder %v320, 6
      %v515 = vsel %vm514, %v512, %v513
      %v516 = vsel %vm514, %v513, %v512
      %v517 = vadd.f32 %v510, %v515
      %v518 = vadd.f32 %v511, %v516
      %v519 = vshra.s32 %v320, 1
      %v520 = vshra.s32 %v321, 1
      %v521 = vand.u32 %v519, 1
      %v522 = vand.u32 %v520, 1
      %vm523 = vcmp.eq.s32.totalorder %v521, 0
      %vm524 = vcmp.eq.s32.totalorder %v522, 0
      %v525 = vrot.slane %v517, 6
      %v526 = vrot.slane %v518, 6
      %vm527 = vcmp.lt.s32.totalorder %v320, 2
      %v528 = vsel %vm527, %v525, %v526
      %v529 = vsel %vm527, %v526, %v525
      %v530 = vsel %vm523, %v517, %v529
      %v531 = vsel %vm524, %v518, %v528
      %v532 = vmul.f32 %v530, 0.25
      %v533 = vmul.f32 %v531, 0.25
      %v534 = vsub.f32 %v447, %v532
      %v535 = vsub.f32 %v448, %v533
      %v536 = vand.u32 2147483647, %v534
      %v537 = vand.u32 2147483647, %v535
      %v538 = vsel %vm365, %v536, 0.0
      %v539 = vsel %vm365, %v537, 0.0
      %v540 = vadd.f32 %v538, %v539
      %541 = vadd.xlane.f32.xlu0 %v540
      %v542 = vpop.xlane.xlu0 %541
      %v543 = vrot.slane %v542, 4
      %v544 = vadd.f32 %v542, %v543
      %v545 = vrot.slane %v544, 2
      %v546 = vadd.f32 %v544, %v545
      %v547 = vrot.slane %v546, 1
      %v548 = vadd.f32 %v546, %v547
      %s549 = vtos %v548
      %v550 = vrcp.pop 4.0
      %s551 = vtos %v550
      %s552 = smul.f32 %s549, %s551
      %553 = vrot.lane.b32.xlu0 %v532, 16
      %v554 = vpop.permute.xlu0 %553
      %v555 = vsel %vm322, %v554, %v532
      %556 = vrot.lane.b32.xlu0 %v533, 16
      %v557 = vpop.permute.xlu0 %556
      %v558 = vsel %vm322, %v557, %v533
      %559 = vrot.lane.b32.xlu0 %v555, 16
      %v560 = vpop.permute.xlu0 %559
      %561 = vrot.lane.b32.xlu0 %v558, 16
      %v562 = vpop.permute.xlu0 %561
      %v563 = vsel %vm322, %v560, %v532
      %v564 = vsel %vm322, %v562, %v533
      %567 = vrot.lane.b32.xlu0 %v563, 124
      %v568 = vpop.permute.xlu0 %567
      %569 = vrot.lane.b32.xlu0 %v564, 124
      %v570 = vpop.permute.xlu0 %569
      %v573 = vadd.f32 %v532, %v568
      %v574 = vadd.f32 %v533, %v570
      %v575 = vshra.s32 %v318, 2
      %v576 = vand.u32 %v575, 1
      %vm577 = vcmp.eq.s32.totalorder %v576, 0
      %578 = vrot.lane.b32.xlu0 %v573, 16
      %v579 = vpop.permute.xlu0 %578
      %v580 = vsel %vm322, %v579, %v573
      %581 = vrot.lane.b32.xlu0 %v574, 16
      %v582 = vpop.permute.xlu0 %581
      %v583 = vsel %vm322, %v582, %v574
      %584 = vrot.lane.b32.xlu0 %v580, 16
      %v585 = vpop.permute.xlu0 %584
      %586 = vrot.lane.b32.xlu0 %v583, 16
      %v587 = vpop.permute.xlu0 %586
      %v588 = vsel %vm322, %v585, %v573
      %v589 = vsel %vm322, %v587, %v574
      %592 = vrot.lane.b32.xlu0 %v588, 116
      %v593 = vpop.permute.xlu0 %592
      %594 = vrot.lane.b32.xlu0 %v589, 116
      %v595 = vpop.permute.xlu0 %594
      %v598 = vsel %vm577, %v573, %v593
      %v599 = vsel %vm577, %v574, %v595
      %v600 = vrot.slane %v598, 4
      %v601 = vrot.slane %v599, 4
      %vm602 = vcmp.lt.s32.totalorder %v320, 4
      %v603 = vsel %vm602, %v600, %v601
      %v604 = vsel %vm602, %v601, %v600
      %v605 = vadd.f32 %v598, %v603
      %v606 = vadd.f32 %v599, %v604
      %v607 = vshra.s32 %v320, 2
      %v608 = vshra.s32 %v321, 2
      %v609 = vand.u32 %v607, 1
      %v610 = vand.u32 %v608, 1
      %vm611 = vcmp.eq.s32.totalorder %v609, 0
      %vm612 = vcmp.eq.s32.totalorder %v610, 0
      %v613 = vrot.slane %v605, 4
      %v614 = vrot.slane %v606, 4
      %v615 = vsel %vm602, %v613, %v614
      %v616 = vsel %vm602, %v614, %v613
      %v617 = vsel %vm611, %v605, %v616
      %v618 = vsel %vm612, %v606, %v615
      %v619 = vmul.f32 %v617, 0.25
      %v620 = vmul.f32 %v618, 0.25
      %v621 = vsub.f32 %v532, %v619
      %v622 = vsub.f32 %v533, %v620
      %v623 = vand.u32 2147483647, %v621
      %v624 = vand.u32 2147483647, %v622
      %v625 = vsel %vm365, %v623, 0.0
      %v626 = vsel %vm365, %v624, 0.0
      %v627 = vadd.f32 %v625, %v626
      %628 = vadd.xlane.f32.xlu0 %v627
      %v629 = vpop.xlane.xlu0 %628
      %v630 = vrot.slane %v629, 4
      %v631 = vadd.f32 %v629, %v630
      %v632 = vrot.slane %v631, 2
      %v633 = vadd.f32 %v631, %v632
      %v634 = vrot.slane %v633, 1
      %v635 = vadd.f32 %v633, %v634
      %s636 = vtos %v635
      %v637 = vrcp.pop 16.0
      %s638 = vtos %v637
      %s639 = smul.f32 %s636, %s638
      %v640 = vstv %s377
      %641 = vst [vmem:[%s294] sm:$0xff] %v640
      %v642 = vstv %s395
      %643 = vst [vmem:[%s298] sm:$0xff] %v642
      %v644 = vstv %s464
      %645 = vst [vmem:[%s302] sm:$0xff] %v644
      %v646 = vstv %s552
      %647 = vst [vmem:[%s306] sm:$0xff] %v646
      %v648 = vstv %s639
      %649 = vst [vmem:[%s310] sm:$0xff] %v648
      %p650 = scmp.lt.s32.totalorder %s18, 5
      %s651 = scalar_select %p650, %s18, 5
      %s652 = smul.addr %s651, 8
      %s653 = scalar_lea.vmem %s2, %s652
      %p654 = scmp.lt.s32.totalorder %s18, 5
      %s655 = scalar_select %p654, %s18, 5
      %s656 = smul.addr %s655, 8
      %s657 = scalar_lea.vmem %s3, %s656
      %p658 = scmp.lt.s32.totalorder %s18, 5
      %s659 = scalar_select %p658, %s18, 5
      %s660 = smul.addr %s659, 8
      %s661 = scalar_lea.vmem %s4, %s660
      %p662 = scmp.lt.s32.totalorder %s18, 5
      %s663 = scalar_select %p662, %s18, 5
      %s664 = smul.addr %s663, 8
      %s665 = scalar_lea.vmem %s5, %s664
      %p666 = scmp.lt.s32.totalorder %s18, 5
      %s667 = scalar_select %p666, %s18, 5
      %s668 = smul.addr %s667, 8
      %s669 = scalar_lea.vmem %s6, %s668
      // Predicated region
      $region29: #{full_model_forward.5} parent=27 // pred_check
        %p670 = pneg %p88
      $region30: #{full_model_forward.5} parent=27 // pred_check_branch
        %672 = sbr.rel (%p670) target = $region32
      $region31: #{full_model_forward.5} parent=27 // pred_region
        _
      $region32: #{full_model_forward.5} parent=27 // pred_fallthru
        _
      // Predicated region
      $region33: #{full_model_forward.5} parent=27 // pred_check
        %p673 = pneg %p114
      $region34: #{full_model_forward.5} parent=27 // pred_check_branch
        %675 = sbr.rel (%p673) target = $region36
      $region35: #{full_model_forward.5} parent=27 // pred_region
        _
      $region36: #{full_model_forward.5} parent=27 // pred_fallthru
        _
      // Predicated region
      $region37: #{full_model_forward.5} parent=27 // pred_check
        %p676 = pneg %p140
      $region38: #{full_model_forward.5} parent=27 // pred_check_branch
        %678 = sbr.rel (%p676) target = $region40
      $region39: #{full_model_forward.5} parent=27 // pred_region
        _
      $region40: #{full_model_forward.5} parent=27 // pred_fallthru
        _
      // Predicated region
      $region41: #{full_model_forward.5} parent=27 // pred_check
        %p679 = pneg %p166
      $region42: #{full_model_forward.5} parent=27 // pred_check_branch
        %681 = sbr.rel (%p679) target = $region44
      $region43: #{full_model_forward.5} parent=27 // pred_region
        _
      $region44: #{full_model_forward.5} parent=27 // pred_fallthru
        _
      // Predicated region
      $region45: #{full_model_forward.5} parent=27 // pred_check
        %p682 = pneg %p192
      $region46: #{full_model_forward.5} parent=27 // pred_check_branch
        %684 = sbr.rel (%p682) target = $region48
      $region47: #{full_model_forward.5} parent=27 // pred_region
        _
      $region48: #{full_model_forward.5} parent=27 // pred_fallthru
        _
    $region28: #{full_model_forward.5} parent=5 // pred_fallthru
      _
    %p685 = scmp.le.s32.totalorder 2, %s13
    // Predicated region
    $region49: #{full_model_forward.5} parent=5 // pred_check
      %p686 = pneg %p685
    $region50: #{full_model_forward.5} parent=5 // pred_check_branch
      %688 = sbr.rel (%p686) target = $region52
    $region51: #{full_model_forward.5} parent=5 // pred_region
      %s689 = ssub.s32 %s13, 2
      // Predicated region
      $region53: #{full_model_forward.5} parent=51 // pred_check
        %p690 = pneg %p94
      $region54: #{full_model_forward.5} parent=51 // pred_check_branch
        %692 = sbr.rel (%p690) target = $region56
      $region55: #{full_model_forward.5} parent=51 // pred_region
        %p693 = scmp.lt.s32.totalorder %s19, 5
        %s694 = scalar_select %p693, %s19, 5
        %s695 = smul.addr %s694, 8
        %s696 = scalar_lea.vmem %s2, %s695
      $region56: #{full_model_forward.5} parent=51 // pred_fallthru
        _
      // Predicated region
      $region57: #{full_model_forward.5} parent=51 // pred_check
        %p697 = pneg %p120
      $region58: #{full_model_forward.5} parent=51 // pred_check_branch
        %699 = sbr.rel (%p697) target = $region60
      $region59: #{full_model_forward.5} parent=51 // pred_region
        %p700 = scmp.lt.s32.totalorder %s19, 5
        %s701 = scalar_select %p700, %s19, 5
        %s702 = smul.addr %s701, 8
        %s703 = scalar_lea.vmem %s3, %s702
      $region60: #{full_model_forward.5} parent=51 // pred_fallthru
        _
      // Predicated region
      $region61: #{full_model_forward.5} parent=51 // pred_check
        %p704 = pneg %p146
      $region62: #{full_model_forward.5} parent=51 // pred_check_branch
        %706 = sbr.rel (%p704) target = $region64
      $region63: #{full_model_forward.5} parent=51 // pred_region
        %p707 = scmp.lt.s32.totalorder %s19, 5
        %s708 = scalar_select %p707, %s19, 5
        %s709 = smul.addr %s708, 8
        %s710 = scalar_lea.vmem %s4, %s709
      $region64: #{full_model_forward.5} parent=51 // pred_fallthru
        _
      // Predicated region
      $region65: #{full_model_forward.5} parent=51 // pred_check
        %p711 = pneg %p172
      $region66: #{full_model_forward.5} parent=51 // pred_check_branch
        %713 = sbr.rel (%p711) target = $region68
      $region67: #{full_model_forward.5} parent=51 // pred_region
        %p714 = scmp.lt.s32.totalorder %s19, 5
        %s715 = scalar_select %p714, %s19, 5
        %s716 = smul.addr %s715, 8
        %s717 = scalar_lea.vmem %s5, %s716
      $region68: #{full_model_forward.5} parent=51 // pred_fallthru
        _
      // Predicated region
      $region69: #{full_model_forward.5} parent=51 // pred_check
        %p718 = pneg %p198
      $region70: #{full_model_forward.5} parent=51 // pred_check_branch
        %720 = sbr.rel (%p718) target = $region72
      $region71: #{full_model_forward.5} parent=51 // pred_region
        %p721 = scmp.lt.s32.totalorder %s19, 5
        %s722 = scalar_select %p721, %s19, 5
        %s723 = smul.addr %s722, 8
        %s724 = scalar_lea.vmem %s6, %s723
      $region72: #{full_model_forward.5} parent=51 // pred_fallthru
        _
    $region52: #{full_model_forward.5} parent=5 // pred_fallthru
      _
  $region6: #{full_model_forward.5} parent=0 // loop_footer
    %s17 = sadd.s32 1, %s13
  $region7: #{full_model_forward.5} parent=0 // loop_footer_branch
    %12 = sbr.rel target = $region3
  $region8: #{full_model_forward.5} parent=0 // loop_exit
    _

// kernel: full_model_forward.4
$region0: #{full_model_forward.4}
  #allocation0 [shape = 'u32[]', space=smem, size = 0x4, offset = 0x4, fixed_abs, tag = 'smem constant byte address 0x4 - core index']
  #allocation1 [shape = 'u32[144,128]{1,0:T(1,128)}', space=vmem, size = 0x12000, scoped, tag = 'internal scratch']
  %s0 = inlined_call_operand.vmem [shape: f32[6,1,256], index: 0, kind: input, shape index: {}]
  %s1 = inlined_call_operand.vmem [shape: f32[6,3,256], index: 1, kind: input, shape index: {}]
  %s2 = inlined_call_operand.vmem [shape: f32[6,3,256], index: 2, kind: input, shape index: {}]
  %s3 = inlined_call_operand.vmem [shape: f32[6,3,256], index: 3, kind: input, shape index: {}]
  %s4 = inlined_call_operand.vmem [shape: f32[1,3,1], index: 4, kind: input, shape index: {}]
  %s5 = inlined_call_operand.vmem [shape: f32[1,3,1], index: 5, kind: input, shape index: {}]
  %s6 = inlined_call_operand.vmem [shape: f32[32,11], index: 6, kind: input, shape index: {}]
  %s7 = inlined_call_operand.vmem [shape: f32[32,1], index: 7, kind: input, shape index: {}]
  %s8 = inlined_call_operand.vmem [shape: f32[7,32], index: 8, kind: input, shape index: {}]
  %s9 = inlined_call_operand.vmem [shape: f32[7,1], index: 9, kind: input, shape index: {}]
  %s10 = inlined_call_operand.vmem [shape: f32[6,3,256], index: 10, kind: output, shape index: {0}]
  %s11 = inlined_call_operand.vmem [shape: f32[6,3,256], index: 11, kind: output, shape index: {1}]
  %s12 = inlined_call_operand.vmem [shape: f32[6,3,256], index: 12, kind: output, shape index: {2}]
  %s13 = inlined_call_operand.vmem [shape: f32[6,1,256], index: 13, kind: output, shape index: {3}]
  %s14 = inlined_call_operand.vmem [shape: f32[6,1,256], index: 14, kind: output, shape index: {4}]
  %s15 = inlined_call_operand.vmem [shape: f32[6,3,256], index: 15, kind: output, shape index: {5}]
  %s16 = inlined_call_operand.vmem [shape: f32[6,3,256], index: 16, kind: output, shape index: {6}]
  %s17 = inlined_call_operand.vmem [shape: f32[6,3,256], index: 17, kind: output, shape index: {7}]
  %s18 = inlined_call_operand.vmem [shape: f32[48,128], index: 18, kind: output, shape index: {8}]
  %s19 = inlined_call_operand.vmem [shape: f32[48,128], index: 19, kind: output, shape index: {9}]
  %s20 = inlined_call_operand.vmem [shape: f32[48,128], index: 20, kind: output, shape index: {10}]
  %s21 = inlined_call_operand.vmem [shape: f32[48,128], index: 21, kind: output, shape index: {11}]
  %s22 = inlined_call_operand.vmem [shape: f32[48,128], index: 22, kind: output, shape index: {12}]
  %23 = xla_tuple %s10, %s11, %s12, %s13, %s14, %s15, %s16, %s17, %s18, %s19, %s20, %s21, %s22
  %s24 = sld [smem:[#allocation0]]
  $region173: #{full_model_forward.4} parent=0
    _
  %s26 = ssub.s32 1, %s24
  %s27 = scalar_select 0, %s26, %s24
  loop: start=0, step=1, limit=8
  $region2: #{full_model_forward.4} parent=0 // loop_pre_header
    _
  $region3: #{full_model_forward.4} parent=0 // loop_header
    %s29 = sphi 0, %s33
    %p30 = scmp.ge.s32.totalorder %s29, 8
    %s36 = sphi 0, %s48
    %s37 = sphi 0, %s44
    %s38 = sphi 0, %s36
    %s39 = sphi 0, %s37
    %s40 = sphi 0, %s38
    %s41 = sphi 0, %s39
    %s53 = sphi 0, %s55
    %s56 = sphi 0, %s53
    %s57 = sphi 0, %s56
    %s73 = sphi 0, %s57
    %s81 = sphi 0, %s83
    %s84 = sphi 0, %s81
    %s85 = sphi 0, %s84
    %s101 = sphi 0, %s85
    %s109 = sphi 0, %s111
    %s112 = sphi 0, %s109
    %s113 = sphi 0, %s112
    %s129 = sphi 0, %s113
    %s137 = sphi 0, %s139
    %s140 = sphi 0, %s137
    %s141 = sphi 0, %s140
    %s157 = sphi 0, %s141
    %s161 = sphi 0, %s161
    %s163 = sphi 0, %s161
    %s164 = sphi 0, %s163
    %s178 = sphi 0, %s164
    %s182 = sphi 0, %s182
    %s184 = sphi 0, %s182
    %s185 = sphi 0, %s184
    %s199 = sphi 0, %s185
    %s203 = sphi 0, %s203
    %s205 = sphi 0, %s203
    %s206 = sphi 0, %s205
    %s220 = sphi 0, %s206
    %s224 = sphi 0, %s224
    %s226 = sphi 0, %s224
    %s227 = sphi 0, %s226
    %s241 = sphi 0, %s227
    %s245 = sphi 0, %s245
    %s247 = sphi 0, %s245
    %s248 = sphi 0, %s247
    %s262 = sphi 0, %s248
    %s266 = sphi 0, %s266
    %s268 = sphi 0, %s266
    %s269 = sphi 0, %s268
    %s283 = sphi 0, %s269
    %s291 = sphi 0, %s293
    %s294 = sphi 0, %s291
    %s295 = sphi 0, %s294
    %s311 = sphi 0, %s295
    %s319 = sphi 0, %s321
    %s322 = sphi 0, %s319
    %s323 = sphi 0, %s322
    %s339 = sphi 0, %s323
    %s347 = sphi 0, %s349
    %s350 = sphi 0, %s347
    %s351 = sphi 0, %s350
    %s367 = sphi 0, %s351
    %s375 = sphi 0, %s377
    %s378 = sphi 0, %s375
    %s379 = sphi 0, %s378
    %s395 = sphi 0, %s379
    %s403 = sphi 0, %s405
    %s406 = sphi 0, %s403
    %s407 = sphi 0, %s406
    %s423 = sphi 0, %s407
    %s431 = sphi 0, %s433
    %s434 = sphi 0, %s431
    %s435 = sphi 0, %s434
    %s451 = sphi 0, %s435
    %s459 = sphi 0, %s461
    %s462 = sphi 0, %s459
    %s463 = sphi 0, %s462
    %s479 = sphi 0, %s463
    %s487 = sphi 0, %s489
    %s490 = sphi 0, %s487
    %s491 = sphi 0, %s490
    %s507 = sphi 0, %s491
    %s513 = sphi 0, %s515
    %s516 = sphi 0, %s513
    %s517 = sphi 0, %s516
    %s533 = sphi 0, %s517
    %s539 = sphi 0, %s541
    %s542 = sphi 0, %s539
    %s543 = sphi 0, %s542
    %s559 = sphi 0, %s543
    %s565 = sphi 0, %s567
    %s568 = sphi 0, %s565
    %s569 = sphi 0, %s568
    %s585 = sphi 0, %s569
    %s591 = sphi 0, %s593
    %s594 = sphi 0, %s591
    %s595 = sphi 0, %s594
    %s611 = sphi 0, %s595
    %s617 = sphi 0, %s619
    %s620 = sphi 0, %s617
    %s621 = sphi 0, %s620
    %s637 = sphi 0, %s621
  $region4: #{full_model_forward.4} parent=0 // loop_header_branch
    %32 = sbr.rel (%p30) target = $region8
  $region5: #{full_model_forward.4} parent=0 // loop_body
    %s34 = ssub.s32 %s29, 1
    %s35 = ssub.s32 %s29, 2
    %s42 = sadd.s32 1, %s37
    %p43 = scmp.ge.s32.totalorder %s42, 1
    %s44 = scalar_select %p43, 0, %s42
    %s45 = sadd.s32 1, %s36
    %s46 = scalar_select %p43, %s45, %s36
    %p47 = scmp.ge.s32.totalorder %s46, 6
    %s48 = scalar_select %p47, 0, %s46
    %s49 = ssub.s32 %s36, %s48
    %s50 = ssub.s32 %s37, %s44
    %s51 = sor.u32 %s49, %s50
    %p52 = scmp.eq.s32.totalorder %s51, 0
    %s54 = sadd.s32 %s53, 1
    %s55 = scalar_select %p52, %s53, %s54
    %p58 = pneg %p52
    %p59 = scmp.eq.s32.totalorder %s29, 5
    %p60 = por %p58, %p59
    %p61 = scmp.ne.s32.totalorder %s53, %s56
    %p62 = scmp.eq.s32.totalorder %s29, 0
    %p63 = por %p61, %p62
    %p64 = scmp.ne.s32.totalorder %s53, %s56
    %p65 = scmp.eq.s32.totalorder %s34, 5
    %p66 = por %p64, %p65
    %p67 = scmp.ne.s32.totalorder %s56, %s57
    %p68 = scmp.eq.s32.totalorder %s34, 0
    %p69 = por %p67, %p68
    %p70 = scmp.ne.s32.totalorder %s56, %s57
    %p71 = scmp.eq.s32.totalorder %s35, 5
    %p72 = por %p70, %p71
    %p74 = scmp.ne.s32.totalorder %s57, %s73
    %p75 = scmp.eq.s32.totalorder %s35, 0
    %p76 = por %p74, %p75
    %s77 = ssub.s32 %s36, %s48
    %s78 = ssub.s32 %s37, %s44
    %s79 = sor.u32 %s77, %s78
    %p80 = scmp.eq.s32.totalorder %s79, 0
    %s82 = sadd.s32 %s81, 1
    %s83 = scalar_select %p80, %s81, %s82
    %p86 = pneg %p80
    %p87 = scmp.eq.s32.totalorder %s29, 5
    %p88 = por %p86, %p87
    %p89 = scmp.ne.s32.totalorder %s81, %s84
    %p90 = scmp.eq.s32.totalorder %s29, 0
    %p91 = por %p89, %p90
    %p92 = scmp.ne.s32.totalorder %s81, %s84
    %p93 = scmp.eq.s32.totalorder %s34, 5
    %p94 = por %p92, %p93
    %p95 = scmp.ne.s32.totalorder %s84, %s85
    %p96 = scmp.eq.s32.totalorder %s34, 0
    %p97 = por %p95, %p96
    %p98 = scmp.ne.s32.totalorder %s84, %s85
    %p99 = scmp.eq.s32.totalorder %s35, 5
    %p100 = por %p98, %p99
    %p102 = scmp.ne.s32.totalorder %s85, %s101
    %p103 = scmp.eq.s32.totalorder %s35, 0
    %p104 = por %p102, %p103
    %s105 = ssub.s32 %s36, %s48
    %s106 = ssub.s32 %s37, %s44
    %s107 = sor.u32 %s105, %s106
    %p108 = scmp.eq.s32.totalorder %s107, 0
    %s110 = sadd.s32 %s109, 1
    %s111 = scalar_select %p108, %s109, %s110
    %p114 = pneg %p108
    %p115 = scmp.eq.s32.totalorder %s29, 5
    %p116 = por %p114, %p115
    %p117 = scmp.ne.s32.totalorder %s109, %s112
    %p118 = scmp.eq.s32.totalorder %s29, 0
    %p119 = por %p117, %p118
    %p120 = scmp.ne.s32.totalorder %s109, %s112
    %p121 = scmp.eq.s32.totalorder %s34, 5
    %p122 = por %p120, %p121
    %p123 = scmp.ne.s32.totalorder %s112, %s113
    %p124 = scmp.eq.s32.totalorder %s34, 0
    %p125 = por %p123, %p124
    %p126 = scmp.ne.s32.totalorder %s112, %s113
    %p127 = scmp.eq.s32.totalorder %s35, 5
    %p128 = por %p126, %p127
    %p130 = scmp.ne.s32.totalorder %s113, %s129
    %p131 = scmp.eq.s32.totalorder %s35, 0
    %p132 = por %p130, %p131
    %s133 = ssub.s32 %s36, %s48
    %s134 = ssub.s32 %s37, %s44
    %s135 = sor.u32 %s133, %s134
    %p136 = scmp.eq.s32.totalorder %s135, 0
    %s138 = sadd.s32 %s137, 1
    %s139 = scalar_select %p136, %s137, %s138
    %p142 = pneg %p136
    %p143 = scmp.eq.s32.totalorder %s29, 5
    %p144 = por %p142, %p143
    %p145 = scmp.ne.s32.totalorder %s137, %s140
    %p146 = scmp.eq.s32.totalorder %s29, 0
    %p147 = por %p145, %p146
    %p148 = scmp.ne.s32.totalorder %s137, %s140
    %p149 = scmp.eq.s32.totalorder %s34, 5
    %p150 = por %p148, %p149
    %p151 = scmp.ne.s32.totalorder %s140, %s141
    %p152 = scmp.eq.s32.totalorder %s34, 0
    %p153 = por %p151, %p152
    %p154 = scmp.ne.s32.totalorder %s140, %s141
    %p155 = scmp.eq.s32.totalorder %s35, 5
    %p156 = por %p154, %p155
    %p158 = scmp.ne.s32.totalorder %s141, %s157
    %p159 = scmp.eq.s32.totalorder %s35, 0
    %p160 = por %p158, %p159
    %s162 = sadd.s32 %s161, 1
    %p165 = scmp.eq.s32.totalorder %s29, 5
    %p166 = scmp.ne.s32.totalorder %s161, %s163
    %p167 = scmp.eq.s32.totalorder %s29, 0
    %p168 = por %p166, %p167
    %p169 = scmp.ne.s32.totalorder %s161, %s163
    %p170 = scmp.eq.s32.totalorder %s34, 5
    %p171 = por %p169, %p170
    %p172 = scmp.ne.s32.totalorder %s163, %s164
    %p173 = scmp.eq.s32.totalorder %s34, 0
    %p174 = por %p172, %p173
    %p175 = scmp.ne.s32.totalorder %s163, %s164
    %p176 = scmp.eq.s32.totalorder %s35, 5
    %p177 = por %p175, %p176
    %p179 = scmp.ne.s32.totalorder %s164, %s178
    %p180 = scmp.eq.s32.totalorder %s35, 0
    %p181 = por %p179, %p180
    %s183 = sadd.s32 %s182, 1
    %p186 = scmp.eq.s32.totalorder %s29, 5
    %p187 = scmp.ne.s32.totalorder %s182, %s184
    %p188 = scmp.eq.s32.totalorder %s29, 0
    %p189 = por %p187, %p188
    %p190 = scmp.ne.s32.totalorder %s182, %s184
    %p191 = scmp.eq.s32.totalorder %s34, 5
    %p192 = por %p190, %p191
    %p193 = scmp.ne.s32.totalorder %s184, %s185
    %p194 = scmp.eq.s32.totalorder %s34, 0
    %p195 = por %p193, %p194
    %p196 = scmp.ne.s32.totalorder %s184, %s185
    %p197 = scmp.eq.s32.totalorder %s35, 5
    %p198 = por %p196, %p197
    %p200 = scmp.ne.s32.totalorder %s185, %s199
    %p201 = scmp.eq.s32.totalorder %s35, 0
    %p202 = por %p200, %p201
    %s204 = sadd.s32 %s203, 1
    %p207 = scmp.eq.s32.totalorder %s29, 5
    %p208 = scmp.ne.s32.totalorder %s203, %s205
    %p209 = scmp.eq.s32.totalorder %s29, 0
    %p210 = por %p208, %p209
    %p211 = scmp.ne.s32.totalorder %s203, %s205
    %p212 = scmp.eq.s32.totalorder %s34, 5
    %p213 = por %p211, %p212
    %p214 = scmp.ne.s32.totalorder %s205, %s206
    %p215 = scmp.eq.s32.totalorder %s34, 0
    %p216 = por %p214, %p215
    %p217 = scmp.ne.s32.totalorder %s205, %s206
    %p218 = scmp.eq.s32.totalorder %s35, 5
    %p219 = por %p217, %p218
    %p221 = scmp.ne.s32.totalorder %s206, %s220
    %p222 = scmp.eq.s32.totalorder %s35, 0
    %p223 = por %p221, %p222
    %s225 = sadd.s32 %s224, 1
    %p228 = scmp.eq.s32.totalorder %s29, 5
    %p229 = scmp.ne.s32.totalorder %s224, %s226
    %p230 = scmp.eq.s32.totalorder %s29, 0
    %p231 = por %p229, %p230
    %p232 = scmp.ne.s32.totalorder %s224, %s226
    %p233 = scmp.eq.s32.totalorder %s34, 5
    %p234 = por %p232, %p233
    %p235 = scmp.ne.s32.totalorder %s226, %s227
    %p236 = scmp.eq.s32.totalorder %s34, 0
    %p237 = por %p235, %p236
    %p238 = scmp.ne.s32.totalorder %s226, %s227
    %p239 = scmp.eq.s32.totalorder %s35, 5
    %p240 = por %p238, %p239
    %p242 = scmp.ne.s32.totalorder %s227, %s241
    %p243 = scmp.eq.s32.totalorder %s35, 0
    %p244 = por %p242, %p243
    %s246 = sadd.s32 %s245, 1
    %p249 = scmp.eq.s32.totalorder %s29, 5
    %p250 = scmp.ne.s32.totalorder %s245, %s247
    %p251 = scmp.eq.s32.totalorder %s29, 0
    %p252 = por %p250, %p251
    %p253 = scmp.ne.s32.totalorder %s245, %s247
    %p254 = scmp.eq.s32.totalorder %s34, 5
    %p255 = por %p253, %p254
    %p256 = scmp.ne.s32.totalorder %s247, %s248
    %p257 = scmp.eq.s32.totalorder %s34, 0
    %p258 = por %p256, %p257
    %p259 = scmp.ne.s32.totalorder %s247, %s248
    %p260 = scmp.eq.s32.totalorder %s35, 5
    %p261 = por %p259, %p260
    %p263 = scmp.ne.s32.totalorder %s248, %s262
    %p264 = scmp.eq.s32.totalorder %s35, 0
    %p265 = por %p263, %p264
    %s267 = sadd.s32 %s266, 1
    %p270 = scmp.eq.s32.totalorder %s29, 5
    %p271 = scmp.ne.s32.totalorder %s266, %s268
    %p272 = scmp.eq.s32.totalorder %s29, 0
    %p273 = por %p271, %p272
    %p274 = scmp.ne.s32.totalorder %s266, %s268
    %p275 = scmp.eq.s32.totalorder %s34, 5
    %p276 = por %p274, %p275
    %p277 = scmp.ne.s32.totalorder %s268, %s269
    %p278 = scmp.eq.s32.totalorder %s34, 0
    %p279 = por %p277, %p278
    %p280 = scmp.ne.s32.totalorder %s268, %s269
    %p281 = scmp.eq.s32.totalorder %s35, 5
    %p282 = por %p280, %p281
    %p284 = scmp.ne.s32.totalorder %s269, %s283
    %p285 = scmp.eq.s32.totalorder %s35, 0
    %p286 = por %p284, %p285
    %s287 = ssub.s32 %s36, %s48
    %s288 = ssub.s32 %s37, %s44
    %s289 = sor.u32 %s287, %s288
    %p290 = scmp.eq.s32.totalorder %s289, 0
    %s292 = sadd.s32 %s291, 1
    %s293 = scalar_select %p290, %s291, %s292
    %p296 = pneg %p290
    %p297 = scmp.eq.s32.totalorder %s29, 5
    %p298 = por %p296, %p297
    %p299 = scmp.ne.s32.totalorder %s291, %s294
    %p300 = scmp.eq.s32.totalorder %s29, 0
    %p301 = por %p299, %p300
    %p302 = scmp.ne.s32.totalorder %s291, %s294
    %p303 = scmp.eq.s32.totalorder %s34, 5
    %p304 = por %p302, %p303
    %p305 = scmp.ne.s32.totalorder %s294, %s295
    %p306 = scmp.eq.s32.totalorder %s34, 0
    %p307 = por %p305, %p306
    %p308 = scmp.ne.s32.totalorder %s294, %s295
    %p309 = scmp.eq.s32.totalorder %s35, 5
    %p310 = por %p308, %p309
    %p312 = scmp.ne.s32.totalorder %s295, %s311
    %p313 = scmp.eq.s32.totalorder %s35, 0
    %p314 = por %p312, %p313
    %s315 = ssub.s32 %s36, %s48
    %s316 = ssub.s32 %s37, %s44
    %s317 = sor.u32 %s315, %s316
    %p318 = scmp.eq.s32.totalorder %s317, 0
    %s320 = sadd.s32 %s319, 1
    %s321 = scalar_select %p318, %s319, %s320
    %p324 = pneg %p318
    %p325 = scmp.eq.s32.totalorder %s29, 5
    %p326 = por %p324, %p325
    %p327 = scmp.ne.s32.totalorder %s319, %s322
    %p328 = scmp.eq.s32.totalorder %s29, 0
    %p329 = por %p327, %p328
    %p330 = scmp.ne.s32.totalorder %s319, %s322
    %p331 = scmp.eq.s32.totalorder %s34, 5
    %p332 = por %p330, %p331
    %p333 = scmp.ne.s32.totalorder %s322, %s323
    %p334 = scmp.eq.s32.totalorder %s34, 0
    %p335 = por %p333, %p334
    %p336 = scmp.ne.s32.totalorder %s322, %s323
    %p337 = scmp.eq.s32.totalorder %s35, 5
    %p338 = por %p336, %p337
    %p340 = scmp.ne.s32.totalorder %s323, %s339
    %p341 = scmp.eq.s32.totalorder %s35, 0
    %p342 = por %p340, %p341
    %s343 = ssub.s32 %s36, %s48
    %s344 = ssub.s32 %s37, %s44
    %s345 = sor.u32 %s343, %s344
    %p346 = scmp.eq.s32.totalorder %s345, 0
    %s348 = sadd.s32 %s347, 1
    %s349 = scalar_select %p346, %s347, %s348
    %p352 = pneg %p346
    %p353 = scmp.eq.s32.totalorder %s29, 5
    %p354 = por %p352, %p353
    %p355 = scmp.ne.s32.totalorder %s347, %s350
    %p356 = scmp.eq.s32.totalorder %s29, 0
    %p357 = por %p355, %p356
    %p358 = scmp.ne.s32.totalorder %s347, %s350
    %p359 = scmp.eq.s32.totalorder %s34, 5
    %p360 = por %p358, %p359
    %p361 = scmp.ne.s32.totalorder %s350, %s351
    %p362 = scmp.eq.s32.totalorder %s34, 0
    %p363 = por %p361, %p362
    %p364 = scmp.ne.s32.totalorder %s350, %s351
    %p365 = scmp.eq.s32.totalorder %s35, 5
    %p366 = por %p364, %p365
    %p368 = scmp.ne.s32.totalorder %s351, %s367
    %p369 = scmp.eq.s32.totalorder %s35, 0
    %p370 = por %p368, %p369
    %s371 = ssub.s32 %s36, %s48
    %s372 = ssub.s32 %s37, %s44
    %s373 = sor.u32 %s371, %s372
    %p374 = scmp.eq.s32.totalorder %s373, 0
    %s376 = sadd.s32 %s375, 1
    %s377 = scalar_select %p374, %s375, %s376
    %p380 = pneg %p374
    %p381 = scmp.eq.s32.totalorder %s29, 5
    %p382 = por %p380, %p381
    %p383 = scmp.ne.s32.totalorder %s375, %s378
    %p384 = scmp.eq.s32.totalorder %s29, 0
    %p385 = por %p383, %p384
    %p386 = scmp.ne.s32.totalorder %s375, %s378
    %p387 = scmp.eq.s32.totalorder %s34, 5
    %p388 = por %p386, %p387
    %p389 = scmp.ne.s32.totalorder %s378, %s379
    %p390 = scmp.eq.s32.totalorder %s34, 0
    %p391 = por %p389, %p390
    %p392 = scmp.ne.s32.totalorder %s378, %s379
    %p393 = scmp.eq.s32.totalorder %s35, 5
    %p394 = por %p392, %p393
    %p396 = scmp.ne.s32.totalorder %s379, %s395
    %p397 = scmp.eq.s32.totalorder %s35, 0
    %p398 = por %p396, %p397
    %s399 = ssub.s32 %s36, %s48
    %s400 = ssub.s32 %s37, %s44
    %s401 = sor.u32 %s399, %s400
    %p402 = scmp.eq.s32.totalorder %s401, 0
    %s404 = sadd.s32 %s403, 1
    %s405 = scalar_select %p402, %s403, %s404
    %p408 = pneg %p402
    %p409 = scmp.eq.s32.totalorder %s29, 5
    %p410 = por %p408, %p409
    %p411 = scmp.ne.s32.totalorder %s403, %s406
    %p412 = scmp.eq.s32.totalorder %s29, 0
    %p413 = por %p411, %p412
    %p414 = scmp.ne.s32.totalorder %s403, %s406
    %p415 = scmp.eq.s32.totalorder %s34, 5
    %p416 = por %p414, %p415
    %p417 = scmp.ne.s32.totalorder %s406, %s407
    %p418 = scmp.eq.s32.totalorder %s34, 0
    %p419 = por %p417, %p418
    %p420 = scmp.ne.s32.totalorder %s406, %s407
    %p421 = scmp.eq.s32.totalorder %s35, 5
    %p422 = por %p420, %p421
    %p424 = scmp.ne.s32.totalorder %s407, %s423
    %p425 = scmp.eq.s32.totalorder %s35, 0
    %p426 = por %p424, %p425
    %s427 = ssub.s32 %s36, %s48
    %s428 = ssub.s32 %s37, %s44
    %s429 = sor.u32 %s427, %s428
    %p430 = scmp.eq.s32.totalorder %s429, 0
    %s432 = sadd.s32 %s431, 1
    %s433 = scalar_select %p430, %s431, %s432
    %p436 = pneg %p430
    %p437 = scmp.eq.s32.totalorder %s29, 5
    %p438 = por %p436, %p437
    %p439 = scmp.ne.s32.totalorder %s431, %s434
    %p440 = scmp.eq.s32.totalorder %s29, 0
    %p441 = por %p439, %p440
    %p442 = scmp.ne.s32.totalorder %s431, %s434
    %p443 = scmp.eq.s32.totalorder %s34, 5
    %p444 = por %p442, %p443
    %p445 = scmp.ne.s32.totalorder %s434, %s435
    %p446 = scmp.eq.s32.totalorder %s34, 0
    %p447 = por %p445, %p446
    %p448 = scmp.ne.s32.totalorder %s434, %s435
    %p449 = scmp.eq.s32.totalorder %s35, 5
    %p450 = por %p448, %p449
    %p452 = scmp.ne.s32.totalorder %s435, %s451
    %p453 = scmp.eq.s32.totalorder %s35, 0
    %p454 = por %p452, %p453
    %s455 = ssub.s32 %s36, %s48
    %s456 = ssub.s32 %s37, %s44
    %s457 = sor.u32 %s455, %s456
    %p458 = scmp.eq.s32.totalorder %s457, 0
    %s460 = sadd.s32 %s459, 1
    %s461 = scalar_select %p458, %s459, %s460
    %p464 = pneg %p458
    %p465 = scmp.eq.s32.totalorder %s29, 5
    %p466 = por %p464, %p465
    %p467 = scmp.ne.s32.totalorder %s459, %s462
    %p468 = scmp.eq.s32.totalorder %s29, 0
    %p469 = por %p467, %p468
    %p470 = scmp.ne.s32.totalorder %s459, %s462
    %p471 = scmp.eq.s32.totalorder %s34, 5
    %p472 = por %p470, %p471
    %p473 = scmp.ne.s32.totalorder %s462, %s463
    %p474 = scmp.eq.s32.totalorder %s34, 0
    %p475 = por %p473, %p474
    %p476 = scmp.ne.s32.totalorder %s462, %s463
    %p477 = scmp.eq.s32.totalorder %s35, 5
    %p478 = por %p476, %p477
    %p480 = scmp.ne.s32.totalorder %s463, %s479
    %p481 = scmp.eq.s32.totalorder %s35, 0
    %p482 = por %p480, %p481
    %s483 = ssub.s32 %s36, %s48
    %s484 = ssub.s32 %s37, %s44
    %s485 = sor.u32 %s483, %s484
    %p486 = scmp.eq.s32.totalorder %s485, 0
    %s488 = sadd.s32 %s487, 1
    %s489 = scalar_select %p486, %s487, %s488
    %p492 = pneg %p486
    %p493 = scmp.eq.s32.totalorder %s29, 5
    %p494 = por %p492, %p493
    %p495 = scmp.ne.s32.totalorder %s487, %s490
    %p496 = scmp.eq.s32.totalorder %s29, 0
    %p497 = por %p495, %p496
    %p498 = scmp.ne.s32.totalorder %s487, %s490
    %p499 = scmp.eq.s32.totalorder %s34, 5
    %p500 = por %p498, %p499
    %p501 = scmp.ne.s32.totalorder %s490, %s491
    %p502 = scmp.eq.s32.totalorder %s34, 0
    %p503 = por %p501, %p502
    %p504 = scmp.ne.s32.totalorder %s490, %s491
    %p505 = scmp.eq.s32.totalorder %s35, 5
    %p506 = por %p504, %p505
    %p508 = scmp.ne.s32.totalorder %s491, %s507
    %p509 = scmp.eq.s32.totalorder %s35, 0
    %p510 = por %p508, %p509
    %s511 = ssub.s32 %s36, %s48
    %p512 = scmp.eq.s32.totalorder %s511, 0
    %s514 = sadd.s32 %s513, 1
    %s515 = scalar_select %p512, %s513, %s514
    %p518 = pneg %p512
    %p519 = scmp.eq.s32.totalorder %s29, 5
    %p520 = por %p518, %p519
    %p521 = scmp.ne.s32.totalorder %s513, %s516
    %p522 = scmp.eq.s32.totalorder %s29, 0
    %p523 = por %p521, %p522
    %p524 = scmp.ne.s32.totalorder %s513, %s516
    %p525 = scmp.eq.s32.totalorder %s34, 5
    %p526 = por %p524, %p525
    %p527 = scmp.ne.s32.totalorder %s516, %s517
    %p528 = scmp.eq.s32.totalorder %s34, 0
    %p529 = por %p527, %p528
    %p530 = scmp.ne.s32.totalorder %s516, %s517
    %p531 = scmp.eq.s32.totalorder %s35, 5
    %p532 = por %p530, %p531
    %p534 = scmp.ne.s32.totalorder %s517, %s533
    %p535 = scmp.eq.s32.totalorder %s35, 0
    %p536 = por %p534, %p535
    %s537 = ssub.s32 %s36, %s48
    %p538 = scmp.eq.s32.totalorder %s537, 0
    %s540 = sadd.s32 %s539, 1
    %s541 = scalar_select %p538, %s539, %s540
    %p544 = pneg %p538
    %p545 = scmp.eq.s32.totalorder %s29, 5
    %p546 = por %p544, %p545
    %p547 = scmp.ne.s32.totalorder %s539, %s542
    %p548 = scmp.eq.s32.totalorder %s29, 0
    %p549 = por %p547, %p548
    %p550 = scmp.ne.s32.totalorder %s539, %s542
    %p551 = scmp.eq.s32.totalorder %s34, 5
    %p552 = por %p550, %p551
    %p553 = scmp.ne.s32.totalorder %s542, %s543
    %p554 = scmp.eq.s32.totalorder %s34, 0
    %p555 = por %p553, %p554
    %p556 = scmp.ne.s32.totalorder %s542, %s543
    %p557 = scmp.eq.s32.totalorder %s35, 5
    %p558 = por %p556, %p557
    %p560 = scmp.ne.s32.totalorder %s543, %s559
    %p561 = scmp.eq.s32.totalorder %s35, 0
    %p562 = por %p560, %p561
    %s563 = ssub.s32 %s36, %s48
    %p564 = scmp.eq.s32.totalorder %s563, 0
    %s566 = sadd.s32 %s565, 1
    %s567 = scalar_select %p564, %s565, %s566
    %p570 = pneg %p564
    %p571 = scmp.eq.s32.totalorder %s29, 5
    %p572 = por %p570, %p571
    %p573 = scmp.ne.s32.totalorder %s565, %s568
    %p574 = scmp.eq.s32.totalorder %s29, 0
    %p575 = por %p573, %p574
    %p576 = scmp.ne.s32.totalorder %s565, %s568
    %p577 = scmp.eq.s32.totalorder %s34, 5
    %p578 = por %p576, %p577
    %p579 = scmp.ne.s32.totalorder %s568, %s569
    %p580 = scmp.eq.s32.totalorder %s34, 0
    %p581 = por %p579, %p580
    %p582 = scmp.ne.s32.totalorder %s568, %s569
    %p583 = scmp.eq.s32.totalorder %s35, 5
    %p584 = por %p582, %p583
    %p586 = scmp.ne.s32.totalorder %s569, %s585
    %p587 = scmp.eq.s32.totalorder %s35, 0
    %p588 = por %p586, %p587
    %s589 = ssub.s32 %s36, %s48
    %p590 = scmp.eq.s32.totalorder %s589, 0
    %s592 = sadd.s32 %s591, 1
    %s593 = scalar_select %p590, %s591, %s592
    %p596 = pneg %p590
    %p597 = scmp.eq.s32.totalorder %s29, 5
    %p598 = por %p596, %p597
    %p599 = scmp.ne.s32.totalorder %s591, %s594
    %p600 = scmp.eq.s32.totalorder %s29, 0
    %p601 = por %p599, %p600
    %p602 = scmp.ne.s32.totalorder %s591, %s594
    %p603 = scmp.eq.s32.totalorder %s34, 5
    %p604 = por %p602, %p603
    %p605 = scmp.ne.s32.totalorder %s594, %s595
    %p606 = scmp.eq.s32.totalorder %s34, 0
    %p607 = por %p605, %p606
    %p608 = scmp.ne.s32.totalorder %s594, %s595
    %p609 = scmp.eq.s32.totalorder %s35, 5
    %p610 = por %p608, %p609
    %p612 = scmp.ne.s32.totalorder %s595, %s611
    %p613 = scmp.eq.s32.totalorder %s35, 0
    %p614 = por %p612, %p613
    %s615 = ssub.s32 %s36, %s48
    %p616 = scmp.eq.s32.totalorder %s615, 0
    %s618 = sadd.s32 %s617, 1
    %s619 = scalar_select %p616, %s617, %s618
    %p622 = pneg %p616
    %p623 = scmp.eq.s32.totalorder %s29, 5
    %p624 = por %p622, %p623
    %p625 = scmp.ne.s32.totalorder %s617, %s620
    %p626 = scmp.eq.s32.totalorder %s29, 0
    %p627 = por %p625, %p626
    %p628 = scmp.ne.s32.totalorder %s617, %s620
    %p629 = scmp.eq.s32.totalorder %s34, 5
    %p630 = por %p628, %p629
    %p631 = scmp.ne.s32.totalorder %s620, %s621
    %p632 = scmp.eq.s32.totalorder %s34, 0
    %p633 = por %p631, %p632
    %p634 = scmp.ne.s32.totalorder %s620, %s621
    %p635 = scmp.eq.s32.totalorder %s35, 5
    %p636 = por %p634, %p635
    %p638 = scmp.ne.s32.totalorder %s621, %s637
    %p639 = scmp.eq.s32.totalorder %s35, 0
    %p640 = por %p638, %p639
    %p641 = scmp.le.s32.totalorder 1, %s29
    %p642 = scmp.lt.s32.totalorder %s29, 7
    %p643 = pnand %p641, %p642
    %p644 = pneg %p643
    // Predicated region
    $region9: #{full_model_forward.4} parent=5 // pred_check
      _
    $region10: #{full_model_forward.4} parent=5 // pred_check_branch
      %646 = sbr.rel (%p643) target = $region12
    $region11: #{full_model_forward.4} parent=5 // pred_region
      %s647 = ssub.s32 %s29, 1
      // Predicated region
      $region13: #{full_model_forward.4} parent=11 // pred_check
        %p648 = pneg %p174
      $region14: #{full_model_forward.4} parent=11 // pred_check_branch
        %650 = sbr.rel (%p648) target = $region16
      $region15: #{full_model_forward.4} parent=11 // pred_region
        _
      $region16: #{full_model_forward.4} parent=11 // pred_fallthru
        _
      // Predicated region
      $region17: #{full_model_forward.4} parent=11 // pred_check
        %p651 = pneg %p195
      $region18: #{full_model_forward.4} parent=11 // pred_check_branch
        %653 = sbr.rel (%p651) target = $region20
      $region19: #{full_model_forward.4} parent=11 // pred_region
        _
      $region20: #{full_model_forward.4} parent=11 // pred_fallthru
        _
      // Predicated region
      $region21: #{full_model_forward.4} parent=11 // pred_check
        %p654 = pneg %p216
      $region22: #{full_model_forward.4} parent=11 // pred_check_branch
        %656 = sbr.rel (%p654) target = $region24
      $region23: #{full_model_forward.4} parent=11 // pred_region
        _
      $region24: #{full_model_forward.4} parent=11 // pred_fallthru
        _
      // Predicated region
      $region25: #{full_model_forward.4} parent=11 // pred_check
        %p657 = pneg %p237
      $region26: #{full_model_forward.4} parent=11 // pred_check_branch
        %659 = sbr.rel (%p657) target = $region28
      $region27: #{full_model_forward.4} parent=11 // pred_region
        _
      $region28: #{full_model_forward.4} parent=11 // pred_fallthru
        _
      // Predicated region
      $region29: #{full_model_forward.4} parent=11 // pred_check
        %p660 = pneg %p258
      $region30: #{full_model_forward.4} parent=11 // pred_check_branch
        %662 = sbr.rel (%p660) target = $region32
      $region31: #{full_model_forward.4} parent=11 // pred_region
        _
      $region32: #{full_model_forward.4} parent=11 // pred_fallthru
        _
      // Predicated region
      $region33: #{full_model_forward.4} parent=11 // pred_check
        %p663 = pneg %p279
      $region34: #{full_model_forward.4} parent=11 // pred_check_branch
        %665 = sbr.rel (%p663) target = $region36
      $region35: #{full_model_forward.4} parent=11 // pred_region
        _
      $region36: #{full_model_forward.4} parent=11 // pred_fallthru
        _
    $region12: #{full_model_forward.4} parent=5 // pred_fallthru
      _
    %p666 = scmp.lt.s32.totalorder %s29, 6
    // Predicated region
    $region37: #{full_model_forward.4} parent=5 // pred_check
      %p667 = pneg %p666
    $region38: #{full_model_forward.4} parent=5 // pred_check_branch
      %669 = sbr.rel (%p667) target = $region40
    $region39: #{full_model_forward.4} parent=5 // pred_region
      // Predicated region
      $region41: #{full_model_forward.4} parent=39 // pred_check
        %p670 = pneg %p63
      $region42: #{full_model_forward.4} parent=39 // pred_check_branch
        %672 = sbr.rel (%p670) target = $region44
      $region43: #{full_model_forward.4} parent=39 // pred_region
        %s673 = smul.u32 2, %s37
        %p674 = scmp.lt.s32.totalorder %s36, 5
        %s675 = scalar_select %p674, %s36, 5
        %p676 = scmp.lt.s32.totalorder %s673, 1
        %s677 = scalar_select %p676, %s673, 1
        %s678 = smul.addr %s675, 2
        %s679 = sadd.s32 %s677, %s678
        %s680 = scalar_lea.vmem %s0, %s679
        %s681 = smul.u32 2, %s37
      $region44: #{full_model_forward.4} parent=39 // pred_fallthru
        _
      // Predicated region
      $region45: #{full_model_forward.4} parent=39 // pred_check
        %p682 = pneg %p91
      $region46: #{full_model_forward.4} parent=39 // pred_check_branch
        %684 = sbr.rel (%p682) target = $region48
      $region47: #{full_model_forward.4} parent=39 // pred_region
        %s685 = smul.u32 2, %s37
        %p686 = scmp.lt.s32.totalorder %s36, 5
        %s687 = scalar_select %p686, %s36, 5
        %p688 = scmp.lt.s32.totalorder %s685, 1
        %s689 = scalar_select %p688, %s685, 1
        %s690 = smul.addr %s687, 2
        %s691 = sadd.s32 %s689, %s690
        %s692 = smul.addr %s691, 4
        %s693 = scalar_lea.vmem %s1, %s692
        %s694 = smul.u32 2, %s37
      $region48: #{full_model_forward.4} parent=39 // pred_fallthru
        _
      // Predicated region
      $region49: #{full_model_forward.4} parent=39 // pred_check
        %p695 = pneg %p119
      $region50: #{full_model_forward.4} parent=39 // pred_check_branch
        %697 = sbr.rel (%p695) target = $region52
      $region51: #{full_model_forward.4} parent=39 // pred_region
        %s698 = smul.u32 2, %s37
        %p699 = scmp.lt.s32.totalorder %s36, 5
        %s700 = scalar_select %p699, %s36, 5
        %p701 = scmp.lt.s32.totalorder %s698, 1
        %s702 = scalar_select %p701, %s698, 1
        %s703 = smul.addr %s700, 2
        %s704 = sadd.s32 %s702, %s703
        %s705 = smul.addr %s704, 4
        %s706 = scalar_lea.vmem %s2, %s705
        %s707 = smul.u32 2, %s37
      $region52: #{full_model_forward.4} parent=39 // pred_fallthru
        _
      // Predicated region
      $region53: #{full_model_forward.4} parent=39 // pred_check
        %p708 = pneg %p147
      $region54: #{full_model_forward.4} parent=39 // pred_check_branch
        %710 = sbr.rel (%p708) target = $region56
      $region55: #{full_model_forward.4} parent=39 // pred_region
        %s711 = smul.u32 2, %s37
        %p712 = scmp.lt.s32.totalorder %s36, 5
        %s713 = scalar_select %p712, %s36, 5
        %p714 = scmp.lt.s32.totalorder %s711, 1
        %s715 = scalar_select %p714, %s711, 1
        %s716 = smul.addr %s713, 2
        %s717 = sadd.s32 %s715, %s716
        %s718 = smul.addr %s717, 4
        %s719 = scalar_lea.vmem %s3, %s718
        %s720 = smul.u32 2, %s37
      $region56: #{full_model_forward.4} parent=39 // pred_fallthru
        _
    $region40: #{full_model_forward.4} parent=5 // pred_fallthru
      _
    %p721 = scmp.le.s32.totalorder 1, %s29
    %p722 = scmp.lt.s32.totalorder %s29, 7
    %p723 = pnand %p721, %p722
    %p724 = pneg %p723
    // Predicated region
    $region57: #{full_model_forward.4} parent=5 // pred_check
      _
    $region58: #{full_model_forward.4} parent=5 // pred_check_branch
      %726 = sbr.rel (%p723) target = $region60
    $region59: #{full_model_forward.4} parent=5 // pred_region
      %s727 = ssub.s32 %s29, 1
      %s728 = smul.u32 2, %s39
      %p729 = scmp.lt.s32.totalorder %s38, 5
      %s730 = scalar_select %p729, %s38, 5
      %p731 = scmp.lt.s32.totalorder %s728, 1
      %s732 = scalar_select %p731, %s728, 1
      %s733 = smul.addr %s730, 2
      %s734 = sadd.s32 %s732, %s733
      %s735 = scalar_lea.vmem %s0, %s734
      %p736 = pneg %p69
      %p737 = pneg %p66
      %s738 = smul.u32 2, %s39
      %p739 = scmp.lt.s32.totalorder %s38, 5
      %s740 = scalar_select %p739, %s38, 5
      %p741 = scmp.lt.s32.totalorder %s738, 1
      %s742 = scalar_select %p741, %s738, 1
      %s743 = smul.addr %s740, 2
      %s744 = sadd.s32 %s742, %s743
      %s745 = smul.addr %s744, 4
      %s746 = scalar_lea.vmem %s1, %s745
      %p747 = pneg %p97
      %p748 = pneg %p94
      %s749 = smul.u32 2, %s39
      %p750 = scmp.lt.s32.totalorder %s38, 5
      %s751 = scalar_select %p750, %s38, 5
      %p752 = scmp.lt.s32.totalorder %s749, 1
      %s753 = scalar_select %p752, %s749, 1
      %s754 = smul.addr %s751, 2
      %s755 = sadd.s32 %s753, %s754
      %s756 = smul.addr %s755, 4
      %s757 = scalar_lea.vmem %s2, %s756
      %p758 = pneg %p125
      %p759 = pneg %p122
      %s760 = smul.u32 2, %s39
      %p761 = scmp.lt.s32.totalorder %s38, 5
      %s762 = scalar_select %p761, %s38, 5
      %p763 = scmp.lt.s32.totalorder %s760, 1
      %s764 = scalar_select %p763, %s760, 1
      %s765 = smul.addr %s762, 2
      %s766 = sadd.s32 %s764, %s765
      %s767 = smul.addr %s766, 4
      %s768 = scalar_lea.vmem %s3, %s767
      %p769 = pneg %p153
      %p770 = pneg %p150
      %p771 = pneg %p174
      %p772 = pneg %p171
      %p773 = pneg %p195
      %p774 = pneg %p192
      %p775 = pneg %p216
      %p776 = pneg %p213
      %p777 = pneg %p237
      %p778 = pneg %p234
      %p779 = pneg %p258
      %p780 = pneg %p255
      %p781 = pneg %p279
      %p782 = pneg %p276
      %p783 = pneg %p307
      %p784 = pneg %p304
      %s785 = smul.u32 2, %s39
      %p786 = scmp.lt.s32.totalorder %s38, 5
      %s787 = scalar_select %p786, %s38, 5
      %p788 = scmp.lt.s32.totalorder %s785, 1
      %s789 = scalar_select %p788, %s785, 1
      %s790 = smul.addr %s787, 2
      %s791 = sadd.s32 %s789, %s790
      %s792 = smul.addr %s791, 4
      %s793 = scalar_lea.vmem %s10, %s792
      %p794 = pneg %p335
      %p795 = pneg %p332
      %s796 = smul.u32 2, %s39
      %p797 = scmp.lt.s32.totalorder %s38, 5
      %s798 = scalar_select %p797, %s38, 5
      %p799 = scmp.lt.s32.totalorder %s796, 1
      %s800 = scalar_select %p799, %s796, 1
      %s801 = smul.addr %s798, 2
      %s802 = sadd.s32 %s800, %s801
      %s803 = smul.addr %s802, 4
      %s804 = scalar_lea.vmem %s11, %s803
      %p805 = pneg %p363
      %p806 = pneg %p360
      %s807 = smul.u32 2, %s39
      %p808 = scmp.lt.s32.totalorder %s38, 5
      %s809 = scalar_select %p808, %s38, 5
      %p810 = scmp.lt.s32.totalorder %s807, 1
      %s811 = scalar_select %p810, %s807, 1
      %s812 = smul.addr %s809, 2
      %s813 = sadd.s32 %s811, %s812
      %s814 = smul.addr %s813, 4
      %s815 = scalar_lea.vmem %s12, %s814
      %p816 = pneg %p391
      %p817 = pneg %p388
      %s818 = smul.u32 2, %s39
      %p819 = scmp.lt.s32.totalorder %s38, 5
      %s820 = scalar_select %p819, %s38, 5
      %p821 = scmp.lt.s32.totalorder %s818, 1
      %s822 = scalar_select %p821, %s818, 1
      %s823 = smul.addr %s820, 2
      %s824 = sadd.s32 %s822, %s823
      %s825 = scalar_lea.vmem %s13, %s824
      %p826 = pneg %p419
      %p827 = pneg %p416
      %s828 = smul.u32 2, %s39
      %p829 = scmp.lt.s32.totalorder %s38, 5
      %s830 = scalar_select %p829, %s38, 5
      %p831 = scmp.lt.s32.totalorder %s828, 1
      %s832 = scalar_select %p831, %s828, 1
      %s833 = smul.addr %s830, 2
      %s834 = sadd.s32 %s832, %s833
      %s835 = scalar_lea.vmem %s14, %s834
      %p836 = pneg %p447
      %p837 = pneg %p444
      %s838 = smul.u32 2, %s39
      %p839 = scmp.lt.s32.totalorder %s38, 5
      %s840 = scalar_select %p839, %s38, 5
      %p841 = scmp.lt.s32.totalorder %s838, 1
      %s842 = scalar_select %p841, %s838, 1
      %s843 = smul.addr %s840, 2
      %s844 = sadd.s32 %s842, %s843
      %s845 = smul.addr %s844, 4
      %s846 = scalar_lea.vmem %s15, %s845
      %p847 = pneg %p475
      %p848 = pneg %p472
      %s849 = smul.u32 2, %s39
      %p850 = scmp.lt.s32.totalorder %s38, 5
      %s851 = scalar_select %p850, %s38, 5
      %p852 = scmp.lt.s32.totalorder %s849, 1
      %s853 = scalar_select %p852, %s849, 1
      %s854 = smul.addr %s851, 2
      %s855 = sadd.s32 %s853, %s854
      %s856 = smul.addr %s855, 4
      %s857 = scalar_lea.vmem %s16, %s856
      %p858 = pneg %p503
      %p859 = pneg %p500
      %s860 = smul.u32 2, %s39
      %p861 = scmp.lt.s32.totalorder %s38, 5
      %s862 = scalar_select %p861, %s38, 5
      %p863 = scmp.lt.s32.totalorder %s860, 1
      %s864 = scalar_select %p863, %s860, 1
      %s865 = smul.addr %s862, 2
      %s866 = sadd.s32 %s864, %s865
      %s867 = smul.addr %s866, 4
      %s868 = scalar_lea.vmem %s17, %s867
      %p869 = pneg %p529
      %p870 = pneg %p526
      %p871 = scmp.lt.s32.totalorder %s38, 5
      %s872 = scalar_select %p871, %s38, 5
      %s873 = smul.addr %s872, 8
      %s874 = scalar_lea.vmem %s18, %s873
      %p875 = pneg %p555
      %p876 = pneg %p552
      %p877 = scmp.lt.s32.totalorder %s38, 5
      %s878 = scalar_select %p877, %s38, 5
      %s879 = smul.addr %s878, 8
      %s880 = scalar_lea.vmem %s19, %s879
      %p881 = pneg %p581
      %p882 = pneg %p578
      %p883 = scmp.lt.s32.totalorder %s38, 5
      %s884 = scalar_select %p883, %s38, 5
      %s885 = smul.addr %s884, 8
      %s886 = scalar_lea.vmem %s20, %s885
      %p887 = pneg %p607
      %p888 = pneg %p604
      %p889 = scmp.lt.s32.totalorder %s38, 5
      %s890 = scalar_select %p889, %s38, 5
      %s891 = smul.addr %s890, 8
      %s892 = scalar_lea.vmem %s21, %s891
      %p893 = pneg %p633
      %p894 = pneg %p630
      %p895 = scmp.lt.s32.totalorder %s38, 5
      %s896 = scalar_select %p895, %s38, 5
      %s897 = smul.addr %s896, 8
      %s898 = scalar_lea.vmem %s22, %s897
      %s899 = smul.u32 2, %s39
      %p900 = scmp.lt.s32.totalorder %s38, 5
      %s901 = scalar_select %p900, %s38, 5
      %p902 = scmp.lt.s32.totalorder %s899, 1
      %s903 = scalar_select %p902, %s899, 1
      %s904 = smul.addr %s901, 2
      %s905 = sadd.s32 %s903, %s904
      %s906 = scalar_lea.vmem %s0, %s905
      %s907 = smul.u32 2, %s39
      %s908 = smul.u32 2, %s39
      %p909 = scmp.lt.s32.totalorder %s38, 5
      %s910 = scalar_select %p909, %s38, 5
      %p911 = scmp.lt.s32.totalorder %s908, 1
      %s912 = scalar_select %p911, %s908, 1
      %s913 = smul.addr %s910, 2
      %s914 = sadd.s32 %s912, %s913
      %s915 = smul.addr %s914, 4
      %s916 = scalar_lea.vmem %s1, %s915
      %s917 = smul.u32 2, %s39
      %s918 = smul.u32 2, %s39
      %p919 = scmp.lt.s32.totalorder %s38, 5
      %s920 = scalar_select %p919, %s38, 5
      %p921 = scmp.lt.s32.totalorder %s918, 1
      %s922 = scalar_select %p921, %s918, 1
      %s923 = smul.addr %s920, 2
      %s924 = sadd.s32 %s922, %s923
      %s925 = smul.addr %s924, 4
      %s926 = scalar_lea.vmem %s2, %s925
      %s927 = smul.u32 2, %s39
      %s928 = smul.u32 2, %s39
      %p929 = scmp.lt.s32.totalorder %s38, 5
      %s930 = scalar_select %p929, %s38, 5
      %p931 = scmp.lt.s32.totalorder %s928, 1
      %s932 = scalar_select %p931, %s928, 1
      %s933 = smul.addr %s930, 2
      %s934 = sadd.s32 %s932, %s933
      %s935 = smul.addr %s934, 4
      %s936 = scalar_lea.vmem %s3, %s935
      %s937 = smul.u32 2, %s39
      %s938 = smul.u32 2, %s39
      %p939 = scmp.lt.s32.totalorder %s38, 5
      %s940 = scalar_select %p939, %s38, 5
      %p941 = scmp.lt.s32.totalorder %s938, 1
      %s942 = scalar_select %p941, %s938, 1
      %s943 = smul.addr %s940, 2
      %s944 = sadd.s32 %s942, %s943
      %s945 = smul.addr %s944, 4
      %s946 = scalar_lea.vmem %s10, %s945
      %s947 = smul.u32 2, %s39
      %s948 = smul.u32 2, %s39
      %p949 = scmp.lt.s32.totalorder %s38, 5
      %s950 = scalar_select %p949, %s38, 5
      %p951 = scmp.lt.s32.totalorder %s948, 1
      %s952 = scalar_select %p951, %s948, 1
      %s953 = smul.addr %s950, 2
      %s954 = sadd.s32 %s952, %s953
      %s955 = smul.addr %s954, 4
      %s956 = scalar_lea.vmem %s11, %s955
      %s957 = smul.u32 2, %s39
      %s958 = smul.u32 2, %s39
      %p959 = scmp.lt.s32.totalorder %s38, 5
      %s960 = scalar_select %p959, %s38, 5
      %p961 = scmp.lt.s32.totalorder %s958, 1
      %s962 = scalar_select %p961, %s958, 1
      %s963 = smul.addr %s960, 2
      %s964 = sadd.s32 %s962, %s963
      %s965 = smul.addr %s964, 4
      %s966 = scalar_lea.vmem %s12, %s965
      %s967 = smul.u32 2, %s39
      %s968 = smul.u32 2, %s39
      %p969 = scmp.lt.s32.totalorder %s38, 5
      %s970 = scalar_select %p969, %s38, 5
      %p971 = scmp.lt.s32.totalorder %s968, 1
      %s972 = scalar_select %p971, %s968, 1
      %s973 = smul.addr %s970, 2
      %s974 = sadd.s32 %s972, %s973
      %s975 = scalar_lea.vmem %s13, %s974
      %s976 = smul.u32 2, %s39
      %s977 = smul.u32 2, %s39
      %p978 = scmp.lt.s32.totalorder %s38, 5
      %s979 = scalar_select %p978, %s38, 5
      %p980 = scmp.lt.s32.totalorder %s977, 1
      %s981 = scalar_select %p980, %s977, 1
      %s982 = smul.addr %s979, 2
      %s983 = sadd.s32 %s981, %s982
      %s984 = scalar_lea.vmem %s14, %s983
      %s985 = smul.u32 2, %s39
      %s986 = smul.u32 2, %s39
      %p987 = scmp.lt.s32.totalorder %s38, 5
      %s988 = scalar_select %p987, %s38, 5
      %p989 = scmp.lt.s32.totalorder %s986, 1
      %s990 = scalar_select %p989, %s986, 1
      %s991 = smul.addr %s988, 2
      %s992 = sadd.s32 %s990, %s991
      %s993 = smul.addr %s992, 4
      %s994 = scalar_lea.vmem %s15, %s993
      %s995 = smul.u32 2, %s39
      %s996 = smul.u32 2, %s39
      %p997 = scmp.lt.s32.totalorder %s38, 5
      %s998 = scalar_select %p997, %s38, 5
      %p999 = scmp.lt.s32.totalorder %s996, 1
      %s1000 = scalar_select %p999, %s996, 1
      %s1001 = smul.addr %s998, 2
      %s1002 = sadd.s32 %s1000, %s1001
      %s1003 = smul.addr %s1002, 4
      %s1004 = scalar_lea.vmem %s16, %s1003
      %s1005 = smul.u32 2, %s39
      %s1006 = smul.u32 2, %s39
      %p1007 = scmp.lt.s32.totalorder %s38, 5
      %s1008 = scalar_select %p1007, %s38, 5
      %p1009 = scmp.lt.s32.totalorder %s1006, 1
      %s1010 = scalar_select %p1009, %s1006, 1
      %s1011 = smul.addr %s1008, 2
      %s1012 = sadd.s32 %s1010, %s1011
      %s1013 = smul.addr %s1012, 4
      %s1014 = scalar_lea.vmem %s17, %s1013
      %s1015 = smul.u32 2, %s39
      %p1016 = scmp.lt.s32.totalorder %s38, 5
      %s1017 = scalar_select %p1016, %s38, 5
      %s1018 = smul.addr %s1017, 8
      %s1019 = scalar_lea.vmem %s18, %s1018
      %p1020 = scmp.lt.s32.totalorder %s38, 5
      %s1021 = scalar_select %p1020, %s38, 5
      %s1022 = smul.addr %s1021, 8
      %s1023 = scalar_lea.vmem %s19, %s1022
      %p1024 = scmp.lt.s32.totalorder %s38, 5
      %s1025 = scalar_select %p1024, %s38, 5
      %s1026 = smul.addr %s1025, 8
      %s1027 = scalar_lea.vmem %s20, %s1026
      %p1028 = scmp.lt.s32.totalorder %s38, 5
      %s1029 = scalar_select %p1028, %s38, 5
      %s1030 = smul.addr %s1029, 8
      %s1031 = scalar_lea.vmem %s21, %s1030
      %p1032 = scmp.lt.s32.totalorder %s38, 5
      %s1033 = scalar_select %p1032, %s38, 5
      %s1034 = smul.addr %s1033, 8
      %s1035 = scalar_lea.vmem %s22, %s1034
      %p1036 = scmp.eq.s32.totalorder %s39, 0
      // Predicated region
      $region61: #{full_model_forward.4} parent=59 // pred_check
        %p1037 = pneg %p1036
      $region62: #{full_model_forward.4} parent=59 // pred_check_branch
        %1039 = sbr.rel (%p1037) target = $region64
      $region63: #{full_model_forward.4} parent=59 // pred_region
        %1040 = vst [vmem:[%s1019] sm:$0xff] 0.0
        %1041 = vst [vmem:[%s1023] sm:$0xff] 0.0
        %1042 = vst [vmem:[%s1027] sm:$0xff] 0.0
        %1043 = vst [vmem:[%s1031] sm:$0xff] 0.0
        %1044 = vst [vmem:[%s1035] sm:$0xff] 0.0
      $region64: #{full_model_forward.4} parent=59 // pred_fallthru
        _
      %v1045 = vld [vmem:[%s906] sm:$0x3]
      %v1046 = vld [vmem:[%s916] sm:$0x77]
      %v1047 = vld [vmem:[%s926] sm:$0x77]
      %v1048 = vld [vmem:[%s936] sm:$0x77]
      %v1050 = vlaneseq
      %v1051 = vshrl.u32 %v1050, 7
      %v1052 = vsub.s32 2, %v1051
      %v1053 = vrot.slane %v1046, %v1052
      %v1054 = vlaneseq
      %v1055 = vshrl.u32 %v1054, 7
      %v1056 = vsub.s32 6, %v1055
      %v1057 = vrot.slane %v1046, %v1056
      %v1060 = vlaneseq
      %v1061 = vshrl.u32 %v1060, 7
      %v1062 = vsub.s32 1, %v1061
      %v1063 = vrot.slane %v1046, %v1062
      %v1064 = vlaneseq
      %v1065 = vshrl.u32 %v1064, 7
      %v1066 = vsub.s32 5, %v1065
      %v1067 = vrot.slane %v1046, %v1066
      %v1070 = vlaneseq
      %v1071 = vshrl.u32 %v1070, 7
      %v1072 = vsub.s32 0, %v1071
      %v1073 = vrot.slane %v1046, %v1072
      %v1074 = vlaneseq
      %v1075 = vshrl.u32 %v1074, 7
      %v1076 = vsub.s32 4, %v1075
      %v1077 = vrot.slane %v1046, %v1076
      %vm1080 = vcmask 1040384
      %v1081 = vsel %vm1080, %v1053, %v1063
      %v1082 = vsel %vm1080, %v1057, %v1067
      %vm1083 = vcmask 1041408
      %v1084 = vsel %vm1083, %v1081, %v1073
      %v1085 = vsel %vm1083, %v1082, %v1077
      %v1086 = vmul.f32 %v1084, 0.003921569
      %v1087 = vmul.f32 %v1085, 0.003921569
      %v1089 = vlaneseq
      %v1090 = vshrl.u32 %v1089, 7
      %v1091 = vsub.s32 2, %v1090
      %v1092 = vrot.slane %v1047, %v1091
      %v1093 = vlaneseq
      %v1094 = vshrl.u32 %v1093, 7
      %v1095 = vsub.s32 6, %v1094
      %v1096 = vrot.slane %v1047, %v1095
      %v1099 = vlaneseq
      %v1100 = vshrl.u32 %v1099, 7
      %v1101 = vsub.s32 1, %v1100
      %v1102 = vrot.slane %v1047, %v1101
      %v1103 = vlaneseq
      %v1104 = vshrl.u32 %v1103, 7
      %v1105 = vsub.s32 5, %v1104
      %v1106 = vrot.slane %v1047, %v1105
      %v1109 = vlaneseq
      %v1110 = vshrl.u32 %v1109, 7
      %v1111 = vsub.s32 0, %v1110
      %v1112 = vrot.slane %v1047, %v1111
      %v1113 = vlaneseq
      %v1114 = vshrl.u32 %v1113, 7
      %v1115 = vsub.s32 4, %v1114
      %v1116 = vrot.slane %v1047, %v1115
      %v1119 = vsel %vm1080, %v1092, %v1102
      %v1120 = vsel %vm1080, %v1096, %v1106
      %v1121 = vsel %vm1083, %v1119, %v1112
      %v1122 = vsel %vm1083, %v1120, %v1116
      %v1123 = vmul.f32 %v1121, 0.003921569
      %v1124 = vmul.f32 %v1122, 0.003921569
      %v1126 = vlaneseq
      %v1127 = vshrl.u32 %v1126, 7
      %v1128 = vsub.s32 0, %v1127
      %v1129 = vrot.slane %v1045, %v1128
      %v1130 = vlaneseq
      %v1131 = vshrl.u32 %v1130, 7
      %v1132 = vsub.s32 1, %v1131
      %v1133 = vrot.slane %v1045, %v1132
      %v1136 = vmul.f32 %v1086, %v1129
      %v1137 = vmul.f32 %v1087, %v1133
      %v1138 = vsub.f32 1.0, %v1045
      %v1140 = vlaneseq
      %v1141 = vshrl.u32 %v1140, 7
      %v1142 = vsub.s32 0, %v1141
      %v1143 = vrot.slane %v1138, %v1142
      %v1144 = vlaneseq
      %v1145 = vshrl.u32 %v1144, 7
      %v1146 = vsub.s32 1, %v1145
      %v1147 = vrot.slane %v1138, %v1146
      %v1150 = vmul.f32 %v1123, %v1143
      %v1151 = vmul.f32 %v1124, %v1147
      %v1152 = vadd.f32 %v1136, %v1150
      %v1153 = vadd.f32 %v1137, %v1151
      %v1154 = vld [vmem:[%s4] sm:$0x7]
      %1156 = vset.pattern.permute.xlu0 0
      %1157 = vperm.xlu0 %1156, %v1154
      %v1158 = vpop.permute.xlu0 %1157
      %v1160 = vsub.f32 %v1152, %v1158
      %v1161 = vsub.f32 %v1153, %v1158
      %v1162 = vld [vmem:[%s5] sm:$0x7]
      %1164 = vset.pattern.permute.xlu0 0
      %1165 = vperm.xlu0 %1164, %v1162
      %v1166 = vpop.permute.xlu0 %1165
      %v1168 = vmul.f32 %v1160, %v1166
      %v1169 = vmul.f32 %v1161, %v1166
      %v1171 = vrot.slane %v1048, 5
      %v1172 = vrot.slane %v1171, 4
      %vm1174 = vcmp.ge.f32.partialorder %v1048, %v1172
      %v1175 = vrot.slane %v1048, 6
      %v1176 = vrot.slane %v1175, 4
      %vm1178 = vcmp.ge.f32.partialorder %v1048, %v1176
      %vm1179 = vmand %vm1174, %vm1178
      %vm1180 = vmxor %vm1179, 1
      %v1181 = vsel %vm1174, 1, 0
      %v1182 = vrot.slane %v1181, 5
      %v1183 = vrot.slane %v1182, 4
      %vm1184 = vcmp.ne.s32.totalorder %v1183, 0
      %vm1185 = vmand %vm1180, %vm1184
      %vm1186 = vmor %vm1179, %vm1185
      %vm1187 = vmxor %vm1186, 1
      %v1188 = vsel %vm1179, 1, 0
      %v1189 = vcvt.s32.f32 %v1188
      %v1190 = vsel %vm1187, 1, 0
      %v1191 = vcvt.s32.f32 %v1190
      %v1192 = vsel %vm1185, 1, 0
      %v1193 = vcvt.s32.f32 %v1192
      %v1195 = vlaneseq
      %v1196 = vshrl.u32 %v1195, 7
      %v1197 = vsub.s32 0, %v1196
      %v1198 = vrot.slane %v1189, %v1197
      %v1199 = vlaneseq
      %v1200 = vshrl.u32 %v1199, 7
      %v1201 = vsub.s32 4, %v1200
      %v1202 = vrot.slane %v1189, %v1201
      %v1206 = vlaneseq
      %v1207 = vshrl.u32 %v1206, 7
      %v1208 = vsub.s32 0, %v1207
      %v1209 = vrot.slane %v1191, %v1208
      %v1210 = vlaneseq
      %v1211 = vshrl.u32 %v1210, 7
      %v1212 = vsub.s32 4, %v1211
      %v1213 = vrot.slane %v1191, %v1212
      %v1216 = vlaneseq
      %v1217 = vshrl.u32 %v1216, 7
      %v1218 = vsub.s32 0, %v1217
      %v1219 = vrot.slane %v1048, %v1218
      %v1220 = vlaneseq
      %v1221 = vshrl.u32 %v1220, 7
      %v1222 = vsub.s32 4, %v1221
      %v1223 = vrot.slane %v1048, %v1222
      %v1226 = vlaneseq
      %v1227 = vshrl.u32 %v1226, 7
      %v1228 = vsub.s32 2, %v1227
      %v1229 = vrot.slane %v1048, %v1228
      %v1230 = vlaneseq
      %v1231 = vshrl.u32 %v1230, 7
      %v1232 = vsub.s32 6, %v1231
      %v1233 = vrot.slane %v1048, %v1232
      %v1236 = vsel %vm1083, %v1198, %v1198
      %v1237 = vsel %vm1083, %v1202, %v1202
      %vm1238 = vcmask 1042432
      %v1239 = vsel %vm1238, %v1236, %v1209
      %v1240 = vsel %vm1238, %v1237, %v1213
      %vm1241 = vcmask 1043456
      %v1242 = vsel %vm1241, %v1239, %v1209
      %v1243 = vsel %vm1241, %v1240, %v1213
      %vm1244 = vcmask 1044480
      %v1245 = vsel %vm1244, %v1242, %v1209
      %v1246 = vsel %vm1244, %v1243, %v1213
      %vm1247 = vcmask 1045504
      %v1248 = vsel %vm1247, %v1245, %v1219
      %v1249 = vsel %vm1247, %v1246, %v1223
      %vm1250 = vcmask 1046528
      %v1251 = vsel %vm1250, %v1248, %v1229
      %v1252 = vsel %vm1250, %v1249, %v1233
      %v1255 = vrot.slane %v1251, 5
      %v1256 = vrot.slane %v1252, 5
      %v1259 = vsel %vm1238, %v1168, %v1255
      %v1260 = vsel %vm1238, %v1169, %v1256
      %v1261 = vld [vmem:[%s6] sm:$0xff]
      %v1262 = vld [vmem:[%s6 + $0x8] sm:$0xff]
      %v1263 = vld [vmem:[%s6 + $0x10] sm:$0xff]
      %v1264 = vld [vmem:[%s6 + $0x18] sm:$0xff]
      %v1265 = vld [vmem:[%s7] sm:$0xff]
      %v1266 = vld [vmem:[%s7 + $0x8] sm:$0xff]
      %v1267 = vld [vmem:[%s7 + $0x10] sm:$0xff]
      %v1268 = vld [vmem:[%s7 + $0x18] sm:$0xff]
      %1270 = vset.pattern.permute.xlu0 0
      %1271 = vperm.xlu0 %1270, %v1265
      %v1272 = vpop.permute.xlu0 %1271
      %1275 = vset.pattern.permute.xlu0 0
      %1276 = vperm.xlu0 %1275, %v1266
      %v1277 = vpop.permute.xlu0 %1276
      %1280 = vset.pattern.permute.xlu0 0
      %1281 = vperm.xlu0 %1280, %v1267
      %v1282 = vpop.permute.xlu0 %1281
      %1285 = vset.pattern.permute.xlu0 0
      %1286 = vperm.xlu0 %1285, %v1268
      %v1287 = vpop.permute.xlu0 %1286
      %vm1289 = vcmask 89088
      %v1291 = vsel %vm1289, %v1261, 0
      %v1294 = vsel %vm1289, %v1262, 0
      %v1297 = vsel %vm1289, %v1263, 0
      %v1300 = vsel %vm1289, %v1264, 0
      %v1302 = vsel %vm1238, %v1255, 0
      %v1304 = vsel %vm1238, %v1256, 0
      %1306 = vmatprep.subr.mxu0 %v1260
      %1307 = vmatpush1.msra.mxu0 %v1259
      %1308 = vmatprep.subr.mxu0 %v1304
      %1309 = vmatpush1.msra.mxu0 %v1302
      %1310 = vmatprep.subr.mxu0 0.0
      %1311 = vmatpush1.msra.mxu0 0.0
      %1312 = vmatprep.subr.mxu0 0.0
      %1313 = vmatpush1.msra.mxu0 0.0
      %1314 = vmatprep.subr.mxu0 0.0
      %1315 = vmatpush1.msra.mxu0 0.0
      %1316 = vmatprep.subr.mxu0 0.0
      %1317 = vmatpush1.msra.mxu0 0.0
      %1318 = vmatprep.subr.mxu0 0.0
      %1319 = vmatpush1.msra.mxu0 0.0
      %1320 = vmatprep.subr.mxu0 0.0
      %1321 = vmatpush1.msra.mxu0 0.0
      %1322 = vmatprep.subr.mxu0 0.0
      %1323 = vmatpush1.msra.mxu0 0.0
      %1324 = vmatprep.subr.mxu0 0.0
      %1325 = vmatpush1.msra.mxu0 0.0
      %1326 = vmatprep.subr.mxu0 0.0
      %1327 = vmatpush1.msra.mxu0 0.0
      %1328 = vmatprep.subr.mxu0 0.0
      %1329 = vmatpush1.msra.mxu0 0.0
      %1330 = vmatprep.subr.mxu0 0.0
      %1331 = vmatpush1.msra.mxu0 0.0
      %1332 = vmatprep.subr.mxu0 0.0
      %1333 = vmatpush1.msra.mxu0 0.0
      %1334 = vmatprep.subr.mxu0 0.0
      %1335 = vmatpush1.msra.mxu0 0.0
      %1336 = vmatprep.subr.mxu0 0.0
      %1337 = vmatpush1.msra.mxu0 0.0
      %1338 = vmatprep.subr.mxu0 0.0
      %1339 = vmatpush1.msra.mxu0 0.0
      %1340 = vmatprep.subr.mxu0 0.0
      %1341 = vmatpush1.msra.mxu0 0.0
      %1342 = vmatprep.subr.mxu0 0.0
      %1343 = vmatpush1.msra.mxu0 0.0
      %1344 = vmatprep.subr.mxu0 0.0
      %1345 = vmatpush1.msra.mxu0 0.0
      %1346 = vmatprep.subr.mxu0 0.0
      %1347 = vmatpush1.msra.mxu0 0.0
      %1348 = vmatprep.subr.mxu0 0.0
      %1349 = vmatpush1.msra.mxu0 0.0
      %1350 = vmatprep.subr.mxu0 0.0
      %1351 = vmatpush1.msra.mxu0 0.0
      %1352 = vmatprep.subr.mxu0 0.0
      %1353 = vmatpush1.msra.mxu0 0.0
      %1354 = vmatprep.subr.mxu0 0.0
      %1355 = vmatpush1.msra.mxu0 0.0
      %1356 = vmatprep.subr.mxu0 0.0
      %1357 = vmatpush1.msra.mxu0 0.0
      %1358 = vmatprep.subr.mxu0 0.0
      %1359 = vmatpush1.msra.mxu0 0.0
      %1360 = vmatprep.subr.mxu0 0.0
      %1361 = vmatpush1.msra.mxu0 0.0
      %1362 = vmatprep.subr.mxu0 0.0
      %1363 = vmatpush1.msra.mxu0 0.0
      %1364 = vmatprep.subr.mxu0 0.0
      %1365 = vmatpush1.msra.mxu0 0.0
      %1366 = vmatprep.subr.mxu0 0.0
      %1367 = vmatpush1.msra.mxu0 0.0
      %1368 = vmatprep.subr.mxu0 0.0
      %1369 = vmatpush1.msra.mxu0 0.0
      %1370 = vmatprep.mubr.f32.mxu0 0.0
      %1371 = vmatmul.mubr.f32.gmra.mrb[0].mxu0 %v1291
      %v1372 = vpop.f32.mrb[0].mxu0
      %v1373 = vadd.f32 %v1272, %v1372
      %v1374 = vpop.f32.mrb[0].mxu0
      %v1375 = vadd.f32 %v1272, %v1374
      %1376 = vmatprep.mubr.f32.mxu0 0.0
      %1377 = vmatmul.mubr.f32.gmra.mrb[0].mxu0 %v1294
      %v1378 = vpop.f32.mrb[0].mxu0
      %v1379 = vadd.f32 %v1277, %v1378
      %v1380 = vpop.f32.mrb[0].mxu0
      %v1381 = vadd.f32 %v1277, %v1380
      %1382 = vmatprep.mubr.f32.mxu0 0.0
      %1383 = vmatmul.mubr.f32.gmra.mrb[0].mxu0 %v1297
      %v1384 = vpop.f32.mrb[0].mxu0
      %v1385 = vadd.f32 %v1282, %v1384
      %v1386 = vpop.f32.mrb[0].mxu0
      %v1387 = vadd.f32 %v1282, %v1386
      %1388 = vmatprep.mubr.f32.mxu0 0.0
      %1389 = vmatmul.mubr.f32.gmra.mrb[0].mxu0 %v1300
      %v1390 = vpop.f32.mrb[0].mxu0
      %v1391 = vadd.f32 %v1287, %v1390
      %v1392 = vpop.f32.mrb[0].mxu0
      %v1393 = vadd.f32 %v1287, %v1392
      %1394 = vdwg.mxu0
      %v1395 = vmax.f32 %v1373, 0.0
      %v1396 = vmax.f32 %v1375, 0.0
      %v1397 = vmax.f32 %v1379, 0.0
      %v1398 = vmax.f32 %v1381, 0.0
      %v1399 = vmax.f32 %v1385, 0.0
      %v1400 = vmax.f32 %v1387, 0.0
      %v1401 = vmax.f32 %v1391, 0.0
      %v1402 = vmax.f32 %v1393, 0.0
      %v1403 = vld [vmem:[%s8] sm:$0x7f]
      %v1404 = vld [vmem:[%s9] sm:$0x7f]
      %1406 = vset.pattern.permute.xlu0 0
      %1407 = vperm.xlu0 %1406, %v1404
      %v1408 = vpop.permute.xlu0 %1407
      %vm1410 = vcmask 261120
      %v1412 = vsel %vm1410, %v1403, 0
      %1414 = vmatprep.subr.mxu0 %v1396
      %1415 = vmatpush1.msra.mxu0 %v1395
      %1416 = vmatprep.subr.mxu0 %v1398
      %1417 = vmatpush1.msra.mxu0 %v1397
      %1418 = vmatprep.subr.mxu0 %v1400
      %1419 = vmatpush1.msra.mxu0 %v1399
      %1420 = vmatprep.subr.mxu0 %v1402
      %1421 = vmatpush1.msra.mxu0 %v1401
      %1422 = vmatprep.subr.mxu0 0.0
      %1423 = vmatpush1.msra.mxu0 0.0
      %1424 = vmatprep.subr.mxu0 0.0
      %1425 = vmatpush1.msra.mxu0 0.0
      %1426 = vmatprep.subr.mxu0 0.0
      %1427 = vmatpush1.msra.mxu0 0.0
      %1428 = vmatprep.subr.mxu0 0.0
      %1429 = vmatpush1.msra.mxu0 0.0
      %1430 = vmatprep.subr.mxu0 0.0
      %1431 = vmatpush1.msra.mxu0 0.0
      %1432 = vmatprep.subr.mxu0 0.0
      %1433 = vmatpush1.msra.mxu0 0.0
      %1434 = vmatprep.subr.mxu0 0.0
      %1435 = vmatpush1.msra.mxu0 0.0
      %1436 = vmatprep.subr.mxu0 0.0
      %1437 = vmatpush1.msra.mxu0 0.0
      %1438 = vmatprep.subr.mxu0 0.0
      %1439 = vmatpush1.msra.mxu0 0.0
      %1440 = vmatprep.subr.mxu0 0.0
      %1441 = vmatpush1.msra.mxu0 0.0
      %1442 = vmatprep.subr.mxu0 0.0
      %1443 = vmatpush1.msra.mxu0 0.0
      %1444 = vmatprep.subr.mxu0 0.0
      %1445 = vmatpush1.msra.mxu0 0.0
      %1446 = vmatprep.subr.mxu0 0.0
      %1447 = vmatpush1.msra.mxu0 0.0
      %1448 = vmatprep.subr.mxu0 0.0
      %1449 = vmatpush1.msra.mxu0 0.0
      %1450 = vmatprep.subr.mxu0 0.0
      %1451 = vmatpush1.msra.mxu0 0.0
      %1452 = vmatprep.subr.mxu0 0.0
      %1453 = vmatpush1.msra.mxu0 0.0
      %1454 = vmatprep.subr.mxu0 0.0
      %1455 = vmatpush1.msra.mxu0 0.0
      %1456 = vmatprep.subr.mxu0 0.0
      %1457 = vmatpush1.msra.mxu0 0.0
      %1458 = vmatprep.subr.mxu0 0.0
      %1459 = vmatpush1.msra.mxu0 0.0
      %1460 = vmatprep.subr.mxu0 0.0
      %1461 = vmatpush1.msra.mxu0 0.0
      %1462 = vmatprep.subr.mxu0 0.0
      %1463 = vmatpush1.msra.mxu0 0.0
      %1464 = vmatprep.subr.mxu0 0.0
      %1465 = vmatpush1.msra.mxu0 0.0
      %1466 = vmatprep.subr.mxu0 0.0
      %1467 = vmatpush1.msra.mxu0 0.0
      %1468 = vmatprep.subr.mxu0 0.0
      %1469 = vmatpush1.msra.mxu0 0.0
      %1470 = vmatprep.subr.mxu0 0.0
      %1471 = vmatpush1.msra.mxu0 0.0
      %1472 = vmatprep.subr.mxu0 0.0
      %1473 = vmatpush1.msra.mxu0 0.0
      %1474 = vmatprep.subr.mxu0 0.0
      %1475 = vmatpush1.msra.mxu0 0.0
      %1476 = vmatprep.subr.mxu0 0.0
      %1477 = vmatpush1.msra.mxu0 0.0
      %1478 = vmatprep.mubr.f32.mxu0 0.0
      %1479 = vmatmul.mubr.f32.gmra.mrb[0].mxu0 %v1412
      %v1480 = vpop.f32.mrb[0].mxu0
      %v1481 = vadd.f32 %v1408, %v1480
      %v1482 = vpop.f32.mrb[0].mxu0
      %v1483 = vadd.f32 %v1408, %v1482
      %1484 = vdwg.mxu0
      %v1485 = vxor.u32 %v1481, 2147483648
      %v1486 = vxor.u32 %v1483, 2147483648
      %v1487 = vmul.f32 %v1485, 1.442695
      %v1488 = vpow.pop %v1487
      %v1489 = vmul.f32 %v1486, 1.442695
      %v1490 = vpow.pop %v1489
      %v1491 = vadd.f32 %v1488, 1.0
      %v1492 = vadd.f32 %v1490, 1.0
      %v1493 = vrcp.pop %v1491
      %v1494 = vmul.f32 1.0, %v1493
      %v1495 = vrcp.pop %v1492
      %v1496 = vmul.f32 1.0, %v1495
      %vm1497 = vcmp.gt.f32.partialorder %v1193, 0.0
      %vm1498 = vcmp.gt.f32.partialorder %v1045, 0.0
      %v1499 = vsel %vm1498, 1, 0
      %v1501 = vunpack.c.l.s4 286326784
      %v1502 = vunpack.c.0.s8 %v1501
      %v1503 = vlaneseq
      %v1504 = vshrl.u32 %v1503, 7
      %v1505 = vsub.s32 %v1502, %v1504
      %v1506 = vrot.slane %v1499, %v1505
      %vm1507 = vcmp.ne.s32.totalorder %v1506, 0
      %vm1508 = vmand %vm1497, %vm1507
      %v1509 = vsel %vm1508, 1, 0
      %v1510 = vlaneseq
      %v1511 = vshrl.u32 %v1510, 7
      %v1512 = vsub.s32 0, %v1511
      %v1513 = vrot.slane %v1509, %v1512
      %v1514 = vlaneseq
      %v1515 = vshrl.u32 %v1514, 7
      %v1516 = vsub.s32 4, %v1515
      %v1517 = vrot.slane %v1509, %v1516
      %v1518 = vlaneseq
      %v1519 = vshrl.u32 %v1518, 7
      %v1520 = vsub.s32 0, %v1519
      %v1521 = vrot.slane %v1513, %v1520
      %v1522 = vlaneseq
      %v1523 = vshrl.u32 %v1522, 7
      %v1524 = vsub.s32 0, %v1523
      %v1525 = vrot.slane %v1517, %v1524
      %vm1526 = vcmp.eq.s32.totalorder %v1521, 1
      %vm1527 = vcmp.eq.s32.totalorder %v1525, 1
      %v1530 = vrot.slane %v1086, 7
      %v1531 = vrot.slane %v1087, 7
      %v1534 = vsel %vm1526, %v1494, %v1530
      %v1535 = vsel %vm1527, %v1496, %v1531
      %v1536 = vsel %vm1497, 1, 0
      %v1537 = vlaneseq
      %v1538 = vshrl.u32 %v1537, 7
      %v1539 = vsub.s32 0, %v1538
      %v1540 = vrot.slane %v1536, %v1539
      %v1541 = vlaneseq
      %v1542 = vshrl.u32 %v1541, 7
      %v1543 = vsub.s32 4, %v1542
      %v1544 = vrot.slane %v1536, %v1543
      %v1545 = vlaneseq
      %v1546 = vshrl.u32 %v1545, 7
      %v1547 = vsub.s32 0, %v1546
      %v1548 = vrot.slane %v1540, %v1547
      %v1549 = vlaneseq
      %v1550 = vshrl.u32 %v1549, 7
      %v1551 = vsub.s32 0, %v1550
      %v1552 = vrot.slane %v1544, %v1551
      %vm1553 = vcmp.eq.s32.totalorder %v1548, 1
      %vm1554 = vcmp.eq.s32.totalorder %v1552, 1
      %v1557 = vrot.slane %v1123, 4
      %v1558 = vrot.slane %v1124, 4
      %v1561 = vsel %vm1553, %v1494, %v1557
      %v1562 = vsel %vm1554, %v1496, %v1558
      %v1563 = vlaneseq
      %v1564 = vshrl.u32 %v1563, 7
      %v1565 = vsub.s32 0, %v1564
      %v1566 = vrot.slane %v1494, %v1565
      %v1567 = vlaneseq
      %v1568 = vshrl.u32 %v1567, 7
      %v1569 = vsub.s32 0, %v1568
      %v1570 = vrot.slane %v1496, %v1569
      %v1571 = vmul.f32 %v1534, %v1566
      %v1572 = vmul.f32 %v1535, %v1570
      %v1573 = vsub.f32 1.0, %v1494
      %v1574 = vsub.f32 1.0, %v1496
      %v1575 = vlaneseq
      %v1576 = vshrl.u32 %v1575, 7
      %v1577 = vsub.s32 0, %v1576
      %v1578 = vrot.slane %v1573, %v1577
      %v1579 = vlaneseq
      %v1580 = vshrl.u32 %v1579, 7
      %v1581 = vsub.s32 0, %v1580
      %v1582 = vrot.slane %v1574, %v1581
      %v1583 = vmul.f32 %v1561, %v1578
      %v1584 = vmul.f32 %v1562, %v1582
      %v1587 = vrot.slane %v1583, 3
      %v1588 = vrot.slane %v1584, 3
      %v1591 = vadd.f32 %v1571, %v1587
      %v1592 = vadd.f32 %v1572, %v1588
      %v1595 = vcombine.low %v1152, %v1153
      %1597 = vst [vmem:[%s946] sm:$0x77] %v1595
      %v1598 = vcombine.low %v1086, %v1087
      %1600 = vst [vmem:[%s956] sm:$0x77] %v1598
      %v1601 = vcombine.low %v1123, %v1124
      %1603 = vst [vmem:[%s966] sm:$0x77] %v1601
      %v1605 = vunpack.c.l.s4 286326784
      %v1606 = vunpack.c.0.s8 %v1605
      %v1607 = vlaneseq
      %v1608 = vshrl.u32 %v1607, 7
      %v1609 = vsub.s32 %v1606, %v1608
      %v1610 = vrot.slane %v1045, %v1609
      %v1612 = vsel %vm1497, 0.5019608, %v1610
      %v1615 = vunpack.c.l.s4 1966171168
      %v1616 = vunpack.c.0.s8 %v1615
      %v1617 = vlaneseq
      %v1618 = vshrl.u32 %v1617, 7
      %v1619 = vsub.s32 %v1616, %v1618
      %v1620 = vrot.slane %v1612, %v1619
      %v1622 = vunpack.c.l.s4 1966171168
      %v1623 = vunpack.c.0.s8 %v1622
      %v1624 = vlaneseq
      %v1625 = vshrl.u32 %v1624, 7
      %v1626 = vsub.s32 %v1623, %v1625
      %v1627 = vrot.slane %v1620, %v1626
      %v1629 = vlaneseq
      %vm1630 = vcmp.ge.s32.totalorder %v1629, 0
      %vm1631 = vcmp.lt.s32.totalorder %v1629, 256
      %vm1632 = vmand %vm1630, %vm1631
      %1633 = vst.msk [vmem:[%s975] sm:$0x3] %vm1632, %v1627
      %v1636 = vcombine.low %v1494, %v1496
      %v1638 = vunpack.c.l.s4 1966171168
      %v1639 = vunpack.c.0.s8 %v1638
      %v1640 = vlaneseq
      %v1641 = vshrl.u32 %v1640, 7
      %v1642 = vsub.s32 %v1639, %v1641
      %v1643 = vrot.slane %v1636, %v1642
      %v1645 = vunpack.c.l.s4 1966171168
      %v1646 = vunpack.c.0.s8 %v1645
      %v1647 = vlaneseq
      %v1648 = vshrl.u32 %v1647, 7
      %v1649 = vsub.s32 %v1646, %v1648
      %v1650 = vrot.slane %v1643, %v1649
      %1652 = vst.msk [vmem:[%s984] sm:$0x3] %vm1632, %v1650
      %v1655 = vcombine.low %v1591, %v1592
      %v1656 = vrot.slane %v1655, 5
      %v1657 = vrot.slane %v1656, 4
      %1659 = vst [vmem:[%s994] sm:$0x77] %v1657
      %v1662 = vcombine.low %v1534, %v1535
      %v1663 = vrot.slane %v1662, 5
      %v1664 = vrot.slane %v1663, 4
      %1666 = vst [vmem:[%s1004] sm:$0x77] %v1664
      %v1669 = vcombine.high %v1561, %v1562
      %1671 = vst [vmem:[%s1014] sm:$0x77] %v1669
      %v1672 = vmul.f32 %v1534, %v1129
      %v1673 = vmul.f32 %v1535, %v1133
      %v1674 = vmul.f32 %v1561, %v1143
      %v1675 = vmul.f32 %v1562, %v1147
      %v1678 = vrot.slane %v1674, 3
      %v1679 = vrot.slane %v1675, 3
      %v1682 = vadd.f32 %v1672, %v1678
      %v1683 = vadd.f32 %v1673, %v1679
      %v1684 = vmul.f32 %v1086, %v1566
      %v1685 = vmul.f32 %v1087, %v1570
      %v1686 = vmul.f32 %v1123, %v1578
      %v1687 = vmul.f32 %v1124, %v1582
      %v1688 = vadd.f32 %v1684, %v1686
      %v1689 = vadd.f32 %v1685, %v1687
      %v1690 = vld [vmem:[%s1019] sm:$0xff]
      %v1691 = vsub.f32 %v1494, %v1129
      %v1692 = vsub.f32 %v1496, %v1133
      %v1693 = vand.u32 2147483647, %v1691
      %v1694 = vand.u32 2147483647, %v1692
      %v1695 = vsel %vm1080, %v1693, 0.0
      %v1696 = vsel %vm1080, %v1694, 0.0
      %v1697 = vadd.f32 %v1695, %v1696
      %1698 = vadd.xlane.f32.xlu0 %v1697
      %v1699 = vpop.xlane.xlu0 %1698
      %v1700 = vrot.slane %v1699, 4
      %v1701 = vadd.f32 %v1699, %v1700
      %v1702 = vrot.slane %v1701, 2
      %v1703 = vadd.f32 %v1701, %v1702
      %v1704 = vrot.slane %v1703, 1
      %v1705 = vadd.f32 %v1703, %v1704
      %s1706 = vtos %v1705
      %v1707 = vstv %s1706
      %v1708 = vadd.f32 %v1690, %v1707
      %1709 = vst [vmem:[%s1019] sm:$0xff] %v1708
      %v1710 = vld [vmem:[%s1023] sm:$0xff]
      %v1711 = vrot.slane %v1152, 7
      %v1712 = vrot.slane %v1153, 7
      %v1715 = vsub.f32 %v1682, %v1711
      %v1716 = vsub.f32 %v1683, %v1712
      %v1717 = vand.u32 2147483647, %v1715
      %v1718 = vand.u32 2147483647, %v1716
      %v1721 = vrot.slane %v1717, 1
      %v1722 = vrot.slane %v1718, 1
      %v1725 = vsel %vm1238, %v1721, 0.0
      %v1726 = vsel %vm1238, %v1722, 0.0
      %v1727 = vadd.f32 %v1725, %v1726
      %1728 = vadd.xlane.f32.xlu0 %v1727
      %v1729 = vpop.xlane.xlu0 %1728
      %v1730 = vrot.slane %v1729, 4
      %v1731 = vadd.f32 %v1729, %v1730
      %v1732 = vrot.slane %v1731, 2
      %v1733 = vadd.f32 %v1731, %v1732
      %v1734 = vrot.slane %v1733, 1
      %v1735 = vadd.f32 %v1733, %v1734
      %s1736 = vtos %v1735
      %v1737 = vstv %s1736
      %v1738 = vadd.f32 %v1710, %v1737
      %1739 = vst [vmem:[%s1023] sm:$0xff] %v1738
      %v1740 = vld [vmem:[%s1027] sm:$0xff]
      %v1741 = vsub.f32 %v1688, %v1152
      %v1742 = vsub.f32 %v1689, %v1153
      %v1743 = vand.u32 2147483647, %v1741
      %v1744 = vand.u32 2147483647, %v1742
      %v1745 = vsel %vm1238, %v1743, 0.0
      %v1746 = vsel %vm1238, %v1744, 0.0
      %v1747 = vadd.f32 %v1745, %v1746
      %1748 = vadd.xlane.f32.xlu0 %v1747
      %v1749 = vpop.xlane.xlu0 %1748
      %v1750 = vrot.slane %v1749, 4
      %v1751 = vadd.f32 %v1749, %v1750
      %v1752 = vrot.slane %v1751, 2
      %v1753 = vadd.f32 %v1751, %v1752
      %v1754 = vrot.slane %v1753, 1
      %v1755 = vadd.f32 %v1753, %v1754
      %s1756 = vtos %v1755
      %v1757 = vstv %s1756
      %v1758 = vadd.f32 %v1740, %v1757
      %1759 = vst [vmem:[%s1027] sm:$0xff] %v1758
      %v1760 = vld [vmem:[%s1031] sm:$0xff]
      %v1761 = vsub.f32 %v1534, %v1530
      %v1762 = vsub.f32 %v1535, %v1531
      %v1763 = vand.u32 2147483647, %v1761
      %v1764 = vand.u32 2147483647, %v1762
      %v1767 = vrot.slane %v1763, 1
      %v1768 = vrot.slane %v1764, 1
      %v1771 = vsel %vm1238, %v1767, 0.0
      %v1772 = vsel %vm1238, %v1768, 0.0
      %v1773 = vadd.f32 %v1771, %v1772
      %1774 = vadd.xlane.f32.xlu0 %v1773
      %v1775 = vpop.xlane.xlu0 %1774
      %v1776 = vrot.slane %v1775, 4
      %v1777 = vadd.f32 %v1775, %v1776
      %v1778 = vrot.slane %v1777, 2
      %v1779 = vadd.f32 %v1777, %v1778
      %v1780 = vrot.slane %v1779, 1
      %v1781 = vadd.f32 %v1779, %v1780
      %s1782 = vtos %v1781
      %v1783 = vstv %s1782
      %v1784 = vadd.f32 %v1760, %v1783
      %1785 = vst [vmem:[%s1031] sm:$0xff] %v1784
      %v1786 = vld [vmem:[%s1035] sm:$0xff]
      %v1787 = vsub.f32 %v1561, %v1557
      %v1788 = vsub.f32 %v1562, %v1558
      %v1789 = vand.u32 2147483647, %v1787
      %v1790 = vand.u32 2147483647, %v1788
      %v1793 = vrot.slane %v1789, 4
      %v1794 = vrot.slane %v1790, 4
      %v1797 = vsel %vm1238, %v1793, 0.0
      %v1798 = vsel %vm1238, %v1794, 0.0
      %v1799 = vadd.f32 %v1797, %v1798
      %1800 = vadd.xlane.f32.xlu0 %v1799
      %v1801 = vpop.xlane.xlu0 %1800
      %v1802 = vrot.slane %v1801, 4
      %v1803 = vadd.f32 %v1801, %v1802
      %v1804 = vrot.slane %v1803, 2
      %v1805 = vadd.f32 %v1803, %v1804
      %v1806 = vrot.slane %v1805, 1
      %v1807 = vadd.f32 %v1805, %v1806
      %s1808 = vtos %v1807
      %v1809 = vstv %s1808
      %v1810 = vadd.f32 %v1786, %v1809
      %1811 = vst [vmem:[%s1035] sm:$0xff] %v1810
      %s1812 = smul.u32 2, %s39
      %p1813 = scmp.lt.s32.totalorder %s38, 5
      %s1814 = scalar_select %p1813, %s38, 5
      %p1815 = scmp.lt.s32.totalorder %s1812, 1
      %s1816 = scalar_select %p1815, %s1812, 1
      %s1817 = smul.addr %s1814, 2
      %s1818 = sadd.s32 %s1816, %s1817
      %s1819 = smul.addr %s1818, 4
      %s1820 = scalar_lea.vmem %s10, %s1819
      %s1821 = smul.u32 2, %s39
      %p1822 = scmp.lt.s32.totalorder %s38, 5
      %s1823 = scalar_select %p1822, %s38, 5
      %p1824 = scmp.lt.s32.totalorder %s1821, 1
      %s1825 = scalar_select %p1824, %s1821, 1
      %s1826 = smul.addr %s1823, 2
      %s1827 = sadd.s32 %s1825, %s1826
      %s1828 = smul.addr %s1827, 4
      %s1829 = scalar_lea.vmem %s11, %s1828
      %s1830 = smul.u32 2, %s39
      %p1831 = scmp.lt.s32.totalorder %s38, 5
      %s1832 = scalar_select %p1831, %s38, 5
      %p1833 = scmp.lt.s32.totalorder %s1830, 1
      %s1834 = scalar_select %p1833, %s1830, 1
      %s1835 = smul.addr %s1832, 2
      %s1836 = sadd.s32 %s1834, %s1835
      %s1837 = smul.addr %s1836, 4
      %s1838 = scalar_lea.vmem %s12, %s1837
      %s1839 = smul.u32 2, %s39
      %p1840 = scmp.lt.s32.totalorder %s38, 5
      %s1841 = scalar_select %p1840, %s38, 5
      %p1842 = scmp.lt.s32.totalorder %s1839, 1
      %s1843 = scalar_select %p1842, %s1839, 1
      %s1844 = smul.addr %s1841, 2
      %s1845 = sadd.s32 %s1843, %s1844
      %s1846 = scalar_lea.vmem %s13, %s1845
      %s1847 = smul.u32 2, %s39
      %p1848 = scmp.lt.s32.totalorder %s38, 5
      %s1849 = scalar_select %p1848, %s38, 5
      %p1850 = scmp.lt.s32.totalorder %s1847, 1
      %s1851 = scalar_select %p1850, %s1847, 1
      %s1852 = smul.addr %s1849, 2
      %s1853 = sadd.s32 %s1851, %s1852
      %s1854 = scalar_lea.vmem %s14, %s1853
      %s1855 = smul.u32 2, %s39
      %p1856 = scmp.lt.s32.totalorder %s38, 5
      %s1857 = scalar_select %p1856, %s38, 5
      %p1858 = scmp.lt.s32.totalorder %s1855, 1
      %s1859 = scalar_select %p1858, %s1855, 1
      %s1860 = smul.addr %s1857, 2
      %s1861 = sadd.s32 %s1859, %s1860
      %s1862 = smul.addr %s1861, 4
      %s1863 = scalar_lea.vmem %s15, %s1862
      %s1864 = smul.u32 2, %s39
      %p1865 = scmp.lt.s32.totalorder %s38, 5
      %s1866 = scalar_select %p1865, %s38, 5
      %p1867 = scmp.lt.s32.totalorder %s1864, 1
      %s1868 = scalar_select %p1867, %s1864, 1
      %s1869 = smul.addr %s1866, 2
      %s1870 = sadd.s32 %s1868, %s1869
      %s1871 = smul.addr %s1870, 4
      %s1872 = scalar_lea.vmem %s16, %s1871
      %s1873 = smul.u32 2, %s39
      %p1874 = scmp.lt.s32.totalorder %s38, 5
      %s1875 = scalar_select %p1874, %s38, 5
      %p1876 = scmp.lt.s32.totalorder %s1873, 1
      %s1877 = scalar_select %p1876, %s1873, 1
      %s1878 = smul.addr %s1875, 2
      %s1879 = sadd.s32 %s1877, %s1878
      %s1880 = smul.addr %s1879, 4
      %s1881 = scalar_lea.vmem %s17, %s1880
      %p1882 = scmp.lt.s32.totalorder %s38, 5
      %s1883 = scalar_select %p1882, %s38, 5
      %s1884 = smul.addr %s1883, 8
      %s1885 = scalar_lea.vmem %s18, %s1884
      %p1886 = scmp.lt.s32.totalorder %s38, 5
      %s1887 = scalar_select %p1886, %s38, 5
      %s1888 = smul.addr %s1887, 8
      %s1889 = scalar_lea.vmem %s19, %s1888
      %p1890 = scmp.lt.s32.totalorder %s38, 5
      %s1891 = scalar_select %p1890, %s38, 5
      %s1892 = smul.addr %s1891, 8
      %s1893 = scalar_lea.vmem %s20, %s1892
      %p1894 = scmp.lt.s32.totalorder %s38, 5
      %s1895 = scalar_select %p1894, %s38, 5
      %s1896 = smul.addr %s1895, 8
      %s1897 = scalar_lea.vmem %s21, %s1896
      %p1898 = scmp.lt.s32.totalorder %s38, 5
      %s1899 = scalar_select %p1898, %s38, 5
      %s1900 = smul.addr %s1899, 8
      %s1901 = scalar_lea.vmem %s22, %s1900
      // Predicated region
      $region65: #{full_model_forward.4} parent=59 // pred_check
        %p1902 = pneg %p304
      $region66: #{full_model_forward.4} parent=59 // pred_check_branch
        %1904 = sbr.rel (%p1902) target = $region68
      $region67: #{full_model_forward.4} parent=59 // pred_region
        %s1905 = smul.u32 2, %s39
      $region68: #{full_model_forward.4} parent=59 // pred_fallthru
        _
      // Predicated region
      $region69: #{full_model_forward.4} parent=59 // pred_check
        %p1906 = pneg %p332
      $region70: #{full_model_forward.4} parent=59 // pred_check_branch
        %1908 = sbr.rel (%p1906) target = $region72
      $region71: #{full_model_forward.4} parent=59 // pred_region
        %s1909 = smul.u32 2, %s39
      $region72: #{full_model_forward.4} parent=59 // pred_fallthru
        _
      // Predicated region
      $region73: #{full_model_forward.4} parent=59 // pred_check
        %p1910 = pneg %p360
      $region74: #{full_model_forward.4} parent=59 // pred_check_branch
        %1912 = sbr.rel (%p1910) target = $region76
      $region75: #{full_model_forward.4} parent=59 // pred_region
        %s1913 = smul.u32 2, %s39
      $region76: #{full_model_forward.4} parent=59 // pred_fallthru
        _
      // Predicated region
      $region77: #{full_model_forward.4} parent=59 // pred_check
        %p1914 = pneg %p388
      $region78: #{full_model_forward.4} parent=59 // pred_check_branch
        %1916 = sbr.rel (%p1914) target = $region80
      $region79: #{full_model_forward.4} parent=59 // pred_region
        %s1917 = smul.u32 2, %s39
      $region80: #{full_model_forward.4} parent=59 // pred_fallthru
        _
      // Predicated region
      $region81: #{full_model_forward.4} parent=59 // pred_check
        %p1918 = pneg %p416
      $region82: #{full_model_forward.4} parent=59 // pred_check_branch
        %1920 = sbr.rel (%p1918) target = $region84
      $region83: #{full_model_forward.4} parent=59 // pred_region
        %s1921 = smul.u32 2, %s39
      $region84: #{full_model_forward.4} parent=59 // pred_fallthru
        _
      // Predicated region
      $region85: #{full_model_forward.4} parent=59 // pred_check
        %p1922 = pneg %p444
      $region86: #{full_model_forward.4} parent=59 // pred_check_branch
        %1924 = sbr.rel (%p1922) target = $region88
      $region87: #{full_model_forward.4} parent=59 // pred_region
        %s1925 = smul.u32 2, %s39
      $region88: #{full_model_forward.4} parent=59 // pred_fallthru
        _
      // Predicated region
      $region89: #{full_model_forward.4} parent=59 // pred_check
        %p1926 = pneg %p472
      $region90: #{full_model_forward.4} parent=59 // pred_check_branch
        %1928 = sbr.rel (%p1926) target = $region92
      $region91: #{full_model_forward.4} parent=59 // pred_region
        %s1929 = smul.u32 2, %s39
      $region92: #{full_model_forward.4} parent=59 // pred_fallthru
        _
      // Predicated region
      $region93: #{full_model_forward.4} parent=59 // pred_check
        %p1930 = pneg %p500
      $region94: #{full_model_forward.4} parent=59 // pred_check_branch
        %1932 = sbr.rel (%p1930) target = $region96
      $region95: #{full_model_forward.4} parent=59 // pred_region
        %s1933 = smul.u32 2, %s39
      $region96: #{full_model_forward.4} parent=59 // pred_fallthru
        _
      // Predicated region
      $region97: #{full_model_forward.4} parent=59 // pred_check
        %p1934 = pneg %p526
      $region98: #{full_model_forward.4} parent=59 // pred_check_branch
        %1936 = sbr.rel (%p1934) target = $region100
      $region99: #{full_model_forward.4} parent=59 // pred_region
        _
      $region100: #{full_model_forward.4} parent=59 // pred_fallthru
        _
      // Predicated region
      $region101: #{full_model_forward.4} parent=59 // pred_check
        %p1937 = pneg %p552
      $region102: #{full_model_forward.4} parent=59 // pred_check_branch
        %1939 = sbr.rel (%p1937) target = $region104
      $region103: #{full_model_forward.4} parent=59 // pred_region
        _
      $region104: #{full_model_forward.4} parent=59 // pred_fallthru
        _
      // Predicated region
      $region105: #{full_model_forward.4} parent=59 // pred_check
        %p1940 = pneg %p578
      $region106: #{full_model_forward.4} parent=59 // pred_check_branch
        %1942 = sbr.rel (%p1940) target = $region108
      $region107: #{full_model_forward.4} parent=59 // pred_region
        _
      $region108: #{full_model_forward.4} parent=59 // pred_fallthru
        _
      // Predicated region
      $region109: #{full_model_forward.4} parent=59 // pred_check
        %p1943 = pneg %p604
      $region110: #{full_model_forward.4} parent=59 // pred_check_branch
        %1945 = sbr.rel (%p1943) target = $region112
      $region111: #{full_model_forward.4} parent=59 // pred_region
        _
      $region112: #{full_model_forward.4} parent=59 // pred_fallthru
        _
      // Predicated region
      $region113: #{full_model_forward.4} parent=59 // pred_check
        %p1946 = pneg %p630
      $region114: #{full_model_forward.4} parent=59 // pred_check_branch
        %1948 = sbr.rel (%p1946) target = $region116
      $region115: #{full_model_forward.4} parent=59 // pred_region
        _
      $region116: #{full_model_forward.4} parent=59 // pred_fallthru
        _
    $region60: #{full_model_forward.4} parent=5 // pred_fallthru
      _
    %p1949 = scmp.le.s32.totalorder 2, %s29
    // Predicated region
    $region117: #{full_model_forward.4} parent=5 // pred_check
      %p1950 = pneg %p1949
    $region118: #{full_model_forward.4} parent=5 // pred_check_branch
      %1952 = sbr.rel (%p1950) target = $region120
    $region119: #{full_model_forward.4} parent=5 // pred_region
      %s1953 = ssub.s32 %s29, 2
      // Predicated region
      $region121: #{full_model_forward.4} parent=119 // pred_check
        %p1954 = pneg %p310
      $region122: #{full_model_forward.4} parent=119 // pred_check_branch
        %1956 = sbr.rel (%p1954) target = $region124
      $region123: #{full_model_forward.4} parent=119 // pred_region
        %s1957 = smul.u32 2, %s41
        %p1958 = scmp.lt.s32.totalorder %s40, 5
        %s1959 = scalar_select %p1958, %s40, 5
        %p1960 = scmp.lt.s32.totalorder %s1957, 1
        %s1961 = scalar_select %p1960, %s1957, 1
        %s1962 = smul.addr %s1959, 2
        %s1963 = sadd.s32 %s1961, %s1962
        %s1964 = smul.addr %s1963, 4
        %s1965 = scalar_lea.vmem %s10, %s1964
      $region124: #{full_model_forward.4} parent=119 // pred_fallthru
        _
      // Predicated region
      $region125: #{full_model_forward.4} parent=119 // pred_check
        %p1966 = pneg %p338
      $region126: #{full_model_forward.4} parent=119 // pred_check_branch
        %1968 = sbr.rel (%p1966) target = $region128
      $region127: #{full_model_forward.4} parent=119 // pred_region
        %s1969 = smul.u32 2, %s41
        %p1970 = scmp.lt.s32.totalorder %s40, 5
        %s1971 = scalar_select %p1970, %s40, 5
        %p1972 = scmp.lt.s32.totalorder %s1969, 1
        %s1973 = scalar_select %p1972, %s1969, 1
        %s1974 = smul.addr %s1971, 2
        %s1975 = sadd.s32 %s1973, %s1974
        %s1976 = smul.addr %s1975, 4
        %s1977 = scalar_lea.vmem %s11, %s1976
      $region128: #{full_model_forward.4} parent=119 // pred_fallthru
        _
      // Predicated region
      $region129: #{full_model_forward.4} parent=119 // pred_check
        %p1978 = pneg %p366
      $region130: #{full_model_forward.4} parent=119 // pred_check_branch
        %1980 = sbr.rel (%p1978) target = $region132
      $region131: #{full_model_forward.4} parent=119 // pred_region
        %s1981 = smul.u32 2, %s41
        %p1982 = scmp.lt.s32.totalorder %s40, 5
        %s1983 = scalar_select %p1982, %s40, 5
        %p1984 = scmp.lt.s32.totalorder %s1981, 1
        %s1985 = scalar_select %p1984, %s1981, 1
        %s1986 = smul.addr %s1983, 2
        %s1987 = sadd.s32 %s1985, %s1986
        %s1988 = smul.addr %s1987, 4
        %s1989 = scalar_lea.vmem %s12, %s1988
      $region132: #{full_model_forward.4} parent=119 // pred_fallthru
        _
      // Predicated region
      $region133: #{full_model_forward.4} parent=119 // pred_check
        %p1990 = pneg %p394
      $region134: #{full_model_forward.4} parent=119 // pred_check_branch
        %1992 = sbr.rel (%p1990) target = $region136
      $region135: #{full_model_forward.4} parent=119 // pred_region
        %s1993 = smul.u32 2, %s41
        %p1994 = scmp.lt.s32.totalorder %s40, 5
        %s1995 = scalar_select %p1994, %s40, 5
        %p1996 = scmp.lt.s32.totalorder %s1993, 1
        %s1997 = scalar_select %p1996, %s1993, 1
        %s1998 = smul.addr %s1995, 2
        %s1999 = sadd.s32 %s1997, %s1998
        %s2000 = scalar_lea.vmem %s13, %s1999
      $region136: #{full_model_forward.4} parent=119 // pred_fallthru
        _
      // Predicated region
      $region137: #{full_model_forward.4} parent=119 // pred_check
        %p2001 = pneg %p422
      $region138: #{full_model_forward.4} parent=119 // pred_check_branch
        %2003 = sbr.rel (%p2001) target = $region140
      $region139: #{full_model_forward.4} parent=119 // pred_region
        %s2004 = smul.u32 2, %s41
        %p2005 = scmp.lt.s32.totalorder %s40, 5
        %s2006 = scalar_select %p2005, %s40, 5
        %p2007 = scmp.lt.s32.totalorder %s2004, 1
        %s2008 = scalar_select %p2007, %s2004, 1
        %s2009 = smul.addr %s2006, 2
        %s2010 = sadd.s32 %s2008, %s2009
        %s2011 = scalar_lea.vmem %s14, %s2010
      $region140: #{full_model_forward.4} parent=119 // pred_fallthru
        _
      // Predicated region
      $region141: #{full_model_forward.4} parent=119 // pred_check
        %p2012 = pneg %p450
      $region142: #{full_model_forward.4} parent=119 // pred_check_branch
        %2014 = sbr.rel (%p2012) target = $region144
      $region143: #{full_model_forward.4} parent=119 // pred_region
        %s2015 = smul.u32 2, %s41
        %p2016 = scmp.lt.s32.totalorder %s40, 5
        %s2017 = scalar_select %p2016, %s40, 5
        %p2018 = scmp.lt.s32.totalorder %s2015, 1
        %s2019 = scalar_select %p2018, %s2015, 1
        %s2020 = smul.addr %s2017, 2
        %s2021 = sadd.s32 %s2019, %s2020
        %s2022 = smul.addr %s2021, 4
        %s2023 = scalar_lea.vmem %s15, %s2022
      $region144: #{full_model_forward.4} parent=119 // pred_fallthru
        _
      // Predicated region
      $region145: #{full_model_forward.4} parent=119 // pred_check
        %p2024 = pneg %p478
      $region146: #{full_model_forward.4} parent=119 // pred_check_branch
        %2026 = sbr.rel (%p2024) target = $region148
      $region147: #{full_model_forward.4} parent=119 // pred_region
        %s2027 = smul.u32 2, %s41
        %p2028 = scmp.lt.s32.totalorder %s40, 5
        %s2029 = scalar_select %p2028, %s40, 5
        %p2030 = scmp.lt.s32.totalorder %s2027, 1
        %s2031 = scalar_select %p2030, %s2027, 1
        %s2032 = smul.addr %s2029, 2
        %s2033 = sadd.s32 %s2031, %s2032
        %s2034 = smul.addr %s2033, 4
        %s2035 = scalar_lea.vmem %s16, %s2034
      $region148: #{full_model_forward.4} parent=119 // pred_fallthru
        _
      // Predicated region
      $region149: #{full_model_forward.4} parent=119 // pred_check
        %p2036 = pneg %p506
      $region150: #{full_model_forward.4} parent=119 // pred_check_branch
        %2038 = sbr.rel (%p2036) target = $region152
      $region151: #{full_model_forward.4} parent=119 // pred_region
        %s2039 = smul.u32 2, %s41
        %p2040 = scmp.lt.s32.totalorder %s40, 5
        %s2041 = scalar_select %p2040, %s40, 5
        %p2042 = scmp.lt.s32.totalorder %s2039, 1
        %s2043 = scalar_select %p2042, %s2039, 1
        %s2044 = smul.addr %s2041, 2
        %s2045 = sadd.s32 %s2043, %s2044
        %s2046 = smul.addr %s2045, 4
        %s2047 = scalar_lea.vmem %s17, %s2046
      $region152: #{full_model_forward.4} parent=119 // pred_fallthru
        _
      // Predicated region
      $region153: #{full_model_forward.4} parent=119 // pred_check
        %p2048 = pneg %p532
      $region154: #{full_model_forward.4} parent=119 // pred_check_branch
        %2050 = sbr.rel (%p2048) target = $region156
      $region155: #{full_model_forward.4} parent=119 // pred_region
        %p2051 = scmp.lt.s32.totalorder %s40, 5
        %s2052 = scalar_select %p2051, %s40, 5
        %s2053 = smul.addr %s2052, 8
        %s2054 = scalar_lea.vmem %s18, %s2053
      $region156: #{full_model_forward.4} parent=119 // pred_fallthru
        _
      // Predicated region
      $region157: #{full_model_forward.4} parent=119 // pred_check
        %p2055 = pneg %p558
      $region158: #{full_model_forward.4} parent=119 // pred_check_branch
        %2057 = sbr.rel (%p2055) target = $region160
      $region159: #{full_model_forward.4} parent=119 // pred_region
        %p2058 = scmp.lt.s32.totalorder %s40, 5
        %s2059 = scalar_select %p2058, %s40, 5
        %s2060 = smul.addr %s2059, 8
        %s2061 = scalar_lea.vmem %s19, %s2060
      $region160: #{full_model_forward.4} parent=119 // pred_fallthru
        _
      // Predicated region
      $region161: #{full_model_forward.4} parent=119 // pred_check
        %p2062 = pneg %p584
      $region162: #{full_model_forward.4} parent=119 // pred_check_branch
        %2064 = sbr.rel (%p2062) target = $region164
      $region163: #{full_model_forward.4} parent=119 // pred_region
        %p2065 = scmp.lt.s32.totalorder %s40, 5
        %s2066 = scalar_select %p2065, %s40, 5
        %s2067 = smul.addr %s2066, 8
        %s2068 = scalar_lea.vmem %s20, %s2067
      $region164: #{full_model_forward.4} parent=119 // pred_fallthru
        _
      // Predicated region
      $region165: #{full_model_forward.4} parent=119 // pred_check
        %p2069 = pneg %p610
      $region166: #{full_model_forward.4} parent=119 // pred_check_branch
        %2071 = sbr.rel (%p2069) target = $region168
      $region167: #{full_model_forward.4} parent=119 // pred_region
        %p2072 = scmp.lt.s32.totalorder %s40, 5
        %s2073 = scalar_select %p2072, %s40, 5
        %s2074 = smul.addr %s2073, 8
        %s2075 = scalar_lea.vmem %s21, %s2074
      $region168: #{full_model_forward.4} parent=119 // pred_fallthru
        _
      // Predicated region
      $region169: #{full_model_forward.4} parent=119 // pred_check
        %p2076 = pneg %p636
      $region170: #{full_model_forward.4} parent=119 // pred_check_branch
        %2078 = sbr.rel (%p2076) target = $region172
      $region171: #{full_model_forward.4} parent=119 // pred_region
        %p2079 = scmp.lt.s32.totalorder %s40, 5
        %s2080 = scalar_select %p2079, %s40, 5
        %s2081 = smul.addr %s2080, 8
        %s2082 = scalar_lea.vmem %s22, %s2081
      $region172: #{full_model_forward.4} parent=119 // pred_fallthru
        _
    $region120: #{full_model_forward.4} parent=5 // pred_fallthru
      _
  $region6: #{full_model_forward.4} parent=0 // loop_footer
    %s33 = sadd.s32 1, %s29
  $region7: #{full_model_forward.4} parent=0 // loop_footer_branch
    %28 = sbr.rel target = $region3
  $region8: #{full_model_forward.4} parent=0 // loop_exit
    _

// kernel: full_model_forward.7
$region0: #{full_model_forward.7}
  #allocation0 [shape = 'u32[]', space=smem, size = 0x4, offset = 0x4, fixed_abs, tag = 'smem constant byte address 0x4 - core index']
  #allocation1 [shape = 'u32[144,128]{1,0:T(1,128)}', space=vmem, size = 0x12000, scoped, tag = 'internal scratch']
  %s0 = inlined_call_operand.vmem [shape: f32[2,3,1,256], index: 0, kind: input, shape index: {}, may-alias: {0,1}]
  %s1 = inlined_call_operand.vmem [shape: f32[2,3,1,256], index: 1, kind: input, shape index: {}, may-alias: {0,1}]
  %s2 = inlined_call_operand.vmem [shape: f32[2,3,1,256], index: 2, kind: input, shape index: {}, may-alias: {2,3}]
  %s3 = inlined_call_operand.vmem [shape: f32[2,3,1,256], index: 3, kind: input, shape index: {}, may-alias: {2,3}]
  %s4 = inlined_call_operand.vmem [shape: f32[2,3,3,256], index: 4, kind: input, shape index: {}, may-alias: {4,5}]
  %s5 = inlined_call_operand.vmem [shape: f32[2,3,3,256], index: 5, kind: input, shape index: {}, may-alias: {4,5}]
  %s6 = inlined_call_operand.vmem [shape: f32[2,3,3,256], index: 6, kind: input, shape index: {}, may-alias: {6,7}]
  %s7 = inlined_call_operand.vmem [shape: f32[2,3,3,256], index: 7, kind: input, shape index: {}, may-alias: {6,7}]
  %s8 = inlined_call_operand.vmem [shape: f32[2,3,3,256], index: 8, kind: input, shape index: {}, may-alias: {8,9}]
  %s9 = inlined_call_operand.vmem [shape: f32[2,3,3,256], index: 9, kind: input, shape index: {}, may-alias: {8,9}]
  %s10 = inlined_call_operand.vmem [shape: f32[2,3,3,256], index: 10, kind: input, shape index: {}, may-alias: {10,11}]
  %s11 = inlined_call_operand.vmem [shape: f32[2,3,3,256], index: 11, kind: input, shape index: {}, may-alias: {10,11}]
  %s12 = inlined_call_operand.vmem [shape: f32[32,128], index: 12, kind: output, shape index: {0}]
  %s13 = inlined_call_operand.vmem [shape: f32[32,128], index: 13, kind: output, shape index: {1}]
  %s14 = inlined_call_operand.vmem [shape: f32[32,128], index: 14, kind: output, shape index: {2}]
  %15 = xla_tuple %s12, %s13, %s14
  %s16 = sld [smem:[#allocation0]]
  $region101: #{full_model_forward.7} parent=0
    _
  %s18 = ssub.s32 1, %s16
  %s19 = scalar_select 0, %s18, %s16
  loop: start=0, step=1, limit=6
  $region2: #{full_model_forward.7} parent=0 // loop_pre_header
    _
  $region3: #{full_model_forward.7} parent=0 // loop_header
    %s21 = sphi 0, %s25
    %p22 = scmp.ge.s32.totalorder %s21, 6
    %s28 = sphi 0, %s47
    %s29 = sphi 0, %s43
    %s30 = sphi 0, %s39
    %s31 = sphi 0, %s28
    %s32 = sphi 0, %s29
    %s33 = sphi 0, %s30
    %s34 = sphi 0, %s31
    %s35 = sphi 0, %s32
    %s36 = sphi 0, %s33
    %s54 = sphi 0, %s56
    %s57 = sphi 0, %s54
    %s58 = sphi 0, %s57
    %s74 = sphi 0, %s58
    %s86 = sphi 0, %s88
    %s89 = sphi 0, %s86
    %s90 = sphi 0, %s89
    %s106 = sphi 0, %s90
    %s116 = sphi 0, %s118
    %s119 = sphi 0, %s116
    %s120 = sphi 0, %s119
    %s136 = sphi 0, %s120
    %s148 = sphi 0, %s150
    %s151 = sphi 0, %s148
    %s152 = sphi 0, %s151
    %s168 = sphi 0, %s152
    %s178 = sphi 0, %s180
    %s181 = sphi 0, %s178
    %s182 = sphi 0, %s181
    %s198 = sphi 0, %s182
    %s210 = sphi 0, %s212
    %s213 = sphi 0, %s210
    %s214 = sphi 0, %s213
    %s230 = sphi 0, %s214
    %s240 = sphi 0, %s242
    %s243 = sphi 0, %s240
    %s244 = sphi 0, %s243
    %s260 = sphi 0, %s244
    %s272 = sphi 0, %s274
    %s275 = sphi 0, %s272
    %s276 = sphi 0, %s275
    %s292 = sphi 0, %s276
    %s302 = sphi 0, %s304
    %s305 = sphi 0, %s302
    %s306 = sphi 0, %s305
    %s322 = sphi 0, %s306
    %s334 = sphi 0, %s336
    %s337 = sphi 0, %s334
    %s338 = sphi 0, %s337
    %s354 = sphi 0, %s338
    %s364 = sphi 0, %s366
    %s367 = sphi 0, %s364
    %s368 = sphi 0, %s367
    %s384 = sphi 0, %s368
    %s396 = sphi 0, %s398
    %s399 = sphi 0, %s396
    %s400 = sphi 0, %s399
    %s416 = sphi 0, %s400
    %s426 = sphi 0, %s428
    %s429 = sphi 0, %s426
    %s430 = sphi 0, %s429
    %s446 = sphi 0, %s430
    %s456 = sphi 0, %s458
    %s459 = sphi 0, %s456
    %s460 = sphi 0, %s459
    %s476 = sphi 0, %s460
    %s486 = sphi 0, %s488
    %s489 = sphi 0, %s486
    %s490 = sphi 0, %s489
    %s506 = sphi 0, %s490
  $region4: #{full_model_forward.7} parent=0 // loop_header_branch
    %24 = sbr.rel (%p22) target = $region8
  $region5: #{full_model_forward.7} parent=0 // loop_body
    %s26 = ssub.s32 %s21, 1
    %s27 = ssub.s32 %s21, 2
    %s37 = sadd.s32 1, %s30
    %p38 = scmp.ge.s32.totalorder %s37, 1
    %s39 = scalar_select %p38, 0, %s37
    %s40 = sadd.s32 1, %s29
    %s41 = scalar_select %p38, %s40, %s29
    %p42 = scmp.ge.s32.totalorder %s41, 2
    %s43 = scalar_select %p42, 0, %s41
    %s44 = sadd.s32 1, %s28
    %s45 = scalar_select %p42, %s44, %s28
    %p46 = scmp.ge.s32.totalorder %s45, 2
    %s47 = scalar_select %p46, 0, %s45
    %s48 = ssub.s32 %s28, %s47
    %s49 = ssub.s32 %s29, %s43
    %s50 = sor.u32 %s48, %s49
    %s51 = ssub.s32 %s30, %s39
    %s52 = sor.u32 %s50, %s51
    %p53 = scmp.eq.s32.totalorder %s52, 0
    %s55 = sadd.s32 %s54, 1
    %s56 = scalar_select %p53, %s54, %s55
    %p59 = pneg %p53
    %p60 = scmp.eq.s32.totalorder %s21, 3
    %p61 = por %p59, %p60
    %p62 = scmp.ne.s32.totalorder %s54, %s57
    %p63 = scmp.eq.s32.totalorder %s21, 0
    %p64 = por %p62, %p63
    %p65 = scmp.ne.s32.totalorder %s54, %s57
    %p66 = scmp.eq.s32.totalorder %s26, 3
    %p67 = por %p65, %p66
    %p68 = scmp.ne.s32.totalorder %s57, %s58
    %p69 = scmp.eq.s32.totalorder %s26, 0
    %p70 = por %p68, %p69
    %p71 = scmp.ne.s32.totalorder %s57, %s58
    %p72 = scmp.eq.s32.totalorder %s27, 3
    %p73 = por %p71, %p72
    %p75 = scmp.ne.s32.totalorder %s58, %s74
    %p76 = scmp.eq.s32.totalorder %s27, 0
    %p77 = por %p75, %p76
    %s78 = sadd.s32 %s29, 1
    %s79 = sadd.s32 %s43, 1
    %s80 = ssub.s32 %s28, %s47
    %s81 = ssub.s32 %s78, %s79
    %s82 = sor.u32 %s80, %s81
    %s83 = ssub.s32 %s30, %s39
    %s84 = sor.u32 %s82, %s83
    %p85 = scmp.eq.s32.totalorder %s84, 0
    %s87 = sadd.s32 %s86, 1
    %s88 = scalar_select %p85, %s86, %s87
    %p91 = pneg %p85
    %p92 = scmp.eq.s32.totalorder %s21, 3
    %p93 = por %p91, %p92
    %p94 = scmp.ne.s32.totalorder %s86, %s89
    %p95 = scmp.eq.s32.totalorder %s21, 0
    %p96 = por %p94, %p95
    %p97 = scmp.ne.s32.totalorder %s86, %s89
    %p98 = scmp.eq.s32.totalorder %s26, 3
    %p99 = por %p97, %p98
    %p100 = scmp.ne.s32.totalorder %s89, %s90
    %p101 = scmp.eq.s32.totalorder %s26, 0
    %p102 = por %p100, %p101
    %p103 = scmp.ne.s32.totalorder %s89, %s90
    %p104 = scmp.eq.s32.totalorder %s27, 3
    %p105 = por %p103, %p104
    %p107 = scmp.ne.s32.totalorder %s90, %s106
    %p108 = scmp.eq.s32.totalorder %s27, 0
    %p109 = por %p107, %p108
    %s110 = ssub.s32 %s28, %s47
    %s111 = ssub.s32 %s29, %s43
    %s112 = sor.u32 %s110, %s111
    %s113 = ssub.s32 %s30, %s39
    %s114 = sor.u32 %s112, %s113
    %p115 = scmp.eq.s32.totalorder %s114, 0
    %s117 = sadd.s32 %s116, 1
    %s118 = scalar_select %p115, %s116, %s117
    %p121 = pneg %p115
    %p122 = scmp.eq.s32.totalorder %s21, 3
    %p123 = por %p121, %p122
    %p124 = scmp.ne.s32.totalorder %s116, %s119
    %p125 = scmp.eq.s32.totalorder %s21, 0
    %p126 = por %p124, %p125
    %p127 = scmp.ne.s32.totalorder %s116, %s119
    %p128 = scmp.eq.s32.totalorder %s26, 3
    %p129 = por %p127, %p128
    %p130 = scmp.ne.s32.totalorder %s119, %s120
    %p131 = scmp.eq.s32.totalorder %s26, 0
    %p132 = por %p130, %p131
    %p133 = scmp.ne.s32.totalorder %s119, %s120
    %p134 = scmp.eq.s32.totalorder %s27, 3
    %p135 = por %p133, %p134
    %p137 = scmp.ne.s32.totalorder %s120, %s136
    %p138 = scmp.eq.s32.totalorder %s27, 0
    %p139 = por %p137, %p138
    %s140 = sadd.s32 %s29, 1
    %s141 = sadd.s32 %s43, 1
    %s142 = ssub.s32 %s28, %s47
    %s143 = ssub.s32 %s140, %s141
    %s144 = sor.u32 %s142, %s143
    %s145 = ssub.s32 %s30, %s39
    %s146 = sor.u32 %s144, %s145
    %p147 = scmp.eq.s32.totalorder %s146, 0
    %s149 = sadd.s32 %s148, 1
    %s150 = scalar_select %p147, %s148, %s149
    %p153 = pneg %p147
    %p154 = scmp.eq.s32.totalorder %s21, 3
    %p155 = por %p153, %p154
    %p156 = scmp.ne.s32.totalorder %s148, %s151
    %p157 = scmp.eq.s32.totalorder %s21, 0
    %p158 = por %p156, %p157
    %p159 = scmp.ne.s32.totalorder %s148, %s151
    %p160 = scmp.eq.s32.totalorder %s26, 3
    %p161 = por %p159, %p160
    %p162 = scmp.ne.s32.totalorder %s151, %s152
    %p163 = scmp.eq.s32.totalorder %s26, 0
    %p164 = por %p162, %p163
    %p165 = scmp.ne.s32.totalorder %s151, %s152
    %p166 = scmp.eq.s32.totalorder %s27, 3
    %p167 = por %p165, %p166
    %p169 = scmp.ne.s32.totalorder %s152, %s168
    %p170 = scmp.eq.s32.totalorder %s27, 0
    %p171 = por %p169, %p170
    %s172 = ssub.s32 %s28, %s47
    %s173 = ssub.s32 %s29, %s43
    %s174 = sor.u32 %s172, %s173
    %s175 = ssub.s32 %s30, %s39
    %s176 = sor.u32 %s174, %s175
    %p177 = scmp.eq.s32.totalorder %s176, 0
    %s179 = sadd.s32 %s178, 1
    %s180 = scalar_select %p177, %s178, %s179
    %p183 = pneg %p177
    %p184 = scmp.eq.s32.totalorder %s21, 3
    %p185 = por %p183, %p184
    %p186 = scmp.ne.s32.totalorder %s178, %s181
    %p187 = scmp.eq.s32.totalorder %s21, 0
    %p188 = por %p186, %p187
    %p189 = scmp.ne.s32.totalorder %s178, %s181
    %p190 = scmp.eq.s32.totalorder %s26, 3
    %p191 = por %p189, %p190
    %p192 = scmp.ne.s32.totalorder %s181, %s182
    %p193 = scmp.eq.s32.totalorder %s26, 0
    %p194 = por %p192, %p193
    %p195 = scmp.ne.s32.totalorder %s181, %s182
    %p196 = scmp.eq.s32.totalorder %s27, 3
    %p197 = por %p195, %p196
    %p199 = scmp.ne.s32.totalorder %s182, %s198
    %p200 = scmp.eq.s32.totalorder %s27, 0
    %p201 = por %p199, %p200
    %s202 = sadd.s32 %s29, 1
    %s203 = sadd.s32 %s43, 1
    %s204 = ssub.s32 %s28, %s47
    %s205 = ssub.s32 %s202, %s203
    %s206 = sor.u32 %s204, %s205
    %s207 = ssub.s32 %s30, %s39
    %s208 = sor.u32 %s206, %s207
    %p209 = scmp.eq.s32.totalorder %s208, 0
    %s211 = sadd.s32 %s210, 1
    %s212 = scalar_select %p209, %s210, %s211
    %p215 = pneg %p209
    %p216 = scmp.eq.s32.totalorder %s21, 3
    %p217 = por %p215, %p216
    %p218 = scmp.ne.s32.totalorder %s210, %s213
    %p219 = scmp.eq.s32.totalorder %s21, 0
    %p220 = por %p218, %p219
    %p221 = scmp.ne.s32.totalorder %s210, %s213
    %p222 = scmp.eq.s32.totalorder %s26, 3
    %p223 = por %p221, %p222
    %p224 = scmp.ne.s32.totalorder %s213, %s214
    %p225 = scmp.eq.s32.totalorder %s26, 0
    %p226 = por %p224, %p225
    %p227 = scmp.ne.s32.totalorder %s213, %s214
    %p228 = scmp.eq.s32.totalorder %s27, 3
    %p229 = por %p227, %p228
    %p231 = scmp.ne.s32.totalorder %s214, %s230
    %p232 = scmp.eq.s32.totalorder %s27, 0
    %p233 = por %p231, %p232
    %s234 = ssub.s32 %s28, %s47
    %s235 = ssub.s32 %s29, %s43
    %s236 = sor.u32 %s234, %s235
    %s237 = ssub.s32 %s30, %s39
    %s238 = sor.u32 %s236, %s237
    %p239 = scmp.eq.s32.totalorder %s238, 0
    %s241 = sadd.s32 %s240, 1
    %s242 = scalar_select %p239, %s240, %s241
    %p245 = pneg %p239
    %p246 = scmp.eq.s32.totalorder %s21, 3
    %p247 = por %p245, %p246
    %p248 = scmp.ne.s32.totalorder %s240, %s243
    %p249 = scmp.eq.s32.totalorder %s21, 0
    %p250 = por %p248, %p249
    %p251 = scmp.ne.s32.totalorder %s240, %s243
    %p252 = scmp.eq.s32.totalorder %s26, 3
    %p253 = por %p251, %p252
    %p254 = scmp.ne.s32.totalorder %s243, %s244
    %p255 = scmp.eq.s32.totalorder %s26, 0
    %p256 = por %p254, %p255
    %p257 = scmp.ne.s32.totalorder %s243, %s244
    %p258 = scmp.eq.s32.totalorder %s27, 3
    %p259 = por %p257, %p258
    %p261 = scmp.ne.s32.totalorder %s244, %s260
    %p262 = scmp.eq.s32.totalorder %s27, 0
    %p263 = por %p261, %p262
    %s264 = sadd.s32 %s29, 1
    %s265 = sadd.s32 %s43, 1
    %s266 = ssub.s32 %s28, %s47
    %s267 = ssub.s32 %s264, %s265
    %s268 = sor.u32 %s266, %s267
    %s269 = ssub.s32 %s30, %s39
    %s270 = sor.u32 %s268, %s269
    %p271 = scmp.eq.s32.totalorder %s270, 0
    %s273 = sadd.s32 %s272, 1
    %s274 = scalar_select %p271, %s272, %s273
    %p277 = pneg %p271
    %p278 = scmp.eq.s32.totalorder %s21, 3
    %p279 = por %p277, %p278
    %p280 = scmp.ne.s32.totalorder %s272, %s275
    %p281 = scmp.eq.s32.totalorder %s21, 0
    %p282 = por %p280, %p281
    %p283 = scmp.ne.s32.totalorder %s272, %s275
    %p284 = scmp.eq.s32.totalorder %s26, 3
    %p285 = por %p283, %p284
    %p286 = scmp.ne.s32.totalorder %s275, %s276
    %p287 = scmp.eq.s32.totalorder %s26, 0
    %p288 = por %p286, %p287
    %p289 = scmp.ne.s32.totalorder %s275, %s276
    %p290 = scmp.eq.s32.totalorder %s27, 3
    %p291 = por %p289, %p290
    %p293 = scmp.ne.s32.totalorder %s276, %s292
    %p294 = scmp.eq.s32.totalorder %s27, 0
    %p295 = por %p293, %p294
    %s296 = ssub.s32 %s28, %s47
    %s297 = ssub.s32 %s29, %s43
    %s298 = sor.u32 %s296, %s297
    %s299 = ssub.s32 %s30, %s39
    %s300 = sor.u32 %s298, %s299
    %p301 = scmp.eq.s32.totalorder %s300, 0
    %s303 = sadd.s32 %s302, 1
    %s304 = scalar_select %p301, %s302, %s303
    %p307 = pneg %p301
    %p308 = scmp.eq.s32.totalorder %s21, 3
    %p309 = por %p307, %p308
    %p310 = scmp.ne.s32.totalorder %s302, %s305
    %p311 = scmp.eq.s32.totalorder %s21, 0
    %p312 = por %p310, %p311
    %p313 = scmp.ne.s32.totalorder %s302, %s305
    %p314 = scmp.eq.s32.totalorder %s26, 3
    %p315 = por %p313, %p314
    %p316 = scmp.ne.s32.totalorder %s305, %s306
    %p317 = scmp.eq.s32.totalorder %s26, 0
    %p318 = por %p316, %p317
    %p319 = scmp.ne.s32.totalorder %s305, %s306
    %p320 = scmp.eq.s32.totalorder %s27, 3
    %p321 = por %p319, %p320
    %p323 = scmp.ne.s32.totalorder %s306, %s322
    %p324 = scmp.eq.s32.totalorder %s27, 0
    %p325 = por %p323, %p324
    %s326 = sadd.s32 %s29, 1
    %s327 = sadd.s32 %s43, 1
    %s328 = ssub.s32 %s28, %s47
    %s329 = ssub.s32 %s326, %s327
    %s330 = sor.u32 %s328, %s329
    %s331 = ssub.s32 %s30, %s39
    %s332 = sor.u32 %s330, %s331
    %p333 = scmp.eq.s32.totalorder %s332, 0
    %s335 = sadd.s32 %s334, 1
    %s336 = scalar_select %p333, %s334, %s335
    %p339 = pneg %p333
    %p340 = scmp.eq.s32.totalorder %s21, 3
    %p341 = por %p339, %p340
    %p342 = scmp.ne.s32.totalorder %s334, %s337
    %p343 = scmp.eq.s32.totalorder %s21, 0
    %p344 = por %p342, %p343
    %p345 = scmp.ne.s32.totalorder %s334, %s337
    %p346 = scmp.eq.s32.totalorder %s26, 3
    %p347 = por %p345, %p346
    %p348 = scmp.ne.s32.totalorder %s337, %s338
    %p349 = scmp.eq.s32.totalorder %s26, 0
    %p350 = por %p348, %p349
    %p351 = scmp.ne.s32.totalorder %s337, %s338
    %p352 = scmp.eq.s32.totalorder %s27, 3
    %p353 = por %p351, %p352
    %p355 = scmp.ne.s32.totalorder %s338, %s354
    %p356 = scmp.eq.s32.totalorder %s27, 0
    %p357 = por %p355, %p356
    %s358 = ssub.s32 %s28, %s47
    %s359 = ssub.s32 %s29, %s43
    %s360 = sor.u32 %s358, %s359
    %s361 = ssub.s32 %s30, %s39
    %s362 = sor.u32 %s360, %s361
    %p363 = scmp.eq.s32.totalorder %s362, 0
    %s365 = sadd.s32 %s364, 1
    %s366 = scalar_select %p363, %s364, %s365
    %p369 = pneg %p363
    %p370 = scmp.eq.s32.totalorder %s21, 3
    %p371 = por %p369, %p370
    %p372 = scmp.ne.s32.totalorder %s364, %s367
    %p373 = scmp.eq.s32.totalorder %s21, 0
    %p374 = por %p372, %p373
    %p375 = scmp.ne.s32.totalorder %s364, %s367
    %p376 = scmp.eq.s32.totalorder %s26, 3
    %p377 = por %p375, %p376
    %p378 = scmp.ne.s32.totalorder %s367, %s368
    %p379 = scmp.eq.s32.totalorder %s26, 0
    %p380 = por %p378, %p379
    %p381 = scmp.ne.s32.totalorder %s367, %s368
    %p382 = scmp.eq.s32.totalorder %s27, 3
    %p383 = por %p381, %p382
    %p385 = scmp.ne.s32.totalorder %s368, %s384
    %p386 = scmp.eq.s32.totalorder %s27, 0
    %p387 = por %p385, %p386
    %s388 = sadd.s32 %s29, 1
    %s389 = sadd.s32 %s43, 1
    %s390 = ssub.s32 %s28, %s47
    %s391 = ssub.s32 %s388, %s389
    %s392 = sor.u32 %s390, %s391
    %s393 = ssub.s32 %s30, %s39
    %s394 = sor.u32 %s392, %s393
    %p395 = scmp.eq.s32.totalorder %s394, 0
    %s397 = sadd.s32 %s396, 1
    %s398 = scalar_select %p395, %s396, %s397
    %p401 = pneg %p395
    %p402 = scmp.eq.s32.totalorder %s21, 3
    %p403 = por %p401, %p402
    %p404 = scmp.ne.s32.totalorder %s396, %s399
    %p405 = scmp.eq.s32.totalorder %s21, 0
    %p406 = por %p404, %p405
    %p407 = scmp.ne.s32.totalorder %s396, %s399
    %p408 = scmp.eq.s32.totalorder %s26, 3
    %p409 = por %p407, %p408
    %p410 = scmp.ne.s32.totalorder %s399, %s400
    %p411 = scmp.eq.s32.totalorder %s26, 0
    %p412 = por %p410, %p411
    %p413 = scmp.ne.s32.totalorder %s399, %s400
    %p414 = scmp.eq.s32.totalorder %s27, 3
    %p415 = por %p413, %p414
    %p417 = scmp.ne.s32.totalorder %s400, %s416
    %p418 = scmp.eq.s32.totalorder %s27, 0
    %p419 = por %p417, %p418
    %s420 = smul.u32 %s28, 2
    %s421 = sadd.s32 %s420, %s29
    %s422 = smul.u32 %s47, 2
    %s423 = sadd.s32 %s422, %s43
    %s424 = ssub.s32 %s421, %s423
    %p425 = scmp.eq.s32.totalorder %s424, 0
    %s427 = sadd.s32 %s426, 1
    %s428 = scalar_select %p425, %s426, %s427
    %p431 = pneg %p425
    %p432 = scmp.eq.s32.totalorder %s21, 3
    %p433 = por %p431, %p432
    %p434 = scmp.ne.s32.totalorder %s426, %s429
    %p435 = scmp.eq.s32.totalorder %s21, 0
    %p436 = por %p434, %p435
    %p437 = scmp.ne.s32.totalorder %s426, %s429
    %p438 = scmp.eq.s32.totalorder %s26, 3
    %p439 = por %p437, %p438
    %p440 = scmp.ne.s32.totalorder %s429, %s430
    %p441 = scmp.eq.s32.totalorder %s26, 0
    %p442 = por %p440, %p441
    %p443 = scmp.ne.s32.totalorder %s429, %s430
    %p444 = scmp.eq.s32.totalorder %s27, 3
    %p445 = por %p443, %p444
    %p447 = scmp.ne.s32.totalorder %s430, %s446
    %p448 = scmp.eq.s32.totalorder %s27, 0
    %p449 = por %p447, %p448
    %s450 = smul.u32 %s28, 2
    %s451 = sadd.s32 %s450, %s29
    %s452 = smul.u32 %s47, 2
    %s453 = sadd.s32 %s452, %s43
    %s454 = ssub.s32 %s451, %s453
    %p455 = scmp.eq.s32.totalorder %s454, 0
    %s457 = sadd.s32 %s456, 1
    %s458 = scalar_select %p455, %s456, %s457
    %p461 = pneg %p455
    %p462 = scmp.eq.s32.totalorder %s21, 3
    %p463 = por %p461, %p462
    %p464 = scmp.ne.s32.totalorder %s456, %s459
    %p465 = scmp.eq.s32.totalorder %s21, 0
    %p466 = por %p464, %p465
    %p467 = scmp.ne.s32.totalorder %s456, %s459
    %p468 = scmp.eq.s32.totalorder %s26, 3
    %p469 = por %p467, %p468
    %p470 = scmp.ne.s32.totalorder %s459, %s460
    %p471 = scmp.eq.s32.totalorder %s26, 0
    %p472 = por %p470, %p471
    %p473 = scmp.ne.s32.totalorder %s459, %s460
    %p474 = scmp.eq.s32.totalorder %s27, 3
    %p475 = por %p473, %p474
    %p477 = scmp.ne.s32.totalorder %s460, %s476
    %p478 = scmp.eq.s32.totalorder %s27, 0
    %p479 = por %p477, %p478
    %s480 = smul.u32 %s28, 2
    %s481 = sadd.s32 %s480, %s29
    %s482 = smul.u32 %s47, 2
    %s483 = sadd.s32 %s482, %s43
    %s484 = ssub.s32 %s481, %s483
    %p485 = scmp.eq.s32.totalorder %s484, 0
    %s487 = sadd.s32 %s486, 1
    %s488 = scalar_select %p485, %s486, %s487
    %p491 = pneg %p485
    %p492 = scmp.eq.s32.totalorder %s21, 3
    %p493 = por %p491, %p492
    %p494 = scmp.ne.s32.totalorder %s486, %s489
    %p495 = scmp.eq.s32.totalorder %s21, 0
    %p496 = por %p494, %p495
    %p497 = scmp.ne.s32.totalorder %s486, %s489
    %p498 = scmp.eq.s32.totalorder %s26, 3
    %p499 = por %p497, %p498
    %p500 = scmp.ne.s32.totalorder %s489, %s490
    %p501 = scmp.eq.s32.totalorder %s26, 0
    %p502 = por %p500, %p501
    %p503 = scmp.ne.s32.totalorder %s489, %s490
    %p504 = scmp.eq.s32.totalorder %s27, 3
    %p505 = por %p503, %p504
    %p507 = scmp.ne.s32.totalorder %s490, %s506
    %p508 = scmp.eq.s32.totalorder %s27, 0
    %p509 = por %p507, %p508
    %p510 = scmp.le.s32.totalorder 1, %s21
    %p511 = scmp.lt.s32.totalorder %s21, 5
    %p512 = pnand %p510, %p511
    %p513 = pneg %p512
    // Predicated region
    $region9: #{full_model_forward.7} parent=5 // pred_check
      _
    $region10: #{full_model_forward.7} parent=5 // pred_check_branch
      %515 = sbr.rel (%p512) target = $region12
    $region11: #{full_model_forward.7} parent=5 // pred_region
      %s516 = ssub.s32 %s21, 1
    $region12: #{full_model_forward.7} parent=5 // pred_fallthru
      _
    %p517 = scmp.lt.s32.totalorder %s21, 4
    // Predicated region
    $region13: #{full_model_forward.7} parent=5 // pred_check
      %p518 = pneg %p517
    $region14: #{full_model_forward.7} parent=5 // pred_check_branch
      %520 = sbr.rel (%p518) target = $region16
    $region15: #{full_model_forward.7} parent=5 // pred_region
      // Predicated region
      $region17: #{full_model_forward.7} parent=15 // pred_check
        %p521 = pneg %p64
      $region18: #{full_model_forward.7} parent=15 // pred_check_branch
        %523 = sbr.rel (%p521) target = $region20
      $region19: #{full_model_forward.7} parent=15 // pred_region
        %s524 = smul.u32 2, %s30
        %p525 = scmp.lt.s32.totalorder %s28, 1
        %s526 = scalar_select %p525, %s28, 1
        %p527 = scmp.lt.s32.totalorder %s29, 2
        %s528 = scalar_select %p527, %s29, 2
        %p529 = scmp.lt.s32.totalorder %s524, 1
        %s530 = scalar_select %p529, %s524, 1
        %s531 = smul.addr %s528, 2
        %s532 = sadd.s32 %s530, %s531
        %s533 = smul.addr %s526, 6
        %s534 = sadd.s32 %s532, %s533
        %s535 = scalar_lea.vmem %s0, %s534
        %s536 = smul.u32 2, %s30
      $region20: #{full_model_forward.7} parent=15 // pred_fallthru
        _
      // Predicated region
      $region21: #{full_model_forward.7} parent=15 // pred_check
        %p537 = pneg %p96
      $region22: #{full_model_forward.7} parent=15 // pred_check_branch
        %539 = sbr.rel (%p537) target = $region24
      $region23: #{full_model_forward.7} parent=15 // pred_region
        %s540 = sadd.s32 %s29, 1
        %s541 = smul.u32 2, %s30
        %p542 = scmp.lt.s32.totalorder %s28, 1
        %s543 = scalar_select %p542, %s28, 1
        %p544 = scmp.lt.s32.totalorder %s540, 2
        %s545 = scalar_select %p544, %s540, 2
        %p546 = scmp.lt.s32.totalorder %s541, 1
        %s547 = scalar_select %p546, %s541, 1
        %s548 = smul.addr %s545, 2
        %s549 = sadd.s32 %s547, %s548
        %s550 = smul.addr %s543, 6
        %s551 = sadd.s32 %s549, %s550
        %s552 = scalar_lea.vmem %s1, %s551
        %s553 = sadd.s32 %s29, 1
        %s554 = smul.u32 2, %s30
      $region24: #{full_model_forward.7} parent=15 // pred_fallthru
        _
      // Predicated region
      $region25: #{full_model_forward.7} parent=15 // pred_check
        %p555 = pneg %p126
      $region26: #{full_model_forward.7} parent=15 // pred_check_branch
        %557 = sbr.rel (%p555) target = $region28
      $region27: #{full_model_forward.7} parent=15 // pred_region
        %s558 = smul.u32 2, %s30
        %p559 = scmp.lt.s32.totalorder %s28, 1
        %s560 = scalar_select %p559, %s28, 1
        %p561 = scmp.lt.s32.totalorder %s29, 2
        %s562 = scalar_select %p561, %s29, 2
        %p563 = scmp.lt.s32.totalorder %s558, 1
        %s564 = scalar_select %p563, %s558, 1
        %s565 = smul.addr %s562, 2
        %s566 = sadd.s32 %s564, %s565
        %s567 = smul.addr %s560, 6
        %s568 = sadd.s32 %s566, %s567
        %s569 = scalar_lea.vmem %s2, %s568
        %s570 = smul.u32 2, %s30
      $region28: #{full_model_forward.7} parent=15 // pred_fallthru
        _
      // Predicated region
      $region29: #{full_model_forward.7} parent=15 // pred_check
        %p571 = pneg %p158
      $region30: #{full_model_forward.7} parent=15 // pred_check_branch
        %573 = sbr.rel (%p571) target = $region32
      $region31: #{full_model_forward.7} parent=15 // pred_region
        %s574 = sadd.s32 %s29, 1
        %s575 = smul.u32 2, %s30
        %p576 = scmp.lt.s32.totalorder %s28, 1
        %s577 = scalar_select %p576, %s28, 1
        %p578 = scmp.lt.s32.totalorder %s574, 2
        %s579 = scalar_select %p578, %s574, 2
        %p580 = scmp.lt.s32.totalorder %s575, 1
        %s581 = scalar_select %p580, %s575, 1
        %s582 = smul.addr %s579, 2
        %s583 = sadd.s32 %s581, %s582
        %s584 = smul.addr %s577, 6
        %s585 = sadd.s32 %s583, %s584
        %s586 = scalar_lea.vmem %s3, %s585
        %s587 = sadd.s32 %s29, 1
        %s588 = smul.u32 2, %s30
      $region32: #{full_model_forward.7} parent=15 // pred_fallthru
        _
      // Predicated region
      $region33: #{full_model_forward.7} parent=15 // pred_check
        %p589 = pneg %p188
      $region34: #{full_model_forward.7} parent=15 // pred_check_branch
        %591 = sbr.rel (%p589) target = $region36
      $region35: #{full_model_forward.7} parent=15 // pred_region
        %s592 = smul.u32 2, %s30
        %p593 = scmp.lt.s32.totalorder %s28, 1
        %s594 = scalar_select %p593, %s28, 1
        %p595 = scmp.lt.s32.totalorder %s29, 2
        %s596 = scalar_select %p595, %s29, 2
        %p597 = scmp.lt.s32.totalorder %s592, 1
        %s598 = scalar_select %p597, %s592, 1
        %s599 = smul.addr %s596, 2
        %s600 = sadd.s32 %s598, %s599
        %s601 = smul.addr %s594, 6
        %s602 = sadd.s32 %s600, %s601
        %s603 = smul.addr %s602, 4
        %s604 = scalar_lea.vmem %s4, %s603
        %s605 = smul.u32 2, %s30
      $region36: #{full_model_forward.7} parent=15 // pred_fallthru
        _
      // Predicated region
      $region37: #{full_model_forward.7} parent=15 // pred_check
        %p606 = pneg %p220
      $region38: #{full_model_forward.7} parent=15 // pred_check_branch
        %608 = sbr.rel (%p606) target = $region40
      $region39: #{full_model_forward.7} parent=15 // pred_region
        %s609 = sadd.s32 %s29, 1
        %s610 = smul.u32 2, %s30
        %p611 = scmp.lt.s32.totalorder %s28, 1
        %s612 = scalar_select %p611, %s28, 1
        %p613 = scmp.lt.s32.totalorder %s609, 2
        %s614 = scalar_select %p613, %s609, 2
        %p615 = scmp.lt.s32.totalorder %s610, 1
        %s616 = scalar_select %p615, %s610, 1
        %s617 = smul.addr %s614, 2
        %s618 = sadd.s32 %s616, %s617
        %s619 = smul.addr %s612, 6
        %s620 = sadd.s32 %s618, %s619
        %s621 = smul.addr %s620, 4
        %s622 = scalar_lea.vmem %s5, %s621
        %s623 = sadd.s32 %s29, 1
        %s624 = smul.u32 2, %s30
      $region40: #{full_model_forward.7} parent=15 // pred_fallthru
        _
      // Predicated region
      $region41: #{full_model_forward.7} parent=15 // pred_check
        %p625 = pneg %p250
      $region42: #{full_model_forward.7} parent=15 // pred_check_branch
        %627 = sbr.rel (%p625) target = $region44
      $region43: #{full_model_forward.7} parent=15 // pred_region
        %s628 = smul.u32 2, %s30
        %p629 = scmp.lt.s32.totalorder %s28, 1
        %s630 = scalar_select %p629, %s28, 1
        %p631 = scmp.lt.s32.totalorder %s29, 2
        %s632 = scalar_select %p631, %s29, 2
        %p633 = scmp.lt.s32.totalorder %s628, 1
        %s634 = scalar_select %p633, %s628, 1
        %s635 = smul.addr %s632, 2
        %s636 = sadd.s32 %s634, %s635
        %s637 = smul.addr %s630, 6
        %s638 = sadd.s32 %s636, %s637
        %s639 = smul.addr %s638, 4
        %s640 = scalar_lea.vmem %s6, %s639
        %s641 = smul.u32 2, %s30
      $region44: #{full_model_forward.7} parent=15 // pred_fallthru
        _
      // Predicated region
      $region45: #{full_model_forward.7} parent=15 // pred_check
        %p642 = pneg %p282
      $region46: #{full_model_forward.7} parent=15 // pred_check_branch
        %644 = sbr.rel (%p642) target = $region48
      $region47: #{full_model_forward.7} parent=15 // pred_region
        %s645 = sadd.s32 %s29, 1
        %s646 = smul.u32 2, %s30
        %p647 = scmp.lt.s32.totalorder %s28, 1
        %s648 = scalar_select %p647, %s28, 1
        %p649 = scmp.lt.s32.totalorder %s645, 2
        %s650 = scalar_select %p649, %s645, 2
        %p651 = scmp.lt.s32.totalorder %s646, 1
        %s652 = scalar_select %p651, %s646, 1
        %s653 = smul.addr %s650, 2
        %s654 = sadd.s32 %s652, %s653
        %s655 = smul.addr %s648, 6
        %s656 = sadd.s32 %s654, %s655
        %s657 = smul.addr %s656, 4
        %s658 = scalar_lea.vmem %s7, %s657
        %s659 = sadd.s32 %s29, 1
        %s660 = smul.u32 2, %s30
      $region48: #{full_model_forward.7} parent=15 // pred_fallthru
        _
      // Predicated region
      $region49: #{full_model_forward.7} parent=15 // pred_check
        %p661 = pneg %p312
      $region50: #{full_model_forward.7} parent=15 // pred_check_branch
        %663 = sbr.rel (%p661) target = $region52
      $region51: #{full_model_forward.7} parent=15 // pred_region
        %s664 = smul.u32 2, %s30
        %p665 = scmp.lt.s32.totalorder %s28, 1
        %s666 = scalar_select %p665, %s28, 1
        %p667 = scmp.lt.s32.totalorder %s29, 2
        %s668 = scalar_select %p667, %s29, 2
        %p669 = scmp.lt.s32.totalorder %s664, 1
        %s670 = scalar_select %p669, %s664, 1
        %s671 = smul.addr %s668, 2
        %s672 = sadd.s32 %s670, %s671
        %s673 = smul.addr %s666, 6
        %s674 = sadd.s32 %s672, %s673
        %s675 = smul.addr %s674, 4
        %s676 = scalar_lea.vmem %s8, %s675
        %s677 = smul.u32 2, %s30
      $region52: #{full_model_forward.7} parent=15 // pred_fallthru
        _
      // Predicated region
      $region53: #{full_model_forward.7} parent=15 // pred_check
        %p678 = pneg %p344
      $region54: #{full_model_forward.7} parent=15 // pred_check_branch
        %680 = sbr.rel (%p678) target = $region56
      $region55: #{full_model_forward.7} parent=15 // pred_region
        %s681 = sadd.s32 %s29, 1
        %s682 = smul.u32 2, %s30
        %p683 = scmp.lt.s32.totalorder %s28, 1
        %s684 = scalar_select %p683, %s28, 1
        %p685 = scmp.lt.s32.totalorder %s681, 2
        %s686 = scalar_select %p685, %s681, 2
        %p687 = scmp.lt.s32.totalorder %s682, 1
        %s688 = scalar_select %p687, %s682, 1
        %s689 = smul.addr %s686, 2
        %s690 = sadd.s32 %s688, %s689
        %s691 = smul.addr %s684, 6
        %s692 = sadd.s32 %s690, %s691
        %s693 = smul.addr %s692, 4
        %s694 = scalar_lea.vmem %s9, %s693
        %s695 = sadd.s32 %s29, 1
        %s696 = smul.u32 2, %s30
      $region56: #{full_model_forward.7} parent=15 // pred_fallthru
        _
      // Predicated region
      $region57: #{full_model_forward.7} parent=15 // pred_check
        %p697 = pneg %p374
      $region58: #{full_model_forward.7} parent=15 // pred_check_branch
        %699 = sbr.rel (%p697) target = $region60
      $region59: #{full_model_forward.7} parent=15 // pred_region
        %s700 = smul.u32 2, %s30
        %p701 = scmp.lt.s32.totalorder %s28, 1
        %s702 = scalar_select %p701, %s28, 1
        %p703 = scmp.lt.s32.totalorder %s29, 2
        %s704 = scalar_select %p703, %s29, 2
        %p705 = scmp.lt.s32.totalorder %s700, 1
        %s706 = scalar_select %p705, %s700, 1
        %s707 = smul.addr %s704, 2
        %s708 = sadd.s32 %s706, %s707
        %s709 = smul.addr %s702, 6
        %s710 = sadd.s32 %s708, %s709
        %s711 = smul.addr %s710, 4
        %s712 = scalar_lea.vmem %s10, %s711
        %s713 = smul.u32 2, %s30
      $region60: #{full_model_forward.7} parent=15 // pred_fallthru
        _
      // Predicated region
      $region61: #{full_model_forward.7} parent=15 // pred_check
        %p714 = pneg %p406
      $region62: #{full_model_forward.7} parent=15 // pred_check_branch
        %716 = sbr.rel (%p714) target = $region64
      $region63: #{full_model_forward.7} parent=15 // pred_region
        %s717 = sadd.s32 %s29, 1
        %s718 = smul.u32 2, %s30
        %p719 = scmp.lt.s32.totalorder %s28, 1
        %s720 = scalar_select %p719, %s28, 1
        %p721 = scmp.lt.s32.totalorder %s717, 2
        %s722 = scalar_select %p721, %s717, 2
        %p723 = scmp.lt.s32.totalorder %s718, 1
        %s724 = scalar_select %p723, %s718, 1
        %s725 = smul.addr %s722, 2
        %s726 = sadd.s32 %s724, %s725
        %s727 = smul.addr %s720, 6
        %s728 = sadd.s32 %s726, %s727
        %s729 = smul.addr %s728, 4
        %s730 = scalar_lea.vmem %s11, %s729
        %s731 = sadd.s32 %s29, 1
        %s732 = smul.u32 2, %s30
      $region64: #{full_model_forward.7} parent=15 // pred_fallthru
        _
    $region16: #{full_model_forward.7} parent=5 // pred_fallthru
      _
    %p733 = scmp.le.s32.totalorder 1, %s21
    %p734 = scmp.lt.s32.totalorder %s21, 5
    %p735 = pnand %p733, %p734
    %p736 = pneg %p735
    // Predicated region
    $region65: #{full_model_forward.7} parent=5 // pred_check
      _
    $region66: #{full_model_forward.7} parent=5 // pred_check_branch
      %738 = sbr.rel (%p735) target = $region68
    $region67: #{full_model_forward.7} parent=5 // pred_region
      %s739 = ssub.s32 %s21, 1
      %s740 = smul.u32 2, %s33
      %p741 = scmp.lt.s32.totalorder %s31, 1
      %s742 = scalar_select %p741, %s31, 1
      %p743 = scmp.lt.s32.totalorder %s32, 2
      %s744 = scalar_select %p743, %s32, 2
      %p745 = scmp.lt.s32.totalorder %s740, 1
      %s746 = scalar_select %p745, %s740, 1
      %s747 = smul.addr %s744, 2
      %s748 = sadd.s32 %s746, %s747
      %s749 = smul.addr %s742, 6
      %s750 = sadd.s32 %s748, %s749
      %s751 = scalar_lea.vmem %s0, %s750
      %p752 = pneg %p70
      %p753 = pneg %p67
      %s754 = sadd.s32 %s32, 1
      %s755 = smul.u32 2, %s33
      %p756 = scmp.lt.s32.totalorder %s31, 1
      %s757 = scalar_select %p756, %s31, 1
      %p758 = scmp.lt.s32.totalorder %s754, 2
      %s759 = scalar_select %p758, %s754, 2
      %p760 = scmp.lt.s32.totalorder %s755, 1
      %s761 = scalar_select %p760, %s755, 1
      %s762 = smul.addr %s759, 2
      %s763 = sadd.s32 %s761, %s762
      %s764 = smul.addr %s757, 6
      %s765 = sadd.s32 %s763, %s764
      %s766 = scalar_lea.vmem %s1, %s765
      %p767 = pneg %p102
      %p768 = pneg %p99
      %s769 = smul.u32 2, %s33
      %p770 = scmp.lt.s32.totalorder %s31, 1
      %s771 = scalar_select %p770, %s31, 1
      %p772 = scmp.lt.s32.totalorder %s32, 2
      %s773 = scalar_select %p772, %s32, 2
      %p774 = scmp.lt.s32.totalorder %s769, 1
      %s775 = scalar_select %p774, %s769, 1
      %s776 = smul.addr %s773, 2
      %s777 = sadd.s32 %s775, %s776
      %s778 = smul.addr %s771, 6
      %s779 = sadd.s32 %s777, %s778
      %s780 = scalar_lea.vmem %s2, %s779
      %p781 = pneg %p132
      %p782 = pneg %p129
      %s783 = sadd.s32 %s32, 1
      %s784 = smul.u32 2, %s33
      %p785 = scmp.lt.s32.totalorder %s31, 1
      %s786 = scalar_select %p785, %s31, 1
      %p787 = scmp.lt.s32.totalorder %s783, 2
      %s788 = scalar_select %p787, %s783, 2
      %p789 = scmp.lt.s32.totalorder %s784, 1
      %s790 = scalar_select %p789, %s784, 1
      %s791 = smul.addr %s788, 2
      %s792 = sadd.s32 %s790, %s791
      %s793 = smul.addr %s786, 6
      %s794 = sadd.s32 %s792, %s793
      %s795 = scalar_lea.vmem %s3, %s794
      %p796 = pneg %p164
      %p797 = pneg %p161
      %s798 = smul.u32 2, %s33
      %p799 = scmp.lt.s32.totalorder %s31, 1
      %s800 = scalar_select %p799, %s31, 1
      %p801 = scmp.lt.s32.totalorder %s32, 2
      %s802 = scalar_select %p801, %s32, 2
      %p803 = scmp.lt.s32.totalorder %s798, 1
      %s804 = scalar_select %p803, %s798, 1
      %s805 = smul.addr %s802, 2
      %s806 = sadd.s32 %s804, %s805
      %s807 = smul.addr %s800, 6
      %s808 = sadd.s32 %s806, %s807
      %s809 = smul.addr %s808, 4
      %s810 = scalar_lea.vmem %s4, %s809
      %p811 = pneg %p194
      %p812 = pneg %p191
      %s813 = sadd.s32 %s32, 1
      %s814 = smul.u32 2, %s33
      %p815 = scmp.lt.s32.totalorder %s31, 1
      %s816 = scalar_select %p815, %s31, 1
      %p817 = scmp.lt.s32.totalorder %s813, 2
      %s818 = scalar_select %p817, %s813, 2
      %p819 = scmp.lt.s32.totalorder %s814, 1
      %s820 = scalar_select %p819, %s814, 1
      %s821 = smul.addr %s818, 2
      %s822 = sadd.s32 %s820, %s821
      %s823 = smul.addr %s816, 6
      %s824 = sadd.s32 %s822, %s823
      %s825 = smul.addr %s824, 4
      %s826 = scalar_lea.vmem %s5, %s825
      %p827 = pneg %p226
      %p828 = pneg %p223
      %s829 = smul.u32 2, %s33
      %p830 = scmp.lt.s32.totalorder %s31, 1
      %s831 = scalar_select %p830, %s31, 1
      %p832 = scmp.lt.s32.totalorder %s32, 2
      %s833 = scalar_select %p832, %s32, 2
      %p834 = scmp.lt.s32.totalorder %s829, 1
      %s835 = scalar_select %p834, %s829, 1
      %s836 = smul.addr %s833, 2
      %s837 = sadd.s32 %s835, %s836
      %s838 = smul.addr %s831, 6
      %s839 = sadd.s32 %s837, %s838
      %s840 = smul.addr %s839, 4
      %s841 = scalar_lea.vmem %s6, %s840
      %p842 = pneg %p256
      %p843 = pneg %p253
      %s844 = sadd.s32 %s32, 1
      %s845 = smul.u32 2, %s33
      %p846 = scmp.lt.s32.totalorder %s31, 1
      %s847 = scalar_select %p846, %s31, 1
      %p848 = scmp.lt.s32.totalorder %s844, 2
      %s849 = scalar_select %p848, %s844, 2
      %p850 = scmp.lt.s32.totalorder %s845, 1
      %s851 = scalar_select %p850, %s845, 1
      %s852 = smul.addr %s849, 2
      %s853 = sadd.s32 %s851, %s852
      %s854 = smul.addr %s847, 6
      %s855 = sadd.s32 %s853, %s854
      %s856 = smul.addr %s855, 4
      %s857 = scalar_lea.vmem %s7, %s856
      %p858 = pneg %p288
      %p859 = pneg %p285
      %s860 = smul.u32 2, %s33
      %p861 = scmp.lt.s32.totalorder %s31, 1
      %s862 = scalar_select %p861, %s31, 1
      %p863 = scmp.lt.s32.totalorder %s32, 2
      %s864 = scalar_select %p863, %s32, 2
      %p865 = scmp.lt.s32.totalorder %s860, 1
      %s866 = scalar_select %p865, %s860, 1
      %s867 = smul.addr %s864, 2
      %s868 = sadd.s32 %s866, %s867
      %s869 = smul.addr %s862, 6
      %s870 = sadd.s32 %s868, %s869
      %s871 = smul.addr %s870, 4
      %s872 = scalar_lea.vmem %s8, %s871
      %p873 = pneg %p318
      %p874 = pneg %p315
      %s875 = sadd.s32 %s32, 1
      %s876 = smul.u32 2, %s33
      %p877 = scmp.lt.s32.totalorder %s31, 1
      %s878 = scalar_select %p877, %s31, 1
      %p879 = scmp.lt.s32.totalorder %s875, 2
      %s880 = scalar_select %p879, %s875, 2
      %p881 = scmp.lt.s32.totalorder %s876, 1
      %s882 = scalar_select %p881, %s876, 1
      %s883 = smul.addr %s880, 2
      %s884 = sadd.s32 %s882, %s883
      %s885 = smul.addr %s878, 6
      %s886 = sadd.s32 %s884, %s885
      %s887 = smul.addr %s886, 4
      %s888 = scalar_lea.vmem %s9, %s887
      %p889 = pneg %p350
      %p890 = pneg %p347
      %s891 = smul.u32 2, %s33
      %p892 = scmp.lt.s32.totalorder %s31, 1
      %s893 = scalar_select %p892, %s31, 1
      %p894 = scmp.lt.s32.totalorder %s32, 2
      %s895 = scalar_select %p894, %s32, 2
      %p896 = scmp.lt.s32.totalorder %s891, 1
      %s897 = scalar_select %p896, %s891, 1
      %s898 = smul.addr %s895, 2
      %s899 = sadd.s32 %s897, %s898
      %s900 = smul.addr %s893, 6
      %s901 = sadd.s32 %s899, %s900
      %s902 = smul.addr %s901, 4
      %s903 = scalar_lea.vmem %s10, %s902
      %p904 = pneg %p380
      %p905 = pneg %p377
      %s906 = sadd.s32 %s32, 1
      %s907 = smul.u32 2, %s33
      %p908 = scmp.lt.s32.totalorder %s31, 1
      %s909 = scalar_select %p908, %s31, 1
      %p910 = scmp.lt.s32.totalorder %s906, 2
      %s911 = scalar_select %p910, %s906, 2
      %p912 = scmp.lt.s32.totalorder %s907, 1
      %s913 = scalar_select %p912, %s907, 1
      %s914 = smul.addr %s911, 2
      %s915 = sadd.s32 %s913, %s914
      %s916 = smul.addr %s909, 6
      %s917 = sadd.s32 %s915, %s916
      %s918 = smul.addr %s917, 4
      %s919 = scalar_lea.vmem %s11, %s918
      %p920 = pneg %p412
      %p921 = pneg %p409
      %p922 = pneg %p442
      %p923 = pneg %p439
      %s924 = smul.u32 %s31, 2
      %s925 = sadd.s32 %s924, %s32
      %p926 = scmp.lt.s32.totalorder %s925, 3
      %s927 = scalar_select %p926, %s925, 3
      %s928 = smul.addr %s927, 8
      %s929 = scalar_lea.vmem %s12, %s928
      %p930 = pneg %p472
      %p931 = pneg %p469
      %s932 = smul.u32 %s31, 2
      %s933 = sadd.s32 %s932, %s32
      %p934 = scmp.lt.s32.totalorder %s933, 3
      %s935 = scalar_select %p934, %s933, 3
      %s936 = smul.addr %s935, 8
      %s937 = scalar_lea.vmem %s13, %s936
      %p938 = pneg %p502
      %p939 = pneg %p499
      %s940 = smul.u32 %s31, 2
      %s941 = sadd.s32 %s940, %s32
      %p942 = scmp.lt.s32.totalorder %s941, 3
      %s943 = scalar_select %p942, %s941, 3
      %s944 = smul.addr %s943, 8
      %s945 = scalar_lea.vmem %s14, %s944
      %s946 = smul.u32 2, %s33
      %p947 = scmp.lt.s32.totalorder %s31, 1
      %s948 = scalar_select %p947, %s31, 1
      %p949 = scmp.lt.s32.totalorder %s32, 2
      %s950 = scalar_select %p949, %s32, 2
      %p951 = scmp.lt.s32.totalorder %s946, 1
      %s952 = scalar_select %p951, %s946, 1
      %s953 = smul.addr %s950, 2
      %s954 = sadd.s32 %s952, %s953
      %s955 = smul.addr %s948, 6
      %s956 = sadd.s32 %s954, %s955
      %s957 = scalar_lea.vmem %s0, %s956
      %s958 = smul.u32 2, %s33
      %s959 = sadd.s32 %s32, 1
      %s960 = smul.u32 2, %s33
      %p961 = scmp.lt.s32.totalorder %s31, 1
      %s962 = scalar_select %p961, %s31, 1
      %p963 = scmp.lt.s32.totalorder %s959, 2
      %s964 = scalar_select %p963, %s959, 2
      %p965 = scmp.lt.s32.totalorder %s960, 1
      %s966 = scalar_select %p965, %s960, 1
      %s967 = smul.addr %s964, 2
      %s968 = sadd.s32 %s966, %s967
      %s969 = smul.addr %s962, 6
      %s970 = sadd.s32 %s968, %s969
      %s971 = scalar_lea.vmem %s1, %s970
      %s972 = sadd.s32 %s32, 1
      %s973 = smul.u32 2, %s33
      %s974 = smul.u32 2, %s33
      %p975 = scmp.lt.s32.totalorder %s31, 1
      %s976 = scalar_select %p975, %s31, 1
      %p977 = scmp.lt.s32.totalorder %s32, 2
      %s978 = scalar_select %p977, %s32, 2
      %p979 = scmp.lt.s32.totalorder %s974, 1
      %s980 = scalar_select %p979, %s974, 1
      %s981 = smul.addr %s978, 2
      %s982 = sadd.s32 %s980, %s981
      %s983 = smul.addr %s976, 6
      %s984 = sadd.s32 %s982, %s983
      %s985 = scalar_lea.vmem %s2, %s984
      %s986 = smul.u32 2, %s33
      %s987 = sadd.s32 %s32, 1
      %s988 = smul.u32 2, %s33
      %p989 = scmp.lt.s32.totalorder %s31, 1
      %s990 = scalar_select %p989, %s31, 1
      %p991 = scmp.lt.s32.totalorder %s987, 2
      %s992 = scalar_select %p991, %s987, 2
      %p993 = scmp.lt.s32.totalorder %s988, 1
      %s994 = scalar_select %p993, %s988, 1
      %s995 = smul.addr %s992, 2
      %s996 = sadd.s32 %s994, %s995
      %s997 = smul.addr %s990, 6
      %s998 = sadd.s32 %s996, %s997
      %s999 = scalar_lea.vmem %s3, %s998
      %s1000 = sadd.s32 %s32, 1
      %s1001 = smul.u32 2, %s33
      %s1002 = smul.u32 2, %s33
      %p1003 = scmp.lt.s32.totalorder %s31, 1
      %s1004 = scalar_select %p1003, %s31, 1
      %p1005 = scmp.lt.s32.totalorder %s32, 2
      %s1006 = scalar_select %p1005, %s32, 2
      %p1007 = scmp.lt.s32.totalorder %s1002, 1
      %s1008 = scalar_select %p1007, %s1002, 1
      %s1009 = smul.addr %s1006, 2
      %s1010 = sadd.s32 %s1008, %s1009
      %s1011 = smul.addr %s1004, 6
      %s1012 = sadd.s32 %s1010, %s1011
      %s1013 = smul.addr %s1012, 4
      %s1014 = scalar_lea.vmem %s4, %s1013
      %s1015 = smul.u32 2, %s33
      %s1016 = sadd.s32 %s32, 1
      %s1017 = smul.u32 2, %s33
      %p1018 = scmp.lt.s32.totalorder %s31, 1
      %s1019 = scalar_select %p1018, %s31, 1
      %p1020 = scmp.lt.s32.totalorder %s1016, 2
      %s1021 = scalar_select %p1020, %s1016, 2
      %p1022 = scmp.lt.s32.totalorder %s1017, 1
      %s1023 = scalar_select %p1022, %s1017, 1
      %s1024 = smul.addr %s1021, 2
      %s1025 = sadd.s32 %s1023, %s1024
      %s1026 = smul.addr %s1019, 6
      %s1027 = sadd.s32 %s1025, %s1026
      %s1028 = smul.addr %s1027, 4
      %s1029 = scalar_lea.vmem %s5, %s1028
      %s1030 = sadd.s32 %s32, 1
      %s1031 = smul.u32 2, %s33
      %s1032 = smul.u32 2, %s33
      %p1033 = scmp.lt.s32.totalorder %s31, 1
      %s1034 = scalar_select %p1033, %s31, 1
      %p1035 = scmp.lt.s32.totalorder %s32, 2
      %s1036 = scalar_select %p1035, %s32, 2
      %p1037 = scmp.lt.s32.totalorder %s1032, 1
      %s1038 = scalar_select %p1037, %s1032, 1
      %s1039 = smul.addr %s1036, 2
      %s1040 = sadd.s32 %s1038, %s1039
      %s1041 = smul.addr %s1034, 6
      %s1042 = sadd.s32 %s1040, %s1041
      %s1043 = smul.addr %s1042, 4
      %s1044 = scalar_lea.vmem %s6, %s1043
      %s1045 = smul.u32 2, %s33
      %s1046 = sadd.s32 %s32, 1
      %s1047 = smul.u32 2, %s33
      %p1048 = scmp.lt.s32.totalorder %s31, 1
      %s1049 = scalar_select %p1048, %s31, 1
      %p1050 = scmp.lt.s32.totalorder %s1046, 2
      %s1051 = scalar_select %p1050, %s1046, 2
      %p1052 = scmp.lt.s32.totalorder %s1047, 1
      %s1053 = scalar_select %p1052, %s1047, 1
      %s1054 = smul.addr %s1051, 2
      %s1055 = sadd.s32 %s1053, %s1054
      %s1056 = smul.addr %s1049, 6
      %s1057 = sadd.s32 %s1055, %s1056
      %s1058 = smul.addr %s1057, 4
      %s1059 = scalar_lea.vmem %s7, %s1058
      %s1060 = sadd.s32 %s32, 1
      %s1061 = smul.u32 2, %s33
      %s1062 = smul.u32 2, %s33
      %p1063 = scmp.lt.s32.totalorder %s31, 1
      %s1064 = scalar_select %p1063, %s31, 1
      %p1065 = scmp.lt.s32.totalorder %s32, 2
      %s1066 = scalar_select %p1065, %s32, 2
      %p1067 = scmp.lt.s32.totalorder %s1062, 1
      %s1068 = scalar_select %p1067, %s1062, 1
      %s1069 = smul.addr %s1066, 2
      %s1070 = sadd.s32 %s1068, %s1069
      %s1071 = smul.addr %s1064, 6
      %s1072 = sadd.s32 %s1070, %s1071
      %s1073 = smul.addr %s1072, 4
      %s1074 = scalar_lea.vmem %s8, %s1073
      %s1075 = smul.u32 2, %s33
      %s1076 = sadd.s32 %s32, 1
      %s1077 = smul.u32 2, %s33
      %p1078 = scmp.lt.s32.totalorder %s31, 1
      %s1079 = scalar_select %p1078, %s31, 1
      %p1080 = scmp.lt.s32.totalorder %s1076, 2
      %s1081 = scalar_select %p1080, %s1076, 2
      %p1082 = scmp.lt.s32.totalorder %s1077, 1
      %s1083 = scalar_select %p1082, %s1077, 1
      %s1084 = smul.addr %s1081, 2
      %s1085 = sadd.s32 %s1083, %s1084
      %s1086 = smul.addr %s1079, 6
      %s1087 = sadd.s32 %s1085, %s1086
      %s1088 = smul.addr %s1087, 4
      %s1089 = scalar_lea.vmem %s9, %s1088
      %s1090 = sadd.s32 %s32, 1
      %s1091 = smul.u32 2, %s33
      %s1092 = smul.u32 2, %s33
      %p1093 = scmp.lt.s32.totalorder %s31, 1
      %s1094 = scalar_select %p1093, %s31, 1
      %p1095 = scmp.lt.s32.totalorder %s32, 2
      %s1096 = scalar_select %p1095, %s32, 2
      %p1097 = scmp.lt.s32.totalorder %s1092, 1
      %s1098 = scalar_select %p1097, %s1092, 1
      %s1099 = smul.addr %s1096, 2
      %s1100 = sadd.s32 %s1098, %s1099
      %s1101 = smul.addr %s1094, 6
      %s1102 = sadd.s32 %s1100, %s1101
      %s1103 = smul.addr %s1102, 4
      %s1104 = scalar_lea.vmem %s10, %s1103
      %s1105 = smul.u32 2, %s33
      %s1106 = sadd.s32 %s32, 1
      %s1107 = smul.u32 2, %s33
      %p1108 = scmp.lt.s32.totalorder %s31, 1
      %s1109 = scalar_select %p1108, %s31, 1
      %p1110 = scmp.lt.s32.totalorder %s1106, 2
      %s1111 = scalar_select %p1110, %s1106, 2
      %p1112 = scmp.lt.s32.totalorder %s1107, 1
      %s1113 = scalar_select %p1112, %s1107, 1
      %s1114 = smul.addr %s1111, 2
      %s1115 = sadd.s32 %s1113, %s1114
      %s1116 = smul.addr %s1109, 6
      %s1117 = sadd.s32 %s1115, %s1116
      %s1118 = smul.addr %s1117, 4
      %s1119 = scalar_lea.vmem %s11, %s1118
      %s1120 = sadd.s32 %s32, 1
      %s1121 = smul.u32 2, %s33
      %s1122 = smul.u32 %s31, 2
      %s1123 = sadd.s32 %s1122, %s32
      %p1124 = scmp.lt.s32.totalorder %s1123, 3
      %s1125 = scalar_select %p1124, %s1123, 3
      %s1126 = smul.addr %s1125, 8
      %s1127 = scalar_lea.vmem %s12, %s1126
      %s1128 = smul.u32 %s31, 2
      %s1129 = sadd.s32 %s1128, %s32
      %s1130 = smul.u32 %s31, 2
      %s1131 = sadd.s32 %s1130, %s32
      %p1132 = scmp.lt.s32.totalorder %s1131, 3
      %s1133 = scalar_select %p1132, %s1131, 3
      %s1134 = smul.addr %s1133, 8
      %s1135 = scalar_lea.vmem %s13, %s1134
      %s1136 = smul.u32 %s31, 2
      %s1137 = sadd.s32 %s1136, %s32
      %s1138 = smul.u32 %s31, 2
      %s1139 = sadd.s32 %s1138, %s32
      %p1140 = scmp.lt.s32.totalorder %s1139, 3
      %s1141 = scalar_select %p1140, %s1139, 3
      %s1142 = smul.addr %s1141, 8
      %s1143 = scalar_lea.vmem %s14, %s1142
      %s1144 = smul.u32 %s31, 2
      %s1145 = sadd.s32 %s1144, %s32
      %p1146 = scmp.eq.s32.totalorder %s33, 0
      // Predicated region
      $region69: #{full_model_forward.7} parent=67 // pred_check
        %p1147 = pneg %p1146
      $region70: #{full_model_forward.7} parent=67 // pred_check_branch
        %1149 = sbr.rel (%p1147) target = $region72
      $region71: #{full_model_forward.7} parent=67 // pred_region
        %1150 = vst [vmem:[%s1127] sm:$0xff] 0.0
        %1151 = vst [vmem:[%s1135] sm:$0xff] 0.0
        %1152 = vst [vmem:[%s1143] sm:$0xff] 0.0
      $region72: #{full_model_forward.7} parent=67 // pred_fallthru
        _
      %v1153 = vld [vmem:[%s971] sm:$0x3]
      %v1154 = vld [vmem:[%s957] sm:$0x3]
      %v1155 = vsub.f32 %v1153, %v1154
      %v1156 = vld [vmem:[%s999] sm:$0x3]
      %v1157 = vld [vmem:[%s985] sm:$0x3]
      %v1158 = vsub.f32 %v1156, %v1157
      %v1159 = vsub.f32 %v1155, %v1158
      %v1160 = vld [vmem:[%s1029] sm:$0x77]
      %v1161 = vld [vmem:[%s1014] sm:$0x77]
      %v1162 = vsub.f32 %v1160, %v1161
      %v1163 = vld [vmem:[%s1059] sm:$0x77]
      %v1164 = vld [vmem:[%s1044] sm:$0x77]
      %v1165 = vsub.f32 %v1163, %v1164
      %v1166 = vsub.f32 %v1162, %v1165
      %v1167 = vld [vmem:[%s1089] sm:$0x77]
      %v1168 = vld [vmem:[%s1074] sm:$0x77]
      %v1169 = vsub.f32 %v1167, %v1168
      %v1170 = vld [vmem:[%s1119] sm:$0x77]
      %v1171 = vld [vmem:[%s1104] sm:$0x77]
      %v1172 = vsub.f32 %v1170, %v1171
      %v1173 = vsub.f32 %v1169, %v1172
      %v1174 = vld [vmem:[%s1127] sm:$0xff]
      %v1175 = vmul.f32 %v1159, %v1159
      %v1177 = vlaneseq
      %v1178 = vshrl.u32 %v1177, 7
      %v1179 = vsub.s32 0, %v1178
      %v1180 = vrot.slane %v1175, %v1179
      %v1181 = vlaneseq
      %v1182 = vshrl.u32 %v1181, 7
      %v1183 = vsub.s32 1, %v1182
      %v1184 = vrot.slane %v1175, %v1183
      %vm1187 = vcmask 1040384
      %v1188 = vsel %vm1187, %v1180, 0.0
      %v1189 = vsel %vm1187, %v1184, 0.0
      %v1190 = vadd.f32 %v1188, %v1189
      %1191 = vadd.xlane.f32.xlu0 %v1190
      %v1192 = vpop.xlane.xlu0 %1191
      %v1193 = vrot.slane %v1192, 4
      %v1194 = vadd.f32 %v1192, %v1193
      %v1195 = vrot.slane %v1194, 2
      %v1196 = vadd.f32 %v1194, %v1195
      %v1197 = vrot.slane %v1196, 1
      %v1198 = vadd.f32 %v1196, %v1197
      %s1199 = vtos %v1198
      %v1200 = vstv %s1199
      %v1201 = vadd.f32 %v1174, %v1200
      %1202 = vst [vmem:[%s1127] sm:$0xff] %v1201
      %v1203 = vld [vmem:[%s1135] sm:$0xff]
      %v1204 = vmul.f32 %v1166, %v1166
      %v1206 = vcombine.high %v1204, %v1204
      %vm1208 = vcmask 1042432
      %v1209 = vsel %vm1208, %v1204, 0.0
      %v1210 = vsel %vm1208, %v1206, 0.0
      %v1211 = vadd.f32 %v1209, %v1210
      %1212 = vadd.xlane.f32.xlu0 %v1211
      %v1213 = vpop.xlane.xlu0 %1212
      %v1214 = vrot.slane %v1213, 4
      %v1215 = vadd.f32 %v1213, %v1214
      %v1216 = vrot.slane %v1215, 2
      %v1217 = vadd.f32 %v1215, %v1216
      %v1218 = vrot.slane %v1217, 1
      %v1219 = vadd.f32 %v1217, %v1218
      %s1220 = vtos %v1219
      %v1221 = vstv %s1220
      %v1222 = vadd.f32 %v1203, %v1221
      %1223 = vst [vmem:[%s1135] sm:$0xff] %v1222
      %v1224 = vld [vmem:[%s1143] sm:$0xff]
      %v1225 = vmul.f32 %v1173, %v1173
      %v1227 = vcombine.high %v1225, %v1225
      %v1229 = vsel %vm1208, %v1225, 0.0
      %v1230 = vsel %vm1208, %v1227, 0.0
      %v1231 = vadd.f32 %v1229, %v1230
      %1232 = vadd.xlane.f32.xlu0 %v1231
      %v1233 = vpop.xlane.xlu0 %1232
      %v1234 = vrot.slane %v1233, 4
      %v1235 = vadd.f32 %v1233, %v1234
      %v1236 = vrot.slane %v1235, 2
      %v1237 = vadd.f32 %v1235, %v1236
      %v1238 = vrot.slane %v1237, 1
      %v1239 = vadd.f32 %v1237, %v1238
      %s1240 = vtos %v1239
      %v1241 = vstv %s1240
      %v1242 = vadd.f32 %v1224, %v1241
      %1243 = vst [vmem:[%s1143] sm:$0xff] %v1242
      %s1244 = smul.u32 %s31, 2
      %s1245 = sadd.s32 %s1244, %s32
      %p1246 = scmp.lt.s32.totalorder %s1245, 3
      %s1247 = scalar_select %p1246, %s1245, 3
      %s1248 = smul.addr %s1247, 8
      %s1249 = scalar_lea.vmem %s12, %s1248
      %s1250 = smul.u32 %s31, 2
      %s1251 = sadd.s32 %s1250, %s32
      %p1252 = scmp.lt.s32.totalorder %s1251, 3
      %s1253 = scalar_select %p1252, %s1251, 3
      %s1254 = smul.addr %s1253, 8
      %s1255 = scalar_lea.vmem %s13, %s1254
      %s1256 = smul.u32 %s31, 2
      %s1257 = sadd.s32 %s1256, %s32
      %p1258 = scmp.lt.s32.totalorder %s1257, 3
      %s1259 = scalar_select %p1258, %s1257, 3
      %s1260 = smul.addr %s1259, 8
      %s1261 = scalar_lea.vmem %s14, %s1260
      // Predicated region
      $region73: #{full_model_forward.7} parent=67 // pred_check
        %p1262 = pneg %p439
      $region74: #{full_model_forward.7} parent=67 // pred_check_branch
        %1264 = sbr.rel (%p1262) target = $region76
      $region75: #{full_model_forward.7} parent=67 // pred_region
        %s1265 = smul.u32 %s31, 2
        %s1266 = sadd.s32 %s1265, %s32
      $region76: #{full_model_forward.7} parent=67 // pred_fallthru
        _
      // Predicated region
      $region77: #{full_model_forward.7} parent=67 // pred_check
        %p1267 = pneg %p469
      $region78: #{full_model_forward.7} parent=67 // pred_check_branch
        %1269 = sbr.rel (%p1267) target = $region80
      $region79: #{full_model_forward.7} parent=67 // pred_region
        %s1270 = smul.u32 %s31, 2
        %s1271 = sadd.s32 %s1270, %s32
      $region80: #{full_model_forward.7} parent=67 // pred_fallthru
        _
      // Predicated region
      $region81: #{full_model_forward.7} parent=67 // pred_check
        %p1272 = pneg %p499
      $region82: #{full_model_forward.7} parent=67 // pred_check_branch
        %1274 = sbr.rel (%p1272) target = $region84
      $region83: #{full_model_forward.7} parent=67 // pred_region
        %s1275 = smul.u32 %s31, 2
        %s1276 = sadd.s32 %s1275, %s32
      $region84: #{full_model_forward.7} parent=67 // pred_fallthru
        _
    $region68: #{full_model_forward.7} parent=5 // pred_fallthru
      _
    %p1277 = scmp.le.s32.totalorder 2, %s21
    // Predicated region
    $region85: #{full_model_forward.7} parent=5 // pred_check
      %p1278 = pneg %p1277
    $region86: #{full_model_forward.7} parent=5 // pred_check_branch
      %1280 = sbr.rel (%p1278) target = $region88
    $region87: #{full_model_forward.7} parent=5 // pred_region
      %s1281 = ssub.s32 %s21, 2
      // Predicated region
      $region89: #{full_model_forward.7} parent=87 // pred_check
        %p1282 = pneg %p445
      $region90: #{full_model_forward.7} parent=87 // pred_check_branch
        %1284 = sbr.rel (%p1282) target = $region92
      $region91: #{full_model_forward.7} parent=87 // pred_region
        %s1285 = smul.u32 %s34, 2
        %s1286 = sadd.s32 %s1285, %s35
        %p1287 = scmp.lt.s32.totalorder %s1286, 3
        %s1288 = scalar_select %p1287, %s1286, 3
        %s1289 = smul.addr %s1288, 8
        %s1290 = scalar_lea.vmem %s12, %s1289
      $region92: #{full_model_forward.7} parent=87 // pred_fallthru
        _
      // Predicated region
      $region93: #{full_model_forward.7} parent=87 // pred_check
        %p1291 = pneg %p475
      $region94: #{full_model_forward.7} parent=87 // pred_check_branch
        %1293 = sbr.rel (%p1291) target = $region96
      $region95: #{full_model_forward.7} parent=87 // pred_region
        %s1294 = smul.u32 %s34, 2
        %s1295 = sadd.s32 %s1294, %s35
        %p1296 = scmp.lt.s32.totalorder %s1295, 3
        %s1297 = scalar_select %p1296, %s1295, 3
        %s1298 = smul.addr %s1297, 8
        %s1299 = scalar_lea.vmem %s13, %s1298
      $region96: #{full_model_forward.7} parent=87 // pred_fallthru
        _
      // Predicated region
      $region97: #{full_model_forward.7} parent=87 // pred_check
        %p1300 = pneg %p505
      $region98: #{full_model_forward.7} parent=87 // pred_check_branch
        %1302 = sbr.rel (%p1300) target = $region100
      $region99: #{full_model_forward.7} parent=87 // pred_region
        %s1303 = smul.u32 %s34, 2
        %s1304 = sadd.s32 %s1303, %s35
        %p1305 = scmp.lt.s32.totalorder %s1304, 3
        %s1306 = scalar_select %p1305, %s1304, 3
        %s1307 = smul.addr %s1306, 8
        %s1308 = scalar_lea.vmem %s14, %s1307
      $region100: #{full_model_forward.7} parent=87 // pred_fallthru
        _
    $region88: #{full_model_forward.7} parent=5 // pred_fallthru
      _
  $region6: #{full_model_forward.7} parent=0 // loop_footer
    %s25 = sadd.s32 1, %s21
  $region7: #{full_model_forward.7} parent=0 // loop_footer_branch
    %20 = sbr.rel target = $region3
  $region8: #{full_model_forward.7} parent=0 // loop_exit
    _

// kernel: full_model_forward.6
$region0: #{full_model_forward.6}
  #allocation0 [shape = 'u32[]', space=smem, size = 0x4, offset = 0x4, fixed_abs, tag = 'smem constant byte address 0x4 - core index']
  #allocation1 [shape = 'u32[144,128]{1,0:T(1,128)}', space=vmem, size = 0x12000, scoped, tag = 'internal scratch']
  %s0 = inlined_call_operand.vmem [shape: f32[18,16,16], index: 0, kind: input, shape index: {}]
  %s1 = inlined_call_operand.vmem [shape: f32[18,16,16], index: 1, kind: input, shape index: {}]
  %s2 = inlined_call_operand.vmem [shape: f32[18,16,16], index: 2, kind: input, shape index: {}]
  %s3 = inlined_call_operand.vmem [shape: f32[18,16,16], index: 3, kind: input, shape index: {}]
  %s4 = inlined_call_operand.vmem [shape: f32[144,128], index: 4, kind: output, shape index: {0}]
  %s5 = inlined_call_operand.vmem [shape: f32[144,128], index: 5, kind: output, shape index: {1}]
  %s6 = inlined_call_operand.vmem [shape: f32[144,128], index: 6, kind: output, shape index: {2}]
  %s7 = inlined_call_operand.vmem [shape: f32[144,128], index: 7, kind: output, shape index: {3}]
  %s8 = inlined_call_operand.vmem [shape: f32[144,128], index: 8, kind: output, shape index: {4}]
  %s9 = inlined_call_operand.vmem [shape: f32[144,128], index: 9, kind: output, shape index: {5}]
  %s10 = inlined_call_operand.vmem [shape: f32[144,128], index: 10, kind: output, shape index: {6}]
  %s11 = inlined_call_operand.vmem [shape: f32[144,128], index: 11, kind: output, shape index: {7}]
  %s12 = inlined_call_operand.vmem [shape: f32[144,128], index: 12, kind: output, shape index: {8}]
  %s13 = inlined_call_operand.vmem [shape: f32[144,128], index: 13, kind: output, shape index: {9}]
  %s14 = inlined_call_operand.vmem [shape: f32[144,128], index: 14, kind: output, shape index: {10}]
  %s15 = inlined_call_operand.vmem [shape: f32[144,128], index: 15, kind: output, shape index: {11}]
  %16 = xla_tuple %s4, %s5, %s6, %s7, %s8, %s9, %s10, %s11, %s12, %s13, %s14, %s15
  %s17 = sld [smem:[#allocation0]]
  $region137: #{full_model_forward.6} parent=0
    _
  %s19 = ssub.s32 1, %s17
  %s20 = scalar_select 0, %s19, %s17
  loop: start=0, step=1, limit=20
  $region2: #{full_model_forward.6} parent=0 // loop_pre_header
    _
  $region3: #{full_model_forward.6} parent=0 // loop_header
    %s22 = sphi 0, %s26
    %p23 = scmp.ge.s32.totalorder %s22, 20
    %s32 = sphi 0, %s34
    %s35 = sphi 0, %s32
    %s36 = sphi 0, %s35
    %s52 = sphi 0, %s36
    %s58 = sphi 0, %s60
    %s61 = sphi 0, %s58
    %s62 = sphi 0, %s61
    %s78 = sphi 0, %s62
    %s84 = sphi 0, %s86
    %s87 = sphi 0, %s84
    %s88 = sphi 0, %s87
    %s104 = sphi 0, %s88
    %s110 = sphi 0, %s112
    %s113 = sphi 0, %s110
    %s114 = sphi 0, %s113
    %s130 = sphi 0, %s114
    %s136 = sphi 0, %s138
    %s139 = sphi 0, %s136
    %s140 = sphi 0, %s139
    %s156 = sphi 0, %s140
    %s162 = sphi 0, %s164
    %s165 = sphi 0, %s162
    %s166 = sphi 0, %s165
    %s182 = sphi 0, %s166
    %s188 = sphi 0, %s190
    %s191 = sphi 0, %s188
    %s192 = sphi 0, %s191
    %s208 = sphi 0, %s192
    %s214 = sphi 0, %s216
    %s217 = sphi 0, %s214
    %s218 = sphi 0, %s217
    %s234 = sphi 0, %s218
    %s240 = sphi 0, %s242
    %s243 = sphi 0, %s240
    %s244 = sphi 0, %s243
    %s260 = sphi 0, %s244
    %s266 = sphi 0, %s268
    %s269 = sphi 0, %s266
    %s270 = sphi 0, %s269
    %s286 = sphi 0, %s270
    %s292 = sphi 0, %s294
    %s295 = sphi 0, %s292
    %s296 = sphi 0, %s295
    %s312 = sphi 0, %s296
    %s318 = sphi 0, %s320
    %s321 = sphi 0, %s318
    %s322 = sphi 0, %s321
    %s338 = sphi 0, %s322
    %s344 = sphi 0, %s346
    %s347 = sphi 0, %s344
    %s348 = sphi 0, %s347
    %s364 = sphi 0, %s348
    %s370 = sphi 0, %s372
    %s373 = sphi 0, %s370
    %s374 = sphi 0, %s373
    %s390 = sphi 0, %s374
    %s396 = sphi 0, %s398
    %s399 = sphi 0, %s396
    %s400 = sphi 0, %s399
    %s416 = sphi 0, %s400
    %s422 = sphi 0, %s424
    %s425 = sphi 0, %s422
    %s426 = sphi 0, %s425
    %s442 = sphi 0, %s426
  $region4: #{full_model_forward.6} parent=0 // loop_header_branch
    %25 = sbr.rel (%p23) target = $region8
  $region5: #{full_model_forward.6} parent=0 // loop_body
    %s27 = ssub.s32 %s22, 1
    %s28 = ssub.s32 %s22, 2
    %s29 = sadd.s32 %s22, 1
    %s30 = ssub.s32 %s22, %s29
    %p31 = scmp.eq.s32.totalorder %s30, 0
    %s33 = sadd.s32 %s32, 1
    %s34 = scalar_select %p31, %s32, %s33
    %p37 = pneg %p31
    %p38 = scmp.eq.s32.totalorder %s22, 17
    %p39 = por %p37, %p38
    %p40 = scmp.ne.s32.totalorder %s32, %s35
    %p41 = scmp.eq.s32.totalorder %s22, 0
    %p42 = por %p40, %p41
    %p43 = scmp.ne.s32.totalorder %s32, %s35
    %p44 = scmp.eq.s32.totalorder %s27, 17
    %p45 = por %p43, %p44
    %p46 = scmp.ne.s32.totalorder %s35, %s36
    %p47 = scmp.eq.s32.totalorder %s27, 0
    %p48 = por %p46, %p47
    %p49 = scmp.ne.s32.totalorder %s35, %s36
    %p50 = scmp.eq.s32.totalorder %s28, 17
    %p51 = por %p49, %p50
    %p53 = scmp.ne.s32.totalorder %s36, %s52
    %p54 = scmp.eq.s32.totalorder %s28, 0
    %p55 = por %p53, %p54
    %s56 = ssub.s32 %s22, %s29
    %p57 = scmp.eq.s32.totalorder %s56, 0
    %s59 = sadd.s32 %s58, 1
    %s60 = scalar_select %p57, %s58, %s59
    %p63 = pneg %p57
    %p64 = scmp.eq.s32.totalorder %s22, 17
    %p65 = por %p63, %p64
    %p66 = scmp.ne.s32.totalorder %s58, %s61
    %p67 = scmp.eq.s32.totalorder %s22, 0
    %p68 = por %p66, %p67
    %p69 = scmp.ne.s32.totalorder %s58, %s61
    %p70 = scmp.eq.s32.totalorder %s27, 17
    %p71 = por %p69, %p70
    %p72 = scmp.ne.s32.totalorder %s61, %s62
    %p73 = scmp.eq.s32.totalorder %s27, 0
    %p74 = por %p72, %p73
    %p75 = scmp.ne.s32.totalorder %s61, %s62
    %p76 = scmp.eq.s32.totalorder %s28, 17
    %p77 = por %p75, %p76
    %p79 = scmp.ne.s32.totalorder %s62, %s78
    %p80 = scmp.eq.s32.totalorder %s28, 0
    %p81 = por %p79, %p80
    %s82 = ssub.s32 %s22, %s29
    %p83 = scmp.eq.s32.totalorder %s82, 0
    %s85 = sadd.s32 %s84, 1
    %s86 = scalar_select %p83, %s84, %s85
    %p89 = pneg %p83
    %p90 = scmp.eq.s32.totalorder %s22, 17
    %p91 = por %p89, %p90
    %p92 = scmp.ne.s32.totalorder %s84, %s87
    %p93 = scmp.eq.s32.totalorder %s22, 0
    %p94 = por %p92, %p93
    %p95 = scmp.ne.s32.totalorder %s84, %s87
    %p96 = scmp.eq.s32.totalorder %s27, 17
    %p97 = por %p95, %p96
    %p98 = scmp.ne.s32.totalorder %s87, %s88
    %p99 = scmp.eq.s32.totalorder %s27, 0
    %p100 = por %p98, %p99
    %p101 = scmp.ne.s32.totalorder %s87, %s88
    %p102 = scmp.eq.s32.totalorder %s28, 17
    %p103 = por %p101, %p102
    %p105 = scmp.ne.s32.totalorder %s88, %s104
    %p106 = scmp.eq.s32.totalorder %s28, 0
    %p107 = por %p105, %p106
    %s108 = ssub.s32 %s22, %s29
    %p109 = scmp.eq.s32.totalorder %s108, 0
    %s111 = sadd.s32 %s110, 1
    %s112 = scalar_select %p109, %s110, %s111
    %p115 = pneg %p109
    %p116 = scmp.eq.s32.totalorder %s22, 17
    %p117 = por %p115, %p116
    %p118 = scmp.ne.s32.totalorder %s110, %s113
    %p119 = scmp.eq.s32.totalorder %s22, 0
    %p120 = por %p118, %p119
    %p121 = scmp.ne.s32.totalorder %s110, %s113
    %p122 = scmp.eq.s32.totalorder %s27, 17
    %p123 = por %p121, %p122
    %p124 = scmp.ne.s32.totalorder %s113, %s114
    %p125 = scmp.eq.s32.totalorder %s27, 0
    %p126 = por %p124, %p125
    %p127 = scmp.ne.s32.totalorder %s113, %s114
    %p128 = scmp.eq.s32.totalorder %s28, 17
    %p129 = por %p127, %p128
    %p131 = scmp.ne.s32.totalorder %s114, %s130
    %p132 = scmp.eq.s32.totalorder %s28, 0
    %p133 = por %p131, %p132
    %s134 = ssub.s32 %s22, %s29
    %p135 = scmp.eq.s32.totalorder %s134, 0
    %s137 = sadd.s32 %s136, 1
    %s138 = scalar_select %p135, %s136, %s137
    %p141 = pneg %p135
    %p142 = scmp.eq.s32.totalorder %s22, 17
    %p143 = por %p141, %p142
    %p144 = scmp.ne.s32.totalorder %s136, %s139
    %p145 = scmp.eq.s32.totalorder %s22, 0
    %p146 = por %p144, %p145
    %p147 = scmp.ne.s32.totalorder %s136, %s139
    %p148 = scmp.eq.s32.totalorder %s27, 17
    %p149 = por %p147, %p148
    %p150 = scmp.ne.s32.totalorder %s139, %s140
    %p151 = scmp.eq.s32.totalorder %s27, 0
    %p152 = por %p150, %p151
    %p153 = scmp.ne.s32.totalorder %s139, %s140
    %p154 = scmp.eq.s32.totalorder %s28, 17
    %p155 = por %p153, %p154
    %p157 = scmp.ne.s32.totalorder %s140, %s156
    %p158 = scmp.eq.s32.totalorder %s28, 0
    %p159 = por %p157, %p158
    %s160 = ssub.s32 %s22, %s29
    %p161 = scmp.eq.s32.totalorder %s160, 0
    %s163 = sadd.s32 %s162, 1
    %s164 = scalar_select %p161, %s162, %s163
    %p167 = pneg %p161
    %p168 = scmp.eq.s32.totalorder %s22, 17
    %p169 = por %p167, %p168
    %p170 = scmp.ne.s32.totalorder %s162, %s165
    %p171 = scmp.eq.s32.totalorder %s22, 0
    %p172 = por %p170, %p171
    %p173 = scmp.ne.s32.totalorder %s162, %s165
    %p174 = scmp.eq.s32.totalorder %s27, 17
    %p175 = por %p173, %p174
    %p176 = scmp.ne.s32.totalorder %s165, %s166
    %p177 = scmp.eq.s32.totalorder %s27, 0
    %p178 = por %p176, %p177
    %p179 = scmp.ne.s32.totalorder %s165, %s166
    %p180 = scmp.eq.s32.totalorder %s28, 17
    %p181 = por %p179, %p180
    %p183 = scmp.ne.s32.totalorder %s166, %s182
    %p184 = scmp.eq.s32.totalorder %s28, 0
    %p185 = por %p183, %p184
    %s186 = ssub.s32 %s22, %s29
    %p187 = scmp.eq.s32.totalorder %s186, 0
    %s189 = sadd.s32 %s188, 1
    %s190 = scalar_select %p187, %s188, %s189
    %p193 = pneg %p187
    %p194 = scmp.eq.s32.totalorder %s22, 17
    %p195 = por %p193, %p194
    %p196 = scmp.ne.s32.totalorder %s188, %s191
    %p197 = scmp.eq.s32.totalorder %s22, 0
    %p198 = por %p196, %p197
    %p199 = scmp.ne.s32.totalorder %s188, %s191
    %p200 = scmp.eq.s32.totalorder %s27, 17
    %p201 = por %p199, %p200
    %p202 = scmp.ne.s32.totalorder %s191, %s192
    %p203 = scmp.eq.s32.totalorder %s27, 0
    %p204 = por %p202, %p203
    %p205 = scmp.ne.s32.totalorder %s191, %s192
    %p206 = scmp.eq.s32.totalorder %s28, 17
    %p207 = por %p205, %p206
    %p209 = scmp.ne.s32.totalorder %s192, %s208
    %p210 = scmp.eq.s32.totalorder %s28, 0
    %p211 = por %p209, %p210
    %s212 = ssub.s32 %s22, %s29
    %p213 = scmp.eq.s32.totalorder %s212, 0
    %s215 = sadd.s32 %s214, 1
    %s216 = scalar_select %p213, %s214, %s215
    %p219 = pneg %p213
    %p220 = scmp.eq.s32.totalorder %s22, 17
    %p221 = por %p219, %p220
    %p222 = scmp.ne.s32.totalorder %s214, %s217
    %p223 = scmp.eq.s32.totalorder %s22, 0
    %p224 = por %p222, %p223
    %p225 = scmp.ne.s32.totalorder %s214, %s217
    %p226 = scmp.eq.s32.totalorder %s27, 17
    %p227 = por %p225, %p226
    %p228 = scmp.ne.s32.totalorder %s217, %s218
    %p229 = scmp.eq.s32.totalorder %s27, 0
    %p230 = por %p228, %p229
    %p231 = scmp.ne.s32.totalorder %s217, %s218
    %p232 = scmp.eq.s32.totalorder %s28, 17
    %p233 = por %p231, %p232
    %p235 = scmp.ne.s32.totalorder %s218, %s234
    %p236 = scmp.eq.s32.totalorder %s28, 0
    %p237 = por %p235, %p236
    %s238 = ssub.s32 %s22, %s29
    %p239 = scmp.eq.s32.totalorder %s238, 0
    %s241 = sadd.s32 %s240, 1
    %s242 = scalar_select %p239, %s240, %s241
    %p245 = pneg %p239
    %p246 = scmp.eq.s32.totalorder %s22, 17
    %p247 = por %p245, %p246
    %p248 = scmp.ne.s32.totalorder %s240, %s243
    %p249 = scmp.eq.s32.totalorder %s22, 0
    %p250 = por %p248, %p249
    %p251 = scmp.ne.s32.totalorder %s240, %s243
    %p252 = scmp.eq.s32.totalorder %s27, 17
    %p253 = por %p251, %p252
    %p254 = scmp.ne.s32.totalorder %s243, %s244
    %p255 = scmp.eq.s32.totalorder %s27, 0
    %p256 = por %p254, %p255
    %p257 = scmp.ne.s32.totalorder %s243, %s244
    %p258 = scmp.eq.s32.totalorder %s28, 17
    %p259 = por %p257, %p258
    %p261 = scmp.ne.s32.totalorder %s244, %s260
    %p262 = scmp.eq.s32.totalorder %s28, 0
    %p263 = por %p261, %p262
    %s264 = ssub.s32 %s22, %s29
    %p265 = scmp.eq.s32.totalorder %s264, 0
    %s267 = sadd.s32 %s266, 1
    %s268 = scalar_select %p265, %s266, %s267
    %p271 = pneg %p265
    %p272 = scmp.eq.s32.totalorder %s22, 17
    %p273 = por %p271, %p272
    %p274 = scmp.ne.s32.totalorder %s266, %s269
    %p275 = scmp.eq.s32.totalorder %s22, 0
    %p276 = por %p274, %p275
    %p277 = scmp.ne.s32.totalorder %s266, %s269
    %p278 = scmp.eq.s32.totalorder %s27, 17
    %p279 = por %p277, %p278
    %p280 = scmp.ne.s32.totalorder %s269, %s270
    %p281 = scmp.eq.s32.totalorder %s27, 0
    %p282 = por %p280, %p281
    %p283 = scmp.ne.s32.totalorder %s269, %s270
    %p284 = scmp.eq.s32.totalorder %s28, 17
    %p285 = por %p283, %p284
    %p287 = scmp.ne.s32.totalorder %s270, %s286
    %p288 = scmp.eq.s32.totalorder %s28, 0
    %p289 = por %p287, %p288
    %s290 = ssub.s32 %s22, %s29
    %p291 = scmp.eq.s32.totalorder %s290, 0
    %s293 = sadd.s32 %s292, 1
    %s294 = scalar_select %p291, %s292, %s293
    %p297 = pneg %p291
    %p298 = scmp.eq.s32.totalorder %s22, 17
    %p299 = por %p297, %p298
    %p300 = scmp.ne.s32.totalorder %s292, %s295
    %p301 = scmp.eq.s32.totalorder %s22, 0
    %p302 = por %p300, %p301
    %p303 = scmp.ne.s32.totalorder %s292, %s295
    %p304 = scmp.eq.s32.totalorder %s27, 17
    %p305 = por %p303, %p304
    %p306 = scmp.ne.s32.totalorder %s295, %s296
    %p307 = scmp.eq.s32.totalorder %s27, 0
    %p308 = por %p306, %p307
    %p309 = scmp.ne.s32.totalorder %s295, %s296
    %p310 = scmp.eq.s32.totalorder %s28, 17
    %p311 = por %p309, %p310
    %p313 = scmp.ne.s32.totalorder %s296, %s312
    %p314 = scmp.eq.s32.totalorder %s28, 0
    %p315 = por %p313, %p314
    %s316 = ssub.s32 %s22, %s29
    %p317 = scmp.eq.s32.totalorder %s316, 0
    %s319 = sadd.s32 %s318, 1
    %s320 = scalar_select %p317, %s318, %s319
    %p323 = pneg %p317
    %p324 = scmp.eq.s32.totalorder %s22, 17
    %p325 = por %p323, %p324
    %p326 = scmp.ne.s32.totalorder %s318, %s321
    %p327 = scmp.eq.s32.totalorder %s22, 0
    %p328 = por %p326, %p327
    %p329 = scmp.ne.s32.totalorder %s318, %s321
    %p330 = scmp.eq.s32.totalorder %s27, 17
    %p331 = por %p329, %p330
    %p332 = scmp.ne.s32.totalorder %s321, %s322
    %p333 = scmp.eq.s32.totalorder %s27, 0
    %p334 = por %p332, %p333
    %p335 = scmp.ne.s32.totalorder %s321, %s322
    %p336 = scmp.eq.s32.totalorder %s28, 17
    %p337 = por %p335, %p336
    %p339 = scmp.ne.s32.totalorder %s322, %s338
    %p340 = scmp.eq.s32.totalorder %s28, 0
    %p341 = por %p339, %p340
    %s342 = ssub.s32 %s22, %s29
    %p343 = scmp.eq.s32.totalorder %s342, 0
    %s345 = sadd.s32 %s344, 1
    %s346 = scalar_select %p343, %s344, %s345
    %p349 = pneg %p343
    %p350 = scmp.eq.s32.totalorder %s22, 17
    %p351 = por %p349, %p350
    %p352 = scmp.ne.s32.totalorder %s344, %s347
    %p353 = scmp.eq.s32.totalorder %s22, 0
    %p354 = por %p352, %p353
    %p355 = scmp.ne.s32.totalorder %s344, %s347
    %p356 = scmp.eq.s32.totalorder %s27, 17
    %p357 = por %p355, %p356
    %p358 = scmp.ne.s32.totalorder %s347, %s348
    %p359 = scmp.eq.s32.totalorder %s27, 0
    %p360 = por %p358, %p359
    %p361 = scmp.ne.s32.totalorder %s347, %s348
    %p362 = scmp.eq.s32.totalorder %s28, 17
    %p363 = por %p361, %p362
    %p365 = scmp.ne.s32.totalorder %s348, %s364
    %p366 = scmp.eq.s32.totalorder %s28, 0
    %p367 = por %p365, %p366
    %s368 = ssub.s32 %s22, %s29
    %p369 = scmp.eq.s32.totalorder %s368, 0
    %s371 = sadd.s32 %s370, 1
    %s372 = scalar_select %p369, %s370, %s371
    %p375 = pneg %p369
    %p376 = scmp.eq.s32.totalorder %s22, 17
    %p377 = por %p375, %p376
    %p378 = scmp.ne.s32.totalorder %s370, %s373
    %p379 = scmp.eq.s32.totalorder %s22, 0
    %p380 = por %p378, %p379
    %p381 = scmp.ne.s32.totalorder %s370, %s373
    %p382 = scmp.eq.s32.totalorder %s27, 17
    %p383 = por %p381, %p382
    %p384 = scmp.ne.s32.totalorder %s373, %s374
    %p385 = scmp.eq.s32.totalorder %s27, 0
    %p386 = por %p384, %p385
    %p387 = scmp.ne.s32.totalorder %s373, %s374
    %p388 = scmp.eq.s32.totalorder %s28, 17
    %p389 = por %p387, %p388
    %p391 = scmp.ne.s32.totalorder %s374, %s390
    %p392 = scmp.eq.s32.totalorder %s28, 0
    %p393 = por %p391, %p392
    %s394 = ssub.s32 %s22, %s29
    %p395 = scmp.eq.s32.totalorder %s394, 0
    %s397 = sadd.s32 %s396, 1
    %s398 = scalar_select %p395, %s396, %s397
    %p401 = pneg %p395
    %p402 = scmp.eq.s32.totalorder %s22, 17
    %p403 = por %p401, %p402
    %p404 = scmp.ne.s32.totalorder %s396, %s399
    %p405 = scmp.eq.s32.totalorder %s22, 0
    %p406 = por %p404, %p405
    %p407 = scmp.ne.s32.totalorder %s396, %s399
    %p408 = scmp.eq.s32.totalorder %s27, 17
    %p409 = por %p407, %p408
    %p410 = scmp.ne.s32.totalorder %s399, %s400
    %p411 = scmp.eq.s32.totalorder %s27, 0
    %p412 = por %p410, %p411
    %p413 = scmp.ne.s32.totalorder %s399, %s400
    %p414 = scmp.eq.s32.totalorder %s28, 17
    %p415 = por %p413, %p414
    %p417 = scmp.ne.s32.totalorder %s400, %s416
    %p418 = scmp.eq.s32.totalorder %s28, 0
    %p419 = por %p417, %p418
    %s420 = ssub.s32 %s22, %s29
    %p421 = scmp.eq.s32.totalorder %s420, 0
    %s423 = sadd.s32 %s422, 1
    %s424 = scalar_select %p421, %s422, %s423
    %p427 = pneg %p421
    %p428 = scmp.eq.s32.totalorder %s22, 17
    %p429 = por %p427, %p428
    %p430 = scmp.ne.s32.totalorder %s422, %s425
    %p431 = scmp.eq.s32.totalorder %s22, 0
    %p432 = por %p430, %p431
    %p433 = scmp.ne.s32.totalorder %s422, %s425
    %p434 = scmp.eq.s32.totalorder %s27, 17
    %p435 = por %p433, %p434
    %p436 = scmp.ne.s32.totalorder %s425, %s426
    %p437 = scmp.eq.s32.totalorder %s27, 0
    %p438 = por %p436, %p437
    %p439 = scmp.ne.s32.totalorder %s425, %s426
    %p440 = scmp.eq.s32.totalorder %s28, 17
    %p441 = por %p439, %p440
    %p443 = scmp.ne.s32.totalorder %s426, %s442
    %p444 = scmp.eq.s32.totalorder %s28, 0
    %p445 = por %p443, %p444
    %p446 = scmp.le.s32.totalorder 1, %s22
    %p447 = scmp.lt.s32.totalorder %s22, 19
    %p448 = pnand %p446, %p447
    %p449 = pneg %p448
    // Predicated region
    $region9: #{full_model_forward.6} parent=5 // pred_check
      _
    $region10: #{full_model_forward.6} parent=5 // pred_check_branch
      %451 = sbr.rel (%p448) target = $region12
    $region11: #{full_model_forward.6} parent=5 // pred_region
      %s452 = ssub.s32 %s22, 1
    $region12: #{full_model_forward.6} parent=5 // pred_fallthru
      _
    %p453 = scmp.lt.s32.totalorder %s22, 18
    // Predicated region
    $region13: #{full_model_forward.6} parent=5 // pred_check
      %p454 = pneg %p453
    $region14: #{full_model_forward.6} parent=5 // pred_check_branch
      %456 = sbr.rel (%p454) target = $region16
    $region15: #{full_model_forward.6} parent=5 // pred_region
      // Predicated region
      $region17: #{full_model_forward.6} parent=15 // pred_check
        %p457 = pneg %p42
      $region18: #{full_model_forward.6} parent=15 // pred_check_branch
        %459 = sbr.rel (%p457) target = $region20
      $region19: #{full_model_forward.6} parent=15 // pred_region
        %p460 = scmp.lt.s32.totalorder %s22, 17
        %s461 = scalar_select %p460, %s22, 17
        %s462 = smul.addr %s461, 2
        %s463 = smul.addr %s462, 8
        %s464 = scalar_lea.vmem %s0, %s463
      $region20: #{full_model_forward.6} parent=15 // pred_fallthru
        _
      // Predicated region
      $region21: #{full_model_forward.6} parent=15 // pred_check
        %p465 = pneg %p68
      $region22: #{full_model_forward.6} parent=15 // pred_check_branch
        %467 = sbr.rel (%p465) target = $region24
      $region23: #{full_model_forward.6} parent=15 // pred_region
        %p468 = scmp.lt.s32.totalorder %s22, 17
        %s469 = scalar_select %p468, %s22, 17
        %s470 = smul.addr %s469, 2
        %s471 = smul.addr %s470, 8
        %s472 = scalar_lea.vmem %s1, %s471
      $region24: #{full_model_forward.6} parent=15 // pred_fallthru
        _
      // Predicated region
      $region25: #{full_model_forward.6} parent=15 // pred_check
        %p473 = pneg %p94
      $region26: #{full_model_forward.6} parent=15 // pred_check_branch
        %475 = sbr.rel (%p473) target = $region28
      $region27: #{full_model_forward.6} parent=15 // pred_region
        %p476 = scmp.lt.s32.totalorder %s22, 17
        %s477 = scalar_select %p476, %s22, 17
        %s478 = smul.addr %s477, 2
        %s479 = smul.addr %s478, 8
        %s480 = scalar_lea.vmem %s2, %s479
      $region28: #{full_model_forward.6} parent=15 // pred_fallthru
        _
      // Predicated region
      $region29: #{full_model_forward.6} parent=15 // pred_check
        %p481 = pneg %p120
      $region30: #{full_model_forward.6} parent=15 // pred_check_branch
        %483 = sbr.rel (%p481) target = $region32
      $region31: #{full_model_forward.6} parent=15 // pred_region
        %p484 = scmp.lt.s32.totalorder %s22, 17
        %s485 = scalar_select %p484, %s22, 17
        %s486 = smul.addr %s485, 2
        %s487 = smul.addr %s486, 8
        %s488 = scalar_lea.vmem %s3, %s487
      $region32: #{full_model_forward.6} parent=15 // pred_fallthru
        _
    $region16: #{full_model_forward.6} parent=5 // pred_fallthru
      _
    %p489 = scmp.le.s32.totalorder 1, %s22
    %p490 = scmp.lt.s32.totalorder %s22, 19
    %p491 = pnand %p489, %p490
    %p492 = pneg %p491
    // Predicated region
    $region33: #{full_model_forward.6} parent=5 // pred_check
      _
    $region34: #{full_model_forward.6} parent=5 // pred_check_branch
      %494 = sbr.rel (%p491) target = $region36
    $region35: #{full_model_forward.6} parent=5 // pred_region
      %s495 = ssub.s32 %s22, 1
      %p496 = scmp.lt.s32.totalorder %s27, 17
      %s497 = scalar_select %p496, %s27, 17
      %s498 = smul.addr %s497, 2
      %s499 = smul.addr %s498, 8
      %s500 = scalar_lea.vmem %s0, %s499
      %p501 = pneg %p48
      %p502 = pneg %p45
      %p503 = scmp.lt.s32.totalorder %s27, 17
      %s504 = scalar_select %p503, %s27, 17
      %s505 = smul.addr %s504, 2
      %s506 = smul.addr %s505, 8
      %s507 = scalar_lea.vmem %s1, %s506
      %p508 = pneg %p74
      %p509 = pneg %p71
      %p510 = scmp.lt.s32.totalorder %s27, 17
      %s511 = scalar_select %p510, %s27, 17
      %s512 = smul.addr %s511, 2
      %s513 = smul.addr %s512, 8
      %s514 = scalar_lea.vmem %s2, %s513
      %p515 = pneg %p100
      %p516 = pneg %p97
      %p517 = scmp.lt.s32.totalorder %s27, 17
      %s518 = scalar_select %p517, %s27, 17
      %s519 = smul.addr %s518, 2
      %s520 = smul.addr %s519, 8
      %s521 = scalar_lea.vmem %s3, %s520
      %p522 = pneg %p126
      %p523 = pneg %p123
      %p524 = pneg %p152
      %p525 = pneg %p149
      %p526 = scmp.lt.s32.totalorder %s27, 17
      %s527 = scalar_select %p526, %s27, 17
      %s528 = smul.addr %s527, 8
      %s529 = scalar_lea.vmem %s4, %s528
      %p530 = pneg %p178
      %p531 = pneg %p175
      %p532 = scmp.lt.s32.totalorder %s27, 17
      %s533 = scalar_select %p532, %s27, 17
      %s534 = smul.addr %s533, 8
      %s535 = scalar_lea.vmem %s5, %s534
      %p536 = pneg %p204
      %p537 = pneg %p201
      %p538 = scmp.lt.s32.totalorder %s27, 17
      %s539 = scalar_select %p538, %s27, 17
      %s540 = smul.addr %s539, 8
      %s541 = scalar_lea.vmem %s6, %s540
      %p542 = pneg %p230
      %p543 = pneg %p227
      %p544 = scmp.lt.s32.totalorder %s27, 17
      %s545 = scalar_select %p544, %s27, 17
      %s546 = smul.addr %s545, 8
      %s547 = scalar_lea.vmem %s7, %s546
      %p548 = pneg %p256
      %p549 = pneg %p253
      %p550 = scmp.lt.s32.totalorder %s27, 17
      %s551 = scalar_select %p550, %s27, 17
      %s552 = smul.addr %s551, 8
      %s553 = scalar_lea.vmem %s8, %s552
      %p554 = pneg %p282
      %p555 = pneg %p279
      %p556 = scmp.lt.s32.totalorder %s27, 17
      %s557 = scalar_select %p556, %s27, 17
      %s558 = smul.addr %s557, 8
      %s559 = scalar_lea.vmem %s9, %s558
      %p560 = pneg %p308
      %p561 = pneg %p305
      %p562 = scmp.lt.s32.totalorder %s27, 17
      %s563 = scalar_select %p562, %s27, 17
      %s564 = smul.addr %s563, 8
      %s565 = scalar_lea.vmem %s10, %s564
      %p566 = pneg %p334
      %p567 = pneg %p331
      %p568 = scmp.lt.s32.totalorder %s27, 17
      %s569 = scalar_select %p568, %s27, 17
      %s570 = smul.addr %s569, 8
      %s571 = scalar_lea.vmem %s11, %s570
      %p572 = pneg %p360
      %p573 = pneg %p357
      %p574 = scmp.lt.s32.totalorder %s27, 17
      %s575 = scalar_select %p574, %s27, 17
      %s576 = smul.addr %s575, 8
      %s577 = scalar_lea.vmem %s12, %s576
      %p578 = pneg %p386
      %p579 = pneg %p383
      %p580 = scmp.lt.s32.totalorder %s27, 17
      %s581 = scalar_select %p580, %s27, 17
      %s582 = smul.addr %s581, 8
      %s583 = scalar_lea.vmem %s13, %s582
      %p584 = pneg %p412
      %p585 = pneg %p409
      %p586 = scmp.lt.s32.totalorder %s27, 17
      %s587 = scalar_select %p586, %s27, 17
      %s588 = smul.addr %s587, 8
      %s589 = scalar_lea.vmem %s14, %s588
      %p590 = pneg %p438
      %p591 = pneg %p435
      %p592 = scmp.lt.s32.totalorder %s27, 17
      %s593 = scalar_select %p592, %s27, 17
      %s594 = smul.addr %s593, 8
      %s595 = scalar_lea.vmem %s15, %s594
      %p596 = scmp.lt.s32.totalorder %s27, 17
      %s597 = scalar_select %p596, %s27, 17
      %s598 = smul.addr %s597, 2
      %s599 = smul.addr %s598, 8
      %s600 = scalar_lea.vmem %s0, %s599
      %p601 = scmp.lt.s32.totalorder %s27, 17
      %s602 = scalar_select %p601, %s27, 17
      %s603 = smul.addr %s602, 2
      %s604 = smul.addr %s603, 8
      %s605 = scalar_lea.vmem %s1, %s604
      %p606 = scmp.lt.s32.totalorder %s27, 17
      %s607 = scalar_select %p606, %s27, 17
      %s608 = smul.addr %s607, 2
      %s609 = smul.addr %s608, 8
      %s610 = scalar_lea.vmem %s2, %s609
      %p611 = scmp.lt.s32.totalorder %s27, 17
      %s612 = scalar_select %p611, %s27, 17
      %s613 = smul.addr %s612, 2
      %s614 = smul.addr %s613, 8
      %s615 = scalar_lea.vmem %s3, %s614
      %p616 = scmp.lt.s32.totalorder %s27, 17
      %s617 = scalar_select %p616, %s27, 17
      %s618 = smul.addr %s617, 8
      %s619 = scalar_lea.vmem %s4, %s618
      %p620 = scmp.lt.s32.totalorder %s27, 17
      %s621 = scalar_select %p620, %s27, 17
      %s622 = smul.addr %s621, 8
      %s623 = scalar_lea.vmem %s5, %s622
      %p624 = scmp.lt.s32.totalorder %s27, 17
      %s625 = scalar_select %p624, %s27, 17
      %s626 = smul.addr %s625, 8
      %s627 = scalar_lea.vmem %s6, %s626
      %p628 = scmp.lt.s32.totalorder %s27, 17
      %s629 = scalar_select %p628, %s27, 17
      %s630 = smul.addr %s629, 8
      %s631 = scalar_lea.vmem %s7, %s630
      %p632 = scmp.lt.s32.totalorder %s27, 17
      %s633 = scalar_select %p632, %s27, 17
      %s634 = smul.addr %s633, 8
      %s635 = scalar_lea.vmem %s8, %s634
      %p636 = scmp.lt.s32.totalorder %s27, 17
      %s637 = scalar_select %p636, %s27, 17
      %s638 = smul.addr %s637, 8
      %s639 = scalar_lea.vmem %s9, %s638
      %p640 = scmp.lt.s32.totalorder %s27, 17
      %s641 = scalar_select %p640, %s27, 17
      %s642 = smul.addr %s641, 8
      %s643 = scalar_lea.vmem %s10, %s642
      %p644 = scmp.lt.s32.totalorder %s27, 17
      %s645 = scalar_select %p644, %s27, 17
      %s646 = smul.addr %s645, 8
      %s647 = scalar_lea.vmem %s11, %s646
      %p648 = scmp.lt.s32.totalorder %s27, 17
      %s649 = scalar_select %p648, %s27, 17
      %s650 = smul.addr %s649, 8
      %s651 = scalar_lea.vmem %s12, %s650
      %p652 = scmp.lt.s32.totalorder %s27, 17
      %s653 = scalar_select %p652, %s27, 17
      %s654 = smul.addr %s653, 8
      %s655 = scalar_lea.vmem %s13, %s654
      %p656 = scmp.lt.s32.totalorder %s27, 17
      %s657 = scalar_select %p656, %s27, 17
      %s658 = smul.addr %s657, 8
      %s659 = scalar_lea.vmem %s14, %s658
      %p660 = scmp.lt.s32.totalorder %s27, 17
      %s661 = scalar_select %p660, %s27, 17
      %s662 = smul.addr %s661, 8
      %s663 = scalar_lea.vmem %s15, %s662
      %v664 = vld [vmem:[%s600] sm:$0xff]
      %v665 = vld [vmem:[%s600 + $0x8] sm:$0xff]
      %v666 = vld [vmem:[%s605] sm:$0xff]
      %v667 = vld [vmem:[%s605 + $0x8] sm:$0xff]
      %v668 = vld [vmem:[%s610] sm:$0xff]
      %v669 = vld [vmem:[%s610 + $0x8] sm:$0xff]
      %v670 = vsub.f32 %v664, %v668
      %v671 = vsub.f32 %v665, %v669
      %v672 = vld [vmem:[%s615] sm:$0xff]
      %v673 = vld [vmem:[%s615 + $0x8] sm:$0xff]
      %v674 = vsub.f32 %v666, %v672
      %v675 = vsub.f32 %v667, %v673
      %v676 = vlaneseq
      %v677 = vand.u32 %v676, 127
      %v678 = vlaneseq
      %v679 = vshrl.u32 %v678, 7
      %v680 = vadd.s32 %v679, 8
      %vm681 = vcmask 1047680
      %682 = vrot.lane.b32.xlu0 %v664, 16
      %v683 = vpop.permute.xlu0 %682
      %v684 = vsel %vm681, %v683, %v664
      %685 = vrot.lane.b32.xlu0 %v665, 16
      %v686 = vpop.permute.xlu0 %685
      %v687 = vsel %vm681, %v686, %v665
      %688 = vrot.lane.b32.xlu0 %v684, 16
      %v689 = vpop.permute.xlu0 %688
      %690 = vrot.lane.b32.xlu0 %v687, 16
      %v691 = vpop.permute.xlu0 %690
      %v692 = vsel %vm681, %v689, %v664
      %v693 = vsel %vm681, %v691, %v665
      %696 = vrot.lane.b32.xlu0 %v664, 1
      %v697 = vpop.permute.xlu0 %696
      %698 = vrot.lane.b32.xlu0 %v665, 1
      %v699 = vpop.permute.xlu0 %698
      %v702 = vsub.f32 %v692, %v697
      %v703 = vsub.f32 %v693, %v699
      %704 = vrot.lane.b32.xlu0 %v666, 16
      %v705 = vpop.permute.xlu0 %704
      %v706 = vsel %vm681, %v705, %v666
      %707 = vrot.lane.b32.xlu0 %v667, 16
      %v708 = vpop.permute.xlu0 %707
      %v709 = vsel %vm681, %v708, %v667
      %710 = vrot.lane.b32.xlu0 %v706, 16
      %v711 = vpop.permute.xlu0 %710
      %712 = vrot.lane.b32.xlu0 %v709, 16
      %v713 = vpop.permute.xlu0 %712
      %v714 = vsel %vm681, %v711, %v666
      %v715 = vsel %vm681, %v713, %v667
      %718 = vrot.lane.b32.xlu0 %v666, 1
      %v719 = vpop.permute.xlu0 %718
      %720 = vrot.lane.b32.xlu0 %v667, 1
      %v721 = vpop.permute.xlu0 %720
      %v724 = vsub.f32 %v714, %v719
      %v725 = vsub.f32 %v715, %v721
      %v726 = vrot.slane %v664, 1
      %v727 = vrot.slane %v665, 1
      %vm728 = vcmp.lt.s32.totalorder %v679, 7
      %v729 = vsel %vm728, %v726, %v727
      %v730 = vsel %vm728, %v727, %v726
      %v731 = vsub.f32 %v729, %v664
      %v732 = vsub.f32 %v730, %v665
      %v733 = vrot.slane %v666, 1
      %v734 = vrot.slane %v667, 1
      %v735 = vsel %vm728, %v733, %v734
      %v736 = vsel %vm728, %v734, %v733
      %v737 = vsub.f32 %v735, %v666
      %v738 = vsub.f32 %v736, %v667
      %vm739 = vcmp.lt.s32.totalorder %v677, 15
      %v740 = vand.u32 2147483647, %v702
      %v741 = vand.u32 2147483647, %v703
      %v742 = vand.u32 2147483647, %v724
      %v743 = vand.u32 2147483647, %v725
      %v744 = vmul.f32 %v740, %v742
      %v745 = vmul.f32 %v741, %v743
      %748 = vrot.lane.b32.xlu0 %v744, 127
      %v749 = vpop.permute.xlu0 %748
      %750 = vrot.lane.b32.xlu0 %v745, 127
      %v751 = vpop.permute.xlu0 %750
      %v754 = vsel %vm739, %v749, 0.0
      %v755 = vsel %vm739, %v751, 0.0
      %vm756 = vcmask 130048
      %v757 = vsel %vm756, %v754, 0.0
      %v758 = vsel %vm756, %v755, 0.0
      %v759 = vadd.f32 %v757, %v758
      %760 = vadd.xlane.f32.xlu0 %v759
      %v761 = vpop.xlane.xlu0 %760
      %v762 = vrot.slane %v761, 4
      %v763 = vadd.f32 %v761, %v762
      %v764 = vrot.slane %v763, 2
      %v765 = vadd.f32 %v763, %v764
      %v766 = vrot.slane %v765, 1
      %v767 = vadd.f32 %v765, %v766
      %s768 = vtos %v767
      %vm769 = vcmp.lt.s32.totalorder %v679, 15
      %vm770 = vcmp.lt.s32.totalorder %v680, 15
      %v771 = vand.u32 2147483647, %v731
      %v772 = vand.u32 2147483647, %v732
      %v773 = vand.u32 2147483647, %v737
      %v774 = vand.u32 2147483647, %v738
      %v775 = vmul.f32 %v771, %v773
      %v776 = vmul.f32 %v772, %v774
      %v777 = vsel %vm769, %v775, 0.0
      %v778 = vsel %vm770, %v776, 0.0
      %v779 = vsel %vm756, %v777, 0.0
      %v780 = vsel %vm756, %v778, 0.0
      %v781 = vadd.f32 %v779, %v780
      %782 = vadd.xlane.f32.xlu0 %v781
      %v783 = vpop.xlane.xlu0 %782
      %v784 = vrot.slane %v783, 4
      %v785 = vadd.f32 %v783, %v784
      %v786 = vrot.slane %v785, 2
      %v787 = vadd.f32 %v785, %v786
      %v788 = vrot.slane %v787, 1
      %v789 = vadd.f32 %v787, %v788
      %s790 = vtos %v789
      %791 = vrot.lane.b32.xlu0 %v670, 16
      %v792 = vpop.permute.xlu0 %791
      %v793 = vsel %vm681, %v792, %v670
      %794 = vrot.lane.b32.xlu0 %v671, 16
      %v795 = vpop.permute.xlu0 %794
      %v796 = vsel %vm681, %v795, %v671
      %797 = vrot.lane.b32.xlu0 %v793, 16
      %v798 = vpop.permute.xlu0 %797
      %799 = vrot.lane.b32.xlu0 %v796, 16
      %v800 = vpop.permute.xlu0 %799
      %v801 = vsel %vm681, %v798, %v670
      %v802 = vsel %vm681, %v800, %v671
      %805 = vrot.lane.b32.xlu0 %v801, 127
      %v806 = vpop.permute.xlu0 %805
      %807 = vrot.lane.b32.xlu0 %v802, 127
      %v808 = vpop.permute.xlu0 %807
      %v811 = vadd.f32 %v670, %v806
      %v812 = vadd.f32 %v671, %v808
      %v813 = vand.u32 %v677, 1
      %vm814 = vcmp.eq.s32.totalorder %v813, 0
      %815 = vrot.lane.b32.xlu0 %v811, 16
      %v816 = vpop.permute.xlu0 %815
      %v817 = vsel %vm681, %v816, %v811
      %818 = vrot.lane.b32.xlu0 %v812, 16
      %v819 = vpop.permute.xlu0 %818
      %v820 = vsel %vm681, %v819, %v812
      %821 = vrot.lane.b32.xlu0 %v817, 16
      %v822 = vpop.permute.xlu0 %821
      %823 = vrot.lane.b32.xlu0 %v820, 16
      %v824 = vpop.permute.xlu0 %823
      %v825 = vsel %vm681, %v822, %v811
      %v826 = vsel %vm681, %v824, %v812
      %829 = vrot.lane.b32.xlu0 %v825, 113
      %v830 = vpop.permute.xlu0 %829
      %831 = vrot.lane.b32.xlu0 %v826, 113
      %v832 = vpop.permute.xlu0 %831
      %v835 = vsel %vm814, %v811, %v830
      %v836 = vsel %vm814, %v812, %v832
      %v837 = vrot.slane %v835, 1
      %v838 = vrot.slane %v836, 1
      %v839 = vsel %vm728, %v837, %v838
      %v840 = vsel %vm728, %v838, %v837
      %v841 = vadd.f32 %v835, %v839
      %v842 = vadd.f32 %v836, %v840
      %v843 = vand.u32 %v679, 1
      %v844 = vand.u32 %v680, 1
      %vm845 = vcmp.eq.s32.totalorder %v843, 0
      %vm846 = vcmp.eq.s32.totalorder %v844, 0
      %v847 = vrot.slane %v841, 7
      %v848 = vrot.slane %v842, 7
      %vm849 = vcmp.lt.s32.totalorder %v679, 1
      %v850 = vsel %vm849, %v847, %v848
      %v851 = vsel %vm849, %v848, %v847
      %v852 = vsel %vm845, %v841, %v851
      %v853 = vsel %vm846, %v842, %v850
      %v854 = vmul.f32 %v852, 0.25
      %v855 = vmul.f32 %v853, 0.25
      %856 = vrot.lane.b32.xlu0 %v674, 16
      %v857 = vpop.permute.xlu0 %856
      %v858 = vsel %vm681, %v857, %v674
      %859 = vrot.lane.b32.xlu0 %v675, 16
      %v860 = vpop.permute.xlu0 %859
      %v861 = vsel %vm681, %v860, %v675
      %862 = vrot.lane.b32.xlu0 %v858, 16
      %v863 = vpop.permute.xlu0 %862
      %864 = vrot.lane.b32.xlu0 %v861, 16
      %v865 = vpop.permute.xlu0 %864
      %v866 = vsel %vm681, %v863, %v674
      %v867 = vsel %vm681, %v865, %v675
      %870 = vrot.lane.b32.xlu0 %v866, 127
      %v871 = vpop.permute.xlu0 %870
      %872 = vrot.lane.b32.xlu0 %v867, 127
      %v873 = vpop.permute.xlu0 %872
      %v876 = vadd.f32 %v674, %v871
      %v877 = vadd.f32 %v675, %v873
      %878 = vrot.lane.b32.xlu0 %v876, 16
      %v879 = vpop.permute.xlu0 %878
      %v880 = vsel %vm681, %v879, %v876
      %881 = vrot.lane.b32.xlu0 %v877, 16
      %v882 = vpop.permute.xlu0 %881
      %v883 = vsel %vm681, %v882, %v877
      %884 = vrot.lane.b32.xlu0 %v880, 16
      %v885 = vpop.permute.xlu0 %884
      %886 = vrot.lane.b32.xlu0 %v883, 16
      %v887 = vpop.permute.xlu0 %886
      %v888 = vsel %vm681, %v885, %v876
      %v889 = vsel %vm681, %v887, %v877
      %892 = vrot.lane.b32.xlu0 %v888, 113
      %v893 = vpop.permute.xlu0 %892
      %894 = vrot.lane.b32.xlu0 %v889, 113
      %v895 = vpop.permute.xlu0 %894
      %v898 = vsel %vm814, %v876, %v893
      %v899 = vsel %vm814, %v877, %v895
      %v900 = vrot.slane %v898, 1
      %v901 = vrot.slane %v899, 1
      %v902 = vsel %vm728, %v900, %v901
      %v903 = vsel %vm728, %v901, %v900
      %v904 = vadd.f32 %v898, %v902
      %v905 = vadd.f32 %v899, %v903
      %v906 = vrot.slane %v904, 7
      %v907 = vrot.slane %v905, 7
      %v908 = vsel %vm849, %v906, %v907
      %v909 = vsel %vm849, %v907, %v906
      %v910 = vsel %vm845, %v904, %v909
      %v911 = vsel %vm846, %v905, %v908
      %v912 = vmul.f32 %v910, 0.25
      %v913 = vmul.f32 %v911, 0.25
      %v914 = vsub.f32 %v670, %v854
      %v915 = vsub.f32 %v671, %v855
      %v916 = vand.u32 2147483647, %v914
      %v917 = vand.u32 2147483647, %v915
      %v918 = vsel %vm756, %v916, 0.0
      %v919 = vsel %vm756, %v917, 0.0
      %v920 = vadd.f32 %v918, %v919
      %921 = vadd.xlane.f32.xlu0 %v920
      %v922 = vpop.xlane.xlu0 %921
      %v923 = vrot.slane %v922, 4
      %v924 = vadd.f32 %v922, %v923
      %v925 = vrot.slane %v924, 2
      %v926 = vadd.f32 %v924, %v925
      %v927 = vrot.slane %v926, 1
      %v928 = vadd.f32 %v926, %v927
      %s929 = vtos %v928
      %v930 = vsub.f32 %v674, %v912
      %v931 = vsub.f32 %v675, %v913
      %v932 = vand.u32 2147483647, %v930
      %v933 = vand.u32 2147483647, %v931
      %v934 = vsel %vm756, %v932, 0.0
      %v935 = vsel %vm756, %v933, 0.0
      %v936 = vadd.f32 %v934, %v935
      %937 = vadd.xlane.f32.xlu0 %v936
      %v938 = vpop.xlane.xlu0 %937
      %v939 = vrot.slane %v938, 4
      %v940 = vadd.f32 %v938, %v939
      %v941 = vrot.slane %v940, 2
      %v942 = vadd.f32 %v940, %v941
      %v943 = vrot.slane %v942, 1
      %v944 = vadd.f32 %v942, %v943
      %s945 = vtos %v944
      %948 = vrot.lane.b32.xlu0 %v692, 127
      %v949 = vpop.permute.xlu0 %948
      %950 = vrot.lane.b32.xlu0 %v693, 127
      %v951 = vpop.permute.xlu0 %950
      %v954 = vadd.f32 %v664, %v949
      %v955 = vadd.f32 %v665, %v951
      %956 = vrot.lane.b32.xlu0 %v954, 16
      %v957 = vpop.permute.xlu0 %956
      %v958 = vsel %vm681, %v957, %v954
      %959 = vrot.lane.b32.xlu0 %v955, 16
      %v960 = vpop.permute.xlu0 %959
      %v961 = vsel %vm681, %v960, %v955
      %962 = vrot.lane.b32.xlu0 %v958, 16
      %v963 = vpop.permute.xlu0 %962
      %964 = vrot.lane.b32.xlu0 %v961, 16
      %v965 = vpop.permute.xlu0 %964
      %v966 = vsel %vm681, %v963, %v954
      %v967 = vsel %vm681, %v965, %v955
      %970 = vrot.lane.b32.xlu0 %v966, 113
      %v971 = vpop.permute.xlu0 %970
      %972 = vrot.lane.b32.xlu0 %v967, 113
      %v973 = vpop.permute.xlu0 %972
      %v976 = vsel %vm814, %v954, %v971
      %v977 = vsel %vm814, %v955, %v973
      %v978 = vrot.slane %v976, 1
      %v979 = vrot.slane %v977, 1
      %v980 = vsel %vm728, %v978, %v979
      %v981 = vsel %vm728, %v979, %v978
      %v982 = vadd.f32 %v976, %v980
      %v983 = vadd.f32 %v977, %v981
      %v984 = vrot.slane %v982, 7
      %v985 = vrot.slane %v983, 7
      %v986 = vsel %vm849, %v984, %v985
      %v987 = vsel %vm849, %v985, %v984
      %v988 = vsel %vm845, %v982, %v987
      %v989 = vsel %vm846, %v983, %v986
      %v990 = vmul.f32 %v988, 0.25
      %v991 = vmul.f32 %v989, 0.25
      %994 = vrot.lane.b32.xlu0 %v714, 127
      %v995 = vpop.permute.xlu0 %994
      %996 = vrot.lane.b32.xlu0 %v715, 127
      %v997 = vpop.permute.xlu0 %996
      %v1000 = vadd.f32 %v666, %v995
      %v1001 = vadd.f32 %v667, %v997
      %1002 = vrot.lane.b32.xlu0 %v1000, 16
      %v1003 = vpop.permute.xlu0 %1002
      %v1004 = vsel %vm681, %v1003, %v1000
      %1005 = vrot.lane.b32.xlu0 %v1001, 16
      %v1006 = vpop.permute.xlu0 %1005
      %v1007 = vsel %vm681, %v1006, %v1001
      %1008 = vrot.lane.b32.xlu0 %v1004, 16
      %v1009 = vpop.permute.xlu0 %1008
      %1010 = vrot.lane.b32.xlu0 %v1007, 16
      %v1011 = vpop.permute.xlu0 %1010
      %v1012 = vsel %vm681, %v1009, %v1000
      %v1013 = vsel %vm681, %v1011, %v1001
      %1016 = vrot.lane.b32.xlu0 %v1012, 113
      %v1017 = vpop.permute.xlu0 %1016
      %1018 = vrot.lane.b32.xlu0 %v1013, 113
      %v1019 = vpop.permute.xlu0 %1018
      %v1022 = vsel %vm814, %v1000, %v1017
      %v1023 = vsel %vm814, %v1001, %v1019
      %v1024 = vrot.slane %v1022, 1
      %v1025 = vrot.slane %v1023, 1
      %v1026 = vsel %vm728, %v1024, %v1025
      %v1027 = vsel %vm728, %v1025, %v1024
      %v1028 = vadd.f32 %v1022, %v1026
      %v1029 = vadd.f32 %v1023, %v1027
      %v1030 = vrot.slane %v1028, 7
      %v1031 = vrot.slane %v1029, 7
      %v1032 = vsel %vm849, %v1030, %v1031
      %v1033 = vsel %vm849, %v1031, %v1030
      %v1034 = vsel %vm845, %v1028, %v1033
      %v1035 = vsel %vm846, %v1029, %v1032
      %v1036 = vmul.f32 %v1034, 0.25
      %v1037 = vmul.f32 %v1035, 0.25
      %1038 = vrot.lane.b32.xlu0 %v990, 16
      %v1039 = vpop.permute.xlu0 %1038
      %v1040 = vsel %vm681, %v1039, %v990
      %1041 = vrot.lane.b32.xlu0 %v991, 16
      %v1042 = vpop.permute.xlu0 %1041
      %v1043 = vsel %vm681, %v1042, %v991
      %1044 = vrot.lane.b32.xlu0 %v1040, 16
      %v1045 = vpop.permute.xlu0 %1044
      %1046 = vrot.lane.b32.xlu0 %v1043, 16
      %v1047 = vpop.permute.xlu0 %1046
      %v1048 = vsel %vm681, %v1045, %v990
      %v1049 = vsel %vm681, %v1047, %v991
      %1052 = vrot.lane.b32.xlu0 %v990, 2
      %v1053 = vpop.permute.xlu0 %1052
      %1054 = vrot.lane.b32.xlu0 %v991, 2
      %v1055 = vpop.permute.xlu0 %1054
      %v1058 = vsub.f32 %v1048, %v1053
      %v1059 = vsub.f32 %v1049, %v1055
      %1060 = vrot.lane.b32.xlu0 %v1036, 16
      %v1061 = vpop.permute.xlu0 %1060
      %v1062 = vsel %vm681, %v1061, %v1036
      %1063 = vrot.lane.b32.xlu0 %v1037, 16
      %v1064 = vpop.permute.xlu0 %1063
      %v1065 = vsel %vm681, %v1064, %v1037
      %1066 = vrot.lane.b32.xlu0 %v1062, 16
      %v1067 = vpop.permute.xlu0 %1066
      %1068 = vrot.lane.b32.xlu0 %v1065, 16
      %v1069 = vpop.permute.xlu0 %1068
      %v1070 = vsel %vm681, %v1067, %v1036
      %v1071 = vsel %vm681, %v1069, %v1037
      %1074 = vrot.lane.b32.xlu0 %v1036, 2
      %v1075 = vpop.permute.xlu0 %1074
      %1076 = vrot.lane.b32.xlu0 %v1037, 2
      %v1077 = vpop.permute.xlu0 %1076
      %v1080 = vsub.f32 %v1070, %v1075
      %v1081 = vsub.f32 %v1071, %v1077
      %v1082 = vrot.slane %v990, 2
      %v1083 = vrot.slane %v991, 2
      %vm1084 = vcmp.lt.s32.totalorder %v679, 6
      %v1085 = vsel %vm1084, %v1082, %v1083
      %v1086 = vsel %vm1084, %v1083, %v1082
      %v1087 = vsub.f32 %v1085, %v990
      %v1088 = vsub.f32 %v1086, %v991
      %v1089 = vrot.slane %v1036, 2
      %v1090 = vrot.slane %v1037, 2
      %v1091 = vsel %vm1084, %v1089, %v1090
      %v1092 = vsel %vm1084, %v1090, %v1089
      %v1093 = vsub.f32 %v1091, %v1036
      %v1094 = vsub.f32 %v1092, %v1037
      %vm1095 = vcmp.lt.s32.totalorder %v677, 14
      %v1096 = vand.u32 2147483647, %v1058
      %v1097 = vand.u32 2147483647, %v1059
      %v1098 = vand.u32 2147483647, %v1080
      %v1099 = vand.u32 2147483647, %v1081
      %v1100 = vmul.f32 %v1096, %v1098
      %v1101 = vmul.f32 %v1097, %v1099
      %1104 = vrot.lane.b32.xlu0 %v1100, 126
      %v1105 = vpop.permute.xlu0 %1104
      %1106 = vrot.lane.b32.xlu0 %v1101, 126
      %v1107 = vpop.permute.xlu0 %1106
      %v1110 = vsel %vm1095, %v1105, 0.0
      %v1111 = vsel %vm1095, %v1107, 0.0
      %v1112 = vsel %vm756, %v1110, 0.0
      %v1113 = vsel %vm756, %v1111, 0.0
      %v1114 = vadd.f32 %v1112, %v1113
      %1115 = vadd.xlane.f32.xlu0 %v1114
      %v1116 = vpop.xlane.xlu0 %1115
      %v1117 = vrot.slane %v1116, 4
      %v1118 = vadd.f32 %v1116, %v1117
      %v1119 = vrot.slane %v1118, 2
      %v1120 = vadd.f32 %v1118, %v1119
      %v1121 = vrot.slane %v1120, 1
      %v1122 = vadd.f32 %v1120, %v1121
      %s1123 = vtos %v1122
      %s1124 = smul.f32 %s1123, 0.25
      %vm1125 = vcmp.lt.s32.totalorder %v679, 14
      %vm1126 = vcmp.lt.s32.totalorder %v680, 14
      %v1127 = vand.u32 2147483647, %v1087
      %v1128 = vand.u32 2147483647, %v1088
      %v1129 = vand.u32 2147483647, %v1093
      %v1130 = vand.u32 2147483647, %v1094
      %v1131 = vmul.f32 %v1127, %v1129
      %v1132 = vmul.f32 %v1128, %v1130
      %v1133 = vsel %vm1125, %v1131, 0.0
      %v1134 = vsel %vm1126, %v1132, 0.0
      %v1135 = vsel %vm756, %v1133, 0.0
      %v1136 = vsel %vm756, %v1134, 0.0
      %v1137 = vadd.f32 %v1135, %v1136
      %1138 = vadd.xlane.f32.xlu0 %v1137
      %v1139 = vpop.xlane.xlu0 %1138
      %v1140 = vrot.slane %v1139, 4
      %v1141 = vadd.f32 %v1139, %v1140
      %v1142 = vrot.slane %v1141, 2
      %v1143 = vadd.f32 %v1141, %v1142
      %v1144 = vrot.slane %v1143, 1
      %v1145 = vadd.f32 %v1143, %v1144
      %s1146 = vtos %v1145
      %s1147 = smul.f32 %s1146, 0.25
      %1148 = vrot.lane.b32.xlu0 %v854, 16
      %v1149 = vpop.permute.xlu0 %1148
      %v1150 = vsel %vm681, %v1149, %v854
      %1151 = vrot.lane.b32.xlu0 %v855, 16
      %v1152 = vpop.permute.xlu0 %1151
      %v1153 = vsel %vm681, %v1152, %v855
      %1154 = vrot.lane.b32.xlu0 %v1150, 16
      %v1155 = vpop.permute.xlu0 %1154
      %1156 = vrot.lane.b32.xlu0 %v1153, 16
      %v1157 = vpop.permute.xlu0 %1156
      %v1158 = vsel %vm681, %v1155, %v854
      %v1159 = vsel %vm681, %v1157, %v855
      %1162 = vrot.lane.b32.xlu0 %v1158, 126
      %v1163 = vpop.permute.xlu0 %1162
      %1164 = vrot.lane.b32.xlu0 %v1159, 126
      %v1165 = vpop.permute.xlu0 %1164
      %v1168 = vadd.f32 %v854, %v1163
      %v1169 = vadd.f32 %v855, %v1165
      %v1170 = vshra.s32 %v677, 1
      %v1171 = vand.u32 %v1170, 1
      %vm1172 = vcmp.eq.s32.totalorder %v1171, 0
      %1173 = vrot.lane.b32.xlu0 %v1168, 16
      %v1174 = vpop.permute.xlu0 %1173
      %v1175 = vsel %vm681, %v1174, %v1168
      %1176 = vrot.lane.b32.xlu0 %v1169, 16
      %v1177 = vpop.permute.xlu0 %1176
      %v1178 = vsel %vm681, %v1177, %v1169
      %1179 = vrot.lane.b32.xlu0 %v1175, 16
      %v1180 = vpop.permute.xlu0 %1179
      %1181 = vrot.lane.b32.xlu0 %v1178, 16
      %v1182 = vpop.permute.xlu0 %1181
      %v1183 = vsel %vm681, %v1180, %v1168
      %v1184 = vsel %vm681, %v1182, %v1169
      %1187 = vrot.lane.b32.xlu0 %v1183, 114
      %v1188 = vpop.permute.xlu0 %1187
      %1189 = vrot.lane.b32.xlu0 %v1184, 114
      %v1190 = vpop.permute.xlu0 %1189
      %v1193 = vsel %vm1172, %v1168, %v1188
      %v1194 = vsel %vm1172, %v1169, %v1190
      %v1195 = vrot.slane %v1193, 2
      %v1196 = vrot.slane %v1194, 2
      %v1197 = vsel %vm1084, %v1195, %v1196
      %v1198 = vsel %vm1084, %v1196, %v1195
      %v1199 = vadd.f32 %v1193, %v1197
      %v1200 = vadd.f32 %v1194, %v1198
      %v1201 = vshra.s32 %v679, 1
      %v1202 = vshra.s32 %v680, 1
      %v1203 = vand.u32 %v1201, 1
      %v1204 = vand.u32 %v1202, 1
      %vm1205 = vcmp.eq.s32.totalorder %v1203, 0
      %vm1206 = vcmp.eq.s32.totalorder %v1204, 0
      %v1207 = vrot.slane %v1199, 6
      %v1208 = vrot.slane %v1200, 6
      %vm1209 = vcmp.lt.s32.totalorder %v679, 2
      %v1210 = vsel %vm1209, %v1207, %v1208
      %v1211 = vsel %vm1209, %v1208, %v1207
      %v1212 = vsel %vm1205, %v1199, %v1211
      %v1213 = vsel %vm1206, %v1200, %v1210
      %v1214 = vmul.f32 %v1212, 0.25
      %v1215 = vmul.f32 %v1213, 0.25
      %1216 = vrot.lane.b32.xlu0 %v912, 16
      %v1217 = vpop.permute.xlu0 %1216
      %v1218 = vsel %vm681, %v1217, %v912
      %1219 = vrot.lane.b32.xlu0 %v913, 16
      %v1220 = vpop.permute.xlu0 %1219
      %v1221 = vsel %vm681, %v1220, %v913
      %1222 = vrot.lane.b32.xlu0 %v1218, 16
      %v1223 = vpop.permute.xlu0 %1222
      %1224 = vrot.lane.b32.xlu0 %v1221, 16
      %v1225 = vpop.permute.xlu0 %1224
      %v1226 = vsel %vm681, %v1223, %v912
      %v1227 = vsel %vm681, %v1225, %v913
      %1230 = vrot.lane.b32.xlu0 %v1226, 126
      %v1231 = vpop.permute.xlu0 %1230
      %1232 = vrot.lane.b32.xlu0 %v1227, 126
      %v1233 = vpop.permute.xlu0 %1232
      %v1236 = vadd.f32 %v912, %v1231
      %v1237 = vadd.f32 %v913, %v1233
      %1238 = vrot.lane.b32.xlu0 %v1236, 16
      %v1239 = vpop.permute.xlu0 %1238
      %v1240 = vsel %vm681, %v1239, %v1236
      %1241 = vrot.lane.b32.xlu0 %v1237, 16
      %v1242 = vpop.permute.xlu0 %1241
      %v1243 = vsel %vm681, %v1242, %v1237
      %1244 = vrot.lane.b32.xlu0 %v1240, 16
      %v1245 = vpop.permute.xlu0 %1244
      %1246 = vrot.lane.b32.xlu0 %v1243, 16
      %v1247 = vpop.permute.xlu0 %1246
      %v1248 = vsel %vm681, %v1245, %v1236
      %v1249 = vsel %vm681, %v1247, %v1237
      %1252 = vrot.lane.b32.xlu0 %v1248, 114
      %v1253 = vpop.permute.xlu0 %1252
      %1254 = vrot.lane.b32.xlu0 %v1249, 114
      %v1255 = vpop.permute.xlu0 %1254
      %v1258 = vsel %vm1172, %v1236, %v1253
      %v1259 = vsel %vm1172, %v1237, %v1255
      %v1260 = vrot.slane %v1258, 2
      %v1261 = vrot.slane %v1259, 2
      %v1262 = vsel %vm1084, %v1260, %v1261
      %v1263 = vsel %vm1084, %v1261, %v1260
      %v1264 = vadd.f32 %v1258, %v1262
      %v1265 = vadd.f32 %v1259, %v1263
      %v1266 = vrot.slane %v1264, 6
      %v1267 = vrot.slane %v1265, 6
      %v1268 = vsel %vm1209, %v1266, %v1267
      %v1269 = vsel %vm1209, %v1267, %v1266
      %v1270 = vsel %vm1205, %v1264, %v1269
      %v1271 = vsel %vm1206, %v1265, %v1268
      %v1272 = vmul.f32 %v1270, 0.25
      %v1273 = vmul.f32 %v1271, 0.25
      %v1274 = vsub.f32 %v854, %v1214
      %v1275 = vsub.f32 %v855, %v1215
      %v1276 = vand.u32 2147483647, %v1274
      %v1277 = vand.u32 2147483647, %v1275
      %v1278 = vsel %vm756, %v1276, 0.0
      %v1279 = vsel %vm756, %v1277, 0.0
      %v1280 = vadd.f32 %v1278, %v1279
      %1281 = vadd.xlane.f32.xlu0 %v1280
      %v1282 = vpop.xlane.xlu0 %1281
      %v1283 = vrot.slane %v1282, 4
      %v1284 = vadd.f32 %v1282, %v1283
      %v1285 = vrot.slane %v1284, 2
      %v1286 = vadd.f32 %v1284, %v1285
      %v1287 = vrot.slane %v1286, 1
      %v1288 = vadd.f32 %v1286, %v1287
      %s1289 = vtos %v1288
      %s1290 = smul.f32 %s1289, 0.25
      %v1291 = vsub.f32 %v912, %v1272
      %v1292 = vsub.f32 %v913, %v1273
      %v1293 = vand.u32 2147483647, %v1291
      %v1294 = vand.u32 2147483647, %v1292
      %v1295 = vsel %vm756, %v1293, 0.0
      %v1296 = vsel %vm756, %v1294, 0.0
      %v1297 = vadd.f32 %v1295, %v1296
      %1298 = vadd.xlane.f32.xlu0 %v1297
      %v1299 = vpop.xlane.xlu0 %1298
      %v1300 = vrot.slane %v1299, 4
      %v1301 = vadd.f32 %v1299, %v1300
      %v1302 = vrot.slane %v1301, 2
      %v1303 = vadd.f32 %v1301, %v1302
      %v1304 = vrot.slane %v1303, 1
      %v1305 = vadd.f32 %v1303, %v1304
      %s1306 = vtos %v1305
      %s1307 = smul.f32 %s1306, 0.25
      %1310 = vrot.lane.b32.xlu0 %v1048, 126
      %v1311 = vpop.permute.xlu0 %1310
      %1312 = vrot.lane.b32.xlu0 %v1049, 126
      %v1313 = vpop.permute.xlu0 %1312
      %v1316 = vadd.f32 %v990, %v1311
      %v1317 = vadd.f32 %v991, %v1313
      %1318 = vrot.lane.b32.xlu0 %v1316, 16
      %v1319 = vpop.permute.xlu0 %1318
      %v1320 = vsel %vm681, %v1319, %v1316
      %1321 = vrot.lane.b32.xlu0 %v1317, 16
      %v1322 = vpop.permute.xlu0 %1321
      %v1323 = vsel %vm681, %v1322, %v1317
      %1324 = vrot.lane.b32.xlu0 %v1320, 16
      %v1325 = vpop.permute.xlu0 %1324
      %1326 = vrot.lane.b32.xlu0 %v1323, 16
      %v1327 = vpop.permute.xlu0 %1326
      %v1328 = vsel %vm681, %v1325, %v1316
      %v1329 = vsel %vm681, %v1327, %v1317
      %1332 = vrot.lane.b32.xlu0 %v1328, 114
      %v1333 = vpop.permute.xlu0 %1332
      %1334 = vrot.lane.b32.xlu0 %v1329, 114
      %v1335 = vpop.permute.xlu0 %1334
      %v1338 = vsel %vm1172, %v1316, %v1333
      %v1339 = vsel %vm1172, %v1317, %v1335
      %v1340 = vrot.slane %v1338, 2
      %v1341 = vrot.slane %v1339, 2
      %v1342 = vsel %vm1084, %v1340, %v1341
      %v1343 = vsel %vm1084, %v1341, %v1340
      %v1344 = vadd.f32 %v1338, %v1342
      %v1345 = vadd.f32 %v1339, %v1343
      %v1346 = vrot.slane %v1344, 6
      %v1347 = vrot.slane %v1345, 6
      %v1348 = vsel %vm1209, %v1346, %v1347
      %v1349 = vsel %vm1209, %v1347, %v1346
      %v1350 = vsel %vm1205, %v1344, %v1349
      %v1351 = vsel %vm1206, %v1345, %v1348
      %v1352 = vmul.f32 %v1350, 0.25
      %v1353 = vmul.f32 %v1351, 0.25
      %1356 = vrot.lane.b32.xlu0 %v1070, 126
      %v1357 = vpop.permute.xlu0 %1356
      %1358 = vrot.lane.b32.xlu0 %v1071, 126
      %v1359 = vpop.permute.xlu0 %1358
      %v1362 = vadd.f32 %v1036, %v1357
      %v1363 = vadd.f32 %v1037, %v1359
      %1364 = vrot.lane.b32.xlu0 %v1362, 16
      %v1365 = vpop.permute.xlu0 %1364
      %v1366 = vsel %vm681, %v1365, %v1362
      %1367 = vrot.lane.b32.xlu0 %v1363, 16
      %v1368 = vpop.permute.xlu0 %1367
      %v1369 = vsel %vm681, %v1368, %v1363
      %1370 = vrot.lane.b32.xlu0 %v1366, 16
      %v1371 = vpop.permute.xlu0 %1370
      %1372 = vrot.lane.b32.xlu0 %v1369, 16
      %v1373 = vpop.permute.xlu0 %1372
      %v1374 = vsel %vm681, %v1371, %v1362
      %v1375 = vsel %vm681, %v1373, %v1363
      %1378 = vrot.lane.b32.xlu0 %v1374, 114
      %v1379 = vpop.permute.xlu0 %1378
      %1380 = vrot.lane.b32.xlu0 %v1375, 114
      %v1381 = vpop.permute.xlu0 %1380
      %v1384 = vsel %vm1172, %v1362, %v1379
      %v1385 = vsel %vm1172, %v1363, %v1381
      %v1386 = vrot.slane %v1384, 2
      %v1387 = vrot.slane %v1385, 2
      %v1388 = vsel %vm1084, %v1386, %v1387
      %v1389 = vsel %vm1084, %v1387, %v1386
      %v1390 = vadd.f32 %v1384, %v1388
      %v1391 = vadd.f32 %v1385, %v1389
      %v1392 = vrot.slane %v1390, 6
      %v1393 = vrot.slane %v1391, 6
      %v1394 = vsel %vm1209, %v1392, %v1393
      %v1395 = vsel %vm1209, %v1393, %v1392
      %v1396 = vsel %vm1205, %v1390, %v1395
      %v1397 = vsel %vm1206, %v1391, %v1394
      %v1398 = vmul.f32 %v1396, 0.25
      %v1399 = vmul.f32 %v1397, 0.25
      %1400 = vrot.lane.b32.xlu0 %v1352, 16
      %v1401 = vpop.permute.xlu0 %1400
      %v1402 = vsel %vm681, %v1401, %v1352
      %1403 = vrot.lane.b32.xlu0 %v1353, 16
      %v1404 = vpop.permute.xlu0 %1403
      %v1405 = vsel %vm681, %v1404, %v1353
      %1406 = vrot.lane.b32.xlu0 %v1402, 16
      %v1407 = vpop.permute.xlu0 %1406
      %1408 = vrot.lane.b32.xlu0 %v1405, 16
      %v1409 = vpop.permute.xlu0 %1408
      %v1410 = vsel %vm681, %v1407, %v1352
      %v1411 = vsel %vm681, %v1409, %v1353
      %1414 = vrot.lane.b32.xlu0 %v1352, 4
      %v1415 = vpop.permute.xlu0 %1414
      %1416 = vrot.lane.b32.xlu0 %v1353, 4
      %v1417 = vpop.permute.xlu0 %1416
      %v1420 = vsub.f32 %v1410, %v1415
      %v1421 = vsub.f32 %v1411, %v1417
      %1422 = vrot.lane.b32.xlu0 %v1398, 16
      %v1423 = vpop.permute.xlu0 %1422
      %v1424 = vsel %vm681, %v1423, %v1398
      %1425 = vrot.lane.b32.xlu0 %v1399, 16
      %v1426 = vpop.permute.xlu0 %1425
      %v1427 = vsel %vm681, %v1426, %v1399
      %1428 = vrot.lane.b32.xlu0 %v1424, 16
      %v1429 = vpop.permute.xlu0 %1428
      %1430 = vrot.lane.b32.xlu0 %v1427, 16
      %v1431 = vpop.permute.xlu0 %1430
      %v1432 = vsel %vm681, %v1429, %v1398
      %v1433 = vsel %vm681, %v1431, %v1399
      %1436 = vrot.lane.b32.xlu0 %v1398, 4
      %v1437 = vpop.permute.xlu0 %1436
      %1438 = vrot.lane.b32.xlu0 %v1399, 4
      %v1439 = vpop.permute.xlu0 %1438
      %v1442 = vsub.f32 %v1432, %v1437
      %v1443 = vsub.f32 %v1433, %v1439
      %v1444 = vrot.slane %v1352, 4
      %v1445 = vrot.slane %v1353, 4
      %vm1446 = vcmp.lt.s32.totalorder %v679, 4
      %v1447 = vsel %vm1446, %v1444, %v1445
      %v1448 = vsel %vm1446, %v1445, %v1444
      %v1449 = vsub.f32 %v1447, %v1352
      %v1450 = vsub.f32 %v1448, %v1353
      %v1451 = vrot.slane %v1398, 4
      %v1452 = vrot.slane %v1399, 4
      %v1453 = vsel %vm1446, %v1451, %v1452
      %v1454 = vsel %vm1446, %v1452, %v1451
      %v1455 = vsub.f32 %v1453, %v1398
      %v1456 = vsub.f32 %v1454, %v1399
      %vm1457 = vcmp.lt.s32.totalorder %v677, 12
      %v1458 = vand.u32 2147483647, %v1420
      %v1459 = vand.u32 2147483647, %v1421
      %v1460 = vand.u32 2147483647, %v1442
      %v1461 = vand.u32 2147483647, %v1443
      %v1462 = vmul.f32 %v1458, %v1460
      %v1463 = vmul.f32 %v1459, %v1461
      %1466 = vrot.lane.b32.xlu0 %v1462, 124
      %v1467 = vpop.permute.xlu0 %1466
      %1468 = vrot.lane.b32.xlu0 %v1463, 124
      %v1469 = vpop.permute.xlu0 %1468
      %v1472 = vsel %vm1457, %v1467, 0.0
      %v1473 = vsel %vm1457, %v1469, 0.0
      %v1474 = vsel %vm756, %v1472, 0.0
      %v1475 = vsel %vm756, %v1473, 0.0
      %v1476 = vadd.f32 %v1474, %v1475
      %1477 = vadd.xlane.f32.xlu0 %v1476
      %v1478 = vpop.xlane.xlu0 %1477
      %v1479 = vrot.slane %v1478, 4
      %v1480 = vadd.f32 %v1478, %v1479
      %v1481 = vrot.slane %v1480, 2
      %v1482 = vadd.f32 %v1480, %v1481
      %v1483 = vrot.slane %v1482, 1
      %v1484 = vadd.f32 %v1482, %v1483
      %s1485 = vtos %v1484
      %s1486 = smul.f32 %s1485, 0.0625
      %vm1487 = vcmp.lt.s32.totalorder %v679, 12
      %vm1488 = vcmp.lt.s32.totalorder %v680, 12
      %v1489 = vand.u32 2147483647, %v1449
      %v1490 = vand.u32 2147483647, %v1450
      %v1491 = vand.u32 2147483647, %v1455
      %v1492 = vand.u32 2147483647, %v1456
      %v1493 = vmul.f32 %v1489, %v1491
      %v1494 = vmul.f32 %v1490, %v1492
      %v1495 = vsel %vm1487, %v1493, 0.0
      %v1496 = vsel %vm1488, %v1494, 0.0
      %v1497 = vsel %vm756, %v1495, 0.0
      %v1498 = vsel %vm756, %v1496, 0.0
      %v1499 = vadd.f32 %v1497, %v1498
      %1500 = vadd.xlane.f32.xlu0 %v1499
      %v1501 = vpop.xlane.xlu0 %1500
      %v1502 = vrot.slane %v1501, 4
      %v1503 = vadd.f32 %v1501, %v1502
      %v1504 = vrot.slane %v1503, 2
      %v1505 = vadd.f32 %v1503, %v1504
      %v1506 = vrot.slane %v1505, 1
      %v1507 = vadd.f32 %v1505, %v1506
      %s1508 = vtos %v1507
      %s1509 = smul.f32 %s1508, 0.0625
      %1510 = vrot.lane.b32.xlu0 %v1214, 16
      %v1511 = vpop.permute.xlu0 %1510
      %v1512 = vsel %vm681, %v1511, %v1214
      %1513 = vrot.lane.b32.xlu0 %v1215, 16
      %v1514 = vpop.permute.xlu0 %1513
      %v1515 = vsel %vm681, %v1514, %v1215
      %1516 = vrot.lane.b32.xlu0 %v1512, 16
      %v1517 = vpop.permute.xlu0 %1516
      %1518 = vrot.lane.b32.xlu0 %v1515, 16
      %v1519 = vpop.permute.xlu0 %1518
      %v1520 = vsel %vm681, %v1517, %v1214
      %v1521 = vsel %vm681, %v1519, %v1215
      %1524 = vrot.lane.b32.xlu0 %v1520, 124
      %v1525 = vpop.permute.xlu0 %1524
      %1526 = vrot.lane.b32.xlu0 %v1521, 124
      %v1527 = vpop.permute.xlu0 %1526
      %v1530 = vadd.f32 %v1214, %v1525
      %v1531 = vadd.f32 %v1215, %v1527
      %v1532 = vshra.s32 %v677, 2
      %v1533 = vand.u32 %v1532, 1
      %vm1534 = vcmp.eq.s32.totalorder %v1533, 0
      %1535 = vrot.lane.b32.xlu0 %v1530, 16
      %v1536 = vpop.permute.xlu0 %1535
      %v1537 = vsel %vm681, %v1536, %v1530
      %1538 = vrot.lane.b32.xlu0 %v1531, 16
      %v1539 = vpop.permute.xlu0 %1538
      %v1540 = vsel %vm681, %v1539, %v1531
      %1541 = vrot.lane.b32.xlu0 %v1537, 16
      %v1542 = vpop.permute.xlu0 %1541
      %1543 = vrot.lane.b32.xlu0 %v1540, 16
      %v1544 = vpop.permute.xlu0 %1543
      %v1545 = vsel %vm681, %v1542, %v1530
      %v1546 = vsel %vm681, %v1544, %v1531
      %1549 = vrot.lane.b32.xlu0 %v1545, 116
      %v1550 = vpop.permute.xlu0 %1549
      %1551 = vrot.lane.b32.xlu0 %v1546, 116
      %v1552 = vpop.permute.xlu0 %1551
      %v1555 = vsel %vm1534, %v1530, %v1550
      %v1556 = vsel %vm1534, %v1531, %v1552
      %v1557 = vrot.slane %v1555, 4
      %v1558 = vrot.slane %v1556, 4
      %v1559 = vsel %vm1446, %v1557, %v1558
      %v1560 = vsel %vm1446, %v1558, %v1557
      %v1561 = vadd.f32 %v1555, %v1559
      %v1562 = vadd.f32 %v1556, %v1560
      %v1563 = vshra.s32 %v679, 2
      %v1564 = vshra.s32 %v680, 2
      %v1565 = vand.u32 %v1563, 1
      %v1566 = vand.u32 %v1564, 1
      %vm1567 = vcmp.eq.s32.totalorder %v1565, 0
      %vm1568 = vcmp.eq.s32.totalorder %v1566, 0
      %v1569 = vrot.slane %v1561, 4
      %v1570 = vrot.slane %v1562, 4
      %v1571 = vsel %vm1446, %v1569, %v1570
      %v1572 = vsel %vm1446, %v1570, %v1569
      %v1573 = vsel %vm1567, %v1561, %v1572
      %v1574 = vsel %vm1568, %v1562, %v1571
      %v1575 = vmul.f32 %v1573, 0.25
      %v1576 = vmul.f32 %v1574, 0.25
      %1577 = vrot.lane.b32.xlu0 %v1272, 16
      %v1578 = vpop.permute.xlu0 %1577
      %v1579 = vsel %vm681, %v1578, %v1272
      %1580 = vrot.lane.b32.xlu0 %v1273, 16
      %v1581 = vpop.permute.xlu0 %1580
      %v1582 = vsel %vm681, %v1581, %v1273
      %1583 = vrot.lane.b32.xlu0 %v1579, 16
      %v1584 = vpop.permute.xlu0 %1583
      %1585 = vrot.lane.b32.xlu0 %v1582, 16
      %v1586 = vpop.permute.xlu0 %1585
      %v1587 = vsel %vm681, %v1584, %v1272
      %v1588 = vsel %vm681, %v1586, %v1273
      %1591 = vrot.lane.b32.xlu0 %v1587, 124
      %v1592 = vpop.permute.xlu0 %1591
      %1593 = vrot.lane.b32.xlu0 %v1588, 124
      %v1594 = vpop.permute.xlu0 %1593
      %v1597 = vadd.f32 %v1272, %v1592
      %v1598 = vadd.f32 %v1273, %v1594
      %1599 = vrot.lane.b32.xlu0 %v1597, 16
      %v1600 = vpop.permute.xlu0 %1599
      %v1601 = vsel %vm681, %v1600, %v1597
      %1602 = vrot.lane.b32.xlu0 %v1598, 16
      %v1603 = vpop.permute.xlu0 %1602
      %v1604 = vsel %vm681, %v1603, %v1598
      %1605 = vrot.lane.b32.xlu0 %v1601, 16
      %v1606 = vpop.permute.xlu0 %1605
      %1607 = vrot.lane.b32.xlu0 %v1604, 16
      %v1608 = vpop.permute.xlu0 %1607
      %v1609 = vsel %vm681, %v1606, %v1597
      %v1610 = vsel %vm681, %v1608, %v1598
      %1613 = vrot.lane.b32.xlu0 %v1609, 116
      %v1614 = vpop.permute.xlu0 %1613
      %1615 = vrot.lane.b32.xlu0 %v1610, 116
      %v1616 = vpop.permute.xlu0 %1615
      %v1619 = vsel %vm1534, %v1597, %v1614
      %v1620 = vsel %vm1534, %v1598, %v1616
      %v1621 = vrot.slane %v1619, 4
      %v1622 = vrot.slane %v1620, 4
      %v1623 = vsel %vm1446, %v1621, %v1622
      %v1624 = vsel %vm1446, %v1622, %v1621
      %v1625 = vadd.f32 %v1619, %v1623
      %v1626 = vadd.f32 %v1620, %v1624
      %v1627 = vrot.slane %v1625, 4
      %v1628 = vrot.slane %v1626, 4
      %v1629 = vsel %vm1446, %v1627, %v1628
      %v1630 = vsel %vm1446, %v1628, %v1627
      %v1631 = vsel %vm1567, %v1625, %v1630
      %v1632 = vsel %vm1568, %v1626, %v1629
      %v1633 = vmul.f32 %v1631, 0.25
      %v1634 = vmul.f32 %v1632, 0.25
      %v1635 = vsub.f32 %v1214, %v1575
      %v1636 = vsub.f32 %v1215, %v1576
      %v1637 = vand.u32 2147483647, %v1635
      %v1638 = vand.u32 2147483647, %v1636
      %v1639 = vsel %vm756, %v1637, 0.0
      %v1640 = vsel %vm756, %v1638, 0.0
      %v1641 = vadd.f32 %v1639, %v1640
      %1642 = vadd.xlane.f32.xlu0 %v1641
      %v1643 = vpop.xlane.xlu0 %1642
      %v1644 = vrot.slane %v1643, 4
      %v1645 = vadd.f32 %v1643, %v1644
      %v1646 = vrot.slane %v1645, 2
      %v1647 = vadd.f32 %v1645, %v1646
      %v1648 = vrot.slane %v1647, 1
      %v1649 = vadd.f32 %v1647, %v1648
      %s1650 = vtos %v1649
      %s1651 = smul.f32 %s1650, 0.0625
      %v1652 = vsub.f32 %v1272, %v1633
      %v1653 = vsub.f32 %v1273, %v1634
      %v1654 = vand.u32 2147483647, %v1652
      %v1655 = vand.u32 2147483647, %v1653
      %v1656 = vsel %vm756, %v1654, 0.0
      %v1657 = vsel %vm756, %v1655, 0.0
      %v1658 = vadd.f32 %v1656, %v1657
      %1659 = vadd.xlane.f32.xlu0 %v1658
      %v1660 = vpop.xlane.xlu0 %1659
      %v1661 = vrot.slane %v1660, 4
      %v1662 = vadd.f32 %v1660, %v1661
      %v1663 = vrot.slane %v1662, 2
      %v1664 = vadd.f32 %v1662, %v1663
      %v1665 = vrot.slane %v1664, 1
      %v1666 = vadd.f32 %v1664, %v1665
      %s1667 = vtos %v1666
      %s1668 = smul.f32 %s1667, 0.0625
      %v1669 = vstv %s929
      %1670 = vst [vmem:[%s619] sm:$0xff] %v1669
      %v1671 = vstv %s1290
      %1672 = vst [vmem:[%s623] sm:$0xff] %v1671
      %v1673 = vstv %s1651
      %1674 = vst [vmem:[%s627] sm:$0xff] %v1673
      %v1675 = vstv %s945
      %1676 = vst [vmem:[%s631] sm:$0xff] %v1675
      %v1677 = vstv %s1307
      %1678 = vst [vmem:[%s635] sm:$0xff] %v1677
      %v1679 = vstv %s1668
      %1680 = vst [vmem:[%s639] sm:$0xff] %v1679
      %v1681 = vstv %s768
      %1682 = vst [vmem:[%s643] sm:$0xff] %v1681
      %v1683 = vstv %s1124
      %1684 = vst [vmem:[%s647] sm:$0xff] %v1683
      %v1685 = vstv %s1486
      %1686 = vst [vmem:[%s651] sm:$0xff] %v1685
      %v1687 = vstv %s790
      %1688 = vst [vmem:[%s655] sm:$0xff] %v1687
      %v1689 = vstv %s1147
      %1690 = vst [vmem:[%s659] sm:$0xff] %v1689
      %v1691 = vstv %s1509
      %1692 = vst [vmem:[%s663] sm:$0xff] %v1691
      %p1693 = scmp.lt.s32.totalorder %s27, 17
      %s1694 = scalar_select %p1693, %s27, 17
      %s1695 = smul.addr %s1694, 8
      %s1696 = scalar_lea.vmem %s4, %s1695
      %p1697 = scmp.lt.s32.totalorder %s27, 17
      %s1698 = scalar_select %p1697, %s27, 17
      %s1699 = smul.addr %s1698, 8
      %s1700 = scalar_lea.vmem %s5, %s1699
      %p1701 = scmp.lt.s32.totalorder %s27, 17
      %s1702 = scalar_select %p1701, %s27, 17
      %s1703 = smul.addr %s1702, 8
      %s1704 = scalar_lea.vmem %s6, %s1703
      %p1705 = scmp.lt.s32.totalorder %s27, 17
      %s1706 = scalar_select %p1705, %s27, 17
      %s1707 = smul.addr %s1706, 8
      %s1708 = scalar_lea.vmem %s7, %s1707
      %p1709 = scmp.lt.s32.totalorder %s27, 17
      %s1710 = scalar_select %p1709, %s27, 17
      %s1711 = smul.addr %s1710, 8
      %s1712 = scalar_lea.vmem %s8, %s1711
      %p1713 = scmp.lt.s32.totalorder %s27, 17
      %s1714 = scalar_select %p1713, %s27, 17
      %s1715 = smul.addr %s1714, 8
      %s1716 = scalar_lea.vmem %s9, %s1715
      %p1717 = scmp.lt.s32.totalorder %s27, 17
      %s1718 = scalar_select %p1717, %s27, 17
      %s1719 = smul.addr %s1718, 8
      %s1720 = scalar_lea.vmem %s10, %s1719
      %p1721 = scmp.lt.s32.totalorder %s27, 17
      %s1722 = scalar_select %p1721, %s27, 17
      %s1723 = smul.addr %s1722, 8
      %s1724 = scalar_lea.vmem %s11, %s1723
      %p1725 = scmp.lt.s32.totalorder %s27, 17
      %s1726 = scalar_select %p1725, %s27, 17
      %s1727 = smul.addr %s1726, 8
      %s1728 = scalar_lea.vmem %s12, %s1727
      %p1729 = scmp.lt.s32.totalorder %s27, 17
      %s1730 = scalar_select %p1729, %s27, 17
      %s1731 = smul.addr %s1730, 8
      %s1732 = scalar_lea.vmem %s13, %s1731
      %p1733 = scmp.lt.s32.totalorder %s27, 17
      %s1734 = scalar_select %p1733, %s27, 17
      %s1735 = smul.addr %s1734, 8
      %s1736 = scalar_lea.vmem %s14, %s1735
      %p1737 = scmp.lt.s32.totalorder %s27, 17
      %s1738 = scalar_select %p1737, %s27, 17
      %s1739 = smul.addr %s1738, 8
      %s1740 = scalar_lea.vmem %s15, %s1739
      // Predicated region
      $region37: #{full_model_forward.6} parent=35 // pred_check
        %p1741 = pneg %p149
      $region38: #{full_model_forward.6} parent=35 // pred_check_branch
        %1743 = sbr.rel (%p1741) target = $region40
      $region39: #{full_model_forward.6} parent=35 // pred_region
        _
      $region40: #{full_model_forward.6} parent=35 // pred_fallthru
        _
      // Predicated region
      $region41: #{full_model_forward.6} parent=35 // pred_check
        %p1744 = pneg %p175
      $region42: #{full_model_forward.6} parent=35 // pred_check_branch
        %1746 = sbr.rel (%p1744) target = $region44
      $region43: #{full_model_forward.6} parent=35 // pred_region
        _
      $region44: #{full_model_forward.6} parent=35 // pred_fallthru
        _
      // Predicated region
      $region45: #{full_model_forward.6} parent=35 // pred_check
        %p1747 = pneg %p201
      $region46: #{full_model_forward.6} parent=35 // pred_check_branch
        %1749 = sbr.rel (%p1747) target = $region48
      $region47: #{full_model_forward.6} parent=35 // pred_region
        _
      $region48: #{full_model_forward.6} parent=35 // pred_fallthru
        _
      // Predicated region
      $region49: #{full_model_forward.6} parent=35 // pred_check
        %p1750 = pneg %p227
      $region50: #{full_model_forward.6} parent=35 // pred_check_branch
        %1752 = sbr.rel (%p1750) target = $region52
      $region51: #{full_model_forward.6} parent=35 // pred_region
        _
      $region52: #{full_model_forward.6} parent=35 // pred_fallthru
        _
      // Predicated region
      $region53: #{full_model_forward.6} parent=35 // pred_check
        %p1753 = pneg %p253
      $region54: #{full_model_forward.6} parent=35 // pred_check_branch
        %1755 = sbr.rel (%p1753) target = $region56
      $region55: #{full_model_forward.6} parent=35 // pred_region
        _
      $region56: #{full_model_forward.6} parent=35 // pred_fallthru
        _
      // Predicated region
      $region57: #{full_model_forward.6} parent=35 // pred_check
        %p1756 = pneg %p279
      $region58: #{full_model_forward.6} parent=35 // pred_check_branch
        %1758 = sbr.rel (%p1756) target = $region60
      $region59: #{full_model_forward.6} parent=35 // pred_region
        _
      $region60: #{full_model_forward.6} parent=35 // pred_fallthru
        _
      // Predicated region
      $region61: #{full_model_forward.6} parent=35 // pred_check
        %p1759 = pneg %p305
      $region62: #{full_model_forward.6} parent=35 // pred_check_branch
        %1761 = sbr.rel (%p1759) target = $region64
      $region63: #{full_model_forward.6} parent=35 // pred_region
        _
      $region64: #{full_model_forward.6} parent=35 // pred_fallthru
        _
      // Predicated region
      $region65: #{full_model_forward.6} parent=35 // pred_check
        %p1762 = pneg %p331
      $region66: #{full_model_forward.6} parent=35 // pred_check_branch
        %1764 = sbr.rel (%p1762) target = $region68
      $region67: #{full_model_forward.6} parent=35 // pred_region
        _
      $region68: #{full_model_forward.6} parent=35 // pred_fallthru
        _
      // Predicated region
      $region69: #{full_model_forward.6} parent=35 // pred_check
        %p1765 = pneg %p357
      $region70: #{full_model_forward.6} parent=35 // pred_check_branch
        %1767 = sbr.rel (%p1765) target = $region72
      $region71: #{full_model_forward.6} parent=35 // pred_region
        _
      $region72: #{full_model_forward.6} parent=35 // pred_fallthru
        _
      // Predicated region
      $region73: #{full_model_forward.6} parent=35 // pred_check
        %p1768 = pneg %p383
      $region74: #{full_model_forward.6} parent=35 // pred_check_branch
        %1770 = sbr.rel (%p1768) target = $region76
      $region75: #{full_model_forward.6} parent=35 // pred_region
        _
      $region76: #{full_model_forward.6} parent=35 // pred_fallthru
        _
      // Predicated region
      $region77: #{full_model_forward.6} parent=35 // pred_check
        %p1771 = pneg %p409
      $region78: #{full_model_forward.6} parent=35 // pred_check_branch
        %1773 = sbr.rel (%p1771) target = $region80
      $region79: #{full_model_forward.6} parent=35 // pred_region
        _
      $region80: #{full_model_forward.6} parent=35 // pred_fallthru
        _
      // Predicated region
      $region81: #{full_model_forward.6} parent=35 // pred_check
        %p1774 = pneg %p435
      $region82: #{full_model_forward.6} parent=35 // pred_check_branch
        %1776 = sbr.rel (%p1774) target = $region84
      $region83: #{full_model_forward.6} parent=35 // pred_region
        _
      $region84: #{full_model_forward.6} parent=35 // pred_fallthru
        _
    $region36: #{full_model_forward.6} parent=5 // pred_fallthru
      _
    %p1777 = scmp.le.s32.totalorder 2, %s22
    // Predicated region
    $region85: #{full_model_forward.6} parent=5 // pred_check
      %p1778 = pneg %p1777
    $region86: #{full_model_forward.6} parent=5 // pred_check_branch
      %1780 = sbr.rel (%p1778) target = $region88
    $region87: #{full_model_forward.6} parent=5 // pred_region
      %s1781 = ssub.s32 %s22, 2
      // Predicated region
      $region89: #{full_model_forward.6} parent=87 // pred_check
        %p1782 = pneg %p155
      $region90: #{full_model_forward.6} parent=87 // pred_check_branch
        %1784 = sbr.rel (%p1782) target = $region92
      $region91: #{full_model_forward.6} parent=87 // pred_region
        %p1785 = scmp.lt.s32.totalorder %s28, 17
        %s1786 = scalar_select %p1785, %s28, 17
        %s1787 = smul.addr %s1786, 8
        %s1788 = scalar_lea.vmem %s4, %s1787
      $region92: #{full_model_forward.6} parent=87 // pred_fallthru
        _
      // Predicated region
      $region93: #{full_model_forward.6} parent=87 // pred_check
        %p1789 = pneg %p181
      $region94: #{full_model_forward.6} parent=87 // pred_check_branch
        %1791 = sbr.rel (%p1789) target = $region96
      $region95: #{full_model_forward.6} parent=87 // pred_region
        %p1792 = scmp.lt.s32.totalorder %s28, 17
        %s1793 = scalar_select %p1792, %s28, 17
        %s1794 = smul.addr %s1793, 8
        %s1795 = scalar_lea.vmem %s5, %s1794
      $region96: #{full_model_forward.6} parent=87 // pred_fallthru
        _
      // Predicated region
      $region97: #{full_model_forward.6} parent=87 // pred_check
        %p1796 = pneg %p207
      $region98: #{full_model_forward.6} parent=87 // pred_check_branch
        %1798 = sbr.rel (%p1796) target = $region100
      $region99: #{full_model_forward.6} parent=87 // pred_region
        %p1799 = scmp.lt.s32.totalorder %s28, 17
        %s1800 = scalar_select %p1799, %s28, 17
        %s1801 = smul.addr %s1800, 8
        %s1802 = scalar_lea.vmem %s6, %s1801
      $region100: #{full_model_forward.6} parent=87 // pred_fallthru
        _
      // Predicated region
      $region101: #{full_model_forward.6} parent=87 // pred_check
        %p1803 = pneg %p233
      $region102: #{full_model_forward.6} parent=87 // pred_check_branch
        %1805 = sbr.rel (%p1803) target = $region104
      $region103: #{full_model_forward.6} parent=87 // pred_region
        %p1806 = scmp.lt.s32.totalorder %s28, 17
        %s1807 = scalar_select %p1806, %s28, 17
        %s1808 = smul.addr %s1807, 8
        %s1809 = scalar_lea.vmem %s7, %s1808
      $region104: #{full_model_forward.6} parent=87 // pred_fallthru
        _
      // Predicated region
      $region105: #{full_model_forward.6} parent=87 // pred_check
        %p1810 = pneg %p259
      $region106: #{full_model_forward.6} parent=87 // pred_check_branch
        %1812 = sbr.rel (%p1810) target = $region108
      $region107: #{full_model_forward.6} parent=87 // pred_region
        %p1813 = scmp.lt.s32.totalorder %s28, 17
        %s1814 = scalar_select %p1813, %s28, 17
        %s1815 = smul.addr %s1814, 8
        %s1816 = scalar_lea.vmem %s8, %s1815
      $region108: #{full_model_forward.6} parent=87 // pred_fallthru
        _
      // Predicated region
      $region109: #{full_model_forward.6} parent=87 // pred_check
        %p1817 = pneg %p285
      $region110: #{full_model_forward.6} parent=87 // pred_check_branch
        %1819 = sbr.rel (%p1817) target = $region112
      $region111: #{full_model_forward.6} parent=87 // pred_region
        %p1820 = scmp.lt.s32.totalorder %s28, 17
        %s1821 = scalar_select %p1820, %s28, 17
        %s1822 = smul.addr %s1821, 8
        %s1823 = scalar_lea.vmem %s9, %s1822
      $region112: #{full_model_forward.6} parent=87 // pred_fallthru
        _
      // Predicated region
      $region113: #{full_model_forward.6} parent=87 // pred_check
        %p1824 = pneg %p311
      $region114: #{full_model_forward.6} parent=87 // pred_check_branch
        %1826 = sbr.rel (%p1824) target = $region116
      $region115: #{full_model_forward.6} parent=87 // pred_region
        %p1827 = scmp.lt.s32.totalorder %s28, 17
        %s1828 = scalar_select %p1827, %s28, 17
        %s1829 = smul.addr %s1828, 8
        %s1830 = scalar_lea.vmem %s10, %s1829
      $region116: #{full_model_forward.6} parent=87 // pred_fallthru
        _
      // Predicated region
      $region117: #{full_model_forward.6} parent=87 // pred_check
        %p1831 = pneg %p337
      $region118: #{full_model_forward.6} parent=87 // pred_check_branch
        %1833 = sbr.rel (%p1831) target = $region120
      $region119: #{full_model_forward.6} parent=87 // pred_region
        %p1834 = scmp.lt.s32.totalorder %s28, 17
        %s1835 = scalar_select %p1834, %s28, 17
        %s1836 = smul.addr %s1835, 8
        %s1837 = scalar_lea.vmem %s11, %s1836
      $region120: #{full_model_forward.6} parent=87 // pred_fallthru
        _
      // Predicated region
      $region121: #{full_model_forward.6} parent=87 // pred_check
        %p1838 = pneg %p363
      $region122: #{full_model_forward.6} parent=87 // pred_check_branch
        %1840 = sbr.rel (%p1838) target = $region124
      $region123: #{full_model_forward.6} parent=87 // pred_region
        %p1841 = scmp.lt.s32.totalorder %s28, 17
        %s1842 = scalar_select %p1841, %s28, 17
        %s1843 = smul.addr %s1842, 8
        %s1844 = scalar_lea.vmem %s12, %s1843
      $region124: #{full_model_forward.6} parent=87 // pred_fallthru
        _
      // Predicated region
      $region125: #{full_model_forward.6} parent=87 // pred_check
        %p1845 = pneg %p389
      $region126: #{full_model_forward.6} parent=87 // pred_check_branch
        %1847 = sbr.rel (%p1845) target = $region128
      $region127: #{full_model_forward.6} parent=87 // pred_region
        %p1848 = scmp.lt.s32.totalorder %s28, 17
        %s1849 = scalar_select %p1848, %s28, 17
        %s1850 = smul.addr %s1849, 8
        %s1851 = scalar_lea.vmem %s13, %s1850
      $region128: #{full_model_forward.6} parent=87 // pred_fallthru
        _
      // Predicated region
      $region129: #{full_model_forward.6} parent=87 // pred_check
        %p1852 = pneg %p415
      $region130: #{full_model_forward.6} parent=87 // pred_check_branch
        %1854 = sbr.rel (%p1852) target = $region132
      $region131: #{full_model_forward.6} parent=87 // pred_region
        %p1855 = scmp.lt.s32.totalorder %s28, 17
        %s1856 = scalar_select %p1855, %s28, 17
        %s1857 = smul.addr %s1856, 8
        %s1858 = scalar_lea.vmem %s14, %s1857
      $region132: #{full_model_forward.6} parent=87 // pred_fallthru
        _
      // Predicated region
      $region133: #{full_model_forward.6} parent=87 // pred_check
        %p1859 = pneg %p441
      $region134: #{full_model_forward.6} parent=87 // pred_check_branch
        %1861 = sbr.rel (%p1859) target = $region136
      $region135: #{full_model_forward.6} parent=87 // pred_region
        %p1862 = scmp.lt.s32.totalorder %s28, 17
        %s1863 = scalar_select %p1862, %s28, 17
        %s1864 = smul.addr %s1863, 8
        %s1865 = scalar_lea.vmem %s15, %s1864
      $region136: #{full_model_forward.6} parent=87 // pred_fallthru
        _
    $region88: #{full_model_forward.6} parent=5 // pred_fallthru
      _
  $region6: #{full_model_forward.6} parent=0 // loop_footer
    %s26 = sadd.s32 1, %s22
  $region7: #{full_model_forward.6} parent=0 // loop_footer_branch
    %21 = sbr.rel target = $region3
  $region8: #{full_model_forward.6} parent=0 // loop_exit
    _

</llo_original>
